<compile_context>
chip_gen: v6e
topology: v6e:2x2x1
jax: 0.10.0
libtpu: 0.0.40
codegen_flags: <defaults>
</compile_context>

<pallas_src>
import jax
import jax.numpy as jnp
from jax.experimental import pallas as pl
from jax.experimental.pallas import tpu as pltpu


# --------------------------- Pallas kernel bodies ---------------------------

def _conv_block_kernel(x_ref, w1_ref, b1_ref, w2_ref, b2_ref, o_ref, hp_ref):
    """Per batch-block: conv1+ReLU -> conv2+ReLU -> 2x2 max-pool, all in VMEM.

    x_ref : (BB, 28, 28, 1)  NHWC images (f32)
    w1_ref: (9, 32)          conv1 taps, row = ky*3+kx (f32)
    b1_ref: (1, 32)
    w2_ref: (288, 64)        conv2 im2col weight, row = (ky*3+kx)*32 + cin (bf16)
    b2_ref: (1, 64)
    o_ref : (BB, 12, 6, 128) pooled output; lane l<64 -> col 2t, l>=64 -> col 2t+1
                             (== NHWC flatten order i*768 + j*64 + c, lane-dense store)
    hp_ref: VMEM (BB, 12, 24, 64) scratch (H-pooled activation for strided W-pool)
    """
    BB = x_ref.shape[0]
    x = x_ref[...]                                              # (BB, 28, 28, 1)

    # ---- conv1 (1->32): 9 broadcast VPU multiply-adds (C_in = 1) ----
    h1 = jnp.zeros((BB, 26, 26, 32), jnp.float32)
    for ky in range(3):
        for kx in range(3):
            k = ky * 3 + kx
            tap = x[:, ky:ky + 26, kx:kx + 26, :]               # (BB, 26, 26, 1)
            wv = w1_ref[k:k + 1, :].reshape(1, 1, 1, 32)        # (1, 1, 1, 32)
            h1 = h1 + tap * wv
    h1 = jnp.maximum(h1 + b1_ref[...].reshape(1, 1, 1, 32), 0.0)   # (BB, 26, 26, 32)

    # ---- conv2 (32->64): in-VMEM im2col -> single K=288 bf16 MXU matmul ----
    h1b = h1.astype(jnp.bfloat16)
    cols = [h1b[:, ky:ky + 24, kx:kx + 24, :].reshape(BB * 576, 32)
            for ky in range(3) for kx in range(3)]
    patches = jnp.concatenate(cols, axis=-1)                    # (BB*576, 288) bf16
    h2 = jnp.dot(patches, w2_ref[...], preferred_element_type=jnp.float32)
    h2 = jnp.maximum(h2 + b2_ref[...], 0.0)                     # (BB*576, 64) f32

    # ---- fused 2x2 max-pool ----
    # H direction: rows split on leading dims (576 = 12*2*24) -> plain VPU max.
    hp = jnp.max(h2.reshape(BB, 12, 2, 24, 64), axis=2)         # (BB, 12, 24, 64)
    # W direction: stride-4 sublane reads from VMEM scratch.  Pairs (4t,4t+1) and
    # (4t+2,4t+3) give pooled output columns 2t and 2t+1, which are lane-concatenated
    # into a 128-wide row so the final store is lane-dense.
    hp_ref[...] = hp
    a0 = hp_ref[:, :, pl.ds(0, 6, stride=4), :]                 # (BB, 12, 6, 64)
    a1 = hp_ref[:, :, pl.ds(1, 6, stride=4), :]
    a2 = hp_ref[:, :, pl.ds(2, 6, stride=4), :]
    a3 = hp_ref[:, :, pl.ds(3, 6, stride=4), :]
    left = jnp.maximum(a0, a1)                                  # pooled col 2t
    right = jnp.maximum(a2, a3)                                 # pooled col 2t+1
    o_ref[...] = jnp.concatenate([left, right], axis=-1)        # (BB, 12, 6, 128)


def _fc_block_kernel(h_ref, w3_ref, b3_ref, w4_ref, b4_ref, o_ref, acc_ref):
    """fc1 + ReLU + fc2 + log_softmax, K-tiled over the 9216 contraction axis.

    h_ref : (B, KT)     flat activation tile (f32, NHWC flatten order)
    w3_ref: (KT, 128)   fc1 weight tile (bf16, rows pre-permuted to flatten order)
    b3_ref: (1, 128)
    w4_ref: (128, 128)  fc2 weight zero-padded from (128, 10) (bf16)
    b4_ref: (1, 128)    fc2 bias, padded lanes = -1e30 (vanish from the LSE)
    o_ref : (B, 128)    lane-dense log-softmax output; caller slices [:, :10]
    acc_ref: VMEM (B, 128) f32 accumulator (persists across K tiles)
    """
    k = pl.program_id(0)

    @pl.when(k == 0)
    def _():
        acc_ref[...] = jnp.zeros_like(acc_ref)

    acc_ref[...] += jnp.dot(h_ref[...].astype(jnp.bfloat16), w3_ref[...],
                            preferred_element_type=jnp.float32)

    @pl.when(k == pl.num_programs(0) - 1)
    def _():
        hid = jnp.maximum(acc_ref[...] + b3_ref[...], 0.0)
        logits = jnp.dot(hid.astype(jnp.bfloat16), w4_ref[...],
                         preferred_element_type=jnp.float32) + b4_ref[...]
        m = jnp.max(logits, axis=-1, keepdims=True)
        z = logits - m
        lse = jnp.log(jnp.sum(jnp.exp(z), axis=-1, keepdims=True))
        o_ref[...] = (z - lse).astype(o_ref.dtype)


# ------------------------------ pallas wrappers ------------------------------

def _pick_batch_block(B):
    """Largest divisor of B in {8,4,2,1} that still yields >=2 grid steps
    (keeps both v7x TensorCores busy); falls back to the largest divisor."""
    for bb in (8, 4, 2, 1):
        if B % bb == 0 and B // bb >= 2:
            return bb
    for bb in (8, 4, 2, 1):
        if B % bb == 0:
            return bb
    return 1


def conv_block(x_nhwc, w1, b1, w2, b2):
    B = x_nhwc.shape[0]
    BB = _pick_batch_block(B)
    return pl.pallas_call(
        _conv_block_kernel,
        out_shape=jax.ShapeDtypeStruct((B, 12, 6, 128), jnp.float32),
        grid_spec=pltpu.PrefetchScalarGridSpec(
            num_scalar_prefetch=0,
            grid=(B // BB,),
            in_specs=[
                pl.BlockSpec((BB, 28, 28, 1), lambda b: (b, 0, 0, 0)),
                pl.BlockSpec((9, 32), lambda b: (0, 0)),
                pl.BlockSpec((1, 32), lambda b: (0, 0)),
                pl.BlockSpec((288, 64), lambda b: (0, 0)),
                pl.BlockSpec((1, 64), lambda b: (0, 0)),
            ],
            out_specs=pl.BlockSpec((BB, 12, 6, 128), lambda b: (b, 0, 0, 0)),
            scratch_shapes=[pltpu.VMEM((BB, 12, 24, 64), jnp.float32)],
        ),
        compiler_params=pltpu.CompilerParams(
            dimension_semantics=("parallel",)),
    )(x_nhwc, w1, b1, w2, b2)


def fc_block(flat, w3, b3, w4p, b4p, *, kt=1152):
    """flat: (B, 9216) -> (B, 128) log-softmax (lanes 10..127 are padding)."""
    B = flat.shape[0]
    nk = flat.shape[1] // kt
    return pl.pallas_call(
        _fc_block_kernel,
        out_shape=jax.ShapeDtypeStruct((B, 128), jnp.float32),
        grid_spec=pltpu.PrefetchScalarGridSpec(
            num_scalar_prefetch=0,
            grid=(nk,),
            in_specs=[
                pl.BlockSpec((B, kt), lambda k: (0, k)),
                pl.BlockSpec((kt, 128), lambda k: (k, 0)),
                pl.BlockSpec((1, 128), lambda k: (0, 0)),
                pl.BlockSpec((128, 128), lambda k: (0, 0)),
                pl.BlockSpec((1, 128), lambda k: (0, 0)),
            ],
            out_specs=pl.BlockSpec((B, 128), lambda k: (0, 0)),
            scratch_shapes=[pltpu.VMEM((B, 128), jnp.float32)],
        ),
        compiler_params=pltpu.CompilerParams(
            dimension_semantics=("arbitrary",)),
    )(flat, w3, b3, w4p, b4p)


# ------------------------------ parameters -----------------------------------

def init_torch_params(key):
    """Deterministic synthetic parameters in PyTorch-native layouts."""
    ks = jax.random.split(key, 8)
    return {
        "conv1_w": 0.10 * jax.random.normal(ks[0], (32, 1, 3, 3), jnp.float32),
        "conv1_b": 0.01 * jax.random.normal(ks[1], (32,), jnp.float32),
        "conv2_w": 0.05 * jax.random.normal(ks[2], (64, 32, 3, 3), jnp.float32),
        "conv2_b": 0.01 * jax.random.normal(ks[3], (64,), jnp.float32),
        "fc1_w": 0.02 * jax.random.normal(ks[4], (128, 9216), jnp.float32),
        "fc1_b": 0.01 * jax.random.normal(ks[5], (128,), jnp.float32),
        "fc2_w": 0.05 * jax.random.normal(ks[6], (10, 128), jnp.float32),
        "fc2_b": 0.01 * jax.random.normal(ks[7], (10,), jnp.float32),
    }


def prepare_params(p):
    """One-time conversion of torch-layout params to kernel layouts (bf16 matmul weights)."""
    # conv1 (32,1,3,3) -> (9, 32), rows ordered (ky, kx); stays f32 (VPU path).
    w1 = jnp.transpose(p["conv1_w"][:, 0], (1, 2, 0)).reshape(9, 32)
    b1 = p["conv1_b"].reshape(1, 32)
    # conv2 (64,32,3,3) -> (288, 64): row = (ky*3+kx)*32 + cin, matching the im2col concat.
    w2 = jnp.transpose(p["conv2_w"], (2, 3, 1, 0)).reshape(288, 64).astype(jnp.bfloat16)
    b2 = p["conv2_b"].reshape(1, 64)
    # fc1: reorder input features from torch NCHW flatten (c*144 + h*12 + w) to the
    # kernel's NHWC flatten (h*768 + w*64 + c) so no runtime transpose is needed.
    w3 = jnp.transpose(p["fc1_w"].reshape(128, 64, 12, 12),
                       (2, 3, 1, 0)).reshape(9216, 128).astype(jnp.bfloat16)
    b3 = p["fc1_b"].reshape(1, 128)
    # fc2: (10,128) -> (128,10), zero-padded to (128,128) for a lane-dense store;
    # padded bias lanes are a large negative so they contribute 0 to the softmax sum.
    w4p = jnp.zeros((128, 128), jnp.float32).at[:, :10].set(
        p["fc2_w"].T).astype(jnp.bfloat16)
    b4p = jnp.full((1, 128), -1e30, jnp.float32).at[0, :10].set(p["fc2_b"])
    return {"w1": w1, "b1": b1, "w2": w2, "b2": b2,
            "w3": w3, "b3": b3, "w4": w4p, "b4": b4p}


# ------------------------------ forward pass ----------------------------------

def mnist_forward(x_nchw, kp):
    """x_nchw: (B, 1, 28, 28) float32 -> log-probs (B, 10)."""
    B = x_nchw.shape[0]
    # C == 1, so NCHW -> NHWC is a free reshape (no data movement).
    x_nhwc = x_nchw.reshape(B, 28, 28, 1)
    pooled = conv_block(x_nhwc, kp["w1"], kp["b1"], kp["w2"], kp["b2"])  # (B,12,6,128)
    # dropout1: identity (eval)
    # The kernel already emitted the NHWC flatten order; this reshape is a free bitcast.
    flat = pooled.reshape(B, 9216)
    logp = fc_block(flat, kp["w3"], kp["b3"], kp["w4"], kp["b4"])        # (B, 128)
    # dropout2: identity (eval)
    return logp[:, :10]


# -------------------------- pure-JAX reference (check) ------------------------

def reference_forward(x_nchw, p):
    """Faithful XLA mirror of MnistModel.forward (eval mode, f32)."""
    hi = jax.lax.Precision.HIGHEST
    dn = ("NCHW", "OIHW", "NCHW")
    y = jax.lax.conv_general_dilated(x_nchw, p["conv1_w"], (1, 1), "VALID",
                                     dimension_numbers=dn, precision=hi)
    y = jax.nn.relu(y + p["conv1_b"][None, :, None, None])
    y = jax.lax.conv_general_dilated(y, p["conv2_w"], (1, 1), "VALID",
                                     dimension_numbers=dn, precision=hi)
    y = jax.nn.relu(y + p["conv2_b"][None, :, None, None])
    B, C, H, W = y.shape
    y = y.reshape(B, C, H // 2, 2, W // 2, 2).max(axis=(3, 5))   # max_pool2d(2)
    y = y.reshape(B, -1)                                         # torch NCHW flatten
    y = jax.nn.relu(jnp.dot(y, p["fc1_w"].T, precision=hi) + p["fc1_b"])
    y = jnp.dot(y, p["fc2_w"].T, precision=hi) + p["fc2_b"]
    return jax.nn.log_softmax(y, axis=-1)


if __name__ == "__main__":
    key = jax.random.PRNGKey(0)
    k_x, k_p = jax.random.split(key)
    # Input spatial shape is fixed by the module: fc1 expects 64*12*12 = 9216 features.
    x = jax.random.normal(k_x, (2, 1, 28, 28), jnp.float32)
    torch_params = init_torch_params(k_p)
    kernel_params = prepare_params(torch_params)

    out = jax.jit(mnist_forward)(x, kernel_params)
    out = jax.block_until_ready(out)
    assert out.shape == (2, 10)

    ref = jax.jit(reference_forward)(x, torch_params)
    ref = jax.block_until_ready(ref)
    # Tolerance covers bf16 matmul operands (f32 accumulation) vs the f32 reference;
    # any layout/permutation bug would produce O(1) errors and still be caught.
    assert bool(jnp.allclose(out, ref, atol=2e-2, rtol=2e-2)), (
        f"mismatch vs reference, max abs err = {jnp.max(jnp.abs(out - ref))}")

    print("KERNEL_OK")
</pallas_src>

<mosaic_0001>
module attributes {stable_mosaic.version = 11 : i64} {
  func.func @_conv_block_kernel(%arg0: i32, %arg1: memref<1x28x28x1xf32, #tpu.memory_space<vmem>>, %arg2: memref<9x32xf32, #tpu.memory_space<vmem>>, %arg3: memref<1x32xf32, #tpu.memory_space<vmem>>, %arg4: memref<288x64xbf16, #tpu.memory_space<vmem>>, %arg5: memref<1x64xf32, #tpu.memory_space<vmem>>, %arg6: memref<1x12x6x128xf32, #tpu.memory_space<vmem>>, %arg7: memref<1x12x24x64xf32, #tpu.memory_space<vmem>>) attributes {dimension_semantics = [#tpu.dimension_semantics<parallel>], iteration_bounds = array<i64: 2>, scalar_prefetch = 0 : i64, scratch_operands = 1 : i64, tpu.core_type = #tpu.core_type<tc>, window_params = [{transform_indices = @transform_0, window_bounds = array<i64: 1, 28, 28, 1>}, {pipeline_mode = #tpu.pipeline_mode<synchronous>, transform_indices = @transform_1, window_bounds = array<i64: 9, 32>}, {pipeline_mode = #tpu.pipeline_mode<synchronous>, transform_indices = @transform_2, window_bounds = array<i64: 1, 32>}, {pipeline_mode = #tpu.pipeline_mode<synchronous>, transform_indices = @transform_3, window_bounds = array<i64: 288, 64>}, {pipeline_mode = #tpu.pipeline_mode<synchronous>, transform_indices = @transform_4, window_bounds = array<i64: 1, 64>}, {transform_indices = @transform_5, window_bounds = array<i64: 1, 12, 6, 128>}]} {
    %c0 = arith.constant 0 : index
    %c0_0 = arith.constant 0 : index
    %c0_1 = arith.constant 0 : index
    %c0_2 = arith.constant 0 : index
    %0 = vector.load %arg1[%c0, %c0_0, %c0_1, %c0_2] : memref<1x28x28x1xf32, #tpu.memory_space<vmem>>, vector<1x28x28x1xf32>
    %cst = arith.constant 0.000000e+00 : f32
    %1 = vector.broadcast %cst : f32 to vector<1x26x26x32xf32>
    %2 = vector.extract_strided_slice %0 {offsets = [0, 0, 0, 0], sizes = [1, 26, 26, 1], strides = [1, 1, 1, 1]} : vector<1x28x28x1xf32> to vector<1x26x26x1xf32>
    %c0_3 = arith.constant 0 : index
    %c0_4 = arith.constant 0 : index
    %3 = vector.load %arg2[%c0_3, %c0_4] : memref<9x32xf32, #tpu.memory_space<vmem>>, vector<1x32xf32>
    %4 = vector.shape_cast %3 : vector<1x32xf32> to vector<1x1x1x32xf32>
    %5 = vector.broadcast %2 : vector<1x26x26x1xf32> to vector<1x26x26x32xf32>
    %6 = vector.broadcast %4 : vector<1x1x1x32xf32> to vector<1x26x26x32xf32>
    %7 = arith.mulf %5, %6 : vector<1x26x26x32xf32>
    %8 = arith.addf %1, %7 : vector<1x26x26x32xf32>
    %9 = vector.extract_strided_slice %0 {offsets = [0, 0, 1, 0], sizes = [1, 26, 26, 1], strides = [1, 1, 1, 1]} : vector<1x28x28x1xf32> to vector<1x26x26x1xf32>
    %c1 = arith.constant 1 : index
    %c0_5 = arith.constant 0 : index
    %10 = vector.load %arg2[%c1, %c0_5] : memref<9x32xf32, #tpu.memory_space<vmem>>, vector<1x32xf32>
    %11 = vector.shape_cast %10 : vector<1x32xf32> to vector<1x1x1x32xf32>
    %12 = vector.broadcast %9 : vector<1x26x26x1xf32> to vector<1x26x26x32xf32>
    %13 = vector.broadcast %11 : vector<1x1x1x32xf32> to vector<1x26x26x32xf32>
    %14 = arith.mulf %12, %13 : vector<1x26x26x32xf32>
    %15 = arith.addf %8, %14 : vector<1x26x26x32xf32>
    %16 = vector.extract_strided_slice %0 {offsets = [0, 0, 2, 0], sizes = [1, 26, 26, 1], strides = [1, 1, 1, 1]} : vector<1x28x28x1xf32> to vector<1x26x26x1xf32>
    %c2 = arith.constant 2 : index
    %c0_6 = arith.constant 0 : index
    %17 = vector.load %arg2[%c2, %c0_6] : memref<9x32xf32, #tpu.memory_space<vmem>>, vector<1x32xf32>
    %18 = vector.shape_cast %17 : vector<1x32xf32> to vector<1x1x1x32xf32>
    %19 = vector.broadcast %16 : vector<1x26x26x1xf32> to vector<1x26x26x32xf32>
    %20 = vector.broadcast %18 : vector<1x1x1x32xf32> to vector<1x26x26x32xf32>
    %21 = arith.mulf %19, %20 : vector<1x26x26x32xf32>
    %22 = arith.addf %15, %21 : vector<1x26x26x32xf32>
    %23 = vector.extract_strided_slice %0 {offsets = [0, 1, 0, 0], sizes = [1, 26, 26, 1], strides = [1, 1, 1, 1]} : vector<1x28x28x1xf32> to vector<1x26x26x1xf32>
    %c3 = arith.constant 3 : index
    %c0_7 = arith.constant 0 : index
    %24 = vector.load %arg2[%c3, %c0_7] : memref<9x32xf32, #tpu.memory_space<vmem>>, vector<1x32xf32>
    %25 = vector.shape_cast %24 : vector<1x32xf32> to vector<1x1x1x32xf32>
    %26 = vector.broadcast %23 : vector<1x26x26x1xf32> to vector<1x26x26x32xf32>
    %27 = vector.broadcast %25 : vector<1x1x1x32xf32> to vector<1x26x26x32xf32>
    %28 = arith.mulf %26, %27 : vector<1x26x26x32xf32>
    %29 = arith.addf %22, %28 : vector<1x26x26x32xf32>
    %30 = vector.extract_strided_slice %0 {offsets = [0, 1, 1, 0], sizes = [1, 26, 26, 1], strides = [1, 1, 1, 1]} : vector<1x28x28x1xf32> to vector<1x26x26x1xf32>
    %c4 = arith.constant 4 : index
    %c0_8 = arith.constant 0 : index
    %31 = vector.load %arg2[%c4, %c0_8] : memref<9x32xf32, #tpu.memory_space<vmem>>, vector<1x32xf32>
    %32 = vector.shape_cast %31 : vector<1x32xf32> to vector<1x1x1x32xf32>
    %33 = vector.broadcast %30 : vector<1x26x26x1xf32> to vector<1x26x26x32xf32>
    %34 = vector.broadcast %32 : vector<1x1x1x32xf32> to vector<1x26x26x32xf32>
    %35 = arith.mulf %33, %34 : vector<1x26x26x32xf32>
    %36 = arith.addf %29, %35 : vector<1x26x26x32xf32>
    %37 = vector.extract_strided_slice %0 {offsets = [0, 1, 2, 0], sizes = [1, 26, 26, 1], strides = [1, 1, 1, 1]} : vector<1x28x28x1xf32> to vector<1x26x26x1xf32>
    %c5 = arith.constant 5 : index
    %c0_9 = arith.constant 0 : index
    %38 = vector.load %arg2[%c5, %c0_9] : memref<9x32xf32, #tpu.memory_space<vmem>>, vector<1x32xf32>
    %39 = vector.shape_cast %38 : vector<1x32xf32> to vector<1x1x1x32xf32>
    %40 = vector.broadcast %37 : vector<1x26x26x1xf32> to vector<1x26x26x32xf32>
    %41 = vector.broadcast %39 : vector<1x1x1x32xf32> to vector<1x26x26x32xf32>
    %42 = arith.mulf %40, %41 : vector<1x26x26x32xf32>
    %43 = arith.addf %36, %42 : vector<1x26x26x32xf32>
    %44 = vector.extract_strided_slice %0 {offsets = [0, 2, 0, 0], sizes = [1, 26, 26, 1], strides = [1, 1, 1, 1]} : vector<1x28x28x1xf32> to vector<1x26x26x1xf32>
    %c6 = arith.constant 6 : index
    %c0_10 = arith.constant 0 : index
    %45 = vector.load %arg2[%c6, %c0_10] : memref<9x32xf32, #tpu.memory_space<vmem>>, vector<1x32xf32>
    %46 = vector.shape_cast %45 : vector<1x32xf32> to vector<1x1x1x32xf32>
    %47 = vector.broadcast %44 : vector<1x26x26x1xf32> to vector<1x26x26x32xf32>
    %48 = vector.broadcast %46 : vector<1x1x1x32xf32> to vector<1x26x26x32xf32>
    %49 = arith.mulf %47, %48 : vector<1x26x26x32xf32>
    %50 = arith.addf %43, %49 : vector<1x26x26x32xf32>
    %51 = vector.extract_strided_slice %0 {offsets = [0, 2, 1, 0], sizes = [1, 26, 26, 1], strides = [1, 1, 1, 1]} : vector<1x28x28x1xf32> to vector<1x26x26x1xf32>
    %c7 = arith.constant 7 : index
    %c0_11 = arith.constant 0 : index
    %52 = vector.load %arg2[%c7, %c0_11] : memref<9x32xf32, #tpu.memory_space<vmem>>, vector<1x32xf32>
    %53 = vector.shape_cast %52 : vector<1x32xf32> to vector<1x1x1x32xf32>
    %54 = vector.broadcast %51 : vector<1x26x26x1xf32> to vector<1x26x26x32xf32>
    %55 = vector.broadcast %53 : vector<1x1x1x32xf32> to vector<1x26x26x32xf32>
    %56 = arith.mulf %54, %55 : vector<1x26x26x32xf32>
    %57 = arith.addf %50, %56 : vector<1x26x26x32xf32>
    %58 = vector.extract_strided_slice %0 {offsets = [0, 2, 2, 0], sizes = [1, 26, 26, 1], strides = [1, 1, 1, 1]} : vector<1x28x28x1xf32> to vector<1x26x26x1xf32>
    %c8 = arith.constant 8 : index
    %c0_12 = arith.constant 0 : index
    %59 = vector.load %arg2[%c8, %c0_12] : memref<9x32xf32, #tpu.memory_space<vmem>>, vector<1x32xf32>
    %60 = vector.shape_cast %59 : vector<1x32xf32> to vector<1x1x1x32xf32>
    %61 = vector.broadcast %58 : vector<1x26x26x1xf32> to vector<1x26x26x32xf32>
    %62 = vector.broadcast %60 : vector<1x1x1x32xf32> to vector<1x26x26x32xf32>
    %63 = arith.mulf %61, %62 : vector<1x26x26x32xf32>
    %64 = arith.addf %57, %63 : vector<1x26x26x32xf32>
    %c0_13 = arith.constant 0 : index
    %c0_14 = arith.constant 0 : index
    %65 = vector.load %arg3[%c0_13, %c0_14] : memref<1x32xf32, #tpu.memory_space<vmem>>, vector<1x32xf32>
    %66 = vector.shape_cast %65 : vector<1x32xf32> to vector<1x1x1x32xf32>
    %67 = vector.broadcast %66 : vector<1x1x1x32xf32> to vector<1x26x26x32xf32>
    %68 = arith.addf %64, %67 : vector<1x26x26x32xf32>
    %cst_15 = arith.constant 0.000000e+00 : f32
    %69 = vector.broadcast %cst_15 : f32 to vector<1x26x26x32xf32>
    %70 = arith.maximumf %68, %69 : vector<1x26x26x32xf32>
    %71 = arith.truncf %70 : vector<1x26x26x32xf32> to vector<1x26x26x32xbf16>
    %72 = vector.extract_strided_slice %71 {offsets = [0, 0, 0, 0], sizes = [1, 24, 24, 32], strides = [1, 1, 1, 1]} : vector<1x26x26x32xbf16> to vector<1x24x24x32xbf16>
    %73 = vector.shape_cast %72 : vector<1x24x24x32xbf16> to vector<576x32xbf16>
    %74 = vector.extract_strided_slice %71 {offsets = [0, 0, 1, 0], sizes = [1, 24, 24, 32], strides = [1, 1, 1, 1]} : vector<1x26x26x32xbf16> to vector<1x24x24x32xbf16>
    %75 = vector.shape_cast %74 : vector<1x24x24x32xbf16> to vector<576x32xbf16>
    %76 = vector.extract_strided_slice %71 {offsets = [0, 0, 2, 0], sizes = [1, 24, 24, 32], strides = [1, 1, 1, 1]} : vector<1x26x26x32xbf16> to vector<1x24x24x32xbf16>
    %77 = vector.shape_cast %76 : vector<1x24x24x32xbf16> to vector<576x32xbf16>
    %78 = vector.extract_strided_slice %71 {offsets = [0, 1, 0, 0], sizes = [1, 24, 24, 32], strides = [1, 1, 1, 1]} : vector<1x26x26x32xbf16> to vector<1x24x24x32xbf16>
    %79 = vector.shape_cast %78 : vector<1x24x24x32xbf16> to vector<576x32xbf16>
    %80 = vector.extract_strided_slice %71 {offsets = [0, 1, 1, 0], sizes = [1, 24, 24, 32], strides = [1, 1, 1, 1]} : vector<1x26x26x32xbf16> to vector<1x24x24x32xbf16>
    %81 = vector.shape_cast %80 : vector<1x24x24x32xbf16> to vector<576x32xbf16>
    %82 = vector.extract_strided_slice %71 {offsets = [0, 1, 2, 0], sizes = [1, 24, 24, 32], strides = [1, 1, 1, 1]} : vector<1x26x26x32xbf16> to vector<1x24x24x32xbf16>
    %83 = vector.shape_cast %82 : vector<1x24x24x32xbf16> to vector<576x32xbf16>
    %84 = vector.extract_strided_slice %71 {offsets = [0, 2, 0, 0], sizes = [1, 24, 24, 32], strides = [1, 1, 1, 1]} : vector<1x26x26x32xbf16> to vector<1x24x24x32xbf16>
    %85 = vector.shape_cast %84 : vector<1x24x24x32xbf16> to vector<576x32xbf16>
    %86 = vector.extract_strided_slice %71 {offsets = [0, 2, 1, 0], sizes = [1, 24, 24, 32], strides = [1, 1, 1, 1]} : vector<1x26x26x32xbf16> to vector<1x24x24x32xbf16>
    %87 = vector.shape_cast %86 : vector<1x24x24x32xbf16> to vector<576x32xbf16>
    %88 = vector.extract_strided_slice %71 {offsets = [0, 2, 2, 0], sizes = [1, 24, 24, 32], strides = [1, 1, 1, 1]} : vector<1x26x26x32xbf16> to vector<1x24x24x32xbf16>
    %89 = vector.shape_cast %88 : vector<1x24x24x32xbf16> to vector<576x32xbf16>
    %90 = tpu.concatenate %73, %75, %77, %79, %81, %83, %85, %87, %89 in 1 : vector<576x32xbf16>, vector<576x32xbf16>, vector<576x32xbf16>, vector<576x32xbf16>, vector<576x32xbf16>, vector<576x32xbf16>, vector<576x32xbf16>, vector<576x32xbf16>, vector<576x32xbf16> -> vector<576x288xbf16>
    %c0_16 = arith.constant 0 : index
    %c0_17 = arith.constant 0 : index
    %91 = vector.load %arg4[%c0_16, %c0_17] : memref<288x64xbf16, #tpu.memory_space<vmem>>, vector<288x64xbf16>
    %cst_18 = arith.constant dense<0.000000e+00> : vector<576x64xf32>
    %92 = tpu.matmul %90, %91, %cst_18 {dimension_numbers = #tpu.dot_dimension_numbers<[1], [0], [0], [1], [0, 0, 1, 1], [], []>} : vector<576x288xbf16>, vector<288x64xbf16>, vector<576x64xf32> -> vector<576x64xf32>
    %c0_19 = arith.constant 0 : index
    %c0_20 = arith.constant 0 : index
    %93 = vector.load %arg5[%c0_19, %c0_20] : memref<1x64xf32, #tpu.memory_space<vmem>>, vector<1x64xf32>
    %94 = vector.broadcast %93 : vector<1x64xf32> to vector<576x64xf32>
    %95 = arith.addf %92, %94 : vector<576x64xf32>
    %cst_21 = arith.constant 0.000000e+00 : f32
    %96 = vector.broadcast %cst_21 : f32 to vector<576x64xf32>
    %97 = arith.maximumf %95, %96 : vector<576x64xf32>
    %98 = vector.shape_cast %97 : vector<576x64xf32> to vector<1x12x2x24x64xf32>
    %cst_22 = arith.constant dense<0xFF800000> : vector<1x12x24x64xf32>
    %99 = vector.multi_reduction <maximumf>, %98, %cst_22 [2] : vector<1x12x2x24x64xf32> to vector<1x12x24x64xf32>
    %c0_23 = arith.constant 0 : index
    %c0_24 = arith.constant 0 : index
    %c0_25 = arith.constant 0 : index
    %c0_26 = arith.constant 0 : index
    %100 = vector.load %arg7[%c0_23, %c0_24, %c0_25, %c0_26] : memref<1x12x24x64xf32, #tpu.memory_space<vmem>>, vector<1x12x24x64xf32>
    tpu.vector_store %arg7[%c0_23, %c0_24, %c0_25, %c0_26], %99 {strides = array<i32>} : memref<1x12x24x64xf32, #tpu.memory_space<vmem>>, vector<1x12x24x64xf32>,
    %c0_27 = arith.constant 0 : index
    %c0_28 = arith.constant 0 : index
    %c0_29 = arith.constant 0 : index
    %c0_30 = arith.constant 0 : index
    %101 = tpu.strided_load %arg7[%c0_27, %c0_28, %c0_29, %c0_30] {strides = array<i32: 1, 1, 4, 1>} : memref<1x12x24x64xf32, #tpu.memory_space<vmem>>, vector<1x12x6x64xf32>
    %c0_31 = arith.constant 0 : index
    %c0_32 = arith.constant 0 : index
    %c1_33 = arith.constant 1 : index
    %c0_34 = arith.constant 0 : index
    %102 = tpu.strided_load %arg7[%c0_31, %c0_32, %c1_33, %c0_34] {strides = array<i32: 1, 1, 4, 1>} : memref<1x12x24x64xf32, #tpu.memory_space<vmem>>, vector<1x12x6x64xf32>
    %c0_35 = arith.constant 0 : index
    %c0_36 = arith.constant 0 : index
    %c2_37 = arith.constant 2 : index
    %c0_38 = arith.constant 0 : index
    %103 = tpu.strided_load %arg7[%c0_35, %c0_36, %c2_37, %c0_38] {strides = array<i32: 1, 1, 4, 1>} : memref<1x12x24x64xf32, #tpu.memory_space<vmem>>, vector<1x12x6x64xf32>
    %c0_39 = arith.constant 0 : index
    %c0_40 = arith.constant 0 : index
    %c3_41 = arith.constant 3 : index
    %c0_42 = arith.constant 0 : index
    %104 = tpu.strided_load %arg7[%c0_39, %c0_40, %c3_41, %c0_42] {strides = array<i32: 1, 1, 4, 1>} : memref<1x12x24x64xf32, #tpu.memory_space<vmem>>, vector<1x12x6x64xf32>
    %105 = arith.maximumf %101, %102 : vector<1x12x6x64xf32>
    %106 = arith.maximumf %103, %104 : vector<1x12x6x64xf32>
    %107 = tpu.concatenate %105, %106 in 3 : vector<1x12x6x64xf32>, vector<1x12x6x64xf32> -> vector<1x12x6x128xf32>
    %c0_43 = arith.constant 0 : index
    %c0_44 = arith.constant 0 : index
    %c0_45 = arith.constant 0 : index
    %c0_46 = arith.constant 0 : index
    %108 = vector.load %arg6[%c0_43, %c0_44, %c0_45, %c0_46] : memref<1x12x6x128xf32, #tpu.memory_space<vmem>>, vector<1x12x6x128xf32>
    tpu.vector_store %arg6[%c0_43, %c0_44, %c0_45, %c0_46], %107 {strides = array<i32>} : memref<1x12x6x128xf32, #tpu.memory_space<vmem>>, vector<1x12x6x128xf32>,
    return
  }
  func.func @transform_0(%arg0: i32) -> (i32, i32, i32, i32) {
    %c0_i32 = arith.constant 0 : i32
    %c0_i32_0 = arith.constant 0 : i32
    %c0_i32_1 = arith.constant 0 : i32
    %c0_i32_2 = arith.constant 0 : i32
    return %arg0, %c0_i32, %c0_i32_0, %c0_i32_1 : i32, i32, i32, i32
  }
  func.func @transform_1(%arg0: i32) -> (i32, i32) {
    %c0_i32 = arith.constant 0 : i32
    %c0_i32_0 = arith.constant 0 : i32
    %c0_i32_1 = arith.constant 0 : i32
    return %c0_i32, %c0_i32_0 : i32, i32
  }
  func.func @transform_2(%arg0: i32) -> (i32, i32) {
    %c0_i32 = arith.constant 0 : i32
    %c0_i32_0 = arith.constant 0 : i32
    %c0_i32_1 = arith.constant 0 : i32
    return %c0_i32, %c0_i32_0 : i32, i32
  }
  func.func @transform_3(%arg0: i32) -> (i32, i32) {
    %c0_i32 = arith.constant 0 : i32
    %c0_i32_0 = arith.constant 0 : i32
    %c0_i32_1 = arith.constant 0 : i32
    return %c0_i32, %c0_i32_0 : i32, i32
  }
  func.func @transform_4(%arg0: i32) -> (i32, i32) {
    %c0_i32 = arith.constant 0 : i32
    %c0_i32_0 = arith.constant 0 : i32
    %c0_i32_1 = arith.constant 0 : i32
    return %c0_i32, %c0_i32_0 : i32, i32
  }
  func.func @transform_5(%arg0: i32) -> (i32, i32, i32, i32) {
    %c0_i32 = arith.constant 0 : i32
    %c0_i32_0 = arith.constant 0 : i32
    %c0_i32_1 = arith.constant 0 : i32
    %c0_i32_2 = arith.constant 0 : i32
    return %arg0, %c0_i32, %c0_i32_0, %c0_i32_1 : i32, i32, i32, i32
  }
}

module attributes {stable_mosaic.version = 11 : i64} {
  func.func @_fc_block_kernel(%arg0: i32, %arg1: memref<2x1152xf32, #tpu.memory_space<vmem>>, %arg2: memref<1152x128xbf16, #tpu.memory_space<vmem>>, %arg3: memref<1x128xf32, #tpu.memory_space<vmem>>, %arg4: memref<128x128xbf16, #tpu.memory_space<vmem>>, %arg5: memref<1x128xf32, #tpu.memory_space<vmem>>, %arg6: memref<2x128xf32, #tpu.memory_space<vmem>>, %arg7: memref<2x128xf32, #tpu.memory_space<vmem>>) attributes {dimension_semantics = [#tpu.dimension_semantics<arbitrary>], iteration_bounds = array<i64: 8>, scalar_prefetch = 0 : i64, scratch_operands = 1 : i64, tpu.core_type = #tpu.core_type<tc>, window_params = [{transform_indices = @transform_0, window_bounds = array<i64: 2, 1152>}, {transform_indices = @transform_1, window_bounds = array<i64: 1152, 128>}, {pipeline_mode = #tpu.pipeline_mode<synchronous>, transform_indices = @transform_2, window_bounds = array<i64: 1, 128>}, {pipeline_mode = #tpu.pipeline_mode<synchronous>, transform_indices = @transform_3, window_bounds = array<i64: 128, 128>}, {pipeline_mode = #tpu.pipeline_mode<synchronous>, transform_indices = @transform_4, window_bounds = array<i64: 1, 128>}, {pipeline_mode = #tpu.pipeline_mode<synchronous>, transform_indices = @transform_5, window_bounds = array<i64: 2, 128>}]} {
    %c0_i32 = arith.constant 0 : i32
    %0 = arith.cmpi eq, %arg0, %c0_i32 : i32
    %1 = arith.extui %0 : i1 to i32
    %c0_i32_0 = arith.constant 0 : i32
    %2 = arith.cmpi ne, %1, %c0_i32_0 : i32
    scf.if %2 {
      %cst_9 = arith.constant 0.000000e+00 : f32
      %13 = vector.broadcast %cst_9 : f32 to vector<2x128xf32>
      %c0_10 = arith.constant 0 : index
      %c0_11 = arith.constant 0 : index
      %14 = vector.load %arg7[%c0_10, %c0_11] : memref<2x128xf32, #tpu.memory_space<vmem>>, vector<2x128xf32>
      tpu.vector_store %arg7[%c0_10, %c0_11], %13 {strides = array<i32>} : memref<2x128xf32, #tpu.memory_space<vmem>>, vector<2x128xf32>,
    } else {
    }
    %c0 = arith.constant 0 : index
    %c0_1 = arith.constant 0 : index
    %3 = vector.load %arg7[%c0, %c0_1] : memref<2x128xf32, #tpu.memory_space<vmem>>, vector<2x128xf32>
    %c0_2 = arith.constant 0 : index
    %c0_3 = arith.constant 0 : index
    %4 = vector.load %arg1[%c0_2, %c0_3] : memref<2x1152xf32, #tpu.memory_space<vmem>>, vector<2x1152xf32>
    %5 = arith.truncf %4 : vector<2x1152xf32> to vector<2x1152xbf16>
    %c0_4 = arith.constant 0 : index
    %c0_5 = arith.constant 0 : index
    %6 = vector.load %arg2[%c0_4, %c0_5] : memref<1152x128xbf16, #tpu.memory_space<vmem>>, vector<1152x128xbf16>
    %cst = arith.constant dense<0.000000e+00> : vector<2x128xf32>
    %7 = tpu.matmul %5, %6, %cst {dimension_numbers = #tpu.dot_dimension_numbers<[1], [0], [0], [1], [0, 0, 1, 1], [], []>} : vector<2x1152xbf16>, vector<1152x128xbf16>, vector<2x128xf32> -> vector<2x128xf32>
    %8 = arith.addf %3, %7 : vector<2x128xf32>
    %c0_6 = arith.constant 0 : index
    %c0_7 = arith.constant 0 : index
    %9 = vector.load %arg7[%c0_6, %c0_7] : memref<2x128xf32, #tpu.memory_space<vmem>>, vector<2x128xf32>
    tpu.vector_store %arg7[%c0_6, %c0_7], %8 {strides = array<i32>} : memref<2x128xf32, #tpu.memory_space<vmem>>, vector<2x128xf32>,
    %c7_i32 = arith.constant 7 : i32
    %10 = arith.cmpi eq, %arg0, %c7_i32 : i32
    %11 = arith.extui %10 : i1 to i32
    %c0_i32_8 = arith.constant 0 : i32
    %12 = arith.cmpi ne, %11, %c0_i32_8 : i32
    scf.if %12 {
      %c0_9 = arith.constant 0 : index
      %c0_10 = arith.constant 0 : index
      %13 = vector.load %arg7[%c0_9, %c0_10] : memref<2x128xf32, #tpu.memory_space<vmem>>, vector<2x128xf32>
      %c0_11 = arith.constant 0 : index
      %c0_12 = arith.constant 0 : index
      %14 = vector.load %arg3[%c0_11, %c0_12] : memref<1x128xf32, #tpu.memory_space<vmem>>, vector<1x128xf32>
      %15 = vector.broadcast %14 : vector<1x128xf32> to vector<2x128xf32>
      %16 = arith.addf %13, %15 : vector<2x128xf32>
      %cst_13 = arith.constant 0.000000e+00 : f32
      %17 = vector.broadcast %cst_13 : f32 to vector<2x128xf32>
      %18 = arith.maximumf %16, %17 : vector<2x128xf32>
      %19 = arith.truncf %18 : vector<2x128xf32> to vector<2x128xbf16>
      %c0_14 = arith.constant 0 : index
      %c0_15 = arith.constant 0 : index
      %20 = vector.load %arg4[%c0_14, %c0_15] : memref<128x128xbf16, #tpu.memory_space<vmem>>, vector<128x128xbf16>
      %cst_16 = arith.constant dense<0.000000e+00> : vector<2x128xf32>
      %21 = tpu.matmul %19, %20, %cst_16 {dimension_numbers = #tpu.dot_dimension_numbers<[1], [0], [0], [1], [0, 0, 1, 1], [], []>} : vector<2x128xbf16>, vector<128x128xbf16>, vector<2x128xf32> -> vector<2x128xf32>
      %c0_17 = arith.constant 0 : index
      %c0_18 = arith.constant 0 : index
      %22 = vector.load %arg5[%c0_17, %c0_18] : memref<1x128xf32, #tpu.memory_space<vmem>>, vector<1x128xf32>
      %23 = vector.broadcast %22 : vector<1x128xf32> to vector<2x128xf32>
      %24 = arith.addf %21, %23 : vector<2x128xf32>
      %cst_19 = arith.constant dense<0xFF800000> : vector<2xf32>
      %25 = vector.multi_reduction <maximumf>, %24, %cst_19 [1] : vector<2x128xf32> to vector<2xf32>
      %26 = vector.shape_cast %25 : vector<2xf32> to vector<2x1xf32>
      %27 = vector.broadcast %26 : vector<2x1xf32> to vector<2x128xf32>
      %28 = arith.subf %24, %27 : vector<2x128xf32>
      %29 = math.exp %28 : vector<2x128xf32>
      %cst_20 = arith.constant dense<0.000000e+00> : vector<2xf32>
      %30 = vector.multi_reduction <add>, %29, %cst_20 [1] : vector<2x128xf32> to vector<2xf32>
      %31 = vector.shape_cast %30 : vector<2xf32> to vector<2x1xf32>
      %32 = math.log %31 : vector<2x1xf32>
      %33 = vector.broadcast %32 : vector<2x1xf32> to vector<2x128xf32>
      %34 = arith.subf %28, %33 : vector<2x128xf32>
      %c0_21 = arith.constant 0 : index
      %c0_22 = arith.constant 0 : index
      %35 = vector.load %arg6[%c0_21, %c0_22] : memref<2x128xf32, #tpu.memory_space<vmem>>, vector<2x128xf32>
      tpu.vector_store %arg6[%c0_21, %c0_22], %34 {strides = array<i32>} : memref<2x128xf32, #tpu.memory_space<vmem>>, vector<2x128xf32>,
    } else {
    }
    return
  }
  func.func @transform_0(%arg0: i32) -> (i32, i32) {
    %c0_i32 = arith.constant 0 : i32
    %c0_i32_0 = arith.constant 0 : i32
    return %c0_i32, %arg0 : i32, i32
  }
  func.func @transform_1(%arg0: i32) -> (i32, i32) {
    %c0_i32 = arith.constant 0 : i32
    %c0_i32_0 = arith.constant 0 : i32
    return %arg0, %c0_i32 : i32, i32
  }
  func.func @transform_2(%arg0: i32) -> (i32, i32) {
    %c0_i32 = arith.constant 0 : i32
    %c0_i32_0 = arith.constant 0 : i32
    %c0_i32_1 = arith.constant 0 : i32
    return %c0_i32, %c0_i32_0 : i32, i32
  }
  func.func @transform_3(%arg0: i32) -> (i32, i32) {
    %c0_i32 = arith.constant 0 : i32
    %c0_i32_0 = arith.constant 0 : i32
    %c0_i32_1 = arith.constant 0 : i32
    return %c0_i32, %c0_i32_0 : i32, i32
  }
  func.func @transform_4(%arg0: i32) -> (i32, i32) {
    %c0_i32 = arith.constant 0 : i32
    %c0_i32_0 = arith.constant 0 : i32
    %c0_i32_1 = arith.constant 0 : i32
    return %c0_i32, %c0_i32_0 : i32, i32
  }
  func.func @transform_5(%arg0: i32) -> (i32, i32) {
    %c0_i32 = arith.constant 0 : i32
    %c0_i32_0 = arith.constant 0 : i32
    %c0_i32_1 = arith.constant 0 : i32
    return %c0_i32, %c0_i32_0 : i32, i32
  }
}

</mosaic_0001>

<llo_original>
// kernel: mnist_forward.3
$region0: #{mnist_forward.3}
  #allocation0 [shape = 'u32[]', space=smem, size = 0x4, offset = 0x4, fixed_abs, tag = 'smem constant byte address 0x4 - core index']
  #allocation1 [shape = 'u32[144,128]{1,0:T(1,128)}', space=vmem, size = 0x12000, scoped, tag = 'internal scratch']
  #allocation2 [shape = 'f32[2,128]{1,0:T(2,128)}', space=vmem, size = 0x400, scoped, tag = 'scratch operand']
  %s0 = inlined_call_operand.vmem [shape: f32[2,9216], index: 0, kind: input, shape index: {}]
  %s1 = inlined_call_operand.vmem [shape: bf16[9216,128], index: 1, kind: input, shape index: {}]
  %s2 = inlined_call_operand.vmem [shape: f32[1,128], index: 2, kind: input, shape index: {}]
  %s3 = inlined_call_operand.vmem [shape: bf16[128,128], index: 3, kind: input, shape index: {}]
  %s4 = inlined_call_operand.vmem [shape: f32[1,128], index: 4, kind: input, shape index: {}]
  %s5 = inlined_call_operand.hbm [shape: f32[2,128], index: 5, kind: output, shape index: {}]
  %s6 = sld [smem:[#allocation0]]
  $region61: #{mnist_forward.3} parent=0
    _
  %s8 = ssub.s32 1, %s6
  %s9 = scalar_select 0, %s8, %s6
  $region1: #{mnist_forward.3} parent=0
    #allocation3 [shape = 'u8[1024]{0}', space=vmem, size = 0x400, scoped, tag = 'output window, operand 0, single buffered']
    #allocation4 [shape = 's32[2]{0}', space=sflag, size = 0x8, scoped, tag = 'scoped memory for mnist_forward.3']
    %10 = vsyncpa [#allocation4], 0
    loop: start=0, step=1, limit=10
    $region2: #{mnist_forward.3} parent=1 // loop_pre_header
      _
    $region3: #{mnist_forward.3} parent=1 // loop_header
      %s12 = sphi 0, %s16
      %p13 = scmp.ge.s32.totalorder %s12, 10
      %s22 = sphi 0, %s24
      %s25 = sphi 0, %s22
      %s26 = sphi 0, %s25
      %s42 = sphi 0, %s26
      %s48 = sphi 0, %s50
      %s51 = sphi 0, %s48
      %s52 = sphi 0, %s51
      %s68 = sphi 0, %s52
      %s72 = sphi 0, %s72
      %s74 = sphi 0, %s72
      %s75 = sphi 0, %s74
      %s89 = sphi 0, %s75
      %s93 = sphi 0, %s93
      %s95 = sphi 0, %s93
      %s96 = sphi 0, %s95
      %s110 = sphi 0, %s96
      %s114 = sphi 0, %s114
      %s116 = sphi 0, %s114
      %s117 = sphi 0, %s116
      %s131 = sphi 0, %s117
      %s135 = sphi 0, %s135
      %s137 = sphi 0, %s135
      %s138 = sphi 0, %s137
      %s152 = sphi 0, %s138
    $region4: #{mnist_forward.3} parent=1 // loop_header_branch
      %15 = sbr.rel (%p13) target = $region8
    $region5: #{mnist_forward.3} parent=1 // loop_body
      %s17 = ssub.s32 %s12, 1
      %s18 = ssub.s32 %s12, 2
      %s19 = sadd.s32 %s12, 1
      %s20 = ssub.s32 %s12, %s19
      %p21 = scmp.eq.s32.totalorder %s20, 0
      %s23 = sadd.s32 %s22, 1
      %s24 = scalar_select %p21, %s22, %s23
      %p27 = pneg %p21
      %p28 = scmp.eq.s32.totalorder %s12, 7
      %p29 = por %p27, %p28
      %p30 = scmp.ne.s32.totalorder %s22, %s25
      %p31 = scmp.eq.s32.totalorder %s12, 0
      %p32 = por %p30, %p31
      %p33 = scmp.ne.s32.totalorder %s22, %s25
      %p34 = scmp.eq.s32.totalorder %s17, 7
      %p35 = por %p33, %p34
      %p36 = scmp.ne.s32.totalorder %s25, %s26
      %p37 = scmp.eq.s32.totalorder %s17, 0
      %p38 = por %p36, %p37
      %p39 = scmp.ne.s32.totalorder %s25, %s26
      %p40 = scmp.eq.s32.totalorder %s18, 7
      %p41 = por %p39, %p40
      %p43 = scmp.ne.s32.totalorder %s26, %s42
      %p44 = scmp.eq.s32.totalorder %s18, 0
      %p45 = por %p43, %p44
      %s46 = ssub.s32 %s12, %s19
      %p47 = scmp.eq.s32.totalorder %s46, 0
      %s49 = sadd.s32 %s48, 1
      %s50 = scalar_select %p47, %s48, %s49
      %p53 = pneg %p47
      %p54 = scmp.eq.s32.totalorder %s12, 7
      %p55 = por %p53, %p54
      %p56 = scmp.ne.s32.totalorder %s48, %s51
      %p57 = scmp.eq.s32.totalorder %s12, 0
      %p58 = por %p56, %p57
      %p59 = scmp.ne.s32.totalorder %s48, %s51
      %p60 = scmp.eq.s32.totalorder %s17, 7
      %p61 = por %p59, %p60
      %p62 = scmp.ne.s32.totalorder %s51, %s52
      %p63 = scmp.eq.s32.totalorder %s17, 0
      %p64 = por %p62, %p63
      %p65 = scmp.ne.s32.totalorder %s51, %s52
      %p66 = scmp.eq.s32.totalorder %s18, 7
      %p67 = por %p65, %p66
      %p69 = scmp.ne.s32.totalorder %s52, %s68
      %p70 = scmp.eq.s32.totalorder %s18, 0
      %p71 = por %p69, %p70
      %s73 = sadd.s32 %s72, 1
      %p76 = scmp.eq.s32.totalorder %s12, 7
      %p77 = scmp.ne.s32.totalorder %s72, %s74
      %p78 = scmp.eq.s32.totalorder %s12, 0
      %p79 = por %p77, %p78
      %p80 = scmp.ne.s32.totalorder %s72, %s74
      %p81 = scmp.eq.s32.totalorder %s17, 7
      %p82 = por %p80, %p81
      %p83 = scmp.ne.s32.totalorder %s74, %s75
      %p84 = scmp.eq.s32.totalorder %s17, 0
      %p85 = por %p83, %p84
      %p86 = scmp.ne.s32.totalorder %s74, %s75
      %p87 = scmp.eq.s32.totalorder %s18, 7
      %p88 = por %p86, %p87
      %p90 = scmp.ne.s32.totalorder %s75, %s89
      %p91 = scmp.eq.s32.totalorder %s18, 0
      %p92 = por %p90, %p91
      %s94 = sadd.s32 %s93, 1
      %p97 = scmp.eq.s32.totalorder %s12, 7
      %p98 = scmp.ne.s32.totalorder %s93, %s95
      %p99 = scmp.eq.s32.totalorder %s12, 0
      %p100 = por %p98, %p99
      %p101 = scmp.ne.s32.totalorder %s93, %s95
      %p102 = scmp.eq.s32.totalorder %s17, 7
      %p103 = por %p101, %p102
      %p104 = scmp.ne.s32.totalorder %s95, %s96
      %p105 = scmp.eq.s32.totalorder %s17, 0
      %p106 = por %p104, %p105
      %p107 = scmp.ne.s32.totalorder %s95, %s96
      %p108 = scmp.eq.s32.totalorder %s18, 7
      %p109 = por %p107, %p108
      %p111 = scmp.ne.s32.totalorder %s96, %s110
      %p112 = scmp.eq.s32.totalorder %s18, 0
      %p113 = por %p111, %p112
      %s115 = sadd.s32 %s114, 1
      %p118 = scmp.eq.s32.totalorder %s12, 7
      %p119 = scmp.ne.s32.totalorder %s114, %s116
      %p120 = scmp.eq.s32.totalorder %s12, 0
      %p121 = por %p119, %p120
      %p122 = scmp.ne.s32.totalorder %s114, %s116
      %p123 = scmp.eq.s32.totalorder %s17, 7
      %p124 = por %p122, %p123
      %p125 = scmp.ne.s32.totalorder %s116, %s117
      %p126 = scmp.eq.s32.totalorder %s17, 0
      %p127 = por %p125, %p126
      %p128 = scmp.ne.s32.totalorder %s116, %s117
      %p129 = scmp.eq.s32.totalorder %s18, 7
      %p130 = por %p128, %p129
      %p132 = scmp.ne.s32.totalorder %s117, %s131
      %p133 = scmp.eq.s32.totalorder %s18, 0
      %p134 = por %p132, %p133
      %s136 = sadd.s32 %s135, 1
      %p139 = scmp.eq.s32.totalorder %s12, 7
      %p140 = scmp.ne.s32.totalorder %s135, %s137
      %p141 = scmp.eq.s32.totalorder %s12, 0
      %p142 = por %p140, %p141
      %p143 = scmp.ne.s32.totalorder %s135, %s137
      %p144 = scmp.eq.s32.totalorder %s17, 7
      %p145 = por %p143, %p144
      %p146 = scmp.ne.s32.totalorder %s137, %s138
      %p147 = scmp.eq.s32.totalorder %s17, 0
      %p148 = por %p146, %p147
      %p149 = scmp.ne.s32.totalorder %s137, %s138
      %p150 = scmp.eq.s32.totalorder %s18, 7
      %p151 = por %p149, %p150
      %p153 = scmp.ne.s32.totalorder %s138, %s152
      %p154 = scmp.eq.s32.totalorder %s18, 0
      %p155 = por %p153, %p154
      %p156 = scmp.le.s32.totalorder 1, %s12
      %p157 = scmp.lt.s32.totalorder %s12, 9
      %p158 = pnand %p156, %p157
      %p159 = pneg %p158
      // Predicated region
      $region9: #{mnist_forward.3} parent=5 // pred_check
        _
      $region10: #{mnist_forward.3} parent=5 // pred_check_branch
        %161 = sbr.rel (%p158) target = $region12
      $region11: #{mnist_forward.3} parent=5 // pred_region
        %s162 = ssub.s32 %s12, 1
        // Predicated region
        $region13: #{mnist_forward.3} parent=11 // pred_check
          %p163 = pneg %p85
        $region14: #{mnist_forward.3} parent=11 // pred_check_branch
          %165 = sbr.rel (%p163) target = $region16
        $region15: #{mnist_forward.3} parent=11 // pred_region
          _
        $region16: #{mnist_forward.3} parent=11 // pred_fallthru
          _
        // Predicated region
        $region17: #{mnist_forward.3} parent=11 // pred_check
          %p166 = pneg %p106
        $region18: #{mnist_forward.3} parent=11 // pred_check_branch
          %168 = sbr.rel (%p166) target = $region20
        $region19: #{mnist_forward.3} parent=11 // pred_region
          _
        $region20: #{mnist_forward.3} parent=11 // pred_fallthru
          _
        // Predicated region
        $region21: #{mnist_forward.3} parent=11 // pred_check
          %p169 = pneg %p127
        $region22: #{mnist_forward.3} parent=11 // pred_check_branch
          %171 = sbr.rel (%p169) target = $region24
        $region23: #{mnist_forward.3} parent=11 // pred_region
          _
        $region24: #{mnist_forward.3} parent=11 // pred_fallthru
          _
      $region12: #{mnist_forward.3} parent=5 // pred_fallthru
        _
      %p172 = scmp.lt.s32.totalorder %s12, 8
      // Predicated region
      $region25: #{mnist_forward.3} parent=5 // pred_check
        %p173 = pneg %p172
      $region26: #{mnist_forward.3} parent=5 // pred_check_branch
        %175 = sbr.rel (%p173) target = $region28
      $region27: #{mnist_forward.3} parent=5 // pred_region
        // Predicated region
        $region29: #{mnist_forward.3} parent=27 // pred_check
          %p176 = pneg %p32
        $region30: #{mnist_forward.3} parent=27 // pred_check_branch
          %178 = sbr.rel (%p176) target = $region32
        $region31: #{mnist_forward.3} parent=27 // pred_region
          %s179 = smul.u32 9, %s12
          %p180 = scmp.lt.s32.totalorder %s179, 71
          %s181 = scalar_select %p180, %s179, 71
          %s182 = smul.addr %s181, 2
          %s183 = scalar_lea.vmem %s0, %s182
          %s184 = smul.u32 9, %s12
        $region32: #{mnist_forward.3} parent=27 // pred_fallthru
          _
        // Predicated region
        $region33: #{mnist_forward.3} parent=27 // pred_check
          %p185 = pneg %p58
        $region34: #{mnist_forward.3} parent=27 // pred_check_branch
          %187 = sbr.rel (%p185) target = $region36
        $region35: #{mnist_forward.3} parent=27 // pred_region
          %s188 = smul.u32 144, %s12
          %p189 = scmp.lt.s32.totalorder %s188, 1151
          %s190 = scalar_select %p189, %s188, 1151
          %s191 = smul.addr %s190, 4
          %s192 = scalar_lea.vmem %s1, %s191
          %s193 = smul.u32 144, %s12
        $region36: #{mnist_forward.3} parent=27 // pred_fallthru
          _
      $region28: #{mnist_forward.3} parent=5 // pred_fallthru
        _
      %p194 = scmp.le.s32.totalorder 1, %s12
      %p195 = scmp.lt.s32.totalorder %s12, 9
      %p196 = pnand %p194, %p195
      %p197 = pneg %p196
      // Predicated region
      $region37: #{mnist_forward.3} parent=5 // pred_check
        _
      $region38: #{mnist_forward.3} parent=5 // pred_check_branch
        %199 = sbr.rel (%p196) target = $region40
      $region39: #{mnist_forward.3} parent=5 // pred_region
        %s200 = ssub.s32 %s12, 1
        %s201 = smul.u32 9, %s17
        %p202 = scmp.lt.s32.totalorder %s201, 71
        %s203 = scalar_select %p202, %s201, 71
        %s204 = smul.addr %s203, 2
        %s205 = scalar_lea.vmem %s0, %s204
        %p206 = pneg %p38
        %p207 = pneg %p35
        %s208 = smul.u32 144, %s17
        %p209 = scmp.lt.s32.totalorder %s208, 1151
        %s210 = scalar_select %p209, %s208, 1151
        %s211 = smul.addr %s210, 4
        %s212 = scalar_lea.vmem %s1, %s211
        %p213 = pneg %p64
        %p214 = pneg %p61
        %p215 = pneg %p85
        %p216 = pneg %p82
        %p217 = pneg %p106
        %p218 = pneg %p103
        %p219 = pneg %p127
        %p220 = pneg %p124
        %p221 = pneg %p148
        %p222 = pneg %p145
        %s223 = smul.u32 9, %s17
        %p224 = scmp.lt.s32.totalorder %s223, 71
        %s225 = scalar_select %p224, %s223, 71
        %s226 = smul.addr %s225, 2
        %s227 = scalar_lea.vmem %s0, %s226
        %s228 = smul.u32 9, %s17
        %s229 = smul.u32 144, %s17
        %p230 = scmp.lt.s32.totalorder %s229, 1151
        %s231 = scalar_select %p230, %s229, 1151
        %s232 = smul.addr %s231, 4
        %s233 = scalar_lea.vmem %s1, %s232
        %s234 = smul.u32 144, %s17
        %p236 = scmp.eq.s32.totalorder %s17, 0
        // Predicated region
        $region41: #{mnist_forward.3} parent=39 // pred_check
          %p237 = pneg %p236
        $region42: #{mnist_forward.3} parent=39 // pred_check_branch
          %239 = sbr.rel (%p237) target = $region44
        $region43: #{mnist_forward.3} parent=39 // pred_region
          %240 = vst [vmem:[#allocation2] sm:$0x3] 0.0
        $region44: #{mnist_forward.3} parent=39 // pred_fallthru
          _
        %v241 = vld [vmem:[#allocation2] sm:$0x3]
        %v242 = vld [vmem:[%s227] sm:$0xff]
        %v243 = vld [vmem:[%s227 + $0x8] sm:$0xff]
        %v244 = vld [vmem:[%s227 + $0x10] sm:$0x3]
        %v248 = vcombine.high %v242, %v242
        %v250 = vunpack.c.l.s4 1983009808
        %v251 = vunpack.c.0.s8 %v250
        %v252 = vlaneseq
        %v253 = vshrl.u32 %v252, 7
        %v254 = vsub.s32 %v251, %v253
        %v255 = vrot.slane %v242, %v254
        %v257 = vunpack.c.l.s4 1983009808
        %v258 = vunpack.c.0.s8 %v257
        %v259 = vlaneseq
        %v260 = vshrl.u32 %v259, 7
        %v261 = vsub.s32 %v258, %v260
        %v262 = vrot.slane %v248, %v261
        %v263 = vcombine.high %v255, %v255
        %v264 = vcombine.high %v262, %v262
        %v265 = vcombine.high %v243, %v243
        %v267 = vunpack.c.l.s4 1983009808
        %v268 = vunpack.c.0.s8 %v267
        %v269 = vlaneseq
        %v270 = vshrl.u32 %v269, 7
        %v271 = vsub.s32 %v268, %v270
        %v272 = vrot.slane %v243, %v271
        %v274 = vunpack.c.l.s4 1983009808
        %v275 = vunpack.c.0.s8 %v274
        %v276 = vlaneseq
        %v277 = vshrl.u32 %v276, 7
        %v278 = vsub.s32 %v275, %v277
        %v279 = vrot.slane %v265, %v278
        %v280 = vcombine.high %v272, %v272
        %v281 = vcombine.high %v279, %v279
        %v283 = vunpack.c.l.s4 1983009808
        %v284 = vunpack.c.0.s8 %v283
        %v285 = vlaneseq
        %v286 = vshrl.u32 %v285, 7
        %v287 = vsub.s32 %v284, %v286
        %v288 = vrot.slane %v244, %v287
        %v298 = vpack.c.bf16 %v255, %v255
        %v299 = vpack.c.bf16 %v263, %v263
        %v300 = vpack.c.bf16 %v262, %v262
        %v301 = vpack.c.bf16 %v264, %v264
        %v302 = vpack.c.bf16 %v272, %v272
        %v303 = vpack.c.bf16 %v280, %v280
        %v304 = vpack.c.bf16 %v279, %v279
        %v305 = vpack.c.bf16 %v281, %v281
        %v306 = vpack.c.bf16 %v288, %v288
        %v307 = vld [vmem:[%s233] sm:$0xf]
        %v308 = vld [vmem:[%s233 + $0x4] sm:$0xf]
        %v309 = vld [vmem:[%s233 + $0x8] sm:$0xf]
        %v310 = vld [vmem:[%s233 + $0xc] sm:$0xf]
        %v311 = vld [vmem:[%s233 + $0x10] sm:$0xf]
        %v312 = vld [vmem:[%s233 + $0x14] sm:$0xf]
        %v313 = vld [vmem:[%s233 + $0x18] sm:$0xf]
        %v314 = vld [vmem:[%s233 + $0x1c] sm:$0xf]
        %v315 = vld [vmem:[%s233 + $0x20] sm:$0xf]
        %v316 = vld [vmem:[%s233 + $0x24] sm:$0xf]
        %v317 = vld [vmem:[%s233 + $0x28] sm:$0xf]
        %v318 = vld [vmem:[%s233 + $0x2c] sm:$0xf]
        %v319 = vld [vmem:[%s233 + $0x30] sm:$0xf]
        %v320 = vld [vmem:[%s233 + $0x34] sm:$0xf]
        %v321 = vld [vmem:[%s233 + $0x38] sm:$0xf]
        %v322 = vld [vmem:[%s233 + $0x3c] sm:$0xf]
        %v323 = vld [vmem:[%s233 + $0x40] sm:$0xf]
        %v324 = vld [vmem:[%s233 + $0x44] sm:$0xf]
        %v325 = vld [vmem:[%s233 + $0x48] sm:$0xf]
        %v326 = vld [vmem:[%s233 + $0x4c] sm:$0xf]
        %v327 = vld [vmem:[%s233 + $0x50] sm:$0xf]
        %v328 = vld [vmem:[%s233 + $0x54] sm:$0xf]
        %v329 = vld [vmem:[%s233 + $0x58] sm:$0xf]
        %v330 = vld [vmem:[%s233 + $0x5c] sm:$0xf]
        %v331 = vld [vmem:[%s233 + $0x60] sm:$0xf]
        %v332 = vld [vmem:[%s233 + $0x64] sm:$0xf]
        %v333 = vld [vmem:[%s233 + $0x68] sm:$0xf]
        %v334 = vld [vmem:[%s233 + $0x6c] sm:$0xf]
        %v335 = vld [vmem:[%s233 + $0x70] sm:$0xf]
        %v336 = vld [vmem:[%s233 + $0x74] sm:$0xf]
        %v337 = vld [vmem:[%s233 + $0x78] sm:$0xf]
        %v338 = vld [vmem:[%s233 + $0x7c] sm:$0xf]
        %v339 = vld [vmem:[%s233 + $0x80] sm:$0xf]
        %v340 = vld [vmem:[%s233 + $0x84] sm:$0xf]
        %v341 = vld [vmem:[%s233 + $0x88] sm:$0xf]
        %v342 = vld [vmem:[%s233 + $0x8c] sm:$0xf]
        %v343 = vld [vmem:[%s233 + $0x90] sm:$0xf]
        %v344 = vld [vmem:[%s233 + $0x94] sm:$0xf]
        %v345 = vld [vmem:[%s233 + $0x98] sm:$0xf]
        %v346 = vld [vmem:[%s233 + $0x9c] sm:$0xf]
        %v347 = vld [vmem:[%s233 + $0xa0] sm:$0xf]
        %v348 = vld [vmem:[%s233 + $0xa4] sm:$0xf]
        %v349 = vld [vmem:[%s233 + $0xa8] sm:$0xf]
        %v350 = vld [vmem:[%s233 + $0xac] sm:$0xf]
        %v351 = vld [vmem:[%s233 + $0xb0] sm:$0xf]
        %v352 = vld [vmem:[%s233 + $0xb4] sm:$0xf]
        %v353 = vld [vmem:[%s233 + $0xb8] sm:$0xf]
        %v354 = vld [vmem:[%s233 + $0xbc] sm:$0xf]
        %v355 = vld [vmem:[%s233 + $0xc0] sm:$0xf]
        %v356 = vld [vmem:[%s233 + $0xc4] sm:$0xf]
        %v357 = vld [vmem:[%s233 + $0xc8] sm:$0xf]
        %v358 = vld [vmem:[%s233 + $0xcc] sm:$0xf]
        %v359 = vld [vmem:[%s233 + $0xd0] sm:$0xf]
        %v360 = vld [vmem:[%s233 + $0xd4] sm:$0xf]
        %v361 = vld [vmem:[%s233 + $0xd8] sm:$0xf]
        %v362 = vld [vmem:[%s233 + $0xdc] sm:$0xf]
        %v363 = vld [vmem:[%s233 + $0xe0] sm:$0xf]
        %v364 = vld [vmem:[%s233 + $0xe4] sm:$0xf]
        %v365 = vld [vmem:[%s233 + $0xe8] sm:$0xf]
        %v366 = vld [vmem:[%s233 + $0xec] sm:$0xf]
        %v367 = vld [vmem:[%s233 + $0xf0] sm:$0xf]
        %v368 = vld [vmem:[%s233 + $0xf4] sm:$0xf]
        %v369 = vld [vmem:[%s233 + $0xf8] sm:$0xf]
        %v370 = vld [vmem:[%s233 + $0xfc] sm:$0xf]
        %v371 = vld [vmem:[%s233 + $0x100] sm:$0xf]
        %v372 = vld [vmem:[%s233 + $0x104] sm:$0xf]
        %v373 = vld [vmem:[%s233 + $0x108] sm:$0xf]
        %v374 = vld [vmem:[%s233 + $0x10c] sm:$0xf]
        %v375 = vld [vmem:[%s233 + $0x110] sm:$0xf]
        %v376 = vld [vmem:[%s233 + $0x114] sm:$0xf]
        %v377 = vld [vmem:[%s233 + $0x118] sm:$0xf]
        %v378 = vld [vmem:[%s233 + $0x11c] sm:$0xf]
        %v379 = vld [vmem:[%s233 + $0x120] sm:$0xf]
        %v380 = vld [vmem:[%s233 + $0x124] sm:$0xf]
        %v381 = vld [vmem:[%s233 + $0x128] sm:$0xf]
        %v382 = vld [vmem:[%s233 + $0x12c] sm:$0xf]
        %v383 = vld [vmem:[%s233 + $0x130] sm:$0xf]
        %v384 = vld [vmem:[%s233 + $0x134] sm:$0xf]
        %v385 = vld [vmem:[%s233 + $0x138] sm:$0xf]
        %v386 = vld [vmem:[%s233 + $0x13c] sm:$0xf]
        %v387 = vld [vmem:[%s233 + $0x140] sm:$0xf]
        %v388 = vld [vmem:[%s233 + $0x144] sm:$0xf]
        %v389 = vld [vmem:[%s233 + $0x148] sm:$0xf]
        %v390 = vld [vmem:[%s233 + $0x14c] sm:$0xf]
        %v391 = vld [vmem:[%s233 + $0x150] sm:$0xf]
        %v392 = vld [vmem:[%s233 + $0x154] sm:$0xf]
        %v393 = vld [vmem:[%s233 + $0x158] sm:$0xf]
        %v394 = vld [vmem:[%s233 + $0x15c] sm:$0xf]
        %v395 = vld [vmem:[%s233 + $0x160] sm:$0xf]
        %v396 = vld [vmem:[%s233 + $0x164] sm:$0xf]
        %v397 = vld [vmem:[%s233 + $0x168] sm:$0xf]
        %v398 = vld [vmem:[%s233 + $0x16c] sm:$0xf]
        %v399 = vld [vmem:[%s233 + $0x170] sm:$0xf]
        %v400 = vld [vmem:[%s233 + $0x174] sm:$0xf]
        %v401 = vld [vmem:[%s233 + $0x178] sm:$0xf]
        %v402 = vld [vmem:[%s233 + $0x17c] sm:$0xf]
        %v403 = vld [vmem:[%s233 + $0x180] sm:$0xf]
        %v404 = vld [vmem:[%s233 + $0x184] sm:$0xf]
        %v405 = vld [vmem:[%s233 + $0x188] sm:$0xf]
        %v406 = vld [vmem:[%s233 + $0x18c] sm:$0xf]
        %v407 = vld [vmem:[%s233 + $0x190] sm:$0xf]
        %v408 = vld [vmem:[%s233 + $0x194] sm:$0xf]
        %v409 = vld [vmem:[%s233 + $0x198] sm:$0xf]
        %v410 = vld [vmem:[%s233 + $0x19c] sm:$0xf]
        %v411 = vld [vmem:[%s233 + $0x1a0] sm:$0xf]
        %v412 = vld [vmem:[%s233 + $0x1a4] sm:$0xf]
        %v413 = vld [vmem:[%s233 + $0x1a8] sm:$0xf]
        %v414 = vld [vmem:[%s233 + $0x1ac] sm:$0xf]
        %v415 = vld [vmem:[%s233 + $0x1b0] sm:$0xf]
        %v416 = vld [vmem:[%s233 + $0x1b4] sm:$0xf]
        %v417 = vld [vmem:[%s233 + $0x1b8] sm:$0xf]
        %v418 = vld [vmem:[%s233 + $0x1bc] sm:$0xf]
        %v419 = vld [vmem:[%s233 + $0x1c0] sm:$0xf]
        %v420 = vld [vmem:[%s233 + $0x1c4] sm:$0xf]
        %v421 = vld [vmem:[%s233 + $0x1c8] sm:$0xf]
        %v422 = vld [vmem:[%s233 + $0x1cc] sm:$0xf]
        %v423 = vld [vmem:[%s233 + $0x1d0] sm:$0xf]
        %v424 = vld [vmem:[%s233 + $0x1d4] sm:$0xf]
        %v425 = vld [vmem:[%s233 + $0x1d8] sm:$0xf]
        %v426 = vld [vmem:[%s233 + $0x1dc] sm:$0xf]
        %v427 = vld [vmem:[%s233 + $0x1e0] sm:$0xf]
        %v428 = vld [vmem:[%s233 + $0x1e4] sm:$0xf]
        %v429 = vld [vmem:[%s233 + $0x1e8] sm:$0xf]
        %v430 = vld [vmem:[%s233 + $0x1ec] sm:$0xf]
        %v431 = vld [vmem:[%s233 + $0x1f0] sm:$0xf]
        %v432 = vld [vmem:[%s233 + $0x1f4] sm:$0xf]
        %v433 = vld [vmem:[%s233 + $0x1f8] sm:$0xf]
        %v434 = vld [vmem:[%s233 + $0x1fc] sm:$0xf]
        %v435 = vld [vmem:[%s233 + $0x200] sm:$0xf]
        %v436 = vld [vmem:[%s233 + $0x204] sm:$0xf]
        %v437 = vld [vmem:[%s233 + $0x208] sm:$0xf]
        %v438 = vld [vmem:[%s233 + $0x20c] sm:$0xf]
        %v439 = vld [vmem:[%s233 + $0x210] sm:$0xf]
        %v440 = vld [vmem:[%s233 + $0x214] sm:$0xf]
        %v441 = vld [vmem:[%s233 + $0x218] sm:$0xf]
        %v442 = vld [vmem:[%s233 + $0x21c] sm:$0xf]
        %v443 = vld [vmem:[%s233 + $0x220] sm:$0xf]
        %v444 = vld [vmem:[%s233 + $0x224] sm:$0xf]
        %v445 = vld [vmem:[%s233 + $0x228] sm:$0xf]
        %v446 = vld [vmem:[%s233 + $0x22c] sm:$0xf]
        %v447 = vld [vmem:[%s233 + $0x230] sm:$0xf]
        %v448 = vld [vmem:[%s233 + $0x234] sm:$0xf]
        %v449 = vld [vmem:[%s233 + $0x238] sm:$0xf]
        %v450 = vld [vmem:[%s233 + $0x23c] sm:$0xf]
        %v595 = vunpack.c.l.b16 %v307
        %v596 = vunpack.c.l.b16 %v308
        %v597 = vunpack.c.l.b16 %v309
        %v598 = vunpack.c.l.b16 %v310
        %v599 = vunpack.c.l.b16 %v311
        %v600 = vunpack.c.l.b16 %v312
        %v601 = vunpack.c.l.b16 %v313
        %v602 = vunpack.c.l.b16 %v314
        %v603 = vunpack.c.l.b16 %v315
        %v604 = vunpack.c.l.b16 %v316
        %v605 = vunpack.c.l.b16 %v317
        %v606 = vunpack.c.l.b16 %v318
        %v607 = vunpack.c.l.b16 %v319
        %v608 = vunpack.c.l.b16 %v320
        %v609 = vunpack.c.l.b16 %v321
        %v610 = vunpack.c.l.b16 %v322
        %v611 = vunpack.c.l.b16 %v323
        %v612 = vunpack.c.l.b16 %v324
        %v613 = vunpack.c.l.b16 %v325
        %v614 = vunpack.c.l.b16 %v326
        %v615 = vunpack.c.l.b16 %v327
        %v616 = vunpack.c.l.b16 %v328
        %v617 = vunpack.c.l.b16 %v329
        %v618 = vunpack.c.l.b16 %v330
        %v619 = vunpack.c.l.b16 %v331
        %v620 = vunpack.c.l.b16 %v332
        %v621 = vunpack.c.l.b16 %v333
        %v622 = vunpack.c.l.b16 %v334
        %v623 = vunpack.c.l.b16 %v335
        %v624 = vunpack.c.l.b16 %v336
        %v625 = vunpack.c.l.b16 %v337
        %v626 = vunpack.c.l.b16 %v338
        %v627 = vunpack.c.l.b16 %v339
        %v628 = vunpack.c.l.b16 %v340
        %v629 = vunpack.c.l.b16 %v341
        %v630 = vunpack.c.l.b16 %v342
        %v631 = vunpack.c.l.b16 %v343
        %v632 = vunpack.c.l.b16 %v344
        %v633 = vunpack.c.l.b16 %v345
        %v634 = vunpack.c.l.b16 %v346
        %v635 = vunpack.c.l.b16 %v347
        %v636 = vunpack.c.l.b16 %v348
        %v637 = vunpack.c.l.b16 %v349
        %v638 = vunpack.c.l.b16 %v350
        %v639 = vunpack.c.l.b16 %v351
        %v640 = vunpack.c.l.b16 %v352
        %v641 = vunpack.c.l.b16 %v353
        %v642 = vunpack.c.l.b16 %v354
        %v643 = vunpack.c.l.b16 %v355
        %v644 = vunpack.c.l.b16 %v356
        %v645 = vunpack.c.l.b16 %v357
        %v646 = vunpack.c.l.b16 %v358
        %v647 = vunpack.c.l.b16 %v359
        %v648 = vunpack.c.l.b16 %v360
        %v649 = vunpack.c.l.b16 %v361
        %v650 = vunpack.c.l.b16 %v362
        %v651 = vunpack.c.l.b16 %v363
        %v652 = vunpack.c.l.b16 %v364
        %v653 = vunpack.c.l.b16 %v365
        %v654 = vunpack.c.l.b16 %v366
        %v655 = vunpack.c.l.b16 %v367
        %v656 = vunpack.c.l.b16 %v368
        %v657 = vunpack.c.l.b16 %v369
        %v658 = vunpack.c.l.b16 %v370
        %v659 = vunpack.c.l.b16 %v371
        %v660 = vunpack.c.l.b16 %v372
        %v661 = vunpack.c.l.b16 %v373
        %v662 = vunpack.c.l.b16 %v374
        %v663 = vunpack.c.l.b16 %v375
        %v664 = vunpack.c.l.b16 %v376
        %v665 = vunpack.c.l.b16 %v377
        %v666 = vunpack.c.l.b16 %v378
        %v667 = vunpack.c.l.b16 %v379
        %v668 = vunpack.c.l.b16 %v380
        %v669 = vunpack.c.l.b16 %v381
        %v670 = vunpack.c.l.b16 %v382
        %v671 = vunpack.c.l.b16 %v383
        %v672 = vunpack.c.l.b16 %v384
        %v673 = vunpack.c.l.b16 %v385
        %v674 = vunpack.c.l.b16 %v386
        %v675 = vunpack.c.l.b16 %v387
        %v676 = vunpack.c.l.b16 %v388
        %v677 = vunpack.c.l.b16 %v389
        %v678 = vunpack.c.l.b16 %v390
        %v679 = vunpack.c.l.b16 %v391
        %v680 = vunpack.c.l.b16 %v392
        %v681 = vunpack.c.l.b16 %v393
        %v682 = vunpack.c.l.b16 %v394
        %v683 = vunpack.c.l.b16 %v395
        %v684 = vunpack.c.l.b16 %v396
        %v685 = vunpack.c.l.b16 %v397
        %v686 = vunpack.c.l.b16 %v398
        %v687 = vunpack.c.l.b16 %v399
        %v688 = vunpack.c.l.b16 %v400
        %v689 = vunpack.c.l.b16 %v401
        %v690 = vunpack.c.l.b16 %v402
        %v691 = vunpack.c.l.b16 %v403
        %v692 = vunpack.c.l.b16 %v404
        %v693 = vunpack.c.l.b16 %v405
        %v694 = vunpack.c.l.b16 %v406
        %v695 = vunpack.c.l.b16 %v407
        %v696 = vunpack.c.l.b16 %v408
        %v697 = vunpack.c.l.b16 %v409
        %v698 = vunpack.c.l.b16 %v410
        %v699 = vunpack.c.l.b16 %v411
        %v700 = vunpack.c.l.b16 %v412
        %v701 = vunpack.c.l.b16 %v413
        %v702 = vunpack.c.l.b16 %v414
        %v703 = vunpack.c.l.b16 %v415
        %v704 = vunpack.c.l.b16 %v416
        %v705 = vunpack.c.l.b16 %v417
        %v706 = vunpack.c.l.b16 %v418
        %v707 = vunpack.c.l.b16 %v419
        %v708 = vunpack.c.l.b16 %v420
        %v709 = vunpack.c.l.b16 %v421
        %v710 = vunpack.c.l.b16 %v422
        %v711 = vunpack.c.l.b16 %v423
        %v712 = vunpack.c.l.b16 %v424
        %v713 = vunpack.c.l.b16 %v425
        %v714 = vunpack.c.l.b16 %v426
        %v715 = vunpack.c.l.b16 %v427
        %v716 = vunpack.c.l.b16 %v428
        %v717 = vunpack.c.l.b16 %v429
        %v718 = vunpack.c.l.b16 %v430
        %v719 = vunpack.c.l.b16 %v431
        %v720 = vunpack.c.l.b16 %v432
        %v721 = vunpack.c.l.b16 %v433
        %v722 = vunpack.c.l.b16 %v434
        %v723 = vunpack.c.l.b16 %v435
        %v724 = vunpack.c.l.b16 %v436
        %v725 = vunpack.c.l.b16 %v437
        %v726 = vunpack.c.l.b16 %v438
        %v727 = vunpack.c.l.b16 %v439
        %v728 = vunpack.c.l.b16 %v440
        %v729 = vunpack.c.l.b16 %v441
        %v730 = vunpack.c.l.b16 %v442
        %v731 = vunpack.c.l.b16 %v443
        %v732 = vunpack.c.l.b16 %v444
        %v733 = vunpack.c.l.b16 %v445
        %v734 = vunpack.c.l.b16 %v446
        %v735 = vunpack.c.l.b16 %v447
        %v736 = vunpack.c.l.b16 %v448
        %v737 = vunpack.c.l.b16 %v449
        %v738 = vunpack.c.l.b16 %v450
        %v739 = vpack.c.b16 %v596, %v595
        %v740 = vpack.c.b16 %v598, %v597
        %v741 = vpack.c.b16 %v600, %v599
        %v742 = vpack.c.b16 %v602, %v601
        %v743 = vpack.c.b16 %v604, %v603
        %v744 = vpack.c.b16 %v606, %v605
        %v745 = vpack.c.b16 %v608, %v607
        %v746 = vpack.c.b16 %v610, %v609
        %v747 = vpack.c.b16 %v612, %v611
        %v748 = vpack.c.b16 %v614, %v613
        %v749 = vpack.c.b16 %v616, %v615
        %v750 = vpack.c.b16 %v618, %v617
        %v751 = vpack.c.b16 %v620, %v619
        %v752 = vpack.c.b16 %v622, %v621
        %v753 = vpack.c.b16 %v624, %v623
        %v754 = vpack.c.b16 %v626, %v625
        %v755 = vpack.c.b16 %v628, %v627
        %v756 = vpack.c.b16 %v630, %v629
        %v757 = vpack.c.b16 %v632, %v631
        %v758 = vpack.c.b16 %v634, %v633
        %v759 = vpack.c.b16 %v636, %v635
        %v760 = vpack.c.b16 %v638, %v637
        %v761 = vpack.c.b16 %v640, %v639
        %v762 = vpack.c.b16 %v642, %v641
        %v763 = vpack.c.b16 %v644, %v643
        %v764 = vpack.c.b16 %v646, %v645
        %v765 = vpack.c.b16 %v648, %v647
        %v766 = vpack.c.b16 %v650, %v649
        %v767 = vpack.c.b16 %v652, %v651
        %v768 = vpack.c.b16 %v654, %v653
        %v769 = vpack.c.b16 %v656, %v655
        %v770 = vpack.c.b16 %v658, %v657
        %v771 = vpack.c.b16 %v660, %v659
        %v772 = vpack.c.b16 %v662, %v661
        %v773 = vpack.c.b16 %v664, %v663
        %v774 = vpack.c.b16 %v666, %v665
        %v775 = vpack.c.b16 %v668, %v667
        %v776 = vpack.c.b16 %v670, %v669
        %v777 = vpack.c.b16 %v672, %v671
        %v778 = vpack.c.b16 %v674, %v673
        %v779 = vpack.c.b16 %v676, %v675
        %v780 = vpack.c.b16 %v678, %v677
        %v781 = vpack.c.b16 %v680, %v679
        %v782 = vpack.c.b16 %v682, %v681
        %v783 = vpack.c.b16 %v684, %v683
        %v784 = vpack.c.b16 %v686, %v685
        %v785 = vpack.c.b16 %v688, %v687
        %v786 = vpack.c.b16 %v690, %v689
        %v787 = vpack.c.b16 %v692, %v691
        %v788 = vpack.c.b16 %v694, %v693
        %v789 = vpack.c.b16 %v696, %v695
        %v790 = vpack.c.b16 %v698, %v697
        %v791 = vpack.c.b16 %v700, %v699
        %v792 = vpack.c.b16 %v702, %v701
        %v793 = vpack.c.b16 %v704, %v703
        %v794 = vpack.c.b16 %v706, %v705
        %v795 = vpack.c.b16 %v708, %v707
        %v796 = vpack.c.b16 %v710, %v709
        %v797 = vpack.c.b16 %v712, %v711
        %v798 = vpack.c.b16 %v714, %v713
        %v799 = vpack.c.b16 %v716, %v715
        %v800 = vpack.c.b16 %v718, %v717
        %v801 = vpack.c.b16 %v720, %v719
        %v802 = vpack.c.b16 %v722, %v721
        %v803 = vpack.c.b16 %v724, %v723
        %v804 = vpack.c.b16 %v726, %v725
        %v805 = vpack.c.b16 %v728, %v727
        %v806 = vpack.c.b16 %v730, %v729
        %v807 = vpack.c.b16 %v732, %v731
        %v808 = vpack.c.b16 %v734, %v733
        %v809 = vpack.c.b16 %v736, %v735
        %v810 = vpack.c.b16 %v738, %v737
        %883 = vmatprep.subr.bf16.mxu0 0
        %884 = vmatpush1.bf16.msra.mxu0 %v746
        %885 = vmatprep.subr.bf16.mxu0 0
        %886 = vmatpush1.bf16.msra.mxu0 %v745
        %887 = vmatprep.subr.bf16.mxu0 0
        %888 = vmatpush1.bf16.msra.mxu0 %v744
        %889 = vmatprep.subr.bf16.mxu0 0
        %890 = vmatpush1.bf16.msra.mxu0 %v743
        %891 = vmatprep.subr.bf16.mxu0 0
        %892 = vmatpush1.bf16.msra.mxu0 %v742
        %893 = vmatprep.subr.bf16.mxu0 0
        %894 = vmatpush1.bf16.msra.mxu0 %v741
        %895 = vmatprep.subr.bf16.mxu0 0
        %896 = vmatpush1.bf16.msra.mxu0 %v740
        %897 = vmatprep.subr.bf16.mxu0 0
        %898 = vmatpush1.bf16.msra.mxu0 %v739
        %899 = vmatprep.subr.bf16.mxu0 0
        %900 = vmatpush2.bf16.msra.mxu0 %v754
        %901 = vmatprep.subr.bf16.mxu0 0
        %902 = vmatpush2.bf16.msra.mxu0 %v753
        %903 = vmatprep.subr.bf16.mxu0 0
        %904 = vmatpush2.bf16.msra.mxu0 %v752
        %905 = vmatprep.subr.bf16.mxu0 0
        %906 = vmatpush2.bf16.msra.mxu0 %v751
        %907 = vmatprep.subr.bf16.mxu0 0
        %908 = vmatpush2.bf16.msra.mxu0 %v750
        %909 = vmatprep.subr.bf16.mxu0 0
        %910 = vmatpush2.bf16.msra.mxu0 %v749
        %911 = vmatprep.subr.bf16.mxu0 0
        %912 = vmatpush2.bf16.msra.mxu0 %v748
        %913 = vmatprep.subr.bf16.mxu0 0
        %914 = vmatpush2.bf16.msra.mxu0 %v747
        %915 = vmatprep.mubr.bf16.mxu0 %v299
        %916 = vmatmul.mubr.bf16.gmra.mxu0 %v298
        %v917 = vpop.f32.mrf.mxu0
        %v918 = vadd.f32 0.0, %v917
        %v919 = vpop.f32.mrf.mxu0
        %v920 = vpop.f32.mrf.mxu0
        %v921 = vpop.f32.mrf.mxu0
        %922 = vdwg.mxu0
        %923 = vmatprep.subr.bf16.mxu0 0
        %924 = vmatpush1.bf16.msra.mxu0 %v762
        %925 = vmatprep.subr.bf16.mxu0 0
        %926 = vmatpush1.bf16.msra.mxu0 %v761
        %927 = vmatprep.subr.bf16.mxu0 0
        %928 = vmatpush1.bf16.msra.mxu0 %v760
        %929 = vmatprep.subr.bf16.mxu0 0
        %930 = vmatpush1.bf16.msra.mxu0 %v759
        %931 = vmatprep.subr.bf16.mxu0 0
        %932 = vmatpush1.bf16.msra.mxu0 %v758
        %933 = vmatprep.subr.bf16.mxu0 0
        %934 = vmatpush1.bf16.msra.mxu0 %v757
        %935 = vmatprep.subr.bf16.mxu0 0
        %936 = vmatpush1.bf16.msra.mxu0 %v756
        %937 = vmatprep.subr.bf16.mxu0 0
        %938 = vmatpush1.bf16.msra.mxu0 %v755
        %939 = vmatprep.subr.bf16.mxu0 0
        %940 = vmatpush2.bf16.msra.mxu0 %v770
        %941 = vmatprep.subr.bf16.mxu0 0
        %942 = vmatpush2.bf16.msra.mxu0 %v769
        %943 = vmatprep.subr.bf16.mxu0 0
        %944 = vmatpush2.bf16.msra.mxu0 %v768
        %945 = vmatprep.subr.bf16.mxu0 0
        %946 = vmatpush2.bf16.msra.mxu0 %v767
        %947 = vmatprep.subr.bf16.mxu0 0
        %948 = vmatpush2.bf16.msra.mxu0 %v766
        %949 = vmatprep.subr.bf16.mxu0 0
        %950 = vmatpush2.bf16.msra.mxu0 %v765
        %951 = vmatprep.subr.bf16.mxu0 0
        %952 = vmatpush2.bf16.msra.mxu0 %v764
        %953 = vmatprep.subr.bf16.mxu0 0
        %954 = vmatpush2.bf16.msra.mxu0 %v763
        %955 = vmatprep.mubr.bf16.mxu0 %v301
        %956 = vmatmul.mubr.bf16.gmra.mxu0 %v300
        %v957 = vpop.f32.mrf.mxu0
        %v958 = vadd.f32 %v918, %v957
        %v959 = vpop.f32.mrf.mxu0
        %v960 = vpop.f32.mrf.mxu0
        %v961 = vpop.f32.mrf.mxu0
        %962 = vdwg.mxu0
        %963 = vmatprep.subr.bf16.mxu0 0
        %964 = vmatpush1.bf16.msra.mxu0 %v778
        %965 = vmatprep.subr.bf16.mxu0 0
        %966 = vmatpush1.bf16.msra.mxu0 %v777
        %967 = vmatprep.subr.bf16.mxu0 0
        %968 = vmatpush1.bf16.msra.mxu0 %v776
        %969 = vmatprep.subr.bf16.mxu0 0
        %970 = vmatpush1.bf16.msra.mxu0 %v775
        %971 = vmatprep.subr.bf16.mxu0 0
        %972 = vmatpush1.bf16.msra.mxu0 %v774
        %973 = vmatprep.subr.bf16.mxu0 0
        %974 = vmatpush1.bf16.msra.mxu0 %v773
        %975 = vmatprep.subr.bf16.mxu0 0
        %976 = vmatpush1.bf16.msra.mxu0 %v772
        %977 = vmatprep.subr.bf16.mxu0 0
        %978 = vmatpush1.bf16.msra.mxu0 %v771
        %979 = vmatprep.subr.bf16.mxu0 0
        %980 = vmatpush2.bf16.msra.mxu0 %v786
        %981 = vmatprep.subr.bf16.mxu0 0
        %982 = vmatpush2.bf16.msra.mxu0 %v785
        %983 = vmatprep.subr.bf16.mxu0 0
        %984 = vmatpush2.bf16.msra.mxu0 %v784
        %985 = vmatprep.subr.bf16.mxu0 0
        %986 = vmatpush2.bf16.msra.mxu0 %v783
        %987 = vmatprep.subr.bf16.mxu0 0
        %988 = vmatpush2.bf16.msra.mxu0 %v782
        %989 = vmatprep.subr.bf16.mxu0 0
        %990 = vmatpush2.bf16.msra.mxu0 %v781
        %991 = vmatprep.subr.bf16.mxu0 0
        %992 = vmatpush2.bf16.msra.mxu0 %v780
        %993 = vmatprep.subr.bf16.mxu0 0
        %994 = vmatpush2.bf16.msra.mxu0 %v779
        %995 = vmatprep.mubr.bf16.mxu0 %v303
        %996 = vmatmul.mubr.bf16.gmra.mxu0 %v302
        %v997 = vpop.f32.mrf.mxu0
        %v998 = vadd.f32 %v958, %v997
        %v999 = vpop.f32.mrf.mxu0
        %v1000 = vpop.f32.mrf.mxu0
        %v1001 = vpop.f32.mrf.mxu0
        %1002 = vdwg.mxu0
        %1003 = vmatprep.subr.bf16.mxu0 0
        %1004 = vmatpush1.bf16.msra.mxu0 %v794
        %1005 = vmatprep.subr.bf16.mxu0 0
        %1006 = vmatpush1.bf16.msra.mxu0 %v793
        %1007 = vmatprep.subr.bf16.mxu0 0
        %1008 = vmatpush1.bf16.msra.mxu0 %v792
        %1009 = vmatprep.subr.bf16.mxu0 0
        %1010 = vmatpush1.bf16.msra.mxu0 %v791
        %1011 = vmatprep.subr.bf16.mxu0 0
        %1012 = vmatpush1.bf16.msra.mxu0 %v790
        %1013 = vmatprep.subr.bf16.mxu0 0
        %1014 = vmatpush1.bf16.msra.mxu0 %v789
        %1015 = vmatprep.subr.bf16.mxu0 0
        %1016 = vmatpush1.bf16.msra.mxu0 %v788
        %1017 = vmatprep.subr.bf16.mxu0 0
        %1018 = vmatpush1.bf16.msra.mxu0 %v787
        %1019 = vmatprep.subr.bf16.mxu0 0
        %1020 = vmatpush2.bf16.msra.mxu0 %v802
        %1021 = vmatprep.subr.bf16.mxu0 0
        %1022 = vmatpush2.bf16.msra.mxu0 %v801
        %1023 = vmatprep.subr.bf16.mxu0 0
        %1024 = vmatpush2.bf16.msra.mxu0 %v800
        %1025 = vmatprep.subr.bf16.mxu0 0
        %1026 = vmatpush2.bf16.msra.mxu0 %v799
        %1027 = vmatprep.subr.bf16.mxu0 0
        %1028 = vmatpush2.bf16.msra.mxu0 %v798
        %1029 = vmatprep.subr.bf16.mxu0 0
        %1030 = vmatpush2.bf16.msra.mxu0 %v797
        %1031 = vmatprep.subr.bf16.mxu0 0
        %1032 = vmatpush2.bf16.msra.mxu0 %v796
        %1033 = vmatprep.subr.bf16.mxu0 0
        %1034 = vmatpush2.bf16.msra.mxu0 %v795
        %1035 = vmatprep.mubr.bf16.mxu0 %v305
        %1036 = vmatmul.mubr.bf16.gmra.mxu0 %v304
        %v1037 = vpop.f32.mrf.mxu0
        %v1038 = vadd.f32 %v998, %v1037
        %v1039 = vpop.f32.mrf.mxu0
        %v1040 = vpop.f32.mrf.mxu0
        %v1041 = vpop.f32.mrf.mxu0
        %1042 = vdwg.mxu0
        %1043 = vmatprep.subr.bf16.mxu0 0
        %1044 = vmatpush1.bf16.msra.mxu0 %v810
        %1045 = vmatprep.subr.bf16.mxu0 0
        %1046 = vmatpush1.bf16.msra.mxu0 %v809
        %1047 = vmatprep.subr.bf16.mxu0 0
        %1048 = vmatpush1.bf16.msra.mxu0 %v808
        %1049 = vmatprep.subr.bf16.mxu0 0
        %1050 = vmatpush1.bf16.msra.mxu0 %v807
        %1051 = vmatprep.subr.bf16.mxu0 0
        %1052 = vmatpush1.bf16.msra.mxu0 %v806
        %1053 = vmatprep.subr.bf16.mxu0 0
        %1054 = vmatpush1.bf16.msra.mxu0 %v805
        %1055 = vmatprep.subr.bf16.mxu0 0
        %1056 = vmatpush1.bf16.msra.mxu0 %v804
        %1057 = vmatprep.subr.bf16.mxu0 0
        %1058 = vmatpush1.bf16.msra.mxu0 %v803
        %1059 = vmatprep.subr.bf16.mxu0 0
        %1060 = vmatpush2.bf16.msra.mxu0 0
        %1061 = vmatprep.subr.bf16.mxu0 0
        %1062 = vmatpush2.bf16.msra.mxu0 0
        %1063 = vmatprep.subr.bf16.mxu0 0
        %1064 = vmatpush2.bf16.msra.mxu0 0
        %1065 = vmatprep.subr.bf16.mxu0 0
        %1066 = vmatpush2.bf16.msra.mxu0 0
        %1067 = vmatprep.subr.bf16.mxu0 0
        %1068 = vmatpush2.bf16.msra.mxu0 0
        %1069 = vmatprep.subr.bf16.mxu0 0
        %1070 = vmatpush2.bf16.msra.mxu0 0
        %1071 = vmatprep.subr.bf16.mxu0 0
        %1072 = vmatpush2.bf16.msra.mxu0 0
        %1073 = vmatprep.subr.bf16.mxu0 0
        %1074 = vmatpush2.bf16.msra.mxu0 0
        %1075 = vmatprep.mubr.bf16.mxu0 0
        %1076 = vmatmul.mubr.bf16.gmra.mxu0 %v306
        %v1077 = vpop.f32.mrf.mxu0
        %v1078 = vadd.f32 %v1038, %v1077
        %v1079 = vpop.f32.mrf.mxu0
        %v1080 = vpop.f32.mrf.mxu0
        %v1081 = vpop.f32.mrf.mxu0
        %1082 = vdwg.mxu0
        %v1083 = vadd.f32 %v241, %v1078
        %1084 = vst [vmem:[#allocation2] sm:$0x3] %v1083
        %p1085 = scmp.eq.s32.totalorder %s17, 7
        // Predicated region
        $region45: #{mnist_forward.3} parent=39 // pred_check
          %p1086 = pneg %p1085
        $region46: #{mnist_forward.3} parent=39 // pred_check_branch
          %1088 = sbr.rel (%p1086) target = $region48
        $region47: #{mnist_forward.3} parent=39 // pred_region
          %v1089 = vld [vmem:[#allocation2] sm:$0x3]
          %v1090 = vld [vmem:[%s2] sm:$0x1]
          %v1092 = vlaneseq
          %v1093 = vshrl.u32 %v1092, 7
          %v1094 = vsub.s32 0, %v1093
          %v1095 = vrot.slane %v1090, %v1094
          %v1097 = vadd.f32 %v1089, %v1095
          %v1098 = vmax.f32 %v1097, 0.0
          %v1099 = vpack.c.bf16 %v1098, %v1098
          %v1100 = vld [vmem:[%s3] sm:$0xf]
          %v1101 = vld [vmem:[%s3 + $0x4] sm:$0xf]
          %v1102 = vld [vmem:[%s3 + $0x8] sm:$0xf]
          %v1103 = vld [vmem:[%s3 + $0xc] sm:$0xf]
          %v1104 = vld [vmem:[%s3 + $0x10] sm:$0xf]
          %v1105 = vld [vmem:[%s3 + $0x14] sm:$0xf]
          %v1106 = vld [vmem:[%s3 + $0x18] sm:$0xf]
          %v1107 = vld [vmem:[%s3 + $0x1c] sm:$0xf]
          %v1108 = vld [vmem:[%s3 + $0x20] sm:$0xf]
          %v1109 = vld [vmem:[%s3 + $0x24] sm:$0xf]
          %v1110 = vld [vmem:[%s3 + $0x28] sm:$0xf]
          %v1111 = vld [vmem:[%s3 + $0x2c] sm:$0xf]
          %v1112 = vld [vmem:[%s3 + $0x30] sm:$0xf]
          %v1113 = vld [vmem:[%s3 + $0x34] sm:$0xf]
          %v1114 = vld [vmem:[%s3 + $0x38] sm:$0xf]
          %v1115 = vld [vmem:[%s3 + $0x3c] sm:$0xf]
          %v1116 = vld [vmem:[%s4] sm:$0x1]
          %v1118 = vlaneseq
          %v1119 = vshrl.u32 %v1118, 7
          %v1120 = vsub.s32 0, %v1119
          %v1121 = vrot.slane %v1116, %v1120
          %v1139 = vunpack.c.l.b16 %v1100
          %v1140 = vunpack.c.l.b16 %v1101
          %v1141 = vunpack.c.l.b16 %v1102
          %v1142 = vunpack.c.l.b16 %v1103
          %v1143 = vunpack.c.l.b16 %v1104
          %v1144 = vunpack.c.l.b16 %v1105
          %v1145 = vunpack.c.l.b16 %v1106
          %v1146 = vunpack.c.l.b16 %v1107
          %v1147 = vunpack.c.l.b16 %v1108
          %v1148 = vunpack.c.l.b16 %v1109
          %v1149 = vunpack.c.l.b16 %v1110
          %v1150 = vunpack.c.l.b16 %v1111
          %v1151 = vunpack.c.l.b16 %v1112
          %v1152 = vunpack.c.l.b16 %v1113
          %v1153 = vunpack.c.l.b16 %v1114
          %v1154 = vunpack.c.l.b16 %v1115
          %v1155 = vpack.c.b16 %v1140, %v1139
          %v1156 = vpack.c.b16 %v1142, %v1141
          %v1157 = vpack.c.b16 %v1144, %v1143
          %v1158 = vpack.c.b16 %v1146, %v1145
          %v1159 = vpack.c.b16 %v1148, %v1147
          %v1160 = vpack.c.b16 %v1150, %v1149
          %v1161 = vpack.c.b16 %v1152, %v1151
          %v1162 = vpack.c.b16 %v1154, %v1153
          %1171 = vmatprep.subr.bf16.mxu0 0
          %1172 = vmatpush1.bf16.msra.mxu0 %v1162
          %1173 = vmatprep.subr.bf16.mxu0 0
          %1174 = vmatpush1.bf16.msra.mxu0 %v1161
          %1175 = vmatprep.subr.bf16.mxu0 0
          %1176 = vmatpush1.bf16.msra.mxu0 %v1160
          %1177 = vmatprep.subr.bf16.mxu0 0
          %1178 = vmatpush1.bf16.msra.mxu0 %v1159
          %1179 = vmatprep.subr.bf16.mxu0 0
          %1180 = vmatpush1.bf16.msra.mxu0 %v1158
          %1181 = vmatprep.subr.bf16.mxu0 0
          %1182 = vmatpush1.bf16.msra.mxu0 %v1157
          %1183 = vmatprep.subr.bf16.mxu0 0
          %1184 = vmatpush1.bf16.msra.mxu0 %v1156
          %1185 = vmatprep.subr.bf16.mxu0 0
          %1186 = vmatpush1.bf16.msra.mxu0 %v1155
          %1187 = vmatprep.subr.bf16.mxu0 0
          %1188 = vmatpush2.bf16.msra.mxu0 0
          %1189 = vmatprep.subr.bf16.mxu0 0
          %1190 = vmatpush2.bf16.msra.mxu0 0
          %1191 = vmatprep.subr.bf16.mxu0 0
          %1192 = vmatpush2.bf16.msra.mxu0 0
          %1193 = vmatprep.subr.bf16.mxu0 0
          %1194 = vmatpush2.bf16.msra.mxu0 0
          %1195 = vmatprep.subr.bf16.mxu0 0
          %1196 = vmatpush2.bf16.msra.mxu0 0
          %1197 = vmatprep.subr.bf16.mxu0 0
          %1198 = vmatpush2.bf16.msra.mxu0 0
          %1199 = vmatprep.subr.bf16.mxu0 0
          %1200 = vmatpush2.bf16.msra.mxu0 0
          %1201 = vmatprep.subr.bf16.mxu0 0
          %1202 = vmatpush2.bf16.msra.mxu0 0
          %1203 = vmatprep.mubr.bf16.mxu0 0
          %1204 = vmatmul.mubr.bf16.gmra.mxu0 %v1099
          %v1205 = vpop.f32.mrf.mxu0
          %v1206 = vadd.f32 %v1121, %v1205
          %v1207 = vpop.f32.mrf.mxu0
          %v1208 = vpop.f32.mrf.mxu0
          %v1209 = vpop.f32.mrf.mxu0
          %1210 = vdwg.mxu0
          %vm1211 = vcmask 1041408
          %v1212 = vsel %vm1211, %v1206, -inf
          %1213 = vmax.xlane.f32.xlu0 %v1212
          %v1214 = vpop.xlane.xlu0 %1213
          %v1215 = vsub.f32 %v1206, %v1214
          %v1216 = vmul.f32 %v1215, 1.442695
          %v1217 = vpow.pop %v1216
          %v1218 = vsel %vm1211, %v1217, 0.0
          %1219 = vadd.xlane.f32.xlu0 %v1218
          %v1220 = vpop.xlane.xlu0 %1219
          %v1221 = vlog2.pop %v1220
          %v1222 = vmul.f32 %v1221, 0.6931472
          %v1223 = vsub.f32 %v1215, %v1222
          %1224 = vst [vmem:[#allocation3] sm:$0x3] %v1223
        $region48: #{mnist_forward.3} parent=39 // pred_fallthru
          _
        // Predicated region
        $region49: #{mnist_forward.3} parent=39 // pred_check
          %p1225 = pneg %p145
        $region50: #{mnist_forward.3} parent=39 // pred_check_branch
          %1227 = sbr.rel (%p1225) target = $region52
        $region51: #{mnist_forward.3} parent=39 // pred_region
          %s1229 = ssub.s32 32, 32
          %1230 = vsyncadd [#allocation4], %s1229
          %s1232 = sshll.u32 [#allocation3], 4
          %s1233 = int_to_ptr.vmem [resolvable:$true] %s1232
          %1235 = dma.vmem_to_hbm [thread:$0]  %s1233, 32, %s5, [#allocation4]
        $region52: #{mnist_forward.3} parent=39 // pred_fallthru
          _
        // Predicated region
        $region53: #{mnist_forward.3} parent=39 // pred_check
          %p1236 = pneg %p145
        $region54: #{mnist_forward.3} parent=39 // pred_check_branch
          %1238 = sbr.rel (%p1236) target = $region56
        $region55: #{mnist_forward.3} parent=39 // pred_region
          %1239 = dma.done [#allocation4], 32
        $region56: #{mnist_forward.3} parent=39 // pred_fallthru
          _
      $region40: #{mnist_forward.3} parent=5 // pred_fallthru
        _
      %p1240 = scmp.le.s32.totalorder 2, %s12
      // Predicated region
      $region57: #{mnist_forward.3} parent=5 // pred_check
        %p1241 = pneg %p1240
      $region58: #{mnist_forward.3} parent=5 // pred_check_branch
        %1243 = sbr.rel (%p1241) target = $region60
      $region59: #{mnist_forward.3} parent=5 // pred_region
        %s1244 = ssub.s32 %s12, 2
      $region60: #{mnist_forward.3} parent=5 // pred_fallthru
        _
    $region6: #{mnist_forward.3} parent=1 // loop_footer
      %s16 = sadd.s32 1, %s12
    $region7: #{mnist_forward.3} parent=1 // loop_footer_branch
      %11 = sbr.rel target = $region3
    $region8: #{mnist_forward.3} parent=1 // loop_exit
      _
    %1245 = vsyncpa [#allocation4], 1
    %s1246 = scalar_lea.sflag [#allocation4], 1
    %1247 = vsyncpa %s1246, 1

// kernel: mnist_forward.2
$region0: #{mnist_forward.2}
  #allocation0 [shape = 'u32[]', space=smem, size = 0x4, offset = 0x4, fixed_abs, tag = 'smem constant byte address 0x4 - core index']
  #allocation1 [shape = 'u32[144,128]{1,0:T(1,128)}', space=vmem, size = 0x12000, scoped, tag = 'internal scratch']
  #allocation2 [shape = 'f32[1,12,24,64]{3,2,1,0:T(8,128)}', space=vmem, size = 0x24000, scoped, tag = 'scratch operand']
  %s0 = inlined_call_operand.vmem [shape: f32[2,28,28,1], index: 0, kind: input, shape index: {}]
  %s1 = inlined_call_operand.hbm [shape: f32[9,32], index: 1, kind: input, shape index: {}]
  %s2 = inlined_call_operand.hbm [shape: f32[1,32], index: 2, kind: input, shape index: {}]
  %s3 = inlined_call_operand.vmem [shape: bf16[288,64], index: 3, kind: input, shape index: {}]
  %s4 = inlined_call_operand.hbm [shape: f32[1,64], index: 4, kind: input, shape index: {}]
  %s5 = inlined_call_operand.vmem [shape: f32[2,12,6,128], index: 5, kind: output, shape index: {}]
  %s6 = sld [smem:[#allocation0]]
  $region65: #{mnist_forward.2} parent=0
    _
  %s8 = ssub.s32 1, %s6
  %s9 = scalar_select 0, %s8, %s6
  $region1: #{mnist_forward.2} parent=0
    #allocation3 [shape = 'u8[8192]{0}', space=vmem, size = 0x2000, scoped, tag = 'input window, operand 1, single buffered']
    #allocation4 [shape = 's32[2]{0}', space=sflag, size = 0x8, scoped, tag = 'scoped memory for mnist_forward.2']
    #allocation5 [shape = 'u8[512]{0}', space=vmem, size = 0x400, scoped, tag = 'input window, operand 2, single buffered']
    #allocation6 [shape = 's32[1]{0}', space=sflag, size = 0x4, scoped, tag = 'scoped memory for mnist_forward.2']
    #allocation7 [shape = 'u8[512]{0}', space=vmem, size = 0x400, scoped, tag = 'input window, operand 4, single buffered']
    %10 = vsyncpa [#allocation4], 0
    %11 = vsyncpa [#allocation6], 0
    loop: start=0, step=1, limit=4
    $region2: #{mnist_forward.2} parent=1 // loop_pre_header
      _
    $region3: #{mnist_forward.2} parent=1 // loop_header
      %s13 = sphi 0, %s17
      %p14 = scmp.ge.s32.totalorder %s13, 4
      %s23 = sphi 0, %s25
      %s26 = sphi 0, %s23
      %s27 = sphi 0, %s26
      %s43 = sphi 0, %s27
      %s47 = sphi 0, %s47
      %s49 = sphi 0, %s47
      %s50 = sphi 0, %s49
      %s64 = sphi 0, %s50
      %s68 = sphi 0, %s68
      %s70 = sphi 0, %s68
      %s71 = sphi 0, %s70
      %s85 = sphi 0, %s71
      %s89 = sphi 0, %s89
      %s91 = sphi 0, %s89
      %s92 = sphi 0, %s91
      %s106 = sphi 0, %s92
      %s110 = sphi 0, %s110
      %s112 = sphi 0, %s110
      %s113 = sphi 0, %s112
      %s127 = sphi 0, %s113
      %s133 = sphi 0, %s135
      %s136 = sphi 0, %s133
      %s137 = sphi 0, %s136
      %s153 = sphi 0, %s137
    $region4: #{mnist_forward.2} parent=1 // loop_header_branch
      %16 = sbr.rel (%p14) target = $region8
    $region5: #{mnist_forward.2} parent=1 // loop_body
      %s18 = ssub.s32 %s13, 1
      %s19 = ssub.s32 %s13, 2
      %s20 = sadd.s32 %s13, 1
      %s21 = ssub.s32 %s13, %s20
      %p22 = scmp.eq.s32.totalorder %s21, 0
      %s24 = sadd.s32 %s23, 1
      %s25 = scalar_select %p22, %s23, %s24
      %p28 = pneg %p22
      %p29 = scmp.eq.s32.totalorder %s13, 1
      %p30 = por %p28, %p29
      %p31 = scmp.ne.s32.totalorder %s23, %s26
      %p32 = scmp.eq.s32.totalorder %s13, 0
      %p33 = por %p31, %p32
      %p34 = scmp.ne.s32.totalorder %s23, %s26
      %p35 = scmp.eq.s32.totalorder %s18, 1
      %p36 = por %p34, %p35
      %p37 = scmp.ne.s32.totalorder %s26, %s27
      %p38 = scmp.eq.s32.totalorder %s18, 0
      %p39 = por %p37, %p38
      %p40 = scmp.ne.s32.totalorder %s26, %s27
      %p41 = scmp.eq.s32.totalorder %s19, 1
      %p42 = por %p40, %p41
      %p44 = scmp.ne.s32.totalorder %s27, %s43
      %p45 = scmp.eq.s32.totalorder %s19, 0
      %p46 = por %p44, %p45
      %s48 = sadd.s32 %s47, 1
      %p51 = scmp.eq.s32.totalorder %s13, 1
      %p52 = scmp.ne.s32.totalorder %s47, %s49
      %p53 = scmp.eq.s32.totalorder %s13, 0
      %p54 = por %p52, %p53
      %p55 = scmp.ne.s32.totalorder %s47, %s49
      %p56 = scmp.eq.s32.totalorder %s18, 1
      %p57 = por %p55, %p56
      %p58 = scmp.ne.s32.totalorder %s49, %s50
      %p59 = scmp.eq.s32.totalorder %s18, 0
      %p60 = por %p58, %p59
      %p61 = scmp.ne.s32.totalorder %s49, %s50
      %p62 = scmp.eq.s32.totalorder %s19, 1
      %p63 = por %p61, %p62
      %p65 = scmp.ne.s32.totalorder %s50, %s64
      %p66 = scmp.eq.s32.totalorder %s19, 0
      %p67 = por %p65, %p66
      %s69 = sadd.s32 %s68, 1
      %p72 = scmp.eq.s32.totalorder %s13, 1
      %p73 = scmp.ne.s32.totalorder %s68, %s70
      %p74 = scmp.eq.s32.totalorder %s13, 0
      %p75 = por %p73, %p74
      %p76 = scmp.ne.s32.totalorder %s68, %s70
      %p77 = scmp.eq.s32.totalorder %s18, 1
      %p78 = por %p76, %p77
      %p79 = scmp.ne.s32.totalorder %s70, %s71
      %p80 = scmp.eq.s32.totalorder %s18, 0
      %p81 = por %p79, %p80
      %p82 = scmp.ne.s32.totalorder %s70, %s71
      %p83 = scmp.eq.s32.totalorder %s19, 1
      %p84 = por %p82, %p83
      %p86 = scmp.ne.s32.totalorder %s71, %s85
      %p87 = scmp.eq.s32.totalorder %s19, 0
      %p88 = por %p86, %p87
      %s90 = sadd.s32 %s89, 1
      %p93 = scmp.eq.s32.totalorder %s13, 1
      %p94 = scmp.ne.s32.totalorder %s89, %s91
      %p95 = scmp.eq.s32.totalorder %s13, 0
      %p96 = por %p94, %p95
      %p97 = scmp.ne.s32.totalorder %s89, %s91
      %p98 = scmp.eq.s32.totalorder %s18, 1
      %p99 = por %p97, %p98
      %p100 = scmp.ne.s32.totalorder %s91, %s92
      %p101 = scmp.eq.s32.totalorder %s18, 0
      %p102 = por %p100, %p101
      %p103 = scmp.ne.s32.totalorder %s91, %s92
      %p104 = scmp.eq.s32.totalorder %s19, 1
      %p105 = por %p103, %p104
      %p107 = scmp.ne.s32.totalorder %s92, %s106
      %p108 = scmp.eq.s32.totalorder %s19, 0
      %p109 = por %p107, %p108
      %s111 = sadd.s32 %s110, 1
      %p114 = scmp.eq.s32.totalorder %s13, 1
      %p115 = scmp.ne.s32.totalorder %s110, %s112
      %p116 = scmp.eq.s32.totalorder %s13, 0
      %p117 = por %p115, %p116
      %p118 = scmp.ne.s32.totalorder %s110, %s112
      %p119 = scmp.eq.s32.totalorder %s18, 1
      %p120 = por %p118, %p119
      %p121 = scmp.ne.s32.totalorder %s112, %s113
      %p122 = scmp.eq.s32.totalorder %s18, 0
      %p123 = por %p121, %p122
      %p124 = scmp.ne.s32.totalorder %s112, %s113
      %p125 = scmp.eq.s32.totalorder %s19, 1
      %p126 = por %p124, %p125
      %p128 = scmp.ne.s32.totalorder %s113, %s127
      %p129 = scmp.eq.s32.totalorder %s19, 0
      %p130 = por %p128, %p129
      %s131 = ssub.s32 %s13, %s20
      %p132 = scmp.eq.s32.totalorder %s131, 0
      %s134 = sadd.s32 %s133, 1
      %s135 = scalar_select %p132, %s133, %s134
      %p138 = pneg %p132
      %p139 = scmp.eq.s32.totalorder %s13, 1
      %p140 = por %p138, %p139
      %p141 = scmp.ne.s32.totalorder %s133, %s136
      %p142 = scmp.eq.s32.totalorder %s13, 0
      %p143 = por %p141, %p142
      %p144 = scmp.ne.s32.totalorder %s133, %s136
      %p145 = scmp.eq.s32.totalorder %s18, 1
      %p146 = por %p144, %p145
      %p147 = scmp.ne.s32.totalorder %s136, %s137
      %p148 = scmp.eq.s32.totalorder %s18, 0
      %p149 = por %p147, %p148
      %p150 = scmp.ne.s32.totalorder %s136, %s137
      %p151 = scmp.eq.s32.totalorder %s19, 1
      %p152 = por %p150, %p151
      %p154 = scmp.ne.s32.totalorder %s137, %s153
      %p155 = scmp.eq.s32.totalorder %s19, 0
      %p156 = por %p154, %p155
      %p157 = scmp.le.s32.totalorder 1, %s13
      %p158 = scmp.lt.s32.totalorder %s13, 3
      %p159 = pnand %p157, %p158
      %p160 = pneg %p159
      // Predicated region
      $region9: #{mnist_forward.2} parent=5 // pred_check
        _
      $region10: #{mnist_forward.2} parent=5 // pred_check_branch
        %162 = sbr.rel (%p159) target = $region12
      $region11: #{mnist_forward.2} parent=5 // pred_region
        %s163 = ssub.s32 %s13, 1
        // Predicated region
        $region13: #{mnist_forward.2} parent=11 // pred_check
          %p164 = pneg %p60
        $region14: #{mnist_forward.2} parent=11 // pred_check_branch
          %166 = sbr.rel (%p164) target = $region16
        $region15: #{mnist_forward.2} parent=11 // pred_region
          %s168 = ssub.s32 256, 256
          %169 = vsyncadd [#allocation4], %s168
          %s170 = sshll.u32 [#allocation3], 4
          %s171 = int_to_ptr.vmem [resolvable:$true] %s170
          %176 = dma.hbm_to_vmem [thread:$0]  %s1, 256, %s171, [#allocation4], 128, 128, 8
        $region16: #{mnist_forward.2} parent=11 // pred_fallthru
          _
        // Predicated region
        $region17: #{mnist_forward.2} parent=11 // pred_check
          %p177 = pneg %p81
        $region18: #{mnist_forward.2} parent=11 // pred_check_branch
          %179 = sbr.rel (%p177) target = $region20
        $region19: #{mnist_forward.2} parent=11 // pred_region
          %s181 = ssub.s32 16, 16
          %182 = vsyncadd [#allocation6], %s181
          %s184 = sshll.u32 [#allocation5], 4
          %s185 = int_to_ptr.vmem [resolvable:$true] %s184
          %187 = dma.hbm_to_vmem [thread:$0]  %s2, 16, %s185, [#allocation6]
        $region20: #{mnist_forward.2} parent=11 // pred_fallthru
          _
        // Predicated region
        $region21: #{mnist_forward.2} parent=11 // pred_check
          %p188 = pneg %p102
        $region22: #{mnist_forward.2} parent=11 // pred_check_branch
          %190 = sbr.rel (%p188) target = $region24
        $region23: #{mnist_forward.2} parent=11 // pred_region
          _
        $region24: #{mnist_forward.2} parent=11 // pred_fallthru
          _
        // Predicated region
        $region25: #{mnist_forward.2} parent=11 // pred_check
          %p191 = pneg %p123
        $region26: #{mnist_forward.2} parent=11 // pred_check_branch
          %193 = sbr.rel (%p191) target = $region28
        $region27: #{mnist_forward.2} parent=11 // pred_region
          %s195 = ssub.s32 16, 16
          %196 = vsyncadd [#allocation6], %s195
          %s198 = sshll.u32 [#allocation7], 4
          %s199 = int_to_ptr.vmem [resolvable:$true] %s198
          %201 = dma.hbm_to_vmem [thread:$0]  %s4, 16, %s199, [#allocation6]
        $region28: #{mnist_forward.2} parent=11 // pred_fallthru
          _
      $region12: #{mnist_forward.2} parent=5 // pred_fallthru
        _
      %p202 = scmp.lt.s32.totalorder %s13, 2
      // Predicated region
      $region29: #{mnist_forward.2} parent=5 // pred_check
        %p203 = pneg %p202
      $region30: #{mnist_forward.2} parent=5 // pred_check_branch
        %205 = sbr.rel (%p203) target = $region32
      $region31: #{mnist_forward.2} parent=5 // pred_region
        // Predicated region
        $region33: #{mnist_forward.2} parent=31 // pred_check
          %p206 = pneg %p33
        $region34: #{mnist_forward.2} parent=31 // pred_check_branch
          %208 = sbr.rel (%p206) target = $region36
        $region35: #{mnist_forward.2} parent=31 // pred_region
          %p209 = scmp.lt.s32.totalorder %s13, 1
          %s210 = scalar_select %p209, %s13, 1
          %s211 = smul.addr %s210, 112
          %s212 = smul.addr %s211, 8
          %s213 = scalar_lea.vmem %s0, %s212
        $region36: #{mnist_forward.2} parent=31 // pred_fallthru
          _
      $region32: #{mnist_forward.2} parent=5 // pred_fallthru
        _
      %p214 = scmp.le.s32.totalorder 1, %s13
      %p215 = scmp.lt.s32.totalorder %s13, 3
      %p216 = pnand %p214, %p215
      %p217 = pneg %p216
      // Predicated region
      $region37: #{mnist_forward.2} parent=5 // pred_check
        _
      $region38: #{mnist_forward.2} parent=5 // pred_check_branch
        %219 = sbr.rel (%p216) target = $region40
      $region39: #{mnist_forward.2} parent=5 // pred_region
        %s220 = ssub.s32 %s13, 1
        // Predicated region
        $region41: #{mnist_forward.2} parent=39 // pred_check
          %p221 = pneg %p60
        $region42: #{mnist_forward.2} parent=39 // pred_check_branch
          %223 = sbr.rel (%p221) target = $region44
        $region43: #{mnist_forward.2} parent=39 // pred_region
          %224 = dma.done [#allocation4], 256
        $region44: #{mnist_forward.2} parent=39 // pred_fallthru
          _
        // Predicated region
        $region45: #{mnist_forward.2} parent=39 // pred_check
          %p225 = pneg %p81
        $region46: #{mnist_forward.2} parent=39 // pred_check_branch
          %227 = sbr.rel (%p225) target = $region48
        $region47: #{mnist_forward.2} parent=39 // pred_region
          %228 = dma.done [#allocation6], 16
        $region48: #{mnist_forward.2} parent=39 // pred_fallthru
          _
        // Predicated region
        $region49: #{mnist_forward.2} parent=39 // pred_check
          %p229 = pneg %p123
        $region50: #{mnist_forward.2} parent=39 // pred_check_branch
          %231 = sbr.rel (%p229) target = $region52
        $region51: #{mnist_forward.2} parent=39 // pred_region
          %232 = dma.done [#allocation6], 16
        $region52: #{mnist_forward.2} parent=39 // pred_fallthru
          _
        %p233 = scmp.lt.s32.totalorder %s18, 1
        %s234 = scalar_select %p233, %s18, 1
        %s235 = smul.addr %s234, 112
        %s236 = smul.addr %s235, 8
        %s237 = scalar_lea.vmem %s0, %s236
        %p238 = pneg %p39
        %p239 = pneg %p36
        %p240 = pneg %p60
        %p241 = pneg %p57
        %p242 = pneg %p81
        %p243 = pneg %p78
        %p244 = pneg %p102
        %p245 = pneg %p99
        %p246 = pneg %p123
        %p247 = pneg %p120
        %p248 = pneg %p149
        %p249 = pneg %p146
        %p250 = scmp.lt.s32.totalorder %s18, 1
        %s251 = scalar_select %p250, %s18, 1
        %s252 = smul.addr %s251, 12
        %s253 = smul.addr %s252, 8
        %s254 = scalar_lea.vmem %s5, %s253
        %p255 = scmp.lt.s32.totalorder %s18, 1
        %s256 = scalar_select %p255, %s18, 1
        %s257 = smul.addr %s256, 112
        %s258 = smul.addr %s257, 8
        %s259 = scalar_lea.vmem %s0, %s258
        %p260 = scmp.lt.s32.totalorder %s18, 1
        %s261 = scalar_select %p260, %s18, 1
        %s262 = smul.addr %s261, 12
        %s263 = smul.addr %s262, 8
        %s264 = scalar_lea.vmem %s5, %s263
        %v266 = vld [vmem:[%s259] sm:$0xff]
        %v267 = vld [vmem:[%s259 + $0x8] sm:$0xff]
        %v268 = vld [vmem:[%s259 + $0x10] sm:$0xff]
        %v269 = vld [vmem:[%s259 + $0x18] sm:$0xf]
        %v270 = vld [vmem:[%s259 + $0x20] sm:$0xff]
        %v271 = vld [vmem:[%s259 + $0x28] sm:$0xff]
        %v272 = vld [vmem:[%s259 + $0x30] sm:$0xff]
        %v273 = vld [vmem:[%s259 + $0x38] sm:$0xf]
        %v274 = vld [vmem:[%s259 + $0x40] sm:$0xff]
        %v275 = vld [vmem:[%s259 + $0x48] sm:$0xff]
        %v276 = vld [vmem:[%s259 + $0x50] sm:$0xff]
        %v277 = vld [vmem:[%s259 + $0x58] sm:$0xf]
        %v278 = vld [vmem:[%s259 + $0x60] sm:$0xff]
        %v279 = vld [vmem:[%s259 + $0x68] sm:$0xff]
        %v280 = vld [vmem:[%s259 + $0x70] sm:$0xff]
        %v281 = vld [vmem:[%s259 + $0x78] sm:$0xf]
        %v282 = vld [vmem:[%s259 + $0x80] sm:$0xff]
        %v283 = vld [vmem:[%s259 + $0x88] sm:$0xff]
        %v284 = vld [vmem:[%s259 + $0x90] sm:$0xff]
        %v285 = vld [vmem:[%s259 + $0x98] sm:$0xf]
        %v286 = vld [vmem:[%s259 + $0xa0] sm:$0xff]
        %v287 = vld [vmem:[%s259 + $0xa8] sm:$0xff]
        %v288 = vld [vmem:[%s259 + $0xb0] sm:$0xff]
        %v289 = vld [vmem:[%s259 + $0xb8] sm:$0xf]
        %v290 = vld [vmem:[%s259 + $0xc0] sm:$0xff]
        %v291 = vld [vmem:[%s259 + $0xc8] sm:$0xff]
        %v292 = vld [vmem:[%s259 + $0xd0] sm:$0xff]
        %v293 = vld [vmem:[%s259 + $0xd8] sm:$0xf]
        %v294 = vld [vmem:[%s259 + $0xe0] sm:$0xff]
        %v295 = vld [vmem:[%s259 + $0xe8] sm:$0xff]
        %v296 = vld [vmem:[%s259 + $0xf0] sm:$0xff]
        %v297 = vld [vmem:[%s259 + $0xf8] sm:$0xf]
        %v298 = vld [vmem:[%s259 + $0x100] sm:$0xff]
        %v299 = vld [vmem:[%s259 + $0x108] sm:$0xff]
        %v300 = vld [vmem:[%s259 + $0x110] sm:$0xff]
        %v301 = vld [vmem:[%s259 + $0x118] sm:$0xf]
        %v302 = vld [vmem:[%s259 + $0x120] sm:$0xff]
        %v303 = vld [vmem:[%s259 + $0x128] sm:$0xff]
        %v304 = vld [vmem:[%s259 + $0x130] sm:$0xff]
        %v305 = vld [vmem:[%s259 + $0x138] sm:$0xf]
        %v306 = vld [vmem:[%s259 + $0x140] sm:$0xff]
        %v307 = vld [vmem:[%s259 + $0x148] sm:$0xff]
        %v308 = vld [vmem:[%s259 + $0x150] sm:$0xff]
        %v309 = vld [vmem:[%s259 + $0x158] sm:$0xf]
        %v310 = vld [vmem:[%s259 + $0x160] sm:$0xff]
        %v311 = vld [vmem:[%s259 + $0x168] sm:$0xff]
        %v312 = vld [vmem:[%s259 + $0x170] sm:$0xff]
        %v313 = vld [vmem:[%s259 + $0x178] sm:$0xf]
        %v314 = vld [vmem:[%s259 + $0x180] sm:$0xff]
        %v315 = vld [vmem:[%s259 + $0x188] sm:$0xff]
        %v316 = vld [vmem:[%s259 + $0x190] sm:$0xff]
        %v317 = vld [vmem:[%s259 + $0x198] sm:$0xf]
        %v318 = vld [vmem:[%s259 + $0x1a0] sm:$0xff]
        %v319 = vld [vmem:[%s259 + $0x1a8] sm:$0xff]
        %v320 = vld [vmem:[%s259 + $0x1b0] sm:$0xff]
        %v321 = vld [vmem:[%s259 + $0x1b8] sm:$0xf]
        %v322 = vld [vmem:[%s259 + $0x1c0] sm:$0xff]
        %v323 = vld [vmem:[%s259 + $0x1c8] sm:$0xff]
        %v324 = vld [vmem:[%s259 + $0x1d0] sm:$0xff]
        %v325 = vld [vmem:[%s259 + $0x1d8] sm:$0xf]
        %v326 = vld [vmem:[%s259 + $0x1e0] sm:$0xff]
        %v327 = vld [vmem:[%s259 + $0x1e8] sm:$0xff]
        %v328 = vld [vmem:[%s259 + $0x1f0] sm:$0xff]
        %v329 = vld [vmem:[%s259 + $0x1f8] sm:$0xf]
        %v330 = vld [vmem:[%s259 + $0x200] sm:$0xff]
        %v331 = vld [vmem:[%s259 + $0x208] sm:$0xff]
        %v332 = vld [vmem:[%s259 + $0x210] sm:$0xff]
        %v333 = vld [vmem:[%s259 + $0x218] sm:$0xf]
        %v334 = vld [vmem:[%s259 + $0x220] sm:$0xff]
        %v335 = vld [vmem:[%s259 + $0x228] sm:$0xff]
        %v336 = vld [vmem:[%s259 + $0x230] sm:$0xff]
        %v337 = vld [vmem:[%s259 + $0x238] sm:$0xf]
        %v338 = vld [vmem:[%s259 + $0x240] sm:$0xff]
        %v339 = vld [vmem:[%s259 + $0x248] sm:$0xff]
        %v340 = vld [vmem:[%s259 + $0x250] sm:$0xff]
        %v341 = vld [vmem:[%s259 + $0x258] sm:$0xf]
        %v342 = vld [vmem:[%s259 + $0x260] sm:$0xff]
        %v343 = vld [vmem:[%s259 + $0x268] sm:$0xff]
        %v344 = vld [vmem:[%s259 + $0x270] sm:$0xff]
        %v345 = vld [vmem:[%s259 + $0x278] sm:$0xf]
        %v346 = vld [vmem:[%s259 + $0x280] sm:$0xff]
        %v347 = vld [vmem:[%s259 + $0x288] sm:$0xff]
        %v348 = vld [vmem:[%s259 + $0x290] sm:$0xff]
        %v349 = vld [vmem:[%s259 + $0x298] sm:$0xf]
        %v350 = vld [vmem:[%s259 + $0x2a0] sm:$0xff]
        %v351 = vld [vmem:[%s259 + $0x2a8] sm:$0xff]
        %v352 = vld [vmem:[%s259 + $0x2b0] sm:$0xff]
        %v353 = vld [vmem:[%s259 + $0x2b8] sm:$0xf]
        %v354 = vld [vmem:[%s259 + $0x2c0] sm:$0xff]
        %v355 = vld [vmem:[%s259 + $0x2c8] sm:$0xff]
        %v356 = vld [vmem:[%s259 + $0x2d0] sm:$0xff]
        %v357 = vld [vmem:[%s259 + $0x2d8] sm:$0xf]
        %v358 = vld [vmem:[%s259 + $0x2e0] sm:$0xff]
        %v359 = vld [vmem:[%s259 + $0x2e8] sm:$0xff]
        %v360 = vld [vmem:[%s259 + $0x2f0] sm:$0xff]
        %v361 = vld [vmem:[%s259 + $0x2f8] sm:$0xf]
        %v362 = vld [vmem:[%s259 + $0x300] sm:$0xff]
        %v363 = vld [vmem:[%s259 + $0x308] sm:$0xff]
        %v364 = vld [vmem:[%s259 + $0x310] sm:$0xff]
        %v365 = vld [vmem:[%s259 + $0x318] sm:$0xf]
        %v366 = vld [vmem:[%s259 + $0x320] sm:$0xff]
        %v367 = vld [vmem:[%s259 + $0x328] sm:$0xff]
        %v368 = vld [vmem:[%s259 + $0x330] sm:$0xff]
        %v369 = vld [vmem:[%s259 + $0x338] sm:$0xf]
        %v370 = vld [vmem:[%s259 + $0x340] sm:$0xff]
        %v371 = vld [vmem:[%s259 + $0x348] sm:$0xff]
        %v372 = vld [vmem:[%s259 + $0x350] sm:$0xff]
        %v373 = vld [vmem:[%s259 + $0x358] sm:$0xf]
        %v374 = vld [vmem:[%s259 + $0x360] sm:$0xff]
        %v375 = vld [vmem:[%s259 + $0x368] sm:$0xff]
        %v376 = vld [vmem:[%s259 + $0x370] sm:$0xff]
        %v377 = vld [vmem:[%s259 + $0x378] sm:$0xf]
        %v378 = vld [vmem:[#allocation3] sm:$0x1]
        %380 = vset.pattern.permute.xlu0 0
        %381 = vperm.xlu0 %380, %v266
        %v382 = vpop.permute.xlu0 %381
        %385 = vset.pattern.permute.xlu0 0
        %386 = vperm.xlu0 %385, %v267
        %v387 = vpop.permute.xlu0 %386
        %390 = vset.pattern.permute.xlu0 0
        %391 = vperm.xlu0 %390, %v268
        %v392 = vpop.permute.xlu0 %391
        %395 = vset.pattern.permute.xlu0 0
        %396 = vperm.xlu0 %395, %v269
        %v397 = vpop.permute.xlu0 %396
        %400 = vset.pattern.permute.xlu0 0
        %401 = vperm.xlu0 %400, %v270
        %v402 = vpop.permute.xlu0 %401
        %405 = vset.pattern.permute.xlu0 0
        %406 = vperm.xlu0 %405, %v271
        %v407 = vpop.permute.xlu0 %406
        %410 = vset.pattern.permute.xlu0 0
        %411 = vperm.xlu0 %410, %v272
        %v412 = vpop.permute.xlu0 %411
        %415 = vset.pattern.permute.xlu0 0
        %416 = vperm.xlu0 %415, %v273
        %v417 = vpop.permute.xlu0 %416
        %420 = vset.pattern.permute.xlu0 0
        %421 = vperm.xlu0 %420, %v274
        %v422 = vpop.permute.xlu0 %421
        %425 = vset.pattern.permute.xlu0 0
        %426 = vperm.xlu0 %425, %v275
        %v427 = vpop.permute.xlu0 %426
        %430 = vset.pattern.permute.xlu0 0
        %431 = vperm.xlu0 %430, %v276
        %v432 = vpop.permute.xlu0 %431
        %435 = vset.pattern.permute.xlu0 0
        %436 = vperm.xlu0 %435, %v277
        %v437 = vpop.permute.xlu0 %436
        %440 = vset.pattern.permute.xlu0 0
        %441 = vperm.xlu0 %440, %v278
        %v442 = vpop.permute.xlu0 %441
        %445 = vset.pattern.permute.xlu0 0
        %446 = vperm.xlu0 %445, %v279
        %v447 = vpop.permute.xlu0 %446
        %450 = vset.pattern.permute.xlu0 0
        %451 = vperm.xlu0 %450, %v280
        %v452 = vpop.permute.xlu0 %451
        %455 = vset.pattern.permute.xlu0 0
        %456 = vperm.xlu0 %455, %v281
        %v457 = vpop.permute.xlu0 %456
        %460 = vset.pattern.permute.xlu0 0
        %461 = vperm.xlu0 %460, %v282
        %v462 = vpop.permute.xlu0 %461
        %465 = vset.pattern.permute.xlu0 0
        %466 = vperm.xlu0 %465, %v283
        %v467 = vpop.permute.xlu0 %466
        %470 = vset.pattern.permute.xlu0 0
        %471 = vperm.xlu0 %470, %v284
        %v472 = vpop.permute.xlu0 %471
        %475 = vset.pattern.permute.xlu0 0
        %476 = vperm.xlu0 %475, %v285
        %v477 = vpop.permute.xlu0 %476
        %480 = vset.pattern.permute.xlu0 0
        %481 = vperm.xlu0 %480, %v286
        %v482 = vpop.permute.xlu0 %481
        %485 = vset.pattern.permute.xlu0 0
        %486 = vperm.xlu0 %485, %v287
        %v487 = vpop.permute.xlu0 %486
        %490 = vset.pattern.permute.xlu0 0
        %491 = vperm.xlu0 %490, %v288
        %v492 = vpop.permute.xlu0 %491
        %495 = vset.pattern.permute.xlu0 0
        %496 = vperm.xlu0 %495, %v289
        %v497 = vpop.permute.xlu0 %496
        %500 = vset.pattern.permute.xlu0 0
        %501 = vperm.xlu0 %500, %v290
        %v502 = vpop.permute.xlu0 %501
        %505 = vset.pattern.permute.xlu0 0
        %506 = vperm.xlu0 %505, %v291
        %v507 = vpop.permute.xlu0 %506
        %510 = vset.pattern.permute.xlu0 0
        %511 = vperm.xlu0 %510, %v292
        %v512 = vpop.permute.xlu0 %511
        %515 = vset.pattern.permute.xlu0 0
        %516 = vperm.xlu0 %515, %v293
        %v517 = vpop.permute.xlu0 %516
        %520 = vset.pattern.permute.xlu0 0
        %521 = vperm.xlu0 %520, %v294
        %v522 = vpop.permute.xlu0 %521
        %525 = vset.pattern.permute.xlu0 0
        %526 = vperm.xlu0 %525, %v295
        %v527 = vpop.permute.xlu0 %526
        %530 = vset.pattern.permute.xlu0 0
        %531 = vperm.xlu0 %530, %v296
        %v532 = vpop.permute.xlu0 %531
        %535 = vset.pattern.permute.xlu0 0
        %536 = vperm.xlu0 %535, %v297
        %v537 = vpop.permute.xlu0 %536
        %540 = vset.pattern.permute.xlu0 0
        %541 = vperm.xlu0 %540, %v298
        %v542 = vpop.permute.xlu0 %541
        %545 = vset.pattern.permute.xlu0 0
        %546 = vperm.xlu0 %545, %v299
        %v547 = vpop.permute.xlu0 %546
        %550 = vset.pattern.permute.xlu0 0
        %551 = vperm.xlu0 %550, %v300
        %v552 = vpop.permute.xlu0 %551
        %555 = vset.pattern.permute.xlu0 0
        %556 = vperm.xlu0 %555, %v301
        %v557 = vpop.permute.xlu0 %556
        %560 = vset.pattern.permute.xlu0 0
        %561 = vperm.xlu0 %560, %v302
        %v562 = vpop.permute.xlu0 %561
        %565 = vset.pattern.permute.xlu0 0
        %566 = vperm.xlu0 %565, %v303
        %v567 = vpop.permute.xlu0 %566
        %570 = vset.pattern.permute.xlu0 0
        %571 = vperm.xlu0 %570, %v304
        %v572 = vpop.permute.xlu0 %571
        %575 = vset.pattern.permute.xlu0 0
        %576 = vperm.xlu0 %575, %v305
        %v577 = vpop.permute.xlu0 %576
        %580 = vset.pattern.permute.xlu0 0
        %581 = vperm.xlu0 %580, %v306
        %v582 = vpop.permute.xlu0 %581
        %585 = vset.pattern.permute.xlu0 0
        %586 = vperm.xlu0 %585, %v307
        %v587 = vpop.permute.xlu0 %586
        %590 = vset.pattern.permute.xlu0 0
        %591 = vperm.xlu0 %590, %v308
        %v592 = vpop.permute.xlu0 %591
        %595 = vset.pattern.permute.xlu0 0
        %596 = vperm.xlu0 %595, %v309
        %v597 = vpop.permute.xlu0 %596
        %600 = vset.pattern.permute.xlu0 0
        %601 = vperm.xlu0 %600, %v310
        %v602 = vpop.permute.xlu0 %601
        %605 = vset.pattern.permute.xlu0 0
        %606 = vperm.xlu0 %605, %v311
        %v607 = vpop.permute.xlu0 %606
        %610 = vset.pattern.permute.xlu0 0
        %611 = vperm.xlu0 %610, %v312
        %v612 = vpop.permute.xlu0 %611
        %615 = vset.pattern.permute.xlu0 0
        %616 = vperm.xlu0 %615, %v313
        %v617 = vpop.permute.xlu0 %616
        %620 = vset.pattern.permute.xlu0 0
        %621 = vperm.xlu0 %620, %v314
        %v622 = vpop.permute.xlu0 %621
        %625 = vset.pattern.permute.xlu0 0
        %626 = vperm.xlu0 %625, %v315
        %v627 = vpop.permute.xlu0 %626
        %630 = vset.pattern.permute.xlu0 0
        %631 = vperm.xlu0 %630, %v316
        %v632 = vpop.permute.xlu0 %631
        %635 = vset.pattern.permute.xlu0 0
        %636 = vperm.xlu0 %635, %v317
        %v637 = vpop.permute.xlu0 %636
        %640 = vset.pattern.permute.xlu0 0
        %641 = vperm.xlu0 %640, %v318
        %v642 = vpop.permute.xlu0 %641
        %645 = vset.pattern.permute.xlu0 0
        %646 = vperm.xlu0 %645, %v319
        %v647 = vpop.permute.xlu0 %646
        %650 = vset.pattern.permute.xlu0 0
        %651 = vperm.xlu0 %650, %v320
        %v652 = vpop.permute.xlu0 %651
        %655 = vset.pattern.permute.xlu0 0
        %656 = vperm.xlu0 %655, %v321
        %v657 = vpop.permute.xlu0 %656
        %660 = vset.pattern.permute.xlu0 0
        %661 = vperm.xlu0 %660, %v322
        %v662 = vpop.permute.xlu0 %661
        %665 = vset.pattern.permute.xlu0 0
        %666 = vperm.xlu0 %665, %v323
        %v667 = vpop.permute.xlu0 %666
        %670 = vset.pattern.permute.xlu0 0
        %671 = vperm.xlu0 %670, %v324
        %v672 = vpop.permute.xlu0 %671
        %675 = vset.pattern.permute.xlu0 0
        %676 = vperm.xlu0 %675, %v325
        %v677 = vpop.permute.xlu0 %676
        %680 = vset.pattern.permute.xlu0 0
        %681 = vperm.xlu0 %680, %v326
        %v682 = vpop.permute.xlu0 %681
        %685 = vset.pattern.permute.xlu0 0
        %686 = vperm.xlu0 %685, %v327
        %v687 = vpop.permute.xlu0 %686
        %690 = vset.pattern.permute.xlu0 0
        %691 = vperm.xlu0 %690, %v328
        %v692 = vpop.permute.xlu0 %691
        %695 = vset.pattern.permute.xlu0 0
        %696 = vperm.xlu0 %695, %v329
        %v697 = vpop.permute.xlu0 %696
        %700 = vset.pattern.permute.xlu0 0
        %701 = vperm.xlu0 %700, %v330
        %v702 = vpop.permute.xlu0 %701
        %705 = vset.pattern.permute.xlu0 0
        %706 = vperm.xlu0 %705, %v331
        %v707 = vpop.permute.xlu0 %706
        %710 = vset.pattern.permute.xlu0 0
        %711 = vperm.xlu0 %710, %v332
        %v712 = vpop.permute.xlu0 %711
        %715 = vset.pattern.permute.xlu0 0
        %716 = vperm.xlu0 %715, %v333
        %v717 = vpop.permute.xlu0 %716
        %720 = vset.pattern.permute.xlu0 0
        %721 = vperm.xlu0 %720, %v334
        %v722 = vpop.permute.xlu0 %721
        %725 = vset.pattern.permute.xlu0 0
        %726 = vperm.xlu0 %725, %v335
        %v727 = vpop.permute.xlu0 %726
        %730 = vset.pattern.permute.xlu0 0
        %731 = vperm.xlu0 %730, %v336
        %v732 = vpop.permute.xlu0 %731
        %735 = vset.pattern.permute.xlu0 0
        %736 = vperm.xlu0 %735, %v337
        %v737 = vpop.permute.xlu0 %736
        %740 = vset.pattern.permute.xlu0 0
        %741 = vperm.xlu0 %740, %v338
        %v742 = vpop.permute.xlu0 %741
        %745 = vset.pattern.permute.xlu0 0
        %746 = vperm.xlu0 %745, %v339
        %v747 = vpop.permute.xlu0 %746
        %750 = vset.pattern.permute.xlu0 0
        %751 = vperm.xlu0 %750, %v340
        %v752 = vpop.permute.xlu0 %751
        %755 = vset.pattern.permute.xlu0 0
        %756 = vperm.xlu0 %755, %v341
        %v757 = vpop.permute.xlu0 %756
        %760 = vset.pattern.permute.xlu0 0
        %761 = vperm.xlu0 %760, %v342
        %v762 = vpop.permute.xlu0 %761
        %765 = vset.pattern.permute.xlu0 0
        %766 = vperm.xlu0 %765, %v343
        %v767 = vpop.permute.xlu0 %766
        %770 = vset.pattern.permute.xlu0 0
        %771 = vperm.xlu0 %770, %v344
        %v772 = vpop.permute.xlu0 %771
        %775 = vset.pattern.permute.xlu0 0
        %776 = vperm.xlu0 %775, %v345
        %v777 = vpop.permute.xlu0 %776
        %780 = vset.pattern.permute.xlu0 0
        %781 = vperm.xlu0 %780, %v346
        %v782 = vpop.permute.xlu0 %781
        %785 = vset.pattern.permute.xlu0 0
        %786 = vperm.xlu0 %785, %v347
        %v787 = vpop.permute.xlu0 %786
        %790 = vset.pattern.permute.xlu0 0
        %791 = vperm.xlu0 %790, %v348
        %v792 = vpop.permute.xlu0 %791
        %795 = vset.pattern.permute.xlu0 0
        %796 = vperm.xlu0 %795, %v349
        %v797 = vpop.permute.xlu0 %796
        %800 = vset.pattern.permute.xlu0 0
        %801 = vperm.xlu0 %800, %v350
        %v802 = vpop.permute.xlu0 %801
        %805 = vset.pattern.permute.xlu0 0
        %806 = vperm.xlu0 %805, %v351
        %v807 = vpop.permute.xlu0 %806
        %810 = vset.pattern.permute.xlu0 0
        %811 = vperm.xlu0 %810, %v352
        %v812 = vpop.permute.xlu0 %811
        %815 = vset.pattern.permute.xlu0 0
        %816 = vperm.xlu0 %815, %v353
        %v817 = vpop.permute.xlu0 %816
        %820 = vset.pattern.permute.xlu0 0
        %821 = vperm.xlu0 %820, %v354
        %v822 = vpop.permute.xlu0 %821
        %825 = vset.pattern.permute.xlu0 0
        %826 = vperm.xlu0 %825, %v355
        %v827 = vpop.permute.xlu0 %826
        %830 = vset.pattern.permute.xlu0 0
        %831 = vperm.xlu0 %830, %v356
        %v832 = vpop.permute.xlu0 %831
        %835 = vset.pattern.permute.xlu0 0
        %836 = vperm.xlu0 %835, %v357
        %v837 = vpop.permute.xlu0 %836
        %840 = vset.pattern.permute.xlu0 0
        %841 = vperm.xlu0 %840, %v358
        %v842 = vpop.permute.xlu0 %841
        %845 = vset.pattern.permute.xlu0 0
        %846 = vperm.xlu0 %845, %v359
        %v847 = vpop.permute.xlu0 %846
        %850 = vset.pattern.permute.xlu0 0
        %851 = vperm.xlu0 %850, %v360
        %v852 = vpop.permute.xlu0 %851
        %855 = vset.pattern.permute.xlu0 0
        %856 = vperm.xlu0 %855, %v361
        %v857 = vpop.permute.xlu0 %856
        %860 = vset.pattern.permute.xlu0 0
        %861 = vperm.xlu0 %860, %v362
        %v862 = vpop.permute.xlu0 %861
        %865 = vset.pattern.permute.xlu0 0
        %866 = vperm.xlu0 %865, %v363
        %v867 = vpop.permute.xlu0 %866
        %870 = vset.pattern.permute.xlu0 0
        %871 = vperm.xlu0 %870, %v364
        %v872 = vpop.permute.xlu0 %871
        %875 = vset.pattern.permute.xlu0 0
        %876 = vperm.xlu0 %875, %v365
        %v877 = vpop.permute.xlu0 %876
        %880 = vset.pattern.permute.xlu0 0
        %881 = vperm.xlu0 %880, %v366
        %v882 = vpop.permute.xlu0 %881
        %885 = vset.pattern.permute.xlu0 0
        %886 = vperm.xlu0 %885, %v367
        %v887 = vpop.permute.xlu0 %886
        %890 = vset.pattern.permute.xlu0 0
        %891 = vperm.xlu0 %890, %v368
        %v892 = vpop.permute.xlu0 %891
        %895 = vset.pattern.permute.xlu0 0
        %896 = vperm.xlu0 %895, %v369
        %v897 = vpop.permute.xlu0 %896
        %v899 = vlaneseq
        %v900 = vshrl.u32 %v899, 7
        %v901 = vsub.s32 0, %v900
        %v902 = vrot.slane %v378, %v901
        %v903 = vmul.f32 %v382, %v902
        %v904 = vmul.f32 %v387, %v902
        %v905 = vmul.f32 %v392, %v902
        %v906 = vmul.f32 %v397, %v902
        %v907 = vmul.f32 %v402, %v902
        %v908 = vmul.f32 %v407, %v902
        %v909 = vmul.f32 %v412, %v902
        %v910 = vmul.f32 %v417, %v902
        %v911 = vmul.f32 %v422, %v902
        %v912 = vmul.f32 %v427, %v902
        %v913 = vmul.f32 %v432, %v902
        %v914 = vmul.f32 %v437, %v902
        %v915 = vmul.f32 %v442, %v902
        %v916 = vmul.f32 %v447, %v902
        %v917 = vmul.f32 %v452, %v902
        %v918 = vmul.f32 %v457, %v902
        %v919 = vmul.f32 %v462, %v902
        %v920 = vmul.f32 %v467, %v902
        %v921 = vmul.f32 %v472, %v902
        %v922 = vmul.f32 %v477, %v902
        %v923 = vmul.f32 %v482, %v902
        %v924 = vmul.f32 %v487, %v902
        %v925 = vmul.f32 %v492, %v902
        %v926 = vmul.f32 %v497, %v902
        %v927 = vmul.f32 %v502, %v902
        %v928 = vmul.f32 %v507, %v902
        %v929 = vmul.f32 %v512, %v902
        %v930 = vmul.f32 %v517, %v902
        %v931 = vmul.f32 %v522, %v902
        %v932 = vmul.f32 %v527, %v902
        %v933 = vmul.f32 %v532, %v902
        %v934 = vmul.f32 %v537, %v902
        %v935 = vmul.f32 %v542, %v902
        %v936 = vmul.f32 %v547, %v902
        %v937 = vmul.f32 %v552, %v902
        %v938 = vmul.f32 %v557, %v902
        %v939 = vmul.f32 %v562, %v902
        %v940 = vmul.f32 %v567, %v902
        %v941 = vmul.f32 %v572, %v902
        %v942 = vmul.f32 %v577, %v902
        %v943 = vmul.f32 %v582, %v902
        %v944 = vmul.f32 %v587, %v902
        %v945 = vmul.f32 %v592, %v902
        %v946 = vmul.f32 %v597, %v902
        %v947 = vmul.f32 %v602, %v902
        %v948 = vmul.f32 %v607, %v902
        %v949 = vmul.f32 %v612, %v902
        %v950 = vmul.f32 %v617, %v902
        %v951 = vmul.f32 %v622, %v902
        %v952 = vmul.f32 %v627, %v902
        %v953 = vmul.f32 %v632, %v902
        %v954 = vmul.f32 %v637, %v902
        %v955 = vmul.f32 %v642, %v902
        %v956 = vmul.f32 %v647, %v902
        %v957 = vmul.f32 %v652, %v902
        %v958 = vmul.f32 %v657, %v902
        %v959 = vmul.f32 %v662, %v902
        %v960 = vmul.f32 %v667, %v902
        %v961 = vmul.f32 %v672, %v902
        %v962 = vmul.f32 %v677, %v902
        %v963 = vmul.f32 %v682, %v902
        %v964 = vmul.f32 %v687, %v902
        %v965 = vmul.f32 %v692, %v902
        %v966 = vmul.f32 %v697, %v902
        %v967 = vmul.f32 %v702, %v902
        %v968 = vmul.f32 %v707, %v902
        %v969 = vmul.f32 %v712, %v902
        %v970 = vmul.f32 %v717, %v902
        %v971 = vmul.f32 %v722, %v902
        %v972 = vmul.f32 %v727, %v902
        %v973 = vmul.f32 %v732, %v902
        %v974 = vmul.f32 %v737, %v902
        %v975 = vmul.f32 %v742, %v902
        %v976 = vmul.f32 %v747, %v902
        %v977 = vmul.f32 %v752, %v902
        %v978 = vmul.f32 %v757, %v902
        %v979 = vmul.f32 %v762, %v902
        %v980 = vmul.f32 %v767, %v902
        %v981 = vmul.f32 %v772, %v902
        %v982 = vmul.f32 %v777, %v902
        %v983 = vmul.f32 %v782, %v902
        %v984 = vmul.f32 %v787, %v902
        %v985 = vmul.f32 %v792, %v902
        %v986 = vmul.f32 %v797, %v902
        %v987 = vmul.f32 %v802, %v902
        %v988 = vmul.f32 %v807, %v902
        %v989 = vmul.f32 %v812, %v902
        %v990 = vmul.f32 %v817, %v902
        %v991 = vmul.f32 %v822, %v902
        %v992 = vmul.f32 %v827, %v902
        %v993 = vmul.f32 %v832, %v902
        %v994 = vmul.f32 %v837, %v902
        %v995 = vmul.f32 %v842, %v902
        %v996 = vmul.f32 %v847, %v902
        %v997 = vmul.f32 %v852, %v902
        %v998 = vmul.f32 %v857, %v902
        %v999 = vmul.f32 %v862, %v902
        %v1000 = vmul.f32 %v867, %v902
        %v1001 = vmul.f32 %v872, %v902
        %v1002 = vmul.f32 %v877, %v902
        %v1003 = vmul.f32 %v882, %v902
        %v1004 = vmul.f32 %v887, %v902
        %v1005 = vmul.f32 %v892, %v902
        %v1006 = vmul.f32 %v897, %v902
        %v1007 = vadd.f32 %v903, 0.0
        %v1008 = vadd.f32 %v904, 0.0
        %v1009 = vadd.f32 %v905, 0.0
        %v1010 = vadd.f32 %v906, 0.0
        %v1011 = vadd.f32 %v907, 0.0
        %v1012 = vadd.f32 %v908, 0.0
        %v1013 = vadd.f32 %v909, 0.0
        %v1014 = vadd.f32 %v910, 0.0
        %v1015 = vadd.f32 %v911, 0.0
        %v1016 = vadd.f32 %v912, 0.0
        %v1017 = vadd.f32 %v913, 0.0
        %v1018 = vadd.f32 %v914, 0.0
        %v1019 = vadd.f32 %v915, 0.0
        %v1020 = vadd.f32 %v916, 0.0
        %v1021 = vadd.f32 %v917, 0.0
        %v1022 = vadd.f32 %v918, 0.0
        %v1023 = vadd.f32 %v919, 0.0
        %v1024 = vadd.f32 %v920, 0.0
        %v1025 = vadd.f32 %v921, 0.0
        %v1026 = vadd.f32 %v922, 0.0
        %v1027 = vadd.f32 %v923, 0.0
        %v1028 = vadd.f32 %v924, 0.0
        %v1029 = vadd.f32 %v925, 0.0
        %v1030 = vadd.f32 %v926, 0.0
        %v1031 = vadd.f32 %v927, 0.0
        %v1032 = vadd.f32 %v928, 0.0
        %v1033 = vadd.f32 %v929, 0.0
        %v1034 = vadd.f32 %v930, 0.0
        %v1035 = vadd.f32 %v931, 0.0
        %v1036 = vadd.f32 %v932, 0.0
        %v1037 = vadd.f32 %v933, 0.0
        %v1038 = vadd.f32 %v934, 0.0
        %v1039 = vadd.f32 %v935, 0.0
        %v1040 = vadd.f32 %v936, 0.0
        %v1041 = vadd.f32 %v937, 0.0
        %v1042 = vadd.f32 %v938, 0.0
        %v1043 = vadd.f32 %v939, 0.0
        %v1044 = vadd.f32 %v940, 0.0
        %v1045 = vadd.f32 %v941, 0.0
        %v1046 = vadd.f32 %v942, 0.0
        %v1047 = vadd.f32 %v943, 0.0
        %v1048 = vadd.f32 %v944, 0.0
        %v1049 = vadd.f32 %v945, 0.0
        %v1050 = vadd.f32 %v946, 0.0
        %v1051 = vadd.f32 %v947, 0.0
        %v1052 = vadd.f32 %v948, 0.0
        %v1053 = vadd.f32 %v949, 0.0
        %v1054 = vadd.f32 %v950, 0.0
        %v1055 = vadd.f32 %v951, 0.0
        %v1056 = vadd.f32 %v952, 0.0
        %v1057 = vadd.f32 %v953, 0.0
        %v1058 = vadd.f32 %v954, 0.0
        %v1059 = vadd.f32 %v955, 0.0
        %v1060 = vadd.f32 %v956, 0.0
        %v1061 = vadd.f32 %v957, 0.0
        %v1062 = vadd.f32 %v958, 0.0
        %v1063 = vadd.f32 %v959, 0.0
        %v1064 = vadd.f32 %v960, 0.0
        %v1065 = vadd.f32 %v961, 0.0
        %v1066 = vadd.f32 %v962, 0.0
        %v1067 = vadd.f32 %v963, 0.0
        %v1068 = vadd.f32 %v964, 0.0
        %v1069 = vadd.f32 %v965, 0.0
        %v1070 = vadd.f32 %v966, 0.0
        %v1071 = vadd.f32 %v967, 0.0
        %v1072 = vadd.f32 %v968, 0.0
        %v1073 = vadd.f32 %v969, 0.0
        %v1074 = vadd.f32 %v970, 0.0
        %v1075 = vadd.f32 %v971, 0.0
        %v1076 = vadd.f32 %v972, 0.0
        %v1077 = vadd.f32 %v973, 0.0
        %v1078 = vadd.f32 %v974, 0.0
        %v1079 = vadd.f32 %v975, 0.0
        %v1080 = vadd.f32 %v976, 0.0
        %v1081 = vadd.f32 %v977, 0.0
        %v1082 = vadd.f32 %v978, 0.0
        %v1083 = vadd.f32 %v979, 0.0
        %v1084 = vadd.f32 %v980, 0.0
        %v1085 = vadd.f32 %v981, 0.0
        %v1086 = vadd.f32 %v982, 0.0
        %v1087 = vadd.f32 %v983, 0.0
        %v1088 = vadd.f32 %v984, 0.0
        %v1089 = vadd.f32 %v985, 0.0
        %v1090 = vadd.f32 %v986, 0.0
        %v1091 = vadd.f32 %v987, 0.0
        %v1092 = vadd.f32 %v988, 0.0
        %v1093 = vadd.f32 %v989, 0.0
        %v1094 = vadd.f32 %v990, 0.0
        %v1095 = vadd.f32 %v991, 0.0
        %v1096 = vadd.f32 %v992, 0.0
        %v1097 = vadd.f32 %v993, 0.0
        %v1098 = vadd.f32 %v994, 0.0
        %v1099 = vadd.f32 %v995, 0.0
        %v1100 = vadd.f32 %v996, 0.0
        %v1101 = vadd.f32 %v997, 0.0
        %v1102 = vadd.f32 %v998, 0.0
        %v1103 = vadd.f32 %v999, 0.0
        %v1104 = vadd.f32 %v1000, 0.0
        %v1105 = vadd.f32 %v1001, 0.0
        %v1106 = vadd.f32 %v1002, 0.0
        %v1107 = vadd.f32 %v1003, 0.0
        %v1108 = vadd.f32 %v1004, 0.0
        %v1109 = vadd.f32 %v1005, 0.0
        %v1110 = vadd.f32 %v1006, 0.0
        %v1111 = vld [vmem:[#allocation3 + $0x1] sm:$0x1]
        %v1112 = vlaneseq
        %v1113 = vshrl.u32 %v1112, 7
        %v1114 = vsub.s32 0, %v1113
        %v1115 = vrot.slane %v1111, %v1114
        %v1116 = vmul.f32 %v382, %v1115
        %v1117 = vmul.f32 %v387, %v1115
        %v1118 = vmul.f32 %v392, %v1115
        %v1119 = vmul.f32 %v397, %v1115
        %v1120 = vmul.f32 %v402, %v1115
        %v1121 = vmul.f32 %v407, %v1115
        %v1122 = vmul.f32 %v412, %v1115
        %v1123 = vmul.f32 %v417, %v1115
        %v1124 = vmul.f32 %v422, %v1115
        %v1125 = vmul.f32 %v427, %v1115
        %v1126 = vmul.f32 %v432, %v1115
        %v1127 = vmul.f32 %v437, %v1115
        %v1128 = vmul.f32 %v442, %v1115
        %v1129 = vmul.f32 %v447, %v1115
        %v1130 = vmul.f32 %v452, %v1115
        %v1131 = vmul.f32 %v457, %v1115
        %v1132 = vmul.f32 %v462, %v1115
        %v1133 = vmul.f32 %v467, %v1115
        %v1134 = vmul.f32 %v472, %v1115
        %v1135 = vmul.f32 %v477, %v1115
        %v1136 = vmul.f32 %v482, %v1115
        %v1137 = vmul.f32 %v487, %v1115
        %v1138 = vmul.f32 %v492, %v1115
        %v1139 = vmul.f32 %v497, %v1115
        %v1140 = vmul.f32 %v502, %v1115
        %v1141 = vmul.f32 %v507, %v1115
        %v1142 = vmul.f32 %v512, %v1115
        %v1143 = vmul.f32 %v517, %v1115
        %v1144 = vmul.f32 %v522, %v1115
        %v1145 = vmul.f32 %v527, %v1115
        %v1146 = vmul.f32 %v532, %v1115
        %v1147 = vmul.f32 %v537, %v1115
        %v1148 = vmul.f32 %v542, %v1115
        %v1149 = vmul.f32 %v547, %v1115
        %v1150 = vmul.f32 %v552, %v1115
        %v1151 = vmul.f32 %v557, %v1115
        %v1152 = vmul.f32 %v562, %v1115
        %v1153 = vmul.f32 %v567, %v1115
        %v1154 = vmul.f32 %v572, %v1115
        %v1155 = vmul.f32 %v577, %v1115
        %v1156 = vmul.f32 %v582, %v1115
        %v1157 = vmul.f32 %v587, %v1115
        %v1158 = vmul.f32 %v592, %v1115
        %v1159 = vmul.f32 %v597, %v1115
        %v1160 = vmul.f32 %v602, %v1115
        %v1161 = vmul.f32 %v607, %v1115
        %v1162 = vmul.f32 %v612, %v1115
        %v1163 = vmul.f32 %v617, %v1115
        %v1164 = vmul.f32 %v622, %v1115
        %v1165 = vmul.f32 %v627, %v1115
        %v1166 = vmul.f32 %v632, %v1115
        %v1167 = vmul.f32 %v637, %v1115
        %v1168 = vmul.f32 %v642, %v1115
        %v1169 = vmul.f32 %v647, %v1115
        %v1170 = vmul.f32 %v652, %v1115
        %v1171 = vmul.f32 %v657, %v1115
        %v1172 = vmul.f32 %v662, %v1115
        %v1173 = vmul.f32 %v667, %v1115
        %v1174 = vmul.f32 %v672, %v1115
        %v1175 = vmul.f32 %v677, %v1115
        %v1176 = vmul.f32 %v682, %v1115
        %v1177 = vmul.f32 %v687, %v1115
        %v1178 = vmul.f32 %v692, %v1115
        %v1179 = vmul.f32 %v697, %v1115
        %v1180 = vmul.f32 %v702, %v1115
        %v1181 = vmul.f32 %v707, %v1115
        %v1182 = vmul.f32 %v712, %v1115
        %v1183 = vmul.f32 %v717, %v1115
        %v1184 = vmul.f32 %v722, %v1115
        %v1185 = vmul.f32 %v727, %v1115
        %v1186 = vmul.f32 %v732, %v1115
        %v1187 = vmul.f32 %v737, %v1115
        %v1188 = vmul.f32 %v742, %v1115
        %v1189 = vmul.f32 %v747, %v1115
        %v1190 = vmul.f32 %v752, %v1115
        %v1191 = vmul.f32 %v757, %v1115
        %v1192 = vmul.f32 %v762, %v1115
        %v1193 = vmul.f32 %v767, %v1115
        %v1194 = vmul.f32 %v772, %v1115
        %v1195 = vmul.f32 %v777, %v1115
        %v1196 = vmul.f32 %v782, %v1115
        %v1197 = vmul.f32 %v787, %v1115
        %v1198 = vmul.f32 %v792, %v1115
        %v1199 = vmul.f32 %v797, %v1115
        %v1200 = vmul.f32 %v802, %v1115
        %v1201 = vmul.f32 %v807, %v1115
        %v1202 = vmul.f32 %v812, %v1115
        %v1203 = vmul.f32 %v817, %v1115
        %v1204 = vmul.f32 %v822, %v1115
        %v1205 = vmul.f32 %v827, %v1115
        %v1206 = vmul.f32 %v832, %v1115
        %v1207 = vmul.f32 %v837, %v1115
        %v1208 = vmul.f32 %v842, %v1115
        %v1209 = vmul.f32 %v847, %v1115
        %v1210 = vmul.f32 %v852, %v1115
        %v1211 = vmul.f32 %v857, %v1115
        %v1212 = vmul.f32 %v862, %v1115
        %v1213 = vmul.f32 %v867, %v1115
        %v1214 = vmul.f32 %v872, %v1115
        %v1215 = vmul.f32 %v877, %v1115
        %v1216 = vmul.f32 %v882, %v1115
        %v1217 = vmul.f32 %v887, %v1115
        %v1218 = vmul.f32 %v892, %v1115
        %v1219 = vmul.f32 %v897, %v1115
        %vm1324 = vcmask 1046528
        %v1325 = vrot.slane %v1116, 1
        %v1326 = vrot.slane %v1117, 1
        %v1327 = vsel %vm1324, %v1325, %v1326
        %v1328 = vrot.slane %v1118, 1
        %v1329 = vsel %vm1324, %v1326, %v1328
        %v1330 = vrot.slane %v1119, 1
        %v1331 = vsel %vm1324, %v1328, %v1330
        %v1332 = vrot.slane %v1120, 1
        %v1333 = vrot.slane %v1121, 1
        %v1334 = vsel %vm1324, %v1332, %v1333
        %v1335 = vrot.slane %v1122, 1
        %v1336 = vsel %vm1324, %v1333, %v1335
        %v1337 = vrot.slane %v1123, 1
        %v1338 = vsel %vm1324, %v1335, %v1337
        %v1339 = vrot.slane %v1124, 1
        %v1340 = vrot.slane %v1125, 1
        %v1341 = vsel %vm1324, %v1339, %v1340
        %v1342 = vrot.slane %v1126, 1
        %v1343 = vsel %vm1324, %v1340, %v1342
        %v1344 = vrot.slane %v1127, 1
        %v1345 = vsel %vm1324, %v1342, %v1344
        %v1346 = vrot.slane %v1128, 1
        %v1347 = vrot.slane %v1129, 1
        %v1348 = vsel %vm1324, %v1346, %v1347
        %v1349 = vrot.slane %v1130, 1
        %v1350 = vsel %vm1324, %v1347, %v1349
        %v1351 = vrot.slane %v1131, 1
        %v1352 = vsel %vm1324, %v1349, %v1351
        %v1353 = vrot.slane %v1132, 1
        %v1354 = vrot.slane %v1133, 1
        %v1355 = vsel %vm1324, %v1353, %v1354
        %v1356 = vrot.slane %v1134, 1
        %v1357 = vsel %vm1324, %v1354, %v1356
        %v1358 = vrot.slane %v1135, 1
        %v1359 = vsel %vm1324, %v1356, %v1358
        %v1360 = vrot.slane %v1136, 1
        %v1361 = vrot.slane %v1137, 1
        %v1362 = vsel %vm1324, %v1360, %v1361
        %v1363 = vrot.slane %v1138, 1
        %v1364 = vsel %vm1324, %v1361, %v1363
        %v1365 = vrot.slane %v1139, 1
        %v1366 = vsel %vm1324, %v1363, %v1365
        %v1367 = vrot.slane %v1140, 1
        %v1368 = vrot.slane %v1141, 1
        %v1369 = vsel %vm1324, %v1367, %v1368
        %v1370 = vrot.slane %v1142, 1
        %v1371 = vsel %vm1324, %v1368, %v1370
        %v1372 = vrot.slane %v1143, 1
        %v1373 = vsel %vm1324, %v1370, %v1372
        %v1374 = vrot.slane %v1144, 1
        %v1375 = vrot.slane %v1145, 1
        %v1376 = vsel %vm1324, %v1374, %v1375
        %v1377 = vrot.slane %v1146, 1
        %v1378 = vsel %vm1324, %v1375, %v1377
        %v1379 = vrot.slane %v1147, 1
        %v1380 = vsel %vm1324, %v1377, %v1379
        %v1381 = vrot.slane %v1148, 1
        %v1382 = vrot.slane %v1149, 1
        %v1383 = vsel %vm1324, %v1381, %v1382
        %v1384 = vrot.slane %v1150, 1
        %v1385 = vsel %vm1324, %v1382, %v1384
        %v1386 = vrot.slane %v1151, 1
        %v1387 = vsel %vm1324, %v1384, %v1386
        %v1388 = vrot.slane %v1152, 1
        %v1389 = vrot.slane %v1153, 1
        %v1390 = vsel %vm1324, %v1388, %v1389
        %v1391 = vrot.slane %v1154, 1
        %v1392 = vsel %vm1324, %v1389, %v1391
        %v1393 = vrot.slane %v1155, 1
        %v1394 = vsel %vm1324, %v1391, %v1393
        %v1395 = vrot.slane %v1156, 1
        %v1396 = vrot.slane %v1157, 1
        %v1397 = vsel %vm1324, %v1395, %v1396
        %v1398 = vrot.slane %v1158, 1
        %v1399 = vsel %vm1324, %v1396, %v1398
        %v1400 = vrot.slane %v1159, 1
        %v1401 = vsel %vm1324, %v1398, %v1400
        %v1402 = vrot.slane %v1160, 1
        %v1403 = vrot.slane %v1161, 1
        %v1404 = vsel %vm1324, %v1402, %v1403
        %v1405 = vrot.slane %v1162, 1
        %v1406 = vsel %vm1324, %v1403, %v1405
        %v1407 = vrot.slane %v1163, 1
        %v1408 = vsel %vm1324, %v1405, %v1407
        %v1409 = vrot.slane %v1164, 1
        %v1410 = vrot.slane %v1165, 1
        %v1411 = vsel %vm1324, %v1409, %v1410
        %v1412 = vrot.slane %v1166, 1
        %v1413 = vsel %vm1324, %v1410, %v1412
        %v1414 = vrot.slane %v1167, 1
        %v1415 = vsel %vm1324, %v1412, %v1414
        %v1416 = vrot.slane %v1168, 1
        %v1417 = vrot.slane %v1169, 1
        %v1418 = vsel %vm1324, %v1416, %v1417
        %v1419 = vrot.slane %v1170, 1
        %v1420 = vsel %vm1324, %v1417, %v1419
        %v1421 = vrot.slane %v1171, 1
        %v1422 = vsel %vm1324, %v1419, %v1421
        %v1423 = vrot.slane %v1172, 1
        %v1424 = vrot.slane %v1173, 1
        %v1425 = vsel %vm1324, %v1423, %v1424
        %v1426 = vrot.slane %v1174, 1
        %v1427 = vsel %vm1324, %v1424, %v1426
        %v1428 = vrot.slane %v1175, 1
        %v1429 = vsel %vm1324, %v1426, %v1428
        %v1430 = vrot.slane %v1176, 1
        %v1431 = vrot.slane %v1177, 1
        %v1432 = vsel %vm1324, %v1430, %v1431
        %v1433 = vrot.slane %v1178, 1
        %v1434 = vsel %vm1324, %v1431, %v1433
        %v1435 = vrot.slane %v1179, 1
        %v1436 = vsel %vm1324, %v1433, %v1435
        %v1437 = vrot.slane %v1180, 1
        %v1438 = vrot.slane %v1181, 1
        %v1439 = vsel %vm1324, %v1437, %v1438
        %v1440 = vrot.slane %v1182, 1
        %v1441 = vsel %vm1324, %v1438, %v1440
        %v1442 = vrot.slane %v1183, 1
        %v1443 = vsel %vm1324, %v1440, %v1442
        %v1444 = vrot.slane %v1184, 1
        %v1445 = vrot.slane %v1185, 1
        %v1446 = vsel %vm1324, %v1444, %v1445
        %v1447 = vrot.slane %v1186, 1
        %v1448 = vsel %vm1324, %v1445, %v1447
        %v1449 = vrot.slane %v1187, 1
        %v1450 = vsel %vm1324, %v1447, %v1449
        %v1451 = vrot.slane %v1188, 1
        %v1452 = vrot.slane %v1189, 1
        %v1453 = vsel %vm1324, %v1451, %v1452
        %v1454 = vrot.slane %v1190, 1
        %v1455 = vsel %vm1324, %v1452, %v1454
        %v1456 = vrot.slane %v1191, 1
        %v1457 = vsel %vm1324, %v1454, %v1456
        %v1458 = vrot.slane %v1192, 1
        %v1459 = vrot.slane %v1193, 1
        %v1460 = vsel %vm1324, %v1458, %v1459
        %v1461 = vrot.slane %v1194, 1
        %v1462 = vsel %vm1324, %v1459, %v1461
        %v1463 = vrot.slane %v1195, 1
        %v1464 = vsel %vm1324, %v1461, %v1463
        %v1465 = vrot.slane %v1196, 1
        %v1466 = vrot.slane %v1197, 1
        %v1467 = vsel %vm1324, %v1465, %v1466
        %v1468 = vrot.slane %v1198, 1
        %v1469 = vsel %vm1324, %v1466, %v1468
        %v1470 = vrot.slane %v1199, 1
        %v1471 = vsel %vm1324, %v1468, %v1470
        %v1472 = vrot.slane %v1200, 1
        %v1473 = vrot.slane %v1201, 1
        %v1474 = vsel %vm1324, %v1472, %v1473
        %v1475 = vrot.slane %v1202, 1
        %v1476 = vsel %vm1324, %v1473, %v1475
        %v1477 = vrot.slane %v1203, 1
        %v1478 = vsel %vm1324, %v1475, %v1477
        %v1479 = vrot.slane %v1204, 1
        %v1480 = vrot.slane %v1205, 1
        %v1481 = vsel %vm1324, %v1479, %v1480
        %v1482 = vrot.slane %v1206, 1
        %v1483 = vsel %vm1324, %v1480, %v1482
        %v1484 = vrot.slane %v1207, 1
        %v1485 = vsel %vm1324, %v1482, %v1484
        %v1486 = vrot.slane %v1208, 1
        %v1487 = vrot.slane %v1209, 1
        %v1488 = vsel %vm1324, %v1486, %v1487
        %v1489 = vrot.slane %v1210, 1
        %v1490 = vsel %vm1324, %v1487, %v1489
        %v1491 = vrot.slane %v1211, 1
        %v1492 = vsel %vm1324, %v1489, %v1491
        %v1493 = vrot.slane %v1212, 1
        %v1494 = vrot.slane %v1213, 1
        %v1495 = vsel %vm1324, %v1493, %v1494
        %v1496 = vrot.slane %v1214, 1
        %v1497 = vsel %vm1324, %v1494, %v1496
        %v1498 = vrot.slane %v1215, 1
        %v1499 = vsel %vm1324, %v1496, %v1498
        %v1500 = vrot.slane %v1216, 1
        %v1501 = vrot.slane %v1217, 1
        %v1502 = vsel %vm1324, %v1500, %v1501
        %v1503 = vrot.slane %v1218, 1
        %v1504 = vsel %vm1324, %v1501, %v1503
        %v1505 = vrot.slane %v1219, 1
        %v1506 = vsel %vm1324, %v1503, %v1505
        %v1611 = vadd.f32 %v1007, %v1327
        %v1612 = vadd.f32 %v1008, %v1329
        %v1613 = vadd.f32 %v1009, %v1331
        %v1614 = vadd.f32 %v1010, %v1330
        %v1615 = vadd.f32 %v1011, %v1334
        %v1616 = vadd.f32 %v1012, %v1336
        %v1617 = vadd.f32 %v1013, %v1338
        %v1618 = vadd.f32 %v1014, %v1337
        %v1619 = vadd.f32 %v1015, %v1341
        %v1620 = vadd.f32 %v1016, %v1343
        %v1621 = vadd.f32 %v1017, %v1345
        %v1622 = vadd.f32 %v1018, %v1344
        %v1623 = vadd.f32 %v1019, %v1348
        %v1624 = vadd.f32 %v1020, %v1350
        %v1625 = vadd.f32 %v1021, %v1352
        %v1626 = vadd.f32 %v1022, %v1351
        %v1627 = vadd.f32 %v1023, %v1355
        %v1628 = vadd.f32 %v1024, %v1357
        %v1629 = vadd.f32 %v1025, %v1359
        %v1630 = vadd.f32 %v1026, %v1358
        %v1631 = vadd.f32 %v1027, %v1362
        %v1632 = vadd.f32 %v1028, %v1364
        %v1633 = vadd.f32 %v1029, %v1366
        %v1634 = vadd.f32 %v1030, %v1365
        %v1635 = vadd.f32 %v1031, %v1369
        %v1636 = vadd.f32 %v1032, %v1371
        %v1637 = vadd.f32 %v1033, %v1373
        %v1638 = vadd.f32 %v1034, %v1372
        %v1639 = vadd.f32 %v1035, %v1376
        %v1640 = vadd.f32 %v1036, %v1378
        %v1641 = vadd.f32 %v1037, %v1380
        %v1642 = vadd.f32 %v1038, %v1379
        %v1643 = vadd.f32 %v1039, %v1383
        %v1644 = vadd.f32 %v1040, %v1385
        %v1645 = vadd.f32 %v1041, %v1387
        %v1646 = vadd.f32 %v1042, %v1386
        %v1647 = vadd.f32 %v1043, %v1390
        %v1648 = vadd.f32 %v1044, %v1392
        %v1649 = vadd.f32 %v1045, %v1394
        %v1650 = vadd.f32 %v1046, %v1393
        %v1651 = vadd.f32 %v1047, %v1397
        %v1652 = vadd.f32 %v1048, %v1399
        %v1653 = vadd.f32 %v1049, %v1401
        %v1654 = vadd.f32 %v1050, %v1400
        %v1655 = vadd.f32 %v1051, %v1404
        %v1656 = vadd.f32 %v1052, %v1406
        %v1657 = vadd.f32 %v1053, %v1408
        %v1658 = vadd.f32 %v1054, %v1407
        %v1659 = vadd.f32 %v1055, %v1411
        %v1660 = vadd.f32 %v1056, %v1413
        %v1661 = vadd.f32 %v1057, %v1415
        %v1662 = vadd.f32 %v1058, %v1414
        %v1663 = vadd.f32 %v1059, %v1418
        %v1664 = vadd.f32 %v1060, %v1420
        %v1665 = vadd.f32 %v1061, %v1422
        %v1666 = vadd.f32 %v1062, %v1421
        %v1667 = vadd.f32 %v1063, %v1425
        %v1668 = vadd.f32 %v1064, %v1427
        %v1669 = vadd.f32 %v1065, %v1429
        %v1670 = vadd.f32 %v1066, %v1428
        %v1671 = vadd.f32 %v1067, %v1432
        %v1672 = vadd.f32 %v1068, %v1434
        %v1673 = vadd.f32 %v1069, %v1436
        %v1674 = vadd.f32 %v1070, %v1435
        %v1675 = vadd.f32 %v1071, %v1439
        %v1676 = vadd.f32 %v1072, %v1441
        %v1677 = vadd.f32 %v1073, %v1443
        %v1678 = vadd.f32 %v1074, %v1442
        %v1679 = vadd.f32 %v1075, %v1446
        %v1680 = vadd.f32 %v1076, %v1448
        %v1681 = vadd.f32 %v1077, %v1450
        %v1682 = vadd.f32 %v1078, %v1449
        %v1683 = vadd.f32 %v1079, %v1453
        %v1684 = vadd.f32 %v1080, %v1455
        %v1685 = vadd.f32 %v1081, %v1457
        %v1686 = vadd.f32 %v1082, %v1456
        %v1687 = vadd.f32 %v1083, %v1460
        %v1688 = vadd.f32 %v1084, %v1462
        %v1689 = vadd.f32 %v1085, %v1464
        %v1690 = vadd.f32 %v1086, %v1463
        %v1691 = vadd.f32 %v1087, %v1467
        %v1692 = vadd.f32 %v1088, %v1469
        %v1693 = vadd.f32 %v1089, %v1471
        %v1694 = vadd.f32 %v1090, %v1470
        %v1695 = vadd.f32 %v1091, %v1474
        %v1696 = vadd.f32 %v1092, %v1476
        %v1697 = vadd.f32 %v1093, %v1478
        %v1698 = vadd.f32 %v1094, %v1477
        %v1699 = vadd.f32 %v1095, %v1481
        %v1700 = vadd.f32 %v1096, %v1483
        %v1701 = vadd.f32 %v1097, %v1485
        %v1702 = vadd.f32 %v1098, %v1484
        %v1703 = vadd.f32 %v1099, %v1488
        %v1704 = vadd.f32 %v1100, %v1490
        %v1705 = vadd.f32 %v1101, %v1492
        %v1706 = vadd.f32 %v1102, %v1491
        %v1707 = vadd.f32 %v1103, %v1495
        %v1708 = vadd.f32 %v1104, %v1497
        %v1709 = vadd.f32 %v1105, %v1499
        %v1710 = vadd.f32 %v1106, %v1498
        %v1711 = vadd.f32 %v1107, %v1502
        %v1712 = vadd.f32 %v1108, %v1504
        %v1713 = vadd.f32 %v1109, %v1506
        %v1714 = vadd.f32 %v1110, %v1505
        %v1715 = vld [vmem:[#allocation3 + $0x2] sm:$0x1]
        %v1716 = vlaneseq
        %v1717 = vshrl.u32 %v1716, 7
        %v1718 = vsub.s32 0, %v1717
        %v1719 = vrot.slane %v1715, %v1718
        %v1720 = vmul.f32 %v382, %v1719
        %v1721 = vmul.f32 %v387, %v1719
        %v1722 = vmul.f32 %v392, %v1719
        %v1723 = vmul.f32 %v397, %v1719
        %v1724 = vmul.f32 %v402, %v1719
        %v1725 = vmul.f32 %v407, %v1719
        %v1726 = vmul.f32 %v412, %v1719
        %v1727 = vmul.f32 %v417, %v1719
        %v1728 = vmul.f32 %v422, %v1719
        %v1729 = vmul.f32 %v427, %v1719
        %v1730 = vmul.f32 %v432, %v1719
        %v1731 = vmul.f32 %v437, %v1719
        %v1732 = vmul.f32 %v442, %v1719
        %v1733 = vmul.f32 %v447, %v1719
        %v1734 = vmul.f32 %v452, %v1719
        %v1735 = vmul.f32 %v457, %v1719
        %v1736 = vmul.f32 %v462, %v1719
        %v1737 = vmul.f32 %v467, %v1719
        %v1738 = vmul.f32 %v472, %v1719
        %v1739 = vmul.f32 %v477, %v1719
        %v1740 = vmul.f32 %v482, %v1719
        %v1741 = vmul.f32 %v487, %v1719
        %v1742 = vmul.f32 %v492, %v1719
        %v1743 = vmul.f32 %v497, %v1719
        %v1744 = vmul.f32 %v502, %v1719
        %v1745 = vmul.f32 %v507, %v1719
        %v1746 = vmul.f32 %v512, %v1719
        %v1747 = vmul.f32 %v517, %v1719
        %v1748 = vmul.f32 %v522, %v1719
        %v1749 = vmul.f32 %v527, %v1719
        %v1750 = vmul.f32 %v532, %v1719
        %v1751 = vmul.f32 %v537, %v1719
        %v1752 = vmul.f32 %v542, %v1719
        %v1753 = vmul.f32 %v547, %v1719
        %v1754 = vmul.f32 %v552, %v1719
        %v1755 = vmul.f32 %v557, %v1719
        %v1756 = vmul.f32 %v562, %v1719
        %v1757 = vmul.f32 %v567, %v1719
        %v1758 = vmul.f32 %v572, %v1719
        %v1759 = vmul.f32 %v577, %v1719
        %v1760 = vmul.f32 %v582, %v1719
        %v1761 = vmul.f32 %v587, %v1719
        %v1762 = vmul.f32 %v592, %v1719
        %v1763 = vmul.f32 %v597, %v1719
        %v1764 = vmul.f32 %v602, %v1719
        %v1765 = vmul.f32 %v607, %v1719
        %v1766 = vmul.f32 %v612, %v1719
        %v1767 = vmul.f32 %v617, %v1719
        %v1768 = vmul.f32 %v622, %v1719
        %v1769 = vmul.f32 %v627, %v1719
        %v1770 = vmul.f32 %v632, %v1719
        %v1771 = vmul.f32 %v637, %v1719
        %v1772 = vmul.f32 %v642, %v1719
        %v1773 = vmul.f32 %v647, %v1719
        %v1774 = vmul.f32 %v652, %v1719
        %v1775 = vmul.f32 %v657, %v1719
        %v1776 = vmul.f32 %v662, %v1719
        %v1777 = vmul.f32 %v667, %v1719
        %v1778 = vmul.f32 %v672, %v1719
        %v1779 = vmul.f32 %v677, %v1719
        %v1780 = vmul.f32 %v682, %v1719
        %v1781 = vmul.f32 %v687, %v1719
        %v1782 = vmul.f32 %v692, %v1719
        %v1783 = vmul.f32 %v697, %v1719
        %v1784 = vmul.f32 %v702, %v1719
        %v1785 = vmul.f32 %v707, %v1719
        %v1786 = vmul.f32 %v712, %v1719
        %v1787 = vmul.f32 %v717, %v1719
        %v1788 = vmul.f32 %v722, %v1719
        %v1789 = vmul.f32 %v727, %v1719
        %v1790 = vmul.f32 %v732, %v1719
        %v1791 = vmul.f32 %v737, %v1719
        %v1792 = vmul.f32 %v742, %v1719
        %v1793 = vmul.f32 %v747, %v1719
        %v1794 = vmul.f32 %v752, %v1719
        %v1795 = vmul.f32 %v757, %v1719
        %v1796 = vmul.f32 %v762, %v1719
        %v1797 = vmul.f32 %v767, %v1719
        %v1798 = vmul.f32 %v772, %v1719
        %v1799 = vmul.f32 %v777, %v1719
        %v1800 = vmul.f32 %v782, %v1719
        %v1801 = vmul.f32 %v787, %v1719
        %v1802 = vmul.f32 %v792, %v1719
        %v1803 = vmul.f32 %v797, %v1719
        %v1804 = vmul.f32 %v802, %v1719
        %v1805 = vmul.f32 %v807, %v1719
        %v1806 = vmul.f32 %v812, %v1719
        %v1807 = vmul.f32 %v817, %v1719
        %v1808 = vmul.f32 %v822, %v1719
        %v1809 = vmul.f32 %v827, %v1719
        %v1810 = vmul.f32 %v832, %v1719
        %v1811 = vmul.f32 %v837, %v1719
        %v1812 = vmul.f32 %v842, %v1719
        %v1813 = vmul.f32 %v847, %v1719
        %v1814 = vmul.f32 %v852, %v1719
        %v1815 = vmul.f32 %v857, %v1719
        %v1816 = vmul.f32 %v862, %v1719
        %v1817 = vmul.f32 %v867, %v1719
        %v1818 = vmul.f32 %v872, %v1719
        %v1819 = vmul.f32 %v877, %v1719
        %v1820 = vmul.f32 %v882, %v1719
        %v1821 = vmul.f32 %v887, %v1719
        %v1822 = vmul.f32 %v892, %v1719
        %v1823 = vmul.f32 %v897, %v1719
        %vm1928 = vcmask 1045504
        %v1929 = vrot.slane %v1720, 2
        %v1930 = vrot.slane %v1721, 2
        %v1931 = vsel %vm1928, %v1929, %v1930
        %v1932 = vrot.slane %v1722, 2
        %v1933 = vsel %vm1928, %v1930, %v1932
        %v1934 = vrot.slane %v1723, 2
        %v1935 = vsel %vm1928, %v1932, %v1934
        %v1936 = vrot.slane %v1724, 2
        %v1937 = vrot.slane %v1725, 2
        %v1938 = vsel %vm1928, %v1936, %v1937
        %v1939 = vrot.slane %v1726, 2
        %v1940 = vsel %vm1928, %v1937, %v1939
        %v1941 = vrot.slane %v1727, 2
        %v1942 = vsel %vm1928, %v1939, %v1941
        %v1943 = vrot.slane %v1728, 2
        %v1944 = vrot.slane %v1729, 2
        %v1945 = vsel %vm1928, %v1943, %v1944
        %v1946 = vrot.slane %v1730, 2
        %v1947 = vsel %vm1928, %v1944, %v1946
        %v1948 = vrot.slane %v1731, 2
        %v1949 = vsel %vm1928, %v1946, %v1948
        %v1950 = vrot.slane %v1732, 2
        %v1951 = vrot.slane %v1733, 2
        %v1952 = vsel %vm1928, %v1950, %v1951
        %v1953 = vrot.slane %v1734, 2
        %v1954 = vsel %vm1928, %v1951, %v1953
        %v1955 = vrot.slane %v1735, 2
        %v1956 = vsel %vm1928, %v1953, %v1955
        %v1957 = vrot.slane %v1736, 2
        %v1958 = vrot.slane %v1737, 2
        %v1959 = vsel %vm1928, %v1957, %v1958
        %v1960 = vrot.slane %v1738, 2
        %v1961 = vsel %vm1928, %v1958, %v1960
        %v1962 = vrot.slane %v1739, 2
        %v1963 = vsel %vm1928, %v1960, %v1962
        %v1964 = vrot.slane %v1740, 2
        %v1965 = vrot.slane %v1741, 2
        %v1966 = vsel %vm1928, %v1964, %v1965
        %v1967 = vrot.slane %v1742, 2
        %v1968 = vsel %vm1928, %v1965, %v1967
        %v1969 = vrot.slane %v1743, 2
        %v1970 = vsel %vm1928, %v1967, %v1969
        %v1971 = vrot.slane %v1744, 2
        %v1972 = vrot.slane %v1745, 2
        %v1973 = vsel %vm1928, %v1971, %v1972
        %v1974 = vrot.slane %v1746, 2
        %v1975 = vsel %vm1928, %v1972, %v1974
        %v1976 = vrot.slane %v1747, 2
        %v1977 = vsel %vm1928, %v1974, %v1976
        %v1978 = vrot.slane %v1748, 2
        %v1979 = vrot.slane %v1749, 2
        %v1980 = vsel %vm1928, %v1978, %v1979
        %v1981 = vrot.slane %v1750, 2
        %v1982 = vsel %vm1928, %v1979, %v1981
        %v1983 = vrot.slane %v1751, 2
        %v1984 = vsel %vm1928, %v1981, %v1983
        %v1985 = vrot.slane %v1752, 2
        %v1986 = vrot.slane %v1753, 2
        %v1987 = vsel %vm1928, %v1985, %v1986
        %v1988 = vrot.slane %v1754, 2
        %v1989 = vsel %vm1928, %v1986, %v1988
        %v1990 = vrot.slane %v1755, 2
        %v1991 = vsel %vm1928, %v1988, %v1990
        %v1992 = vrot.slane %v1756, 2
        %v1993 = vrot.slane %v1757, 2
        %v1994 = vsel %vm1928, %v1992, %v1993
        %v1995 = vrot.slane %v1758, 2
        %v1996 = vsel %vm1928, %v1993, %v1995
        %v1997 = vrot.slane %v1759, 2
        %v1998 = vsel %vm1928, %v1995, %v1997
        %v1999 = vrot.slane %v1760, 2
        %v2000 = vrot.slane %v1761, 2
        %v2001 = vsel %vm1928, %v1999, %v2000
        %v2002 = vrot.slane %v1762, 2
        %v2003 = vsel %vm1928, %v2000, %v2002
        %v2004 = vrot.slane %v1763, 2
        %v2005 = vsel %vm1928, %v2002, %v2004
        %v2006 = vrot.slane %v1764, 2
        %v2007 = vrot.slane %v1765, 2
        %v2008 = vsel %vm1928, %v2006, %v2007
        %v2009 = vrot.slane %v1766, 2
        %v2010 = vsel %vm1928, %v2007, %v2009
        %v2011 = vrot.slane %v1767, 2
        %v2012 = vsel %vm1928, %v2009, %v2011
        %v2013 = vrot.slane %v1768, 2
        %v2014 = vrot.slane %v1769, 2
        %v2015 = vsel %vm1928, %v2013, %v2014
        %v2016 = vrot.slane %v1770, 2
        %v2017 = vsel %vm1928, %v2014, %v2016
        %v2018 = vrot.slane %v1771, 2
        %v2019 = vsel %vm1928, %v2016, %v2018
        %v2020 = vrot.slane %v1772, 2
        %v2021 = vrot.slane %v1773, 2
        %v2022 = vsel %vm1928, %v2020, %v2021
        %v2023 = vrot.slane %v1774, 2
        %v2024 = vsel %vm1928, %v2021, %v2023
        %v2025 = vrot.slane %v1775, 2
        %v2026 = vsel %vm1928, %v2023, %v2025
        %v2027 = vrot.slane %v1776, 2
        %v2028 = vrot.slane %v1777, 2
        %v2029 = vsel %vm1928, %v2027, %v2028
        %v2030 = vrot.slane %v1778, 2
        %v2031 = vsel %vm1928, %v2028, %v2030
        %v2032 = vrot.slane %v1779, 2
        %v2033 = vsel %vm1928, %v2030, %v2032
        %v2034 = vrot.slane %v1780, 2
        %v2035 = vrot.slane %v1781, 2
        %v2036 = vsel %vm1928, %v2034, %v2035
        %v2037 = vrot.slane %v1782, 2
        %v2038 = vsel %vm1928, %v2035, %v2037
        %v2039 = vrot.slane %v1783, 2
        %v2040 = vsel %vm1928, %v2037, %v2039
        %v2041 = vrot.slane %v1784, 2
        %v2042 = vrot.slane %v1785, 2
        %v2043 = vsel %vm1928, %v2041, %v2042
        %v2044 = vrot.slane %v1786, 2
        %v2045 = vsel %vm1928, %v2042, %v2044
        %v2046 = vrot.slane %v1787, 2
        %v2047 = vsel %vm1928, %v2044, %v2046
        %v2048 = vrot.slane %v1788, 2
        %v2049 = vrot.slane %v1789, 2
        %v2050 = vsel %vm1928, %v2048, %v2049
        %v2051 = vrot.slane %v1790, 2
        %v2052 = vsel %vm1928, %v2049, %v2051
        %v2053 = vrot.slane %v1791, 2
        %v2054 = vsel %vm1928, %v2051, %v2053
        %v2055 = vrot.slane %v1792, 2
        %v2056 = vrot.slane %v1793, 2
        %v2057 = vsel %vm1928, %v2055, %v2056
        %v2058 = vrot.slane %v1794, 2
        %v2059 = vsel %vm1928, %v2056, %v2058
        %v2060 = vrot.slane %v1795, 2
        %v2061 = vsel %vm1928, %v2058, %v2060
        %v2062 = vrot.slane %v1796, 2
        %v2063 = vrot.slane %v1797, 2
        %v2064 = vsel %vm1928, %v2062, %v2063
        %v2065 = vrot.slane %v1798, 2
        %v2066 = vsel %vm1928, %v2063, %v2065
        %v2067 = vrot.slane %v1799, 2
        %v2068 = vsel %vm1928, %v2065, %v2067
        %v2069 = vrot.slane %v1800, 2
        %v2070 = vrot.slane %v1801, 2
        %v2071 = vsel %vm1928, %v2069, %v2070
        %v2072 = vrot.slane %v1802, 2
        %v2073 = vsel %vm1928, %v2070, %v2072
        %v2074 = vrot.slane %v1803, 2
        %v2075 = vsel %vm1928, %v2072, %v2074
        %v2076 = vrot.slane %v1804, 2
        %v2077 = vrot.slane %v1805, 2
        %v2078 = vsel %vm1928, %v2076, %v2077
        %v2079 = vrot.slane %v1806, 2
        %v2080 = vsel %vm1928, %v2077, %v2079
        %v2081 = vrot.slane %v1807, 2
        %v2082 = vsel %vm1928, %v2079, %v2081
        %v2083 = vrot.slane %v1808, 2
        %v2084 = vrot.slane %v1809, 2
        %v2085 = vsel %vm1928, %v2083, %v2084
        %v2086 = vrot.slane %v1810, 2
        %v2087 = vsel %vm1928, %v2084, %v2086
        %v2088 = vrot.slane %v1811, 2
        %v2089 = vsel %vm1928, %v2086, %v2088
        %v2090 = vrot.slane %v1812, 2
        %v2091 = vrot.slane %v1813, 2
        %v2092 = vsel %vm1928, %v2090, %v2091
        %v2093 = vrot.slane %v1814, 2
        %v2094 = vsel %vm1928, %v2091, %v2093
        %v2095 = vrot.slane %v1815, 2
        %v2096 = vsel %vm1928, %v2093, %v2095
        %v2097 = vrot.slane %v1816, 2
        %v2098 = vrot.slane %v1817, 2
        %v2099 = vsel %vm1928, %v2097, %v2098
        %v2100 = vrot.slane %v1818, 2
        %v2101 = vsel %vm1928, %v2098, %v2100
        %v2102 = vrot.slane %v1819, 2
        %v2103 = vsel %vm1928, %v2100, %v2102
        %v2104 = vrot.slane %v1820, 2
        %v2105 = vrot.slane %v1821, 2
        %v2106 = vsel %vm1928, %v2104, %v2105
        %v2107 = vrot.slane %v1822, 2
        %v2108 = vsel %vm1928, %v2105, %v2107
        %v2109 = vrot.slane %v1823, 2
        %v2110 = vsel %vm1928, %v2107, %v2109
        %v2215 = vadd.f32 %v1611, %v1931
        %v2216 = vadd.f32 %v1612, %v1933
        %v2217 = vadd.f32 %v1613, %v1935
        %v2218 = vadd.f32 %v1614, %v1934
        %v2219 = vadd.f32 %v1615, %v1938
        %v2220 = vadd.f32 %v1616, %v1940
        %v2221 = vadd.f32 %v1617, %v1942
        %v2222 = vadd.f32 %v1618, %v1941
        %v2223 = vadd.f32 %v1619, %v1945
        %v2224 = vadd.f32 %v1620, %v1947
        %v2225 = vadd.f32 %v1621, %v1949
        %v2226 = vadd.f32 %v1622, %v1948
        %v2227 = vadd.f32 %v1623, %v1952
        %v2228 = vadd.f32 %v1624, %v1954
        %v2229 = vadd.f32 %v1625, %v1956
        %v2230 = vadd.f32 %v1626, %v1955
        %v2231 = vadd.f32 %v1627, %v1959
        %v2232 = vadd.f32 %v1628, %v1961
        %v2233 = vadd.f32 %v1629, %v1963
        %v2234 = vadd.f32 %v1630, %v1962
        %v2235 = vadd.f32 %v1631, %v1966
        %v2236 = vadd.f32 %v1632, %v1968
        %v2237 = vadd.f32 %v1633, %v1970
        %v2238 = vadd.f32 %v1634, %v1969
        %v2239 = vadd.f32 %v1635, %v1973
        %v2240 = vadd.f32 %v1636, %v1975
        %v2241 = vadd.f32 %v1637, %v1977
        %v2242 = vadd.f32 %v1638, %v1976
        %v2243 = vadd.f32 %v1639, %v1980
        %v2244 = vadd.f32 %v1640, %v1982
        %v2245 = vadd.f32 %v1641, %v1984
        %v2246 = vadd.f32 %v1642, %v1983
        %v2247 = vadd.f32 %v1643, %v1987
        %v2248 = vadd.f32 %v1644, %v1989
        %v2249 = vadd.f32 %v1645, %v1991
        %v2250 = vadd.f32 %v1646, %v1990
        %v2251 = vadd.f32 %v1647, %v1994
        %v2252 = vadd.f32 %v1648, %v1996
        %v2253 = vadd.f32 %v1649, %v1998
        %v2254 = vadd.f32 %v1650, %v1997
        %v2255 = vadd.f32 %v1651, %v2001
        %v2256 = vadd.f32 %v1652, %v2003
        %v2257 = vadd.f32 %v1653, %v2005
        %v2258 = vadd.f32 %v1654, %v2004
        %v2259 = vadd.f32 %v1655, %v2008
        %v2260 = vadd.f32 %v1656, %v2010
        %v2261 = vadd.f32 %v1657, %v2012
        %v2262 = vadd.f32 %v1658, %v2011
        %v2263 = vadd.f32 %v1659, %v2015
        %v2264 = vadd.f32 %v1660, %v2017
        %v2265 = vadd.f32 %v1661, %v2019
        %v2266 = vadd.f32 %v1662, %v2018
        %v2267 = vadd.f32 %v1663, %v2022
        %v2268 = vadd.f32 %v1664, %v2024
        %v2269 = vadd.f32 %v1665, %v2026
        %v2270 = vadd.f32 %v1666, %v2025
        %v2271 = vadd.f32 %v1667, %v2029
        %v2272 = vadd.f32 %v1668, %v2031
        %v2273 = vadd.f32 %v1669, %v2033
        %v2274 = vadd.f32 %v1670, %v2032
        %v2275 = vadd.f32 %v1671, %v2036
        %v2276 = vadd.f32 %v1672, %v2038
        %v2277 = vadd.f32 %v1673, %v2040
        %v2278 = vadd.f32 %v1674, %v2039
        %v2279 = vadd.f32 %v1675, %v2043
        %v2280 = vadd.f32 %v1676, %v2045
        %v2281 = vadd.f32 %v1677, %v2047
        %v2282 = vadd.f32 %v1678, %v2046
        %v2283 = vadd.f32 %v1679, %v2050
        %v2284 = vadd.f32 %v1680, %v2052
        %v2285 = vadd.f32 %v1681, %v2054
        %v2286 = vadd.f32 %v1682, %v2053
        %v2287 = vadd.f32 %v1683, %v2057
        %v2288 = vadd.f32 %v1684, %v2059
        %v2289 = vadd.f32 %v1685, %v2061
        %v2290 = vadd.f32 %v1686, %v2060
        %v2291 = vadd.f32 %v1687, %v2064
        %v2292 = vadd.f32 %v1688, %v2066
        %v2293 = vadd.f32 %v1689, %v2068
        %v2294 = vadd.f32 %v1690, %v2067
        %v2295 = vadd.f32 %v1691, %v2071
        %v2296 = vadd.f32 %v1692, %v2073
        %v2297 = vadd.f32 %v1693, %v2075
        %v2298 = vadd.f32 %v1694, %v2074
        %v2299 = vadd.f32 %v1695, %v2078
        %v2300 = vadd.f32 %v1696, %v2080
        %v2301 = vadd.f32 %v1697, %v2082
        %v2302 = vadd.f32 %v1698, %v2081
        %v2303 = vadd.f32 %v1699, %v2085
        %v2304 = vadd.f32 %v1700, %v2087
        %v2305 = vadd.f32 %v1701, %v2089
        %v2306 = vadd.f32 %v1702, %v2088
        %v2307 = vadd.f32 %v1703, %v2092
        %v2308 = vadd.f32 %v1704, %v2094
        %v2309 = vadd.f32 %v1705, %v2096
        %v2310 = vadd.f32 %v1706, %v2095
        %v2311 = vadd.f32 %v1707, %v2099
        %v2312 = vadd.f32 %v1708, %v2101
        %v2313 = vadd.f32 %v1709, %v2103
        %v2314 = vadd.f32 %v1710, %v2102
        %v2315 = vadd.f32 %v1711, %v2106
        %v2316 = vadd.f32 %v1712, %v2108
        %v2317 = vadd.f32 %v1713, %v2110
        %v2318 = vadd.f32 %v1714, %v2109
        %v2319 = vld [vmem:[#allocation3 + $0x3] sm:$0x1]
        %2321 = vset.pattern.permute.xlu0 0
        %2322 = vperm.xlu0 %2321, %v370
        %v2323 = vpop.permute.xlu0 %2322
        %2326 = vset.pattern.permute.xlu0 0
        %2327 = vperm.xlu0 %2326, %v371
        %v2328 = vpop.permute.xlu0 %2327
        %2331 = vset.pattern.permute.xlu0 0
        %2332 = vperm.xlu0 %2331, %v372
        %v2333 = vpop.permute.xlu0 %2332
        %2336 = vset.pattern.permute.xlu0 0
        %2337 = vperm.xlu0 %2336, %v373
        %v2338 = vpop.permute.xlu0 %2337
        %v2340 = vlaneseq
        %v2341 = vshrl.u32 %v2340, 7
        %v2342 = vsub.s32 0, %v2341
        %v2343 = vrot.slane %v2319, %v2342
        %v2344 = vmul.f32 %v402, %v2343
        %v2345 = vmul.f32 %v407, %v2343
        %v2346 = vmul.f32 %v412, %v2343
        %v2347 = vmul.f32 %v417, %v2343
        %v2348 = vmul.f32 %v422, %v2343
        %v2349 = vmul.f32 %v427, %v2343
        %v2350 = vmul.f32 %v432, %v2343
        %v2351 = vmul.f32 %v437, %v2343
        %v2352 = vmul.f32 %v442, %v2343
        %v2353 = vmul.f32 %v447, %v2343
        %v2354 = vmul.f32 %v452, %v2343
        %v2355 = vmul.f32 %v457, %v2343
        %v2356 = vmul.f32 %v462, %v2343
        %v2357 = vmul.f32 %v467, %v2343
        %v2358 = vmul.f32 %v472, %v2343
        %v2359 = vmul.f32 %v477, %v2343
        %v2360 = vmul.f32 %v482, %v2343
        %v2361 = vmul.f32 %v487, %v2343
        %v2362 = vmul.f32 %v492, %v2343
        %v2363 = vmul.f32 %v497, %v2343
        %v2364 = vmul.f32 %v502, %v2343
        %v2365 = vmul.f32 %v507, %v2343
        %v2366 = vmul.f32 %v512, %v2343
        %v2367 = vmul.f32 %v517, %v2343
        %v2368 = vmul.f32 %v522, %v2343
        %v2369 = vmul.f32 %v527, %v2343
        %v2370 = vmul.f32 %v532, %v2343
        %v2371 = vmul.f32 %v537, %v2343
        %v2372 = vmul.f32 %v542, %v2343
        %v2373 = vmul.f32 %v547, %v2343
        %v2374 = vmul.f32 %v552, %v2343
        %v2375 = vmul.f32 %v557, %v2343
        %v2376 = vmul.f32 %v562, %v2343
        %v2377 = vmul.f32 %v567, %v2343
        %v2378 = vmul.f32 %v572, %v2343
        %v2379 = vmul.f32 %v577, %v2343
        %v2380 = vmul.f32 %v582, %v2343
        %v2381 = vmul.f32 %v587, %v2343
        %v2382 = vmul.f32 %v592, %v2343
        %v2383 = vmul.f32 %v597, %v2343
        %v2384 = vmul.f32 %v602, %v2343
        %v2385 = vmul.f32 %v607, %v2343
        %v2386 = vmul.f32 %v612, %v2343
        %v2387 = vmul.f32 %v617, %v2343
        %v2388 = vmul.f32 %v622, %v2343
        %v2389 = vmul.f32 %v627, %v2343
        %v2390 = vmul.f32 %v632, %v2343
        %v2391 = vmul.f32 %v637, %v2343
        %v2392 = vmul.f32 %v642, %v2343
        %v2393 = vmul.f32 %v647, %v2343
        %v2394 = vmul.f32 %v652, %v2343
        %v2395 = vmul.f32 %v657, %v2343
        %v2396 = vmul.f32 %v662, %v2343
        %v2397 = vmul.f32 %v667, %v2343
        %v2398 = vmul.f32 %v672, %v2343
        %v2399 = vmul.f32 %v677, %v2343
        %v2400 = vmul.f32 %v682, %v2343
        %v2401 = vmul.f32 %v687, %v2343
        %v2402 = vmul.f32 %v692, %v2343
        %v2403 = vmul.f32 %v697, %v2343
        %v2404 = vmul.f32 %v702, %v2343
        %v2405 = vmul.f32 %v707, %v2343
        %v2406 = vmul.f32 %v712, %v2343
        %v2407 = vmul.f32 %v717, %v2343
        %v2408 = vmul.f32 %v722, %v2343
        %v2409 = vmul.f32 %v727, %v2343
        %v2410 = vmul.f32 %v732, %v2343
        %v2411 = vmul.f32 %v737, %v2343
        %v2412 = vmul.f32 %v742, %v2343
        %v2413 = vmul.f32 %v747, %v2343
        %v2414 = vmul.f32 %v752, %v2343
        %v2415 = vmul.f32 %v757, %v2343
        %v2416 = vmul.f32 %v762, %v2343
        %v2417 = vmul.f32 %v767, %v2343
        %v2418 = vmul.f32 %v772, %v2343
        %v2419 = vmul.f32 %v777, %v2343
        %v2420 = vmul.f32 %v782, %v2343
        %v2421 = vmul.f32 %v787, %v2343
        %v2422 = vmul.f32 %v792, %v2343
        %v2423 = vmul.f32 %v797, %v2343
        %v2424 = vmul.f32 %v802, %v2343
        %v2425 = vmul.f32 %v807, %v2343
        %v2426 = vmul.f32 %v812, %v2343
        %v2427 = vmul.f32 %v817, %v2343
        %v2428 = vmul.f32 %v822, %v2343
        %v2429 = vmul.f32 %v827, %v2343
        %v2430 = vmul.f32 %v832, %v2343
        %v2431 = vmul.f32 %v837, %v2343
        %v2432 = vmul.f32 %v842, %v2343
        %v2433 = vmul.f32 %v847, %v2343
        %v2434 = vmul.f32 %v852, %v2343
        %v2435 = vmul.f32 %v857, %v2343
        %v2436 = vmul.f32 %v862, %v2343
        %v2437 = vmul.f32 %v867, %v2343
        %v2438 = vmul.f32 %v872, %v2343
        %v2439 = vmul.f32 %v877, %v2343
        %v2440 = vmul.f32 %v882, %v2343
        %v2441 = vmul.f32 %v887, %v2343
        %v2442 = vmul.f32 %v892, %v2343
        %v2443 = vmul.f32 %v897, %v2343
        %v2444 = vmul.f32 %v2323, %v2343
        %v2445 = vmul.f32 %v2328, %v2343
        %v2446 = vmul.f32 %v2333, %v2343
        %v2447 = vmul.f32 %v2338, %v2343
        %v2448 = vadd.f32 %v2215, %v2344
        %v2449 = vadd.f32 %v2216, %v2345
        %v2450 = vadd.f32 %v2217, %v2346
        %v2451 = vadd.f32 %v2218, %v2347
        %v2452 = vadd.f32 %v2219, %v2348
        %v2453 = vadd.f32 %v2220, %v2349
        %v2454 = vadd.f32 %v2221, %v2350
        %v2455 = vadd.f32 %v2222, %v2351
        %v2456 = vadd.f32 %v2223, %v2352
        %v2457 = vadd.f32 %v2224, %v2353
        %v2458 = vadd.f32 %v2225, %v2354
        %v2459 = vadd.f32 %v2226, %v2355
        %v2460 = vadd.f32 %v2227, %v2356
        %v2461 = vadd.f32 %v2228, %v2357
        %v2462 = vadd.f32 %v2229, %v2358
        %v2463 = vadd.f32 %v2230, %v2359
        %v2464 = vadd.f32 %v2231, %v2360
        %v2465 = vadd.f32 %v2232, %v2361
        %v2466 = vadd.f32 %v2233, %v2362
        %v2467 = vadd.f32 %v2234, %v2363
        %v2468 = vadd.f32 %v2235, %v2364
        %v2469 = vadd.f32 %v2236, %v2365
        %v2470 = vadd.f32 %v2237, %v2366
        %v2471 = vadd.f32 %v2238, %v2367
        %v2472 = vadd.f32 %v2239, %v2368
        %v2473 = vadd.f32 %v2240, %v2369
        %v2474 = vadd.f32 %v2241, %v2370
        %v2475 = vadd.f32 %v2242, %v2371
        %v2476 = vadd.f32 %v2243, %v2372
        %v2477 = vadd.f32 %v2244, %v2373
        %v2478 = vadd.f32 %v2245, %v2374
        %v2479 = vadd.f32 %v2246, %v2375
        %v2480 = vadd.f32 %v2247, %v2376
        %v2481 = vadd.f32 %v2248, %v2377
        %v2482 = vadd.f32 %v2249, %v2378
        %v2483 = vadd.f32 %v2250, %v2379
        %v2484 = vadd.f32 %v2251, %v2380
        %v2485 = vadd.f32 %v2252, %v2381
        %v2486 = vadd.f32 %v2253, %v2382
        %v2487 = vadd.f32 %v2254, %v2383
        %v2488 = vadd.f32 %v2255, %v2384
        %v2489 = vadd.f32 %v2256, %v2385
        %v2490 = vadd.f32 %v2257, %v2386
        %v2491 = vadd.f32 %v2258, %v2387
        %v2492 = vadd.f32 %v2259, %v2388
        %v2493 = vadd.f32 %v2260, %v2389
        %v2494 = vadd.f32 %v2261, %v2390
        %v2495 = vadd.f32 %v2262, %v2391
        %v2496 = vadd.f32 %v2263, %v2392
        %v2497 = vadd.f32 %v2264, %v2393
        %v2498 = vadd.f32 %v2265, %v2394
        %v2499 = vadd.f32 %v2266, %v2395
        %v2500 = vadd.f32 %v2267, %v2396
        %v2501 = vadd.f32 %v2268, %v2397
        %v2502 = vadd.f32 %v2269, %v2398
        %v2503 = vadd.f32 %v2270, %v2399
        %v2504 = vadd.f32 %v2271, %v2400
        %v2505 = vadd.f32 %v2272, %v2401
        %v2506 = vadd.f32 %v2273, %v2402
        %v2507 = vadd.f32 %v2274, %v2403
        %v2508 = vadd.f32 %v2275, %v2404
        %v2509 = vadd.f32 %v2276, %v2405
        %v2510 = vadd.f32 %v2277, %v2406
        %v2511 = vadd.f32 %v2278, %v2407
        %v2512 = vadd.f32 %v2279, %v2408
        %v2513 = vadd.f32 %v2280, %v2409
        %v2514 = vadd.f32 %v2281, %v2410
        %v2515 = vadd.f32 %v2282, %v2411
        %v2516 = vadd.f32 %v2283, %v2412
        %v2517 = vadd.f32 %v2284, %v2413
        %v2518 = vadd.f32 %v2285, %v2414
        %v2519 = vadd.f32 %v2286, %v2415
        %v2520 = vadd.f32 %v2287, %v2416
        %v2521 = vadd.f32 %v2288, %v2417
        %v2522 = vadd.f32 %v2289, %v2418
        %v2523 = vadd.f32 %v2290, %v2419
        %v2524 = vadd.f32 %v2291, %v2420
        %v2525 = vadd.f32 %v2292, %v2421
        %v2526 = vadd.f32 %v2293, %v2422
        %v2527 = vadd.f32 %v2294, %v2423
        %v2528 = vadd.f32 %v2295, %v2424
        %v2529 = vadd.f32 %v2296, %v2425
        %v2530 = vadd.f32 %v2297, %v2426
        %v2531 = vadd.f32 %v2298, %v2427
        %v2532 = vadd.f32 %v2299, %v2428
        %v2533 = vadd.f32 %v2300, %v2429
        %v2534 = vadd.f32 %v2301, %v2430
        %v2535 = vadd.f32 %v2302, %v2431
        %v2536 = vadd.f32 %v2303, %v2432
        %v2537 = vadd.f32 %v2304, %v2433
        %v2538 = vadd.f32 %v2305, %v2434
        %v2539 = vadd.f32 %v2306, %v2435
        %v2540 = vadd.f32 %v2307, %v2436
        %v2541 = vadd.f32 %v2308, %v2437
        %v2542 = vadd.f32 %v2309, %v2438
        %v2543 = vadd.f32 %v2310, %v2439
        %v2544 = vadd.f32 %v2311, %v2440
        %v2545 = vadd.f32 %v2312, %v2441
        %v2546 = vadd.f32 %v2313, %v2442
        %v2547 = vadd.f32 %v2314, %v2443
        %v2548 = vadd.f32 %v2315, %v2444
        %v2549 = vadd.f32 %v2316, %v2445
        %v2550 = vadd.f32 %v2317, %v2446
        %v2551 = vadd.f32 %v2318, %v2447
        %v2552 = vld [vmem:[#allocation3 + $0x4] sm:$0x1]
        %v2553 = vlaneseq
        %v2554 = vshrl.u32 %v2553, 7
        %v2555 = vsub.s32 0, %v2554
        %v2556 = vrot.slane %v2552, %v2555
        %v2557 = vmul.f32 %v402, %v2556
        %v2558 = vmul.f32 %v407, %v2556
        %v2559 = vmul.f32 %v412, %v2556
        %v2560 = vmul.f32 %v417, %v2556
        %v2561 = vmul.f32 %v422, %v2556
        %v2562 = vmul.f32 %v427, %v2556
        %v2563 = vmul.f32 %v432, %v2556
        %v2564 = vmul.f32 %v437, %v2556
        %v2565 = vmul.f32 %v442, %v2556
        %v2566 = vmul.f32 %v447, %v2556
        %v2567 = vmul.f32 %v452, %v2556
        %v2568 = vmul.f32 %v457, %v2556
        %v2569 = vmul.f32 %v462, %v2556
        %v2570 = vmul.f32 %v467, %v2556
        %v2571 = vmul.f32 %v472, %v2556
        %v2572 = vmul.f32 %v477, %v2556
        %v2573 = vmul.f32 %v482, %v2556
        %v2574 = vmul.f32 %v487, %v2556
        %v2575 = vmul.f32 %v492, %v2556
        %v2576 = vmul.f32 %v497, %v2556
        %v2577 = vmul.f32 %v502, %v2556
        %v2578 = vmul.f32 %v507, %v2556
        %v2579 = vmul.f32 %v512, %v2556
        %v2580 = vmul.f32 %v517, %v2556
        %v2581 = vmul.f32 %v522, %v2556
        %v2582 = vmul.f32 %v527, %v2556
        %v2583 = vmul.f32 %v532, %v2556
        %v2584 = vmul.f32 %v537, %v2556
        %v2585 = vmul.f32 %v542, %v2556
        %v2586 = vmul.f32 %v547, %v2556
        %v2587 = vmul.f32 %v552, %v2556
        %v2588 = vmul.f32 %v557, %v2556
        %v2589 = vmul.f32 %v562, %v2556
        %v2590 = vmul.f32 %v567, %v2556
        %v2591 = vmul.f32 %v572, %v2556
        %v2592 = vmul.f32 %v577, %v2556
        %v2593 = vmul.f32 %v582, %v2556
        %v2594 = vmul.f32 %v587, %v2556
        %v2595 = vmul.f32 %v592, %v2556
        %v2596 = vmul.f32 %v597, %v2556
        %v2597 = vmul.f32 %v602, %v2556
        %v2598 = vmul.f32 %v607, %v2556
        %v2599 = vmul.f32 %v612, %v2556
        %v2600 = vmul.f32 %v617, %v2556
        %v2601 = vmul.f32 %v622, %v2556
        %v2602 = vmul.f32 %v627, %v2556
        %v2603 = vmul.f32 %v632, %v2556
        %v2604 = vmul.f32 %v637, %v2556
        %v2605 = vmul.f32 %v642, %v2556
        %v2606 = vmul.f32 %v647, %v2556
        %v2607 = vmul.f32 %v652, %v2556
        %v2608 = vmul.f32 %v657, %v2556
        %v2609 = vmul.f32 %v662, %v2556
        %v2610 = vmul.f32 %v667, %v2556
        %v2611 = vmul.f32 %v672, %v2556
        %v2612 = vmul.f32 %v677, %v2556
        %v2613 = vmul.f32 %v682, %v2556
        %v2614 = vmul.f32 %v687, %v2556
        %v2615 = vmul.f32 %v692, %v2556
        %v2616 = vmul.f32 %v697, %v2556
        %v2617 = vmul.f32 %v702, %v2556
        %v2618 = vmul.f32 %v707, %v2556
        %v2619 = vmul.f32 %v712, %v2556
        %v2620 = vmul.f32 %v717, %v2556
        %v2621 = vmul.f32 %v722, %v2556
        %v2622 = vmul.f32 %v727, %v2556
        %v2623 = vmul.f32 %v732, %v2556
        %v2624 = vmul.f32 %v737, %v2556
        %v2625 = vmul.f32 %v742, %v2556
        %v2626 = vmul.f32 %v747, %v2556
        %v2627 = vmul.f32 %v752, %v2556
        %v2628 = vmul.f32 %v757, %v2556
        %v2629 = vmul.f32 %v762, %v2556
        %v2630 = vmul.f32 %v767, %v2556
        %v2631 = vmul.f32 %v772, %v2556
        %v2632 = vmul.f32 %v777, %v2556
        %v2633 = vmul.f32 %v782, %v2556
        %v2634 = vmul.f32 %v787, %v2556
        %v2635 = vmul.f32 %v792, %v2556
        %v2636 = vmul.f32 %v797, %v2556
        %v2637 = vmul.f32 %v802, %v2556
        %v2638 = vmul.f32 %v807, %v2556
        %v2639 = vmul.f32 %v812, %v2556
        %v2640 = vmul.f32 %v817, %v2556
        %v2641 = vmul.f32 %v822, %v2556
        %v2642 = vmul.f32 %v827, %v2556
        %v2643 = vmul.f32 %v832, %v2556
        %v2644 = vmul.f32 %v837, %v2556
        %v2645 = vmul.f32 %v842, %v2556
        %v2646 = vmul.f32 %v847, %v2556
        %v2647 = vmul.f32 %v852, %v2556
        %v2648 = vmul.f32 %v857, %v2556
        %v2649 = vmul.f32 %v862, %v2556
        %v2650 = vmul.f32 %v867, %v2556
        %v2651 = vmul.f32 %v872, %v2556
        %v2652 = vmul.f32 %v877, %v2556
        %v2653 = vmul.f32 %v882, %v2556
        %v2654 = vmul.f32 %v887, %v2556
        %v2655 = vmul.f32 %v892, %v2556
        %v2656 = vmul.f32 %v897, %v2556
        %v2657 = vmul.f32 %v2323, %v2556
        %v2658 = vmul.f32 %v2328, %v2556
        %v2659 = vmul.f32 %v2333, %v2556
        %v2660 = vmul.f32 %v2338, %v2556
        %v2765 = vrot.slane %v2557, 1
        %v2766 = vrot.slane %v2558, 1
        %v2767 = vsel %vm1324, %v2765, %v2766
        %v2768 = vrot.slane %v2559, 1
        %v2769 = vsel %vm1324, %v2766, %v2768
        %v2770 = vrot.slane %v2560, 1
        %v2771 = vsel %vm1324, %v2768, %v2770
        %v2772 = vrot.slane %v2561, 1
        %v2773 = vrot.slane %v2562, 1
        %v2774 = vsel %vm1324, %v2772, %v2773
        %v2775 = vrot.slane %v2563, 1
        %v2776 = vsel %vm1324, %v2773, %v2775
        %v2777 = vrot.slane %v2564, 1
        %v2778 = vsel %vm1324, %v2775, %v2777
        %v2779 = vrot.slane %v2565, 1
        %v2780 = vrot.slane %v2566, 1
        %v2781 = vsel %vm1324, %v2779, %v2780
        %v2782 = vrot.slane %v2567, 1
        %v2783 = vsel %vm1324, %v2780, %v2782
        %v2784 = vrot.slane %v2568, 1
        %v2785 = vsel %vm1324, %v2782, %v2784
        %v2786 = vrot.slane %v2569, 1
        %v2787 = vrot.slane %v2570, 1
        %v2788 = vsel %vm1324, %v2786, %v2787
        %v2789 = vrot.slane %v2571, 1
        %v2790 = vsel %vm1324, %v2787, %v2789
        %v2791 = vrot.slane %v2572, 1
        %v2792 = vsel %vm1324, %v2789, %v2791
        %v2793 = vrot.slane %v2573, 1
        %v2794 = vrot.slane %v2574, 1
        %v2795 = vsel %vm1324, %v2793, %v2794
        %v2796 = vrot.slane %v2575, 1
        %v2797 = vsel %vm1324, %v2794, %v2796
        %v2798 = vrot.slane %v2576, 1
        %v2799 = vsel %vm1324, %v2796, %v2798
        %v2800 = vrot.slane %v2577, 1
        %v2801 = vrot.slane %v2578, 1
        %v2802 = vsel %vm1324, %v2800, %v2801
        %v2803 = vrot.slane %v2579, 1
        %v2804 = vsel %vm1324, %v2801, %v2803
        %v2805 = vrot.slane %v2580, 1
        %v2806 = vsel %vm1324, %v2803, %v2805
        %v2807 = vrot.slane %v2581, 1
        %v2808 = vrot.slane %v2582, 1
        %v2809 = vsel %vm1324, %v2807, %v2808
        %v2810 = vrot.slane %v2583, 1
        %v2811 = vsel %vm1324, %v2808, %v2810
        %v2812 = vrot.slane %v2584, 1
        %v2813 = vsel %vm1324, %v2810, %v2812
        %v2814 = vrot.slane %v2585, 1
        %v2815 = vrot.slane %v2586, 1
        %v2816 = vsel %vm1324, %v2814, %v2815
        %v2817 = vrot.slane %v2587, 1
        %v2818 = vsel %vm1324, %v2815, %v2817
        %v2819 = vrot.slane %v2588, 1
        %v2820 = vsel %vm1324, %v2817, %v2819
        %v2821 = vrot.slane %v2589, 1
        %v2822 = vrot.slane %v2590, 1
        %v2823 = vsel %vm1324, %v2821, %v2822
        %v2824 = vrot.slane %v2591, 1
        %v2825 = vsel %vm1324, %v2822, %v2824
        %v2826 = vrot.slane %v2592, 1
        %v2827 = vsel %vm1324, %v2824, %v2826
        %v2828 = vrot.slane %v2593, 1
        %v2829 = vrot.slane %v2594, 1
        %v2830 = vsel %vm1324, %v2828, %v2829
        %v2831 = vrot.slane %v2595, 1
        %v2832 = vsel %vm1324, %v2829, %v2831
        %v2833 = vrot.slane %v2596, 1
        %v2834 = vsel %vm1324, %v2831, %v2833
        %v2835 = vrot.slane %v2597, 1
        %v2836 = vrot.slane %v2598, 1
        %v2837 = vsel %vm1324, %v2835, %v2836
        %v2838 = vrot.slane %v2599, 1
        %v2839 = vsel %vm1324, %v2836, %v2838
        %v2840 = vrot.slane %v2600, 1
        %v2841 = vsel %vm1324, %v2838, %v2840
        %v2842 = vrot.slane %v2601, 1
        %v2843 = vrot.slane %v2602, 1
        %v2844 = vsel %vm1324, %v2842, %v2843
        %v2845 = vrot.slane %v2603, 1
        %v2846 = vsel %vm1324, %v2843, %v2845
        %v2847 = vrot.slane %v2604, 1
        %v2848 = vsel %vm1324, %v2845, %v2847
        %v2849 = vrot.slane %v2605, 1
        %v2850 = vrot.slane %v2606, 1
        %v2851 = vsel %vm1324, %v2849, %v2850
        %v2852 = vrot.slane %v2607, 1
        %v2853 = vsel %vm1324, %v2850, %v2852
        %v2854 = vrot.slane %v2608, 1
        %v2855 = vsel %vm1324, %v2852, %v2854
        %v2856 = vrot.slane %v2609, 1
        %v2857 = vrot.slane %v2610, 1
        %v2858 = vsel %vm1324, %v2856, %v2857
        %v2859 = vrot.slane %v2611, 1
        %v2860 = vsel %vm1324, %v2857, %v2859
        %v2861 = vrot.slane %v2612, 1
        %v2862 = vsel %vm1324, %v2859, %v2861
        %v2863 = vrot.slane %v2613, 1
        %v2864 = vrot.slane %v2614, 1
        %v2865 = vsel %vm1324, %v2863, %v2864
        %v2866 = vrot.slane %v2615, 1
        %v2867 = vsel %vm1324, %v2864, %v2866
        %v2868 = vrot.slane %v2616, 1
        %v2869 = vsel %vm1324, %v2866, %v2868
        %v2870 = vrot.slane %v2617, 1
        %v2871 = vrot.slane %v2618, 1
        %v2872 = vsel %vm1324, %v2870, %v2871
        %v2873 = vrot.slane %v2619, 1
        %v2874 = vsel %vm1324, %v2871, %v2873
        %v2875 = vrot.slane %v2620, 1
        %v2876 = vsel %vm1324, %v2873, %v2875
        %v2877 = vrot.slane %v2621, 1
        %v2878 = vrot.slane %v2622, 1
        %v2879 = vsel %vm1324, %v2877, %v2878
        %v2880 = vrot.slane %v2623, 1
        %v2881 = vsel %vm1324, %v2878, %v2880
        %v2882 = vrot.slane %v2624, 1
        %v2883 = vsel %vm1324, %v2880, %v2882
        %v2884 = vrot.slane %v2625, 1
        %v2885 = vrot.slane %v2626, 1
        %v2886 = vsel %vm1324, %v2884, %v2885
        %v2887 = vrot.slane %v2627, 1
        %v2888 = vsel %vm1324, %v2885, %v2887
        %v2889 = vrot.slane %v2628, 1
        %v2890 = vsel %vm1324, %v2887, %v2889
        %v2891 = vrot.slane %v2629, 1
        %v2892 = vrot.slane %v2630, 1
        %v2893 = vsel %vm1324, %v2891, %v2892
        %v2894 = vrot.slane %v2631, 1
        %v2895 = vsel %vm1324, %v2892, %v2894
        %v2896 = vrot.slane %v2632, 1
        %v2897 = vsel %vm1324, %v2894, %v2896
        %v2898 = vrot.slane %v2633, 1
        %v2899 = vrot.slane %v2634, 1
        %v2900 = vsel %vm1324, %v2898, %v2899
        %v2901 = vrot.slane %v2635, 1
        %v2902 = vsel %vm1324, %v2899, %v2901
        %v2903 = vrot.slane %v2636, 1
        %v2904 = vsel %vm1324, %v2901, %v2903
        %v2905 = vrot.slane %v2637, 1
        %v2906 = vrot.slane %v2638, 1
        %v2907 = vsel %vm1324, %v2905, %v2906
        %v2908 = vrot.slane %v2639, 1
        %v2909 = vsel %vm1324, %v2906, %v2908
        %v2910 = vrot.slane %v2640, 1
        %v2911 = vsel %vm1324, %v2908, %v2910
        %v2912 = vrot.slane %v2641, 1
        %v2913 = vrot.slane %v2642, 1
        %v2914 = vsel %vm1324, %v2912, %v2913
        %v2915 = vrot.slane %v2643, 1
        %v2916 = vsel %vm1324, %v2913, %v2915
        %v2917 = vrot.slane %v2644, 1
        %v2918 = vsel %vm1324, %v2915, %v2917
        %v2919 = vrot.slane %v2645, 1
        %v2920 = vrot.slane %v2646, 1
        %v2921 = vsel %vm1324, %v2919, %v2920
        %v2922 = vrot.slane %v2647, 1
        %v2923 = vsel %vm1324, %v2920, %v2922
        %v2924 = vrot.slane %v2648, 1
        %v2925 = vsel %vm1324, %v2922, %v2924
        %v2926 = vrot.slane %v2649, 1
        %v2927 = vrot.slane %v2650, 1
        %v2928 = vsel %vm1324, %v2926, %v2927
        %v2929 = vrot.slane %v2651, 1
        %v2930 = vsel %vm1324, %v2927, %v2929
        %v2931 = vrot.slane %v2652, 1
        %v2932 = vsel %vm1324, %v2929, %v2931
        %v2933 = vrot.slane %v2653, 1
        %v2934 = vrot.slane %v2654, 1
        %v2935 = vsel %vm1324, %v2933, %v2934
        %v2936 = vrot.slane %v2655, 1
        %v2937 = vsel %vm1324, %v2934, %v2936
        %v2938 = vrot.slane %v2656, 1
        %v2939 = vsel %vm1324, %v2936, %v2938
        %v2940 = vrot.slane %v2657, 1
        %v2941 = vrot.slane %v2658, 1
        %v2942 = vsel %vm1324, %v2940, %v2941
        %v2943 = vrot.slane %v2659, 1
        %v2944 = vsel %vm1324, %v2941, %v2943
        %v2945 = vrot.slane %v2660, 1
        %v2946 = vsel %vm1324, %v2943, %v2945
        %v3051 = vadd.f32 %v2448, %v2767
        %v3052 = vadd.f32 %v2449, %v2769
        %v3053 = vadd.f32 %v2450, %v2771
        %v3054 = vadd.f32 %v2451, %v2770
        %v3055 = vadd.f32 %v2452, %v2774
        %v3056 = vadd.f32 %v2453, %v2776
        %v3057 = vadd.f32 %v2454, %v2778
        %v3058 = vadd.f32 %v2455, %v2777
        %v3059 = vadd.f32 %v2456, %v2781
        %v3060 = vadd.f32 %v2457, %v2783
        %v3061 = vadd.f32 %v2458, %v2785
        %v3062 = vadd.f32 %v2459, %v2784
        %v3063 = vadd.f32 %v2460, %v2788
        %v3064 = vadd.f32 %v2461, %v2790
        %v3065 = vadd.f32 %v2462, %v2792
        %v3066 = vadd.f32 %v2463, %v2791
        %v3067 = vadd.f32 %v2464, %v2795
        %v3068 = vadd.f32 %v2465, %v2797
        %v3069 = vadd.f32 %v2466, %v2799
        %v3070 = vadd.f32 %v2467, %v2798
        %v3071 = vadd.f32 %v2468, %v2802
        %v3072 = vadd.f32 %v2469, %v2804
        %v3073 = vadd.f32 %v2470, %v2806
        %v3074 = vadd.f32 %v2471, %v2805
        %v3075 = vadd.f32 %v2472, %v2809
        %v3076 = vadd.f32 %v2473, %v2811
        %v3077 = vadd.f32 %v2474, %v2813
        %v3078 = vadd.f32 %v2475, %v2812
        %v3079 = vadd.f32 %v2476, %v2816
        %v3080 = vadd.f32 %v2477, %v2818
        %v3081 = vadd.f32 %v2478, %v2820
        %v3082 = vadd.f32 %v2479, %v2819
        %v3083 = vadd.f32 %v2480, %v2823
        %v3084 = vadd.f32 %v2481, %v2825
        %v3085 = vadd.f32 %v2482, %v2827
        %v3086 = vadd.f32 %v2483, %v2826
        %v3087 = vadd.f32 %v2484, %v2830
        %v3088 = vadd.f32 %v2485, %v2832
        %v3089 = vadd.f32 %v2486, %v2834
        %v3090 = vadd.f32 %v2487, %v2833
        %v3091 = vadd.f32 %v2488, %v2837
        %v3092 = vadd.f32 %v2489, %v2839
        %v3093 = vadd.f32 %v2490, %v2841
        %v3094 = vadd.f32 %v2491, %v2840
        %v3095 = vadd.f32 %v2492, %v2844
        %v3096 = vadd.f32 %v2493, %v2846
        %v3097 = vadd.f32 %v2494, %v2848
        %v3098 = vadd.f32 %v2495, %v2847
        %v3099 = vadd.f32 %v2496, %v2851
        %v3100 = vadd.f32 %v2497, %v2853
        %v3101 = vadd.f32 %v2498, %v2855
        %v3102 = vadd.f32 %v2499, %v2854
        %v3103 = vadd.f32 %v2500, %v2858
        %v3104 = vadd.f32 %v2501, %v2860
        %v3105 = vadd.f32 %v2502, %v2862
        %v3106 = vadd.f32 %v2503, %v2861
        %v3107 = vadd.f32 %v2504, %v2865
        %v3108 = vadd.f32 %v2505, %v2867
        %v3109 = vadd.f32 %v2506, %v2869
        %v3110 = vadd.f32 %v2507, %v2868
        %v3111 = vadd.f32 %v2508, %v2872
        %v3112 = vadd.f32 %v2509, %v2874
        %v3113 = vadd.f32 %v2510, %v2876
        %v3114 = vadd.f32 %v2511, %v2875
        %v3115 = vadd.f32 %v2512, %v2879
        %v3116 = vadd.f32 %v2513, %v2881
        %v3117 = vadd.f32 %v2514, %v2883
        %v3118 = vadd.f32 %v2515, %v2882
        %v3119 = vadd.f32 %v2516, %v2886
        %v3120 = vadd.f32 %v2517, %v2888
        %v3121 = vadd.f32 %v2518, %v2890
        %v3122 = vadd.f32 %v2519, %v2889
        %v3123 = vadd.f32 %v2520, %v2893
        %v3124 = vadd.f32 %v2521, %v2895
        %v3125 = vadd.f32 %v2522, %v2897
        %v3126 = vadd.f32 %v2523, %v2896
        %v3127 = vadd.f32 %v2524, %v2900
        %v3128 = vadd.f32 %v2525, %v2902
        %v3129 = vadd.f32 %v2526, %v2904
        %v3130 = vadd.f32 %v2527, %v2903
        %v3131 = vadd.f32 %v2528, %v2907
        %v3132 = vadd.f32 %v2529, %v2909
        %v3133 = vadd.f32 %v2530, %v2911
        %v3134 = vadd.f32 %v2531, %v2910
        %v3135 = vadd.f32 %v2532, %v2914
        %v3136 = vadd.f32 %v2533, %v2916
        %v3137 = vadd.f32 %v2534, %v2918
        %v3138 = vadd.f32 %v2535, %v2917
        %v3139 = vadd.f32 %v2536, %v2921
        %v3140 = vadd.f32 %v2537, %v2923
        %v3141 = vadd.f32 %v2538, %v2925
        %v3142 = vadd.f32 %v2539, %v2924
        %v3143 = vadd.f32 %v2540, %v2928
        %v3144 = vadd.f32 %v2541, %v2930
        %v3145 = vadd.f32 %v2542, %v2932
        %v3146 = vadd.f32 %v2543, %v2931
        %v3147 = vadd.f32 %v2544, %v2935
        %v3148 = vadd.f32 %v2545, %v2937
        %v3149 = vadd.f32 %v2546, %v2939
        %v3150 = vadd.f32 %v2547, %v2938
        %v3151 = vadd.f32 %v2548, %v2942
        %v3152 = vadd.f32 %v2549, %v2944
        %v3153 = vadd.f32 %v2550, %v2946
        %v3154 = vadd.f32 %v2551, %v2945
        %v3155 = vld [vmem:[#allocation3 + $0x5] sm:$0x1]
        %v3156 = vlaneseq
        %v3157 = vshrl.u32 %v3156, 7
        %v3158 = vsub.s32 0, %v3157
        %v3159 = vrot.slane %v3155, %v3158
        %v3160 = vmul.f32 %v402, %v3159
        %v3161 = vmul.f32 %v407, %v3159
        %v3162 = vmul.f32 %v412, %v3159
        %v3163 = vmul.f32 %v417, %v3159
        %v3164 = vmul.f32 %v422, %v3159
        %v3165 = vmul.f32 %v427, %v3159
        %v3166 = vmul.f32 %v432, %v3159
        %v3167 = vmul.f32 %v437, %v3159
        %v3168 = vmul.f32 %v442, %v3159
        %v3169 = vmul.f32 %v447, %v3159
        %v3170 = vmul.f32 %v452, %v3159
        %v3171 = vmul.f32 %v457, %v3159
        %v3172 = vmul.f32 %v462, %v3159
        %v3173 = vmul.f32 %v467, %v3159
        %v3174 = vmul.f32 %v472, %v3159
        %v3175 = vmul.f32 %v477, %v3159
        %v3176 = vmul.f32 %v482, %v3159
        %v3177 = vmul.f32 %v487, %v3159
        %v3178 = vmul.f32 %v492, %v3159
        %v3179 = vmul.f32 %v497, %v3159
        %v3180 = vmul.f32 %v502, %v3159
        %v3181 = vmul.f32 %v507, %v3159
        %v3182 = vmul.f32 %v512, %v3159
        %v3183 = vmul.f32 %v517, %v3159
        %v3184 = vmul.f32 %v522, %v3159
        %v3185 = vmul.f32 %v527, %v3159
        %v3186 = vmul.f32 %v532, %v3159
        %v3187 = vmul.f32 %v537, %v3159
        %v3188 = vmul.f32 %v542, %v3159
        %v3189 = vmul.f32 %v547, %v3159
        %v3190 = vmul.f32 %v552, %v3159
        %v3191 = vmul.f32 %v557, %v3159
        %v3192 = vmul.f32 %v562, %v3159
        %v3193 = vmul.f32 %v567, %v3159
        %v3194 = vmul.f32 %v572, %v3159
        %v3195 = vmul.f32 %v577, %v3159
        %v3196 = vmul.f32 %v582, %v3159
        %v3197 = vmul.f32 %v587, %v3159
        %v3198 = vmul.f32 %v592, %v3159
        %v3199 = vmul.f32 %v597, %v3159
        %v3200 = vmul.f32 %v602, %v3159
        %v3201 = vmul.f32 %v607, %v3159
        %v3202 = vmul.f32 %v612, %v3159
        %v3203 = vmul.f32 %v617, %v3159
        %v3204 = vmul.f32 %v622, %v3159
        %v3205 = vmul.f32 %v627, %v3159
        %v3206 = vmul.f32 %v632, %v3159
        %v3207 = vmul.f32 %v637, %v3159
        %v3208 = vmul.f32 %v642, %v3159
        %v3209 = vmul.f32 %v647, %v3159
        %v3210 = vmul.f32 %v652, %v3159
        %v3211 = vmul.f32 %v657, %v3159
        %v3212 = vmul.f32 %v662, %v3159
        %v3213 = vmul.f32 %v667, %v3159
        %v3214 = vmul.f32 %v672, %v3159
        %v3215 = vmul.f32 %v677, %v3159
        %v3216 = vmul.f32 %v682, %v3159
        %v3217 = vmul.f32 %v687, %v3159
        %v3218 = vmul.f32 %v692, %v3159
        %v3219 = vmul.f32 %v697, %v3159
        %v3220 = vmul.f32 %v702, %v3159
        %v3221 = vmul.f32 %v707, %v3159
        %v3222 = vmul.f32 %v712, %v3159
        %v3223 = vmul.f32 %v717, %v3159
        %v3224 = vmul.f32 %v722, %v3159
        %v3225 = vmul.f32 %v727, %v3159
        %v3226 = vmul.f32 %v732, %v3159
        %v3227 = vmul.f32 %v737, %v3159
        %v3228 = vmul.f32 %v742, %v3159
        %v3229 = vmul.f32 %v747, %v3159
        %v3230 = vmul.f32 %v752, %v3159
        %v3231 = vmul.f32 %v757, %v3159
        %v3232 = vmul.f32 %v762, %v3159
        %v3233 = vmul.f32 %v767, %v3159
        %v3234 = vmul.f32 %v772, %v3159
        %v3235 = vmul.f32 %v777, %v3159
        %v3236 = vmul.f32 %v782, %v3159
        %v3237 = vmul.f32 %v787, %v3159
        %v3238 = vmul.f32 %v792, %v3159
        %v3239 = vmul.f32 %v797, %v3159
        %v3240 = vmul.f32 %v802, %v3159
        %v3241 = vmul.f32 %v807, %v3159
        %v3242 = vmul.f32 %v812, %v3159
        %v3243 = vmul.f32 %v817, %v3159
        %v3244 = vmul.f32 %v822, %v3159
        %v3245 = vmul.f32 %v827, %v3159
        %v3246 = vmul.f32 %v832, %v3159
        %v3247 = vmul.f32 %v837, %v3159
        %v3248 = vmul.f32 %v842, %v3159
        %v3249 = vmul.f32 %v847, %v3159
        %v3250 = vmul.f32 %v852, %v3159
        %v3251 = vmul.f32 %v857, %v3159
        %v3252 = vmul.f32 %v862, %v3159
        %v3253 = vmul.f32 %v867, %v3159
        %v3254 = vmul.f32 %v872, %v3159
        %v3255 = vmul.f32 %v877, %v3159
        %v3256 = vmul.f32 %v882, %v3159
        %v3257 = vmul.f32 %v887, %v3159
        %v3258 = vmul.f32 %v892, %v3159
        %v3259 = vmul.f32 %v897, %v3159
        %v3260 = vmul.f32 %v2323, %v3159
        %v3261 = vmul.f32 %v2328, %v3159
        %v3262 = vmul.f32 %v2333, %v3159
        %v3263 = vmul.f32 %v2338, %v3159
        %v3368 = vrot.slane %v3160, 2
        %v3369 = vrot.slane %v3161, 2
        %v3370 = vsel %vm1928, %v3368, %v3369
        %v3371 = vrot.slane %v3162, 2
        %v3372 = vsel %vm1928, %v3369, %v3371
        %v3373 = vrot.slane %v3163, 2
        %v3374 = vsel %vm1928, %v3371, %v3373
        %v3375 = vrot.slane %v3164, 2
        %v3376 = vrot.slane %v3165, 2
        %v3377 = vsel %vm1928, %v3375, %v3376
        %v3378 = vrot.slane %v3166, 2
        %v3379 = vsel %vm1928, %v3376, %v3378
        %v3380 = vrot.slane %v3167, 2
        %v3381 = vsel %vm1928, %v3378, %v3380
        %v3382 = vrot.slane %v3168, 2
        %v3383 = vrot.slane %v3169, 2
        %v3384 = vsel %vm1928, %v3382, %v3383
        %v3385 = vrot.slane %v3170, 2
        %v3386 = vsel %vm1928, %v3383, %v3385
        %v3387 = vrot.slane %v3171, 2
        %v3388 = vsel %vm1928, %v3385, %v3387
        %v3389 = vrot.slane %v3172, 2
        %v3390 = vrot.slane %v3173, 2
        %v3391 = vsel %vm1928, %v3389, %v3390
        %v3392 = vrot.slane %v3174, 2
        %v3393 = vsel %vm1928, %v3390, %v3392
        %v3394 = vrot.slane %v3175, 2
        %v3395 = vsel %vm1928, %v3392, %v3394
        %v3396 = vrot.slane %v3176, 2
        %v3397 = vrot.slane %v3177, 2
        %v3398 = vsel %vm1928, %v3396, %v3397
        %v3399 = vrot.slane %v3178, 2
        %v3400 = vsel %vm1928, %v3397, %v3399
        %v3401 = vrot.slane %v3179, 2
        %v3402 = vsel %vm1928, %v3399, %v3401
        %v3403 = vrot.slane %v3180, 2
        %v3404 = vrot.slane %v3181, 2
        %v3405 = vsel %vm1928, %v3403, %v3404
        %v3406 = vrot.slane %v3182, 2
        %v3407 = vsel %vm1928, %v3404, %v3406
        %v3408 = vrot.slane %v3183, 2
        %v3409 = vsel %vm1928, %v3406, %v3408
        %v3410 = vrot.slane %v3184, 2
        %v3411 = vrot.slane %v3185, 2
        %v3412 = vsel %vm1928, %v3410, %v3411
        %v3413 = vrot.slane %v3186, 2
        %v3414 = vsel %vm1928, %v3411, %v3413
        %v3415 = vrot.slane %v3187, 2
        %v3416 = vsel %vm1928, %v3413, %v3415
        %v3417 = vrot.slane %v3188, 2
        %v3418 = vrot.slane %v3189, 2
        %v3419 = vsel %vm1928, %v3417, %v3418
        %v3420 = vrot.slane %v3190, 2
        %v3421 = vsel %vm1928, %v3418, %v3420
        %v3422 = vrot.slane %v3191, 2
        %v3423 = vsel %vm1928, %v3420, %v3422
        %v3424 = vrot.slane %v3192, 2
        %v3425 = vrot.slane %v3193, 2
        %v3426 = vsel %vm1928, %v3424, %v3425
        %v3427 = vrot.slane %v3194, 2
        %v3428 = vsel %vm1928, %v3425, %v3427
        %v3429 = vrot.slane %v3195, 2
        %v3430 = vsel %vm1928, %v3427, %v3429
        %v3431 = vrot.slane %v3196, 2
        %v3432 = vrot.slane %v3197, 2
        %v3433 = vsel %vm1928, %v3431, %v3432
        %v3434 = vrot.slane %v3198, 2
        %v3435 = vsel %vm1928, %v3432, %v3434
        %v3436 = vrot.slane %v3199, 2
        %v3437 = vsel %vm1928, %v3434, %v3436
        %v3438 = vrot.slane %v3200, 2
        %v3439 = vrot.slane %v3201, 2
        %v3440 = vsel %vm1928, %v3438, %v3439
        %v3441 = vrot.slane %v3202, 2
        %v3442 = vsel %vm1928, %v3439, %v3441
        %v3443 = vrot.slane %v3203, 2
        %v3444 = vsel %vm1928, %v3441, %v3443
        %v3445 = vrot.slane %v3204, 2
        %v3446 = vrot.slane %v3205, 2
        %v3447 = vsel %vm1928, %v3445, %v3446
        %v3448 = vrot.slane %v3206, 2
        %v3449 = vsel %vm1928, %v3446, %v3448
        %v3450 = vrot.slane %v3207, 2
        %v3451 = vsel %vm1928, %v3448, %v3450
        %v3452 = vrot.slane %v3208, 2
        %v3453 = vrot.slane %v3209, 2
        %v3454 = vsel %vm1928, %v3452, %v3453
        %v3455 = vrot.slane %v3210, 2
        %v3456 = vsel %vm1928, %v3453, %v3455
        %v3457 = vrot.slane %v3211, 2
        %v3458 = vsel %vm1928, %v3455, %v3457
        %v3459 = vrot.slane %v3212, 2
        %v3460 = vrot.slane %v3213, 2
        %v3461 = vsel %vm1928, %v3459, %v3460
        %v3462 = vrot.slane %v3214, 2
        %v3463 = vsel %vm1928, %v3460, %v3462
        %v3464 = vrot.slane %v3215, 2
        %v3465 = vsel %vm1928, %v3462, %v3464
        %v3466 = vrot.slane %v3216, 2
        %v3467 = vrot.slane %v3217, 2
        %v3468 = vsel %vm1928, %v3466, %v3467
        %v3469 = vrot.slane %v3218, 2
        %v3470 = vsel %vm1928, %v3467, %v3469
        %v3471 = vrot.slane %v3219, 2
        %v3472 = vsel %vm1928, %v3469, %v3471
        %v3473 = vrot.slane %v3220, 2
        %v3474 = vrot.slane %v3221, 2
        %v3475 = vsel %vm1928, %v3473, %v3474
        %v3476 = vrot.slane %v3222, 2
        %v3477 = vsel %vm1928, %v3474, %v3476
        %v3478 = vrot.slane %v3223, 2
        %v3479 = vsel %vm1928, %v3476, %v3478
        %v3480 = vrot.slane %v3224, 2
        %v3481 = vrot.slane %v3225, 2
        %v3482 = vsel %vm1928, %v3480, %v3481
        %v3483 = vrot.slane %v3226, 2
        %v3484 = vsel %vm1928, %v3481, %v3483
        %v3485 = vrot.slane %v3227, 2
        %v3486 = vsel %vm1928, %v3483, %v3485
        %v3487 = vrot.slane %v3228, 2
        %v3488 = vrot.slane %v3229, 2
        %v3489 = vsel %vm1928, %v3487, %v3488
        %v3490 = vrot.slane %v3230, 2
        %v3491 = vsel %vm1928, %v3488, %v3490
        %v3492 = vrot.slane %v3231, 2
        %v3493 = vsel %vm1928, %v3490, %v3492
        %v3494 = vrot.slane %v3232, 2
        %v3495 = vrot.slane %v3233, 2
        %v3496 = vsel %vm1928, %v3494, %v3495
        %v3497 = vrot.slane %v3234, 2
        %v3498 = vsel %vm1928, %v3495, %v3497
        %v3499 = vrot.slane %v3235, 2
        %v3500 = vsel %vm1928, %v3497, %v3499
        %v3501 = vrot.slane %v3236, 2
        %v3502 = vrot.slane %v3237, 2
        %v3503 = vsel %vm1928, %v3501, %v3502
        %v3504 = vrot.slane %v3238, 2
        %v3505 = vsel %vm1928, %v3502, %v3504
        %v3506 = vrot.slane %v3239, 2
        %v3507 = vsel %vm1928, %v3504, %v3506
        %v3508 = vrot.slane %v3240, 2
        %v3509 = vrot.slane %v3241, 2
        %v3510 = vsel %vm1928, %v3508, %v3509
        %v3511 = vrot.slane %v3242, 2
        %v3512 = vsel %vm1928, %v3509, %v3511
        %v3513 = vrot.slane %v3243, 2
        %v3514 = vsel %vm1928, %v3511, %v3513
        %v3515 = vrot.slane %v3244, 2
        %v3516 = vrot.slane %v3245, 2
        %v3517 = vsel %vm1928, %v3515, %v3516
        %v3518 = vrot.slane %v3246, 2
        %v3519 = vsel %vm1928, %v3516, %v3518
        %v3520 = vrot.slane %v3247, 2
        %v3521 = vsel %vm1928, %v3518, %v3520
        %v3522 = vrot.slane %v3248, 2
        %v3523 = vrot.slane %v3249, 2
        %v3524 = vsel %vm1928, %v3522, %v3523
        %v3525 = vrot.slane %v3250, 2
        %v3526 = vsel %vm1928, %v3523, %v3525
        %v3527 = vrot.slane %v3251, 2
        %v3528 = vsel %vm1928, %v3525, %v3527
        %v3529 = vrot.slane %v3252, 2
        %v3530 = vrot.slane %v3253, 2
        %v3531 = vsel %vm1928, %v3529, %v3530
        %v3532 = vrot.slane %v3254, 2
        %v3533 = vsel %vm1928, %v3530, %v3532
        %v3534 = vrot.slane %v3255, 2
        %v3535 = vsel %vm1928, %v3532, %v3534
        %v3536 = vrot.slane %v3256, 2
        %v3537 = vrot.slane %v3257, 2
        %v3538 = vsel %vm1928, %v3536, %v3537
        %v3539 = vrot.slane %v3258, 2
        %v3540 = vsel %vm1928, %v3537, %v3539
        %v3541 = vrot.slane %v3259, 2
        %v3542 = vsel %vm1928, %v3539, %v3541
        %v3543 = vrot.slane %v3260, 2
        %v3544 = vrot.slane %v3261, 2
        %v3545 = vsel %vm1928, %v3543, %v3544
        %v3546 = vrot.slane %v3262, 2
        %v3547 = vsel %vm1928, %v3544, %v3546
        %v3548 = vrot.slane %v3263, 2
        %v3549 = vsel %vm1928, %v3546, %v3548
        %v3654 = vadd.f32 %v3051, %v3370
        %v3655 = vadd.f32 %v3052, %v3372
        %v3656 = vadd.f32 %v3053, %v3374
        %v3657 = vadd.f32 %v3054, %v3373
        %v3658 = vadd.f32 %v3055, %v3377
        %v3659 = vadd.f32 %v3056, %v3379
        %v3660 = vadd.f32 %v3057, %v3381
        %v3661 = vadd.f32 %v3058, %v3380
        %v3662 = vadd.f32 %v3059, %v3384
        %v3663 = vadd.f32 %v3060, %v3386
        %v3664 = vadd.f32 %v3061, %v3388
        %v3665 = vadd.f32 %v3062, %v3387
        %v3666 = vadd.f32 %v3063, %v3391
        %v3667 = vadd.f32 %v3064, %v3393
        %v3668 = vadd.f32 %v3065, %v3395
        %v3669 = vadd.f32 %v3066, %v3394
        %v3670 = vadd.f32 %v3067, %v3398
        %v3671 = vadd.f32 %v3068, %v3400
        %v3672 = vadd.f32 %v3069, %v3402
        %v3673 = vadd.f32 %v3070, %v3401
        %v3674 = vadd.f32 %v3071, %v3405
        %v3675 = vadd.f32 %v3072, %v3407
        %v3676 = vadd.f32 %v3073, %v3409
        %v3677 = vadd.f32 %v3074, %v3408
        %v3678 = vadd.f32 %v3075, %v3412
        %v3679 = vadd.f32 %v3076, %v3414
        %v3680 = vadd.f32 %v3077, %v3416
        %v3681 = vadd.f32 %v3078, %v3415
        %v3682 = vadd.f32 %v3079, %v3419
        %v3683 = vadd.f32 %v3080, %v3421
        %v3684 = vadd.f32 %v3081, %v3423
        %v3685 = vadd.f32 %v3082, %v3422
        %v3686 = vadd.f32 %v3083, %v3426
        %v3687 = vadd.f32 %v3084, %v3428
        %v3688 = vadd.f32 %v3085, %v3430
        %v3689 = vadd.f32 %v3086, %v3429
        %v3690 = vadd.f32 %v3087, %v3433
        %v3691 = vadd.f32 %v3088, %v3435
        %v3692 = vadd.f32 %v3089, %v3437
        %v3693 = vadd.f32 %v3090, %v3436
        %v3694 = vadd.f32 %v3091, %v3440
        %v3695 = vadd.f32 %v3092, %v3442
        %v3696 = vadd.f32 %v3093, %v3444
        %v3697 = vadd.f32 %v3094, %v3443
        %v3698 = vadd.f32 %v3095, %v3447
        %v3699 = vadd.f32 %v3096, %v3449
        %v3700 = vadd.f32 %v3097, %v3451
        %v3701 = vadd.f32 %v3098, %v3450
        %v3702 = vadd.f32 %v3099, %v3454
        %v3703 = vadd.f32 %v3100, %v3456
        %v3704 = vadd.f32 %v3101, %v3458
        %v3705 = vadd.f32 %v3102, %v3457
        %v3706 = vadd.f32 %v3103, %v3461
        %v3707 = vadd.f32 %v3104, %v3463
        %v3708 = vadd.f32 %v3105, %v3465
        %v3709 = vadd.f32 %v3106, %v3464
        %v3710 = vadd.f32 %v3107, %v3468
        %v3711 = vadd.f32 %v3108, %v3470
        %v3712 = vadd.f32 %v3109, %v3472
        %v3713 = vadd.f32 %v3110, %v3471
        %v3714 = vadd.f32 %v3111, %v3475
        %v3715 = vadd.f32 %v3112, %v3477
        %v3716 = vadd.f32 %v3113, %v3479
        %v3717 = vadd.f32 %v3114, %v3478
        %v3718 = vadd.f32 %v3115, %v3482
        %v3719 = vadd.f32 %v3116, %v3484
        %v3720 = vadd.f32 %v3117, %v3486
        %v3721 = vadd.f32 %v3118, %v3485
        %v3722 = vadd.f32 %v3119, %v3489
        %v3723 = vadd.f32 %v3120, %v3491
        %v3724 = vadd.f32 %v3121, %v3493
        %v3725 = vadd.f32 %v3122, %v3492
        %v3726 = vadd.f32 %v3123, %v3496
        %v3727 = vadd.f32 %v3124, %v3498
        %v3728 = vadd.f32 %v3125, %v3500
        %v3729 = vadd.f32 %v3126, %v3499
        %v3730 = vadd.f32 %v3127, %v3503
        %v3731 = vadd.f32 %v3128, %v3505
        %v3732 = vadd.f32 %v3129, %v3507
        %v3733 = vadd.f32 %v3130, %v3506
        %v3734 = vadd.f32 %v3131, %v3510
        %v3735 = vadd.f32 %v3132, %v3512
        %v3736 = vadd.f32 %v3133, %v3514
        %v3737 = vadd.f32 %v3134, %v3513
        %v3738 = vadd.f32 %v3135, %v3517
        %v3739 = vadd.f32 %v3136, %v3519
        %v3740 = vadd.f32 %v3137, %v3521
        %v3741 = vadd.f32 %v3138, %v3520
        %v3742 = vadd.f32 %v3139, %v3524
        %v3743 = vadd.f32 %v3140, %v3526
        %v3744 = vadd.f32 %v3141, %v3528
        %v3745 = vadd.f32 %v3142, %v3527
        %v3746 = vadd.f32 %v3143, %v3531
        %v3747 = vadd.f32 %v3144, %v3533
        %v3748 = vadd.f32 %v3145, %v3535
        %v3749 = vadd.f32 %v3146, %v3534
        %v3750 = vadd.f32 %v3147, %v3538
        %v3751 = vadd.f32 %v3148, %v3540
        %v3752 = vadd.f32 %v3149, %v3542
        %v3753 = vadd.f32 %v3150, %v3541
        %v3754 = vadd.f32 %v3151, %v3545
        %v3755 = vadd.f32 %v3152, %v3547
        %v3756 = vadd.f32 %v3153, %v3549
        %v3757 = vadd.f32 %v3154, %v3548
        %v3758 = vld [vmem:[#allocation3 + $0x6] sm:$0x1]
        %3760 = vset.pattern.permute.xlu0 0
        %3761 = vperm.xlu0 %3760, %v374
        %v3762 = vpop.permute.xlu0 %3761
        %3765 = vset.pattern.permute.xlu0 0
        %3766 = vperm.xlu0 %3765, %v375
        %v3767 = vpop.permute.xlu0 %3766
        %3770 = vset.pattern.permute.xlu0 0
        %3771 = vperm.xlu0 %3770, %v376
        %v3772 = vpop.permute.xlu0 %3771
        %3775 = vset.pattern.permute.xlu0 0
        %3776 = vperm.xlu0 %3775, %v377
        %v3777 = vpop.permute.xlu0 %3776
        %v3779 = vlaneseq
        %v3780 = vshrl.u32 %v3779, 7
        %v3781 = vsub.s32 0, %v3780
        %v3782 = vrot.slane %v3758, %v3781
        %v3783 = vmul.f32 %v422, %v3782
        %v3784 = vmul.f32 %v427, %v3782
        %v3785 = vmul.f32 %v432, %v3782
        %v3786 = vmul.f32 %v437, %v3782
        %v3787 = vmul.f32 %v442, %v3782
        %v3788 = vmul.f32 %v447, %v3782
        %v3789 = vmul.f32 %v452, %v3782
        %v3790 = vmul.f32 %v457, %v3782
        %v3791 = vmul.f32 %v462, %v3782
        %v3792 = vmul.f32 %v467, %v3782
        %v3793 = vmul.f32 %v472, %v3782
        %v3794 = vmul.f32 %v477, %v3782
        %v3795 = vmul.f32 %v482, %v3782
        %v3796 = vmul.f32 %v487, %v3782
        %v3797 = vmul.f32 %v492, %v3782
        %v3798 = vmul.f32 %v497, %v3782
        %v3799 = vmul.f32 %v502, %v3782
        %v3800 = vmul.f32 %v507, %v3782
        %v3801 = vmul.f32 %v512, %v3782
        %v3802 = vmul.f32 %v517, %v3782
        %v3803 = vmul.f32 %v522, %v3782
        %v3804 = vmul.f32 %v527, %v3782
        %v3805 = vmul.f32 %v532, %v3782
        %v3806 = vmul.f32 %v537, %v3782
        %v3807 = vmul.f32 %v542, %v3782
        %v3808 = vmul.f32 %v547, %v3782
        %v3809 = vmul.f32 %v552, %v3782
        %v3810 = vmul.f32 %v557, %v3782
        %v3811 = vmul.f32 %v562, %v3782
        %v3812 = vmul.f32 %v567, %v3782
        %v3813 = vmul.f32 %v572, %v3782
        %v3814 = vmul.f32 %v577, %v3782
        %v3815 = vmul.f32 %v582, %v3782
        %v3816 = vmul.f32 %v587, %v3782
        %v3817 = vmul.f32 %v592, %v3782
        %v3818 = vmul.f32 %v597, %v3782
        %v3819 = vmul.f32 %v602, %v3782
        %v3820 = vmul.f32 %v607, %v3782
        %v3821 = vmul.f32 %v612, %v3782
        %v3822 = vmul.f32 %v617, %v3782
        %v3823 = vmul.f32 %v622, %v3782
        %v3824 = vmul.f32 %v627, %v3782
        %v3825 = vmul.f32 %v632, %v3782
        %v3826 = vmul.f32 %v637, %v3782
        %v3827 = vmul.f32 %v642, %v3782
        %v3828 = vmul.f32 %v647, %v3782
        %v3829 = vmul.f32 %v652, %v3782
        %v3830 = vmul.f32 %v657, %v3782
        %v3831 = vmul.f32 %v662, %v3782
        %v3832 = vmul.f32 %v667, %v3782
        %v3833 = vmul.f32 %v672, %v3782
        %v3834 = vmul.f32 %v677, %v3782
        %v3835 = vmul.f32 %v682, %v3782
        %v3836 = vmul.f32 %v687, %v3782
        %v3837 = vmul.f32 %v692, %v3782
        %v3838 = vmul.f32 %v697, %v3782
        %v3839 = vmul.f32 %v702, %v3782
        %v3840 = vmul.f32 %v707, %v3782
        %v3841 = vmul.f32 %v712, %v3782
        %v3842 = vmul.f32 %v717, %v3782
        %v3843 = vmul.f32 %v722, %v3782
        %v3844 = vmul.f32 %v727, %v3782
        %v3845 = vmul.f32 %v732, %v3782
        %v3846 = vmul.f32 %v737, %v3782
        %v3847 = vmul.f32 %v742, %v3782
        %v3848 = vmul.f32 %v747, %v3782
        %v3849 = vmul.f32 %v752, %v3782
        %v3850 = vmul.f32 %v757, %v3782
        %v3851 = vmul.f32 %v762, %v3782
        %v3852 = vmul.f32 %v767, %v3782
        %v3853 = vmul.f32 %v772, %v3782
        %v3854 = vmul.f32 %v777, %v3782
        %v3855 = vmul.f32 %v782, %v3782
        %v3856 = vmul.f32 %v787, %v3782
        %v3857 = vmul.f32 %v792, %v3782
        %v3858 = vmul.f32 %v797, %v3782
        %v3859 = vmul.f32 %v802, %v3782
        %v3860 = vmul.f32 %v807, %v3782
        %v3861 = vmul.f32 %v812, %v3782
        %v3862 = vmul.f32 %v817, %v3782
        %v3863 = vmul.f32 %v822, %v3782
        %v3864 = vmul.f32 %v827, %v3782
        %v3865 = vmul.f32 %v832, %v3782
        %v3866 = vmul.f32 %v837, %v3782
        %v3867 = vmul.f32 %v842, %v3782
        %v3868 = vmul.f32 %v847, %v3782
        %v3869 = vmul.f32 %v852, %v3782
        %v3870 = vmul.f32 %v857, %v3782
        %v3871 = vmul.f32 %v862, %v3782
        %v3872 = vmul.f32 %v867, %v3782
        %v3873 = vmul.f32 %v872, %v3782
        %v3874 = vmul.f32 %v877, %v3782
        %v3875 = vmul.f32 %v882, %v3782
        %v3876 = vmul.f32 %v887, %v3782
        %v3877 = vmul.f32 %v892, %v3782
        %v3878 = vmul.f32 %v897, %v3782
        %v3879 = vmul.f32 %v2323, %v3782
        %v3880 = vmul.f32 %v2328, %v3782
        %v3881 = vmul.f32 %v2333, %v3782
        %v3882 = vmul.f32 %v2338, %v3782
        %v3883 = vmul.f32 %v3762, %v3782
        %v3884 = vmul.f32 %v3767, %v3782
        %v3885 = vmul.f32 %v3772, %v3782
        %v3886 = vmul.f32 %v3777, %v3782
        %v3887 = vadd.f32 %v3654, %v3783
        %v3888 = vadd.f32 %v3655, %v3784
        %v3889 = vadd.f32 %v3656, %v3785
        %v3890 = vadd.f32 %v3657, %v3786
        %v3891 = vadd.f32 %v3658, %v3787
        %v3892 = vadd.f32 %v3659, %v3788
        %v3893 = vadd.f32 %v3660, %v3789
        %v3894 = vadd.f32 %v3661, %v3790
        %v3895 = vadd.f32 %v3662, %v3791
        %v3896 = vadd.f32 %v3663, %v3792
        %v3897 = vadd.f32 %v3664, %v3793
        %v3898 = vadd.f32 %v3665, %v3794
        %v3899 = vadd.f32 %v3666, %v3795
        %v3900 = vadd.f32 %v3667, %v3796
        %v3901 = vadd.f32 %v3668, %v3797
        %v3902 = vadd.f32 %v3669, %v3798
        %v3903 = vadd.f32 %v3670, %v3799
        %v3904 = vadd.f32 %v3671, %v3800
        %v3905 = vadd.f32 %v3672, %v3801
        %v3906 = vadd.f32 %v3673, %v3802
        %v3907 = vadd.f32 %v3674, %v3803
        %v3908 = vadd.f32 %v3675, %v3804
        %v3909 = vadd.f32 %v3676, %v3805
        %v3910 = vadd.f32 %v3677, %v3806
        %v3911 = vadd.f32 %v3678, %v3807
        %v3912 = vadd.f32 %v3679, %v3808
        %v3913 = vadd.f32 %v3680, %v3809
        %v3914 = vadd.f32 %v3681, %v3810
        %v3915 = vadd.f32 %v3682, %v3811
        %v3916 = vadd.f32 %v3683, %v3812
        %v3917 = vadd.f32 %v3684, %v3813
        %v3918 = vadd.f32 %v3685, %v3814
        %v3919 = vadd.f32 %v3686, %v3815
        %v3920 = vadd.f32 %v3687, %v3816
        %v3921 = vadd.f32 %v3688, %v3817
        %v3922 = vadd.f32 %v3689, %v3818
        %v3923 = vadd.f32 %v3690, %v3819
        %v3924 = vadd.f32 %v3691, %v3820
        %v3925 = vadd.f32 %v3692, %v3821
        %v3926 = vadd.f32 %v3693, %v3822
        %v3927 = vadd.f32 %v3694, %v3823
        %v3928 = vadd.f32 %v3695, %v3824
        %v3929 = vadd.f32 %v3696, %v3825
        %v3930 = vadd.f32 %v3697, %v3826
        %v3931 = vadd.f32 %v3698, %v3827
        %v3932 = vadd.f32 %v3699, %v3828
        %v3933 = vadd.f32 %v3700, %v3829
        %v3934 = vadd.f32 %v3701, %v3830
        %v3935 = vadd.f32 %v3702, %v3831
        %v3936 = vadd.f32 %v3703, %v3832
        %v3937 = vadd.f32 %v3704, %v3833
        %v3938 = vadd.f32 %v3705, %v3834
        %v3939 = vadd.f32 %v3706, %v3835
        %v3940 = vadd.f32 %v3707, %v3836
        %v3941 = vadd.f32 %v3708, %v3837
        %v3942 = vadd.f32 %v3709, %v3838
        %v3943 = vadd.f32 %v3710, %v3839
        %v3944 = vadd.f32 %v3711, %v3840
        %v3945 = vadd.f32 %v3712, %v3841
        %v3946 = vadd.f32 %v3713, %v3842
        %v3947 = vadd.f32 %v3714, %v3843
        %v3948 = vadd.f32 %v3715, %v3844
        %v3949 = vadd.f32 %v3716, %v3845
        %v3950 = vadd.f32 %v3717, %v3846
        %v3951 = vadd.f32 %v3718, %v3847
        %v3952 = vadd.f32 %v3719, %v3848
        %v3953 = vadd.f32 %v3720, %v3849
        %v3954 = vadd.f32 %v3721, %v3850
        %v3955 = vadd.f32 %v3722, %v3851
        %v3956 = vadd.f32 %v3723, %v3852
        %v3957 = vadd.f32 %v3724, %v3853
        %v3958 = vadd.f32 %v3725, %v3854
        %v3959 = vadd.f32 %v3726, %v3855
        %v3960 = vadd.f32 %v3727, %v3856
        %v3961 = vadd.f32 %v3728, %v3857
        %v3962 = vadd.f32 %v3729, %v3858
        %v3963 = vadd.f32 %v3730, %v3859
        %v3964 = vadd.f32 %v3731, %v3860
        %v3965 = vadd.f32 %v3732, %v3861
        %v3966 = vadd.f32 %v3733, %v3862
        %v3967 = vadd.f32 %v3734, %v3863
        %v3968 = vadd.f32 %v3735, %v3864
        %v3969 = vadd.f32 %v3736, %v3865
        %v3970 = vadd.f32 %v3737, %v3866
        %v3971 = vadd.f32 %v3738, %v3867
        %v3972 = vadd.f32 %v3739, %v3868
        %v3973 = vadd.f32 %v3740, %v3869
        %v3974 = vadd.f32 %v3741, %v3870
        %v3975 = vadd.f32 %v3742, %v3871
        %v3976 = vadd.f32 %v3743, %v3872
        %v3977 = vadd.f32 %v3744, %v3873
        %v3978 = vadd.f32 %v3745, %v3874
        %v3979 = vadd.f32 %v3746, %v3875
        %v3980 = vadd.f32 %v3747, %v3876
        %v3981 = vadd.f32 %v3748, %v3877
        %v3982 = vadd.f32 %v3749, %v3878
        %v3983 = vadd.f32 %v3750, %v3879
        %v3984 = vadd.f32 %v3751, %v3880
        %v3985 = vadd.f32 %v3752, %v3881
        %v3986 = vadd.f32 %v3753, %v3882
        %v3987 = vadd.f32 %v3754, %v3883
        %v3988 = vadd.f32 %v3755, %v3884
        %v3989 = vadd.f32 %v3756, %v3885
        %v3990 = vadd.f32 %v3757, %v3886
        %v3991 = vld [vmem:[#allocation3 + $0x7] sm:$0x1]
        %v3992 = vlaneseq
        %v3993 = vshrl.u32 %v3992, 7
        %v3994 = vsub.s32 0, %v3993
        %v3995 = vrot.slane %v3991, %v3994
        %v3996 = vmul.f32 %v422, %v3995
        %v3997 = vmul.f32 %v427, %v3995
        %v3998 = vmul.f32 %v432, %v3995
        %v3999 = vmul.f32 %v437, %v3995
        %v4000 = vmul.f32 %v442, %v3995
        %v4001 = vmul.f32 %v447, %v3995
        %v4002 = vmul.f32 %v452, %v3995
        %v4003 = vmul.f32 %v457, %v3995
        %v4004 = vmul.f32 %v462, %v3995
        %v4005 = vmul.f32 %v467, %v3995
        %v4006 = vmul.f32 %v472, %v3995
        %v4007 = vmul.f32 %v477, %v3995
        %v4008 = vmul.f32 %v482, %v3995
        %v4009 = vmul.f32 %v487, %v3995
        %v4010 = vmul.f32 %v492, %v3995
        %v4011 = vmul.f32 %v497, %v3995
        %v4012 = vmul.f32 %v502, %v3995
        %v4013 = vmul.f32 %v507, %v3995
        %v4014 = vmul.f32 %v512, %v3995
        %v4015 = vmul.f32 %v517, %v3995
        %v4016 = vmul.f32 %v522, %v3995
        %v4017 = vmul.f32 %v527, %v3995
        %v4018 = vmul.f32 %v532, %v3995
        %v4019 = vmul.f32 %v537, %v3995
        %v4020 = vmul.f32 %v542, %v3995
        %v4021 = vmul.f32 %v547, %v3995
        %v4022 = vmul.f32 %v552, %v3995
        %v4023 = vmul.f32 %v557, %v3995
        %v4024 = vmul.f32 %v562, %v3995
        %v4025 = vmul.f32 %v567, %v3995
        %v4026 = vmul.f32 %v572, %v3995
        %v4027 = vmul.f32 %v577, %v3995
        %v4028 = vmul.f32 %v582, %v3995
        %v4029 = vmul.f32 %v587, %v3995
        %v4030 = vmul.f32 %v592, %v3995
        %v4031 = vmul.f32 %v597, %v3995
        %v4032 = vmul.f32 %v602, %v3995
        %v4033 = vmul.f32 %v607, %v3995
        %v4034 = vmul.f32 %v612, %v3995
        %v4035 = vmul.f32 %v617, %v3995
        %v4036 = vmul.f32 %v622, %v3995
        %v4037 = vmul.f32 %v627, %v3995
        %v4038 = vmul.f32 %v632, %v3995
        %v4039 = vmul.f32 %v637, %v3995
        %v4040 = vmul.f32 %v642, %v3995
        %v4041 = vmul.f32 %v647, %v3995
        %v4042 = vmul.f32 %v652, %v3995
        %v4043 = vmul.f32 %v657, %v3995
        %v4044 = vmul.f32 %v662, %v3995
        %v4045 = vmul.f32 %v667, %v3995
        %v4046 = vmul.f32 %v672, %v3995
        %v4047 = vmul.f32 %v677, %v3995
        %v4048 = vmul.f32 %v682, %v3995
        %v4049 = vmul.f32 %v687, %v3995
        %v4050 = vmul.f32 %v692, %v3995
        %v4051 = vmul.f32 %v697, %v3995
        %v4052 = vmul.f32 %v702, %v3995
        %v4053 = vmul.f32 %v707, %v3995
        %v4054 = vmul.f32 %v712, %v3995
        %v4055 = vmul.f32 %v717, %v3995
        %v4056 = vmul.f32 %v722, %v3995
        %v4057 = vmul.f32 %v727, %v3995
        %v4058 = vmul.f32 %v732, %v3995
        %v4059 = vmul.f32 %v737, %v3995
        %v4060 = vmul.f32 %v742, %v3995
        %v4061 = vmul.f32 %v747, %v3995
        %v4062 = vmul.f32 %v752, %v3995
        %v4063 = vmul.f32 %v757, %v3995
        %v4064 = vmul.f32 %v762, %v3995
        %v4065 = vmul.f32 %v767, %v3995
        %v4066 = vmul.f32 %v772, %v3995
        %v4067 = vmul.f32 %v777, %v3995
        %v4068 = vmul.f32 %v782, %v3995
        %v4069 = vmul.f32 %v787, %v3995
        %v4070 = vmul.f32 %v792, %v3995
        %v4071 = vmul.f32 %v797, %v3995
        %v4072 = vmul.f32 %v802, %v3995
        %v4073 = vmul.f32 %v807, %v3995
        %v4074 = vmul.f32 %v812, %v3995
        %v4075 = vmul.f32 %v817, %v3995
        %v4076 = vmul.f32 %v822, %v3995
        %v4077 = vmul.f32 %v827, %v3995
        %v4078 = vmul.f32 %v832, %v3995
        %v4079 = vmul.f32 %v837, %v3995
        %v4080 = vmul.f32 %v842, %v3995
        %v4081 = vmul.f32 %v847, %v3995
        %v4082 = vmul.f32 %v852, %v3995
        %v4083 = vmul.f32 %v857, %v3995
        %v4084 = vmul.f32 %v862, %v3995
        %v4085 = vmul.f32 %v867, %v3995
        %v4086 = vmul.f32 %v872, %v3995
        %v4087 = vmul.f32 %v877, %v3995
        %v4088 = vmul.f32 %v882, %v3995
        %v4089 = vmul.f32 %v887, %v3995
        %v4090 = vmul.f32 %v892, %v3995
        %v4091 = vmul.f32 %v897, %v3995
        %v4092 = vmul.f32 %v2323, %v3995
        %v4093 = vmul.f32 %v2328, %v3995
        %v4094 = vmul.f32 %v2333, %v3995
        %v4095 = vmul.f32 %v2338, %v3995
        %v4096 = vmul.f32 %v3762, %v3995
        %v4097 = vmul.f32 %v3767, %v3995
        %v4098 = vmul.f32 %v3772, %v3995
        %v4099 = vmul.f32 %v3777, %v3995
        %v4204 = vrot.slane %v3996, 1
        %v4205 = vrot.slane %v3997, 1
        %v4206 = vsel %vm1324, %v4204, %v4205
        %v4207 = vrot.slane %v3998, 1
        %v4208 = vsel %vm1324, %v4205, %v4207
        %v4209 = vrot.slane %v3999, 1
        %v4210 = vsel %vm1324, %v4207, %v4209
        %v4211 = vrot.slane %v4000, 1
        %v4212 = vrot.slane %v4001, 1
        %v4213 = vsel %vm1324, %v4211, %v4212
        %v4214 = vrot.slane %v4002, 1
        %v4215 = vsel %vm1324, %v4212, %v4214
        %v4216 = vrot.slane %v4003, 1
        %v4217 = vsel %vm1324, %v4214, %v4216
        %v4218 = vrot.slane %v4004, 1
        %v4219 = vrot.slane %v4005, 1
        %v4220 = vsel %vm1324, %v4218, %v4219
        %v4221 = vrot.slane %v4006, 1
        %v4222 = vsel %vm1324, %v4219, %v4221
        %v4223 = vrot.slane %v4007, 1
        %v4224 = vsel %vm1324, %v4221, %v4223
        %v4225 = vrot.slane %v4008, 1
        %v4226 = vrot.slane %v4009, 1
        %v4227 = vsel %vm1324, %v4225, %v4226
        %v4228 = vrot.slane %v4010, 1
        %v4229 = vsel %vm1324, %v4226, %v4228
        %v4230 = vrot.slane %v4011, 1
        %v4231 = vsel %vm1324, %v4228, %v4230
        %v4232 = vrot.slane %v4012, 1
        %v4233 = vrot.slane %v4013, 1
        %v4234 = vsel %vm1324, %v4232, %v4233
        %v4235 = vrot.slane %v4014, 1
        %v4236 = vsel %vm1324, %v4233, %v4235
        %v4237 = vrot.slane %v4015, 1
        %v4238 = vsel %vm1324, %v4235, %v4237
        %v4239 = vrot.slane %v4016, 1
        %v4240 = vrot.slane %v4017, 1
        %v4241 = vsel %vm1324, %v4239, %v4240
        %v4242 = vrot.slane %v4018, 1
        %v4243 = vsel %vm1324, %v4240, %v4242
        %v4244 = vrot.slane %v4019, 1
        %v4245 = vsel %vm1324, %v4242, %v4244
        %v4246 = vrot.slane %v4020, 1
        %v4247 = vrot.slane %v4021, 1
        %v4248 = vsel %vm1324, %v4246, %v4247
        %v4249 = vrot.slane %v4022, 1
        %v4250 = vsel %vm1324, %v4247, %v4249
        %v4251 = vrot.slane %v4023, 1
        %v4252 = vsel %vm1324, %v4249, %v4251
        %v4253 = vrot.slane %v4024, 1
        %v4254 = vrot.slane %v4025, 1
        %v4255 = vsel %vm1324, %v4253, %v4254
        %v4256 = vrot.slane %v4026, 1
        %v4257 = vsel %vm1324, %v4254, %v4256
        %v4258 = vrot.slane %v4027, 1
        %v4259 = vsel %vm1324, %v4256, %v4258
        %v4260 = vrot.slane %v4028, 1
        %v4261 = vrot.slane %v4029, 1
        %v4262 = vsel %vm1324, %v4260, %v4261
        %v4263 = vrot.slane %v4030, 1
        %v4264 = vsel %vm1324, %v4261, %v4263
        %v4265 = vrot.slane %v4031, 1
        %v4266 = vsel %vm1324, %v4263, %v4265
        %v4267 = vrot.slane %v4032, 1
        %v4268 = vrot.slane %v4033, 1
        %v4269 = vsel %vm1324, %v4267, %v4268
        %v4270 = vrot.slane %v4034, 1
        %v4271 = vsel %vm1324, %v4268, %v4270
        %v4272 = vrot.slane %v4035, 1
        %v4273 = vsel %vm1324, %v4270, %v4272
        %v4274 = vrot.slane %v4036, 1
        %v4275 = vrot.slane %v4037, 1
        %v4276 = vsel %vm1324, %v4274, %v4275
        %v4277 = vrot.slane %v4038, 1
        %v4278 = vsel %vm1324, %v4275, %v4277
        %v4279 = vrot.slane %v4039, 1
        %v4280 = vsel %vm1324, %v4277, %v4279
        %v4281 = vrot.slane %v4040, 1
        %v4282 = vrot.slane %v4041, 1
        %v4283 = vsel %vm1324, %v4281, %v4282
        %v4284 = vrot.slane %v4042, 1
        %v4285 = vsel %vm1324, %v4282, %v4284
        %v4286 = vrot.slane %v4043, 1
        %v4287 = vsel %vm1324, %v4284, %v4286
        %v4288 = vrot.slane %v4044, 1
        %v4289 = vrot.slane %v4045, 1
        %v4290 = vsel %vm1324, %v4288, %v4289
        %v4291 = vrot.slane %v4046, 1
        %v4292 = vsel %vm1324, %v4289, %v4291
        %v4293 = vrot.slane %v4047, 1
        %v4294 = vsel %vm1324, %v4291, %v4293
        %v4295 = vrot.slane %v4048, 1
        %v4296 = vrot.slane %v4049, 1
        %v4297 = vsel %vm1324, %v4295, %v4296
        %v4298 = vrot.slane %v4050, 1
        %v4299 = vsel %vm1324, %v4296, %v4298
        %v4300 = vrot.slane %v4051, 1
        %v4301 = vsel %vm1324, %v4298, %v4300
        %v4302 = vrot.slane %v4052, 1
        %v4303 = vrot.slane %v4053, 1
        %v4304 = vsel %vm1324, %v4302, %v4303
        %v4305 = vrot.slane %v4054, 1
        %v4306 = vsel %vm1324, %v4303, %v4305
        %v4307 = vrot.slane %v4055, 1
        %v4308 = vsel %vm1324, %v4305, %v4307
        %v4309 = vrot.slane %v4056, 1
        %v4310 = vrot.slane %v4057, 1
        %v4311 = vsel %vm1324, %v4309, %v4310
        %v4312 = vrot.slane %v4058, 1
        %v4313 = vsel %vm1324, %v4310, %v4312
        %v4314 = vrot.slane %v4059, 1
        %v4315 = vsel %vm1324, %v4312, %v4314
        %v4316 = vrot.slane %v4060, 1
        %v4317 = vrot.slane %v4061, 1
        %v4318 = vsel %vm1324, %v4316, %v4317
        %v4319 = vrot.slane %v4062, 1
        %v4320 = vsel %vm1324, %v4317, %v4319
        %v4321 = vrot.slane %v4063, 1
        %v4322 = vsel %vm1324, %v4319, %v4321
        %v4323 = vrot.slane %v4064, 1
        %v4324 = vrot.slane %v4065, 1
        %v4325 = vsel %vm1324, %v4323, %v4324
        %v4326 = vrot.slane %v4066, 1
        %v4327 = vsel %vm1324, %v4324, %v4326
        %v4328 = vrot.slane %v4067, 1
        %v4329 = vsel %vm1324, %v4326, %v4328
        %v4330 = vrot.slane %v4068, 1
        %v4331 = vrot.slane %v4069, 1
        %v4332 = vsel %vm1324, %v4330, %v4331
        %v4333 = vrot.slane %v4070, 1
        %v4334 = vsel %vm1324, %v4331, %v4333
        %v4335 = vrot.slane %v4071, 1
        %v4336 = vsel %vm1324, %v4333, %v4335
        %v4337 = vrot.slane %v4072, 1
        %v4338 = vrot.slane %v4073, 1
        %v4339 = vsel %vm1324, %v4337, %v4338
        %v4340 = vrot.slane %v4074, 1
        %v4341 = vsel %vm1324, %v4338, %v4340
        %v4342 = vrot.slane %v4075, 1
        %v4343 = vsel %vm1324, %v4340, %v4342
        %v4344 = vrot.slane %v4076, 1
        %v4345 = vrot.slane %v4077, 1
        %v4346 = vsel %vm1324, %v4344, %v4345
        %v4347 = vrot.slane %v4078, 1
        %v4348 = vsel %vm1324, %v4345, %v4347
        %v4349 = vrot.slane %v4079, 1
        %v4350 = vsel %vm1324, %v4347, %v4349
        %v4351 = vrot.slane %v4080, 1
        %v4352 = vrot.slane %v4081, 1
        %v4353 = vsel %vm1324, %v4351, %v4352
        %v4354 = vrot.slane %v4082, 1
        %v4355 = vsel %vm1324, %v4352, %v4354
        %v4356 = vrot.slane %v4083, 1
        %v4357 = vsel %vm1324, %v4354, %v4356
        %v4358 = vrot.slane %v4084, 1
        %v4359 = vrot.slane %v4085, 1
        %v4360 = vsel %vm1324, %v4358, %v4359
        %v4361 = vrot.slane %v4086, 1
        %v4362 = vsel %vm1324, %v4359, %v4361
        %v4363 = vrot.slane %v4087, 1
        %v4364 = vsel %vm1324, %v4361, %v4363
        %v4365 = vrot.slane %v4088, 1
        %v4366 = vrot.slane %v4089, 1
        %v4367 = vsel %vm1324, %v4365, %v4366
        %v4368 = vrot.slane %v4090, 1
        %v4369 = vsel %vm1324, %v4366, %v4368
        %v4370 = vrot.slane %v4091, 1
        %v4371 = vsel %vm1324, %v4368, %v4370
        %v4372 = vrot.slane %v4092, 1
        %v4373 = vrot.slane %v4093, 1
        %v4374 = vsel %vm1324, %v4372, %v4373
        %v4375 = vrot.slane %v4094, 1
        %v4376 = vsel %vm1324, %v4373, %v4375
        %v4377 = vrot.slane %v4095, 1
        %v4378 = vsel %vm1324, %v4375, %v4377
        %v4379 = vrot.slane %v4096, 1
        %v4380 = vrot.slane %v4097, 1
        %v4381 = vsel %vm1324, %v4379, %v4380
        %v4382 = vrot.slane %v4098, 1
        %v4383 = vsel %vm1324, %v4380, %v4382
        %v4384 = vrot.slane %v4099, 1
        %v4385 = vsel %vm1324, %v4382, %v4384
        %v4490 = vadd.f32 %v3887, %v4206
        %v4491 = vadd.f32 %v3888, %v4208
        %v4492 = vadd.f32 %v3889, %v4210
        %v4493 = vadd.f32 %v3890, %v4209
        %v4494 = vadd.f32 %v3891, %v4213
        %v4495 = vadd.f32 %v3892, %v4215
        %v4496 = vadd.f32 %v3893, %v4217
        %v4497 = vadd.f32 %v3894, %v4216
        %v4498 = vadd.f32 %v3895, %v4220
        %v4499 = vadd.f32 %v3896, %v4222
        %v4500 = vadd.f32 %v3897, %v4224
        %v4501 = vadd.f32 %v3898, %v4223
        %v4502 = vadd.f32 %v3899, %v4227
        %v4503 = vadd.f32 %v3900, %v4229
        %v4504 = vadd.f32 %v3901, %v4231
        %v4505 = vadd.f32 %v3902, %v4230
        %v4506 = vadd.f32 %v3903, %v4234
        %v4507 = vadd.f32 %v3904, %v4236
        %v4508 = vadd.f32 %v3905, %v4238
        %v4509 = vadd.f32 %v3906, %v4237
        %v4510 = vadd.f32 %v3907, %v4241
        %v4511 = vadd.f32 %v3908, %v4243
        %v4512 = vadd.f32 %v3909, %v4245
        %v4513 = vadd.f32 %v3910, %v4244
        %v4514 = vadd.f32 %v3911, %v4248
        %v4515 = vadd.f32 %v3912, %v4250
        %v4516 = vadd.f32 %v3913, %v4252
        %v4517 = vadd.f32 %v3914, %v4251
        %v4518 = vadd.f32 %v3915, %v4255
        %v4519 = vadd.f32 %v3916, %v4257
        %v4520 = vadd.f32 %v3917, %v4259
        %v4521 = vadd.f32 %v3918, %v4258
        %v4522 = vadd.f32 %v3919, %v4262
        %v4523 = vadd.f32 %v3920, %v4264
        %v4524 = vadd.f32 %v3921, %v4266
        %v4525 = vadd.f32 %v3922, %v4265
        %v4526 = vadd.f32 %v3923, %v4269
        %v4527 = vadd.f32 %v3924, %v4271
        %v4528 = vadd.f32 %v3925, %v4273
        %v4529 = vadd.f32 %v3926, %v4272
        %v4530 = vadd.f32 %v3927, %v4276
        %v4531 = vadd.f32 %v3928, %v4278
        %v4532 = vadd.f32 %v3929, %v4280
        %v4533 = vadd.f32 %v3930, %v4279
        %v4534 = vadd.f32 %v3931, %v4283
        %v4535 = vadd.f32 %v3932, %v4285
        %v4536 = vadd.f32 %v3933, %v4287
        %v4537 = vadd.f32 %v3934, %v4286
        %v4538 = vadd.f32 %v3935, %v4290
        %v4539 = vadd.f32 %v3936, %v4292
        %v4540 = vadd.f32 %v3937, %v4294
        %v4541 = vadd.f32 %v3938, %v4293
        %v4542 = vadd.f32 %v3939, %v4297
        %v4543 = vadd.f32 %v3940, %v4299
        %v4544 = vadd.f32 %v3941, %v4301
        %v4545 = vadd.f32 %v3942, %v4300
        %v4546 = vadd.f32 %v3943, %v4304
        %v4547 = vadd.f32 %v3944, %v4306
        %v4548 = vadd.f32 %v3945, %v4308
        %v4549 = vadd.f32 %v3946, %v4307
        %v4550 = vadd.f32 %v3947, %v4311
        %v4551 = vadd.f32 %v3948, %v4313
        %v4552 = vadd.f32 %v3949, %v4315
        %v4553 = vadd.f32 %v3950, %v4314
        %v4554 = vadd.f32 %v3951, %v4318
        %v4555 = vadd.f32 %v3952, %v4320
        %v4556 = vadd.f32 %v3953, %v4322
        %v4557 = vadd.f32 %v3954, %v4321
        %v4558 = vadd.f32 %v3955, %v4325
        %v4559 = vadd.f32 %v3956, %v4327
        %v4560 = vadd.f32 %v3957, %v4329
        %v4561 = vadd.f32 %v3958, %v4328
        %v4562 = vadd.f32 %v3959, %v4332
        %v4563 = vadd.f32 %v3960, %v4334
        %v4564 = vadd.f32 %v3961, %v4336
        %v4565 = vadd.f32 %v3962, %v4335
        %v4566 = vadd.f32 %v3963, %v4339
        %v4567 = vadd.f32 %v3964, %v4341
        %v4568 = vadd.f32 %v3965, %v4343
        %v4569 = vadd.f32 %v3966, %v4342
        %v4570 = vadd.f32 %v3967, %v4346
        %v4571 = vadd.f32 %v3968, %v4348
        %v4572 = vadd.f32 %v3969, %v4350
        %v4573 = vadd.f32 %v3970, %v4349
        %v4574 = vadd.f32 %v3971, %v4353
        %v4575 = vadd.f32 %v3972, %v4355
        %v4576 = vadd.f32 %v3973, %v4357
        %v4577 = vadd.f32 %v3974, %v4356
        %v4578 = vadd.f32 %v3975, %v4360
        %v4579 = vadd.f32 %v3976, %v4362
        %v4580 = vadd.f32 %v3977, %v4364
        %v4581 = vadd.f32 %v3978, %v4363
        %v4582 = vadd.f32 %v3979, %v4367
        %v4583 = vadd.f32 %v3980, %v4369
        %v4584 = vadd.f32 %v3981, %v4371
        %v4585 = vadd.f32 %v3982, %v4370
        %v4586 = vadd.f32 %v3983, %v4374
        %v4587 = vadd.f32 %v3984, %v4376
        %v4588 = vadd.f32 %v3985, %v4378
        %v4589 = vadd.f32 %v3986, %v4377
        %v4590 = vadd.f32 %v3987, %v4381
        %v4591 = vadd.f32 %v3988, %v4383
        %v4592 = vadd.f32 %v3989, %v4385
        %v4593 = vadd.f32 %v3990, %v4384
        %v4594 = vld [vmem:[#allocation3 + $0x8] sm:$0x1]
        %v4595 = vlaneseq
        %v4596 = vshrl.u32 %v4595, 7
        %v4597 = vsub.s32 0, %v4596
        %v4598 = vrot.slane %v4594, %v4597
        %v4599 = vmul.f32 %v422, %v4598
        %v4600 = vmul.f32 %v427, %v4598
        %v4601 = vmul.f32 %v432, %v4598
        %v4602 = vmul.f32 %v437, %v4598
        %v4603 = vmul.f32 %v442, %v4598
        %v4604 = vmul.f32 %v447, %v4598
        %v4605 = vmul.f32 %v452, %v4598
        %v4606 = vmul.f32 %v457, %v4598
        %v4607 = vmul.f32 %v462, %v4598
        %v4608 = vmul.f32 %v467, %v4598
        %v4609 = vmul.f32 %v472, %v4598
        %v4610 = vmul.f32 %v477, %v4598
        %v4611 = vmul.f32 %v482, %v4598
        %v4612 = vmul.f32 %v487, %v4598
        %v4613 = vmul.f32 %v492, %v4598
        %v4614 = vmul.f32 %v497, %v4598
        %v4615 = vmul.f32 %v502, %v4598
        %v4616 = vmul.f32 %v507, %v4598
        %v4617 = vmul.f32 %v512, %v4598
        %v4618 = vmul.f32 %v517, %v4598
        %v4619 = vmul.f32 %v522, %v4598
        %v4620 = vmul.f32 %v527, %v4598
        %v4621 = vmul.f32 %v532, %v4598
        %v4622 = vmul.f32 %v537, %v4598
        %v4623 = vmul.f32 %v542, %v4598
        %v4624 = vmul.f32 %v547, %v4598
        %v4625 = vmul.f32 %v552, %v4598
        %v4626 = vmul.f32 %v557, %v4598
        %v4627 = vmul.f32 %v562, %v4598
        %v4628 = vmul.f32 %v567, %v4598
        %v4629 = vmul.f32 %v572, %v4598
        %v4630 = vmul.f32 %v577, %v4598
        %v4631 = vmul.f32 %v582, %v4598
        %v4632 = vmul.f32 %v587, %v4598
        %v4633 = vmul.f32 %v592, %v4598
        %v4634 = vmul.f32 %v597, %v4598
        %v4635 = vmul.f32 %v602, %v4598
        %v4636 = vmul.f32 %v607, %v4598
        %v4637 = vmul.f32 %v612, %v4598
        %v4638 = vmul.f32 %v617, %v4598
        %v4639 = vmul.f32 %v622, %v4598
        %v4640 = vmul.f32 %v627, %v4598
        %v4641 = vmul.f32 %v632, %v4598
        %v4642 = vmul.f32 %v637, %v4598
        %v4643 = vmul.f32 %v642, %v4598
        %v4644 = vmul.f32 %v647, %v4598
        %v4645 = vmul.f32 %v652, %v4598
        %v4646 = vmul.f32 %v657, %v4598
        %v4647 = vmul.f32 %v662, %v4598
        %v4648 = vmul.f32 %v667, %v4598
        %v4649 = vmul.f32 %v672, %v4598
        %v4650 = vmul.f32 %v677, %v4598
        %v4651 = vmul.f32 %v682, %v4598
        %v4652 = vmul.f32 %v687, %v4598
        %v4653 = vmul.f32 %v692, %v4598
        %v4654 = vmul.f32 %v697, %v4598
        %v4655 = vmul.f32 %v702, %v4598
        %v4656 = vmul.f32 %v707, %v4598
        %v4657 = vmul.f32 %v712, %v4598
        %v4658 = vmul.f32 %v717, %v4598
        %v4659 = vmul.f32 %v722, %v4598
        %v4660 = vmul.f32 %v727, %v4598
        %v4661 = vmul.f32 %v732, %v4598
        %v4662 = vmul.f32 %v737, %v4598
        %v4663 = vmul.f32 %v742, %v4598
        %v4664 = vmul.f32 %v747, %v4598
        %v4665 = vmul.f32 %v752, %v4598
        %v4666 = vmul.f32 %v757, %v4598
        %v4667 = vmul.f32 %v762, %v4598
        %v4668 = vmul.f32 %v767, %v4598
        %v4669 = vmul.f32 %v772, %v4598
        %v4670 = vmul.f32 %v777, %v4598
        %v4671 = vmul.f32 %v782, %v4598
        %v4672 = vmul.f32 %v787, %v4598
        %v4673 = vmul.f32 %v792, %v4598
        %v4674 = vmul.f32 %v797, %v4598
        %v4675 = vmul.f32 %v802, %v4598
        %v4676 = vmul.f32 %v807, %v4598
        %v4677 = vmul.f32 %v812, %v4598
        %v4678 = vmul.f32 %v817, %v4598
        %v4679 = vmul.f32 %v822, %v4598
        %v4680 = vmul.f32 %v827, %v4598
        %v4681 = vmul.f32 %v832, %v4598
        %v4682 = vmul.f32 %v837, %v4598
        %v4683 = vmul.f32 %v842, %v4598
        %v4684 = vmul.f32 %v847, %v4598
        %v4685 = vmul.f32 %v852, %v4598
        %v4686 = vmul.f32 %v857, %v4598
        %v4687 = vmul.f32 %v862, %v4598
        %v4688 = vmul.f32 %v867, %v4598
        %v4689 = vmul.f32 %v872, %v4598
        %v4690 = vmul.f32 %v877, %v4598
        %v4691 = vmul.f32 %v882, %v4598
        %v4692 = vmul.f32 %v887, %v4598
        %v4693 = vmul.f32 %v892, %v4598
        %v4694 = vmul.f32 %v897, %v4598
        %v4695 = vmul.f32 %v2323, %v4598
        %v4696 = vmul.f32 %v2328, %v4598
        %v4697 = vmul.f32 %v2333, %v4598
        %v4698 = vmul.f32 %v2338, %v4598
        %v4699 = vmul.f32 %v3762, %v4598
        %v4700 = vmul.f32 %v3767, %v4598
        %v4701 = vmul.f32 %v3772, %v4598
        %v4702 = vmul.f32 %v3777, %v4598
        %v4807 = vrot.slane %v4599, 2
        %v4808 = vrot.slane %v4600, 2
        %v4809 = vsel %vm1928, %v4807, %v4808
        %v4810 = vrot.slane %v4601, 2
        %v4811 = vsel %vm1928, %v4808, %v4810
        %v4812 = vrot.slane %v4602, 2
        %v4813 = vsel %vm1928, %v4810, %v4812
        %v4814 = vrot.slane %v4603, 2
        %v4815 = vrot.slane %v4604, 2
        %v4816 = vsel %vm1928, %v4814, %v4815
        %v4817 = vrot.slane %v4605, 2
        %v4818 = vsel %vm1928, %v4815, %v4817
        %v4819 = vrot.slane %v4606, 2
        %v4820 = vsel %vm1928, %v4817, %v4819
        %v4821 = vrot.slane %v4607, 2
        %v4822 = vrot.slane %v4608, 2
        %v4823 = vsel %vm1928, %v4821, %v4822
        %v4824 = vrot.slane %v4609, 2
        %v4825 = vsel %vm1928, %v4822, %v4824
        %v4826 = vrot.slane %v4610, 2
        %v4827 = vsel %vm1928, %v4824, %v4826
        %v4828 = vrot.slane %v4611, 2
        %v4829 = vrot.slane %v4612, 2
        %v4830 = vsel %vm1928, %v4828, %v4829
        %v4831 = vrot.slane %v4613, 2
        %v4832 = vsel %vm1928, %v4829, %v4831
        %v4833 = vrot.slane %v4614, 2
        %v4834 = vsel %vm1928, %v4831, %v4833
        %v4835 = vrot.slane %v4615, 2
        %v4836 = vrot.slane %v4616, 2
        %v4837 = vsel %vm1928, %v4835, %v4836
        %v4838 = vrot.slane %v4617, 2
        %v4839 = vsel %vm1928, %v4836, %v4838
        %v4840 = vrot.slane %v4618, 2
        %v4841 = vsel %vm1928, %v4838, %v4840
        %v4842 = vrot.slane %v4619, 2
        %v4843 = vrot.slane %v4620, 2
        %v4844 = vsel %vm1928, %v4842, %v4843
        %v4845 = vrot.slane %v4621, 2
        %v4846 = vsel %vm1928, %v4843, %v4845
        %v4847 = vrot.slane %v4622, 2
        %v4848 = vsel %vm1928, %v4845, %v4847
        %v4849 = vrot.slane %v4623, 2
        %v4850 = vrot.slane %v4624, 2
        %v4851 = vsel %vm1928, %v4849, %v4850
        %v4852 = vrot.slane %v4625, 2
        %v4853 = vsel %vm1928, %v4850, %v4852
        %v4854 = vrot.slane %v4626, 2
        %v4855 = vsel %vm1928, %v4852, %v4854
        %v4856 = vrot.slane %v4627, 2
        %v4857 = vrot.slane %v4628, 2
        %v4858 = vsel %vm1928, %v4856, %v4857
        %v4859 = vrot.slane %v4629, 2
        %v4860 = vsel %vm1928, %v4857, %v4859
        %v4861 = vrot.slane %v4630, 2
        %v4862 = vsel %vm1928, %v4859, %v4861
        %v4863 = vrot.slane %v4631, 2
        %v4864 = vrot.slane %v4632, 2
        %v4865 = vsel %vm1928, %v4863, %v4864
        %v4866 = vrot.slane %v4633, 2
        %v4867 = vsel %vm1928, %v4864, %v4866
        %v4868 = vrot.slane %v4634, 2
        %v4869 = vsel %vm1928, %v4866, %v4868
        %v4870 = vrot.slane %v4635, 2
        %v4871 = vrot.slane %v4636, 2
        %v4872 = vsel %vm1928, %v4870, %v4871
        %v4873 = vrot.slane %v4637, 2
        %v4874 = vsel %vm1928, %v4871, %v4873
        %v4875 = vrot.slane %v4638, 2
        %v4876 = vsel %vm1928, %v4873, %v4875
        %v4877 = vrot.slane %v4639, 2
        %v4878 = vrot.slane %v4640, 2
        %v4879 = vsel %vm1928, %v4877, %v4878
        %v4880 = vrot.slane %v4641, 2
        %v4881 = vsel %vm1928, %v4878, %v4880
        %v4882 = vrot.slane %v4642, 2
        %v4883 = vsel %vm1928, %v4880, %v4882
        %v4884 = vrot.slane %v4643, 2
        %v4885 = vrot.slane %v4644, 2
        %v4886 = vsel %vm1928, %v4884, %v4885
        %v4887 = vrot.slane %v4645, 2
        %v4888 = vsel %vm1928, %v4885, %v4887
        %v4889 = vrot.slane %v4646, 2
        %v4890 = vsel %vm1928, %v4887, %v4889
        %v4891 = vrot.slane %v4647, 2
        %v4892 = vrot.slane %v4648, 2
        %v4893 = vsel %vm1928, %v4891, %v4892
        %v4894 = vrot.slane %v4649, 2
        %v4895 = vsel %vm1928, %v4892, %v4894
        %v4896 = vrot.slane %v4650, 2
        %v4897 = vsel %vm1928, %v4894, %v4896
        %v4898 = vrot.slane %v4651, 2
        %v4899 = vrot.slane %v4652, 2
        %v4900 = vsel %vm1928, %v4898, %v4899
        %v4901 = vrot.slane %v4653, 2
        %v4902 = vsel %vm1928, %v4899, %v4901
        %v4903 = vrot.slane %v4654, 2
        %v4904 = vsel %vm1928, %v4901, %v4903
        %v4905 = vrot.slane %v4655, 2
        %v4906 = vrot.slane %v4656, 2
        %v4907 = vsel %vm1928, %v4905, %v4906
        %v4908 = vrot.slane %v4657, 2
        %v4909 = vsel %vm1928, %v4906, %v4908
        %v4910 = vrot.slane %v4658, 2
        %v4911 = vsel %vm1928, %v4908, %v4910
        %v4912 = vrot.slane %v4659, 2
        %v4913 = vrot.slane %v4660, 2
        %v4914 = vsel %vm1928, %v4912, %v4913
        %v4915 = vrot.slane %v4661, 2
        %v4916 = vsel %vm1928, %v4913, %v4915
        %v4917 = vrot.slane %v4662, 2
        %v4918 = vsel %vm1928, %v4915, %v4917
        %v4919 = vrot.slane %v4663, 2
        %v4920 = vrot.slane %v4664, 2
        %v4921 = vsel %vm1928, %v4919, %v4920
        %v4922 = vrot.slane %v4665, 2
        %v4923 = vsel %vm1928, %v4920, %v4922
        %v4924 = vrot.slane %v4666, 2
        %v4925 = vsel %vm1928, %v4922, %v4924
        %v4926 = vrot.slane %v4667, 2
        %v4927 = vrot.slane %v4668, 2
        %v4928 = vsel %vm1928, %v4926, %v4927
        %v4929 = vrot.slane %v4669, 2
        %v4930 = vsel %vm1928, %v4927, %v4929
        %v4931 = vrot.slane %v4670, 2
        %v4932 = vsel %vm1928, %v4929, %v4931
        %v4933 = vrot.slane %v4671, 2
        %v4934 = vrot.slane %v4672, 2
        %v4935 = vsel %vm1928, %v4933, %v4934
        %v4936 = vrot.slane %v4673, 2
        %v4937 = vsel %vm1928, %v4934, %v4936
        %v4938 = vrot.slane %v4674, 2
        %v4939 = vsel %vm1928, %v4936, %v4938
        %v4940 = vrot.slane %v4675, 2
        %v4941 = vrot.slane %v4676, 2
        %v4942 = vsel %vm1928, %v4940, %v4941
        %v4943 = vrot.slane %v4677, 2
        %v4944 = vsel %vm1928, %v4941, %v4943
        %v4945 = vrot.slane %v4678, 2
        %v4946 = vsel %vm1928, %v4943, %v4945
        %v4947 = vrot.slane %v4679, 2
        %v4948 = vrot.slane %v4680, 2
        %v4949 = vsel %vm1928, %v4947, %v4948
        %v4950 = vrot.slane %v4681, 2
        %v4951 = vsel %vm1928, %v4948, %v4950
        %v4952 = vrot.slane %v4682, 2
        %v4953 = vsel %vm1928, %v4950, %v4952
        %v4954 = vrot.slane %v4683, 2
        %v4955 = vrot.slane %v4684, 2
        %v4956 = vsel %vm1928, %v4954, %v4955
        %v4957 = vrot.slane %v4685, 2
        %v4958 = vsel %vm1928, %v4955, %v4957
        %v4959 = vrot.slane %v4686, 2
        %v4960 = vsel %vm1928, %v4957, %v4959
        %v4961 = vrot.slane %v4687, 2
        %v4962 = vrot.slane %v4688, 2
        %v4963 = vsel %vm1928, %v4961, %v4962
        %v4964 = vrot.slane %v4689, 2
        %v4965 = vsel %vm1928, %v4962, %v4964
        %v4966 = vrot.slane %v4690, 2
        %v4967 = vsel %vm1928, %v4964, %v4966
        %v4968 = vrot.slane %v4691, 2
        %v4969 = vrot.slane %v4692, 2
        %v4970 = vsel %vm1928, %v4968, %v4969
        %v4971 = vrot.slane %v4693, 2
        %v4972 = vsel %vm1928, %v4969, %v4971
        %v4973 = vrot.slane %v4694, 2
        %v4974 = vsel %vm1928, %v4971, %v4973
        %v4975 = vrot.slane %v4695, 2
        %v4976 = vrot.slane %v4696, 2
        %v4977 = vsel %vm1928, %v4975, %v4976
        %v4978 = vrot.slane %v4697, 2
        %v4979 = vsel %vm1928, %v4976, %v4978
        %v4980 = vrot.slane %v4698, 2
        %v4981 = vsel %vm1928, %v4978, %v4980
        %v4982 = vrot.slane %v4699, 2
        %v4983 = vrot.slane %v4700, 2
        %v4984 = vsel %vm1928, %v4982, %v4983
        %v4985 = vrot.slane %v4701, 2
        %v4986 = vsel %vm1928, %v4983, %v4985
        %v4987 = vrot.slane %v4702, 2
        %v4988 = vsel %vm1928, %v4985, %v4987
        %v5093 = vadd.f32 %v4490, %v4809
        %v5094 = vadd.f32 %v4491, %v4811
        %v5095 = vadd.f32 %v4492, %v4813
        %v5096 = vadd.f32 %v4493, %v4812
        %v5097 = vadd.f32 %v4494, %v4816
        %v5098 = vadd.f32 %v4495, %v4818
        %v5099 = vadd.f32 %v4496, %v4820
        %v5100 = vadd.f32 %v4497, %v4819
        %v5101 = vadd.f32 %v4498, %v4823
        %v5102 = vadd.f32 %v4499, %v4825
        %v5103 = vadd.f32 %v4500, %v4827
        %v5104 = vadd.f32 %v4501, %v4826
        %v5105 = vadd.f32 %v4502, %v4830
        %v5106 = vadd.f32 %v4503, %v4832
        %v5107 = vadd.f32 %v4504, %v4834
        %v5108 = vadd.f32 %v4505, %v4833
        %v5109 = vadd.f32 %v4506, %v4837
        %v5110 = vadd.f32 %v4507, %v4839
        %v5111 = vadd.f32 %v4508, %v4841
        %v5112 = vadd.f32 %v4509, %v4840
        %v5113 = vadd.f32 %v4510, %v4844
        %v5114 = vadd.f32 %v4511, %v4846
        %v5115 = vadd.f32 %v4512, %v4848
        %v5116 = vadd.f32 %v4513, %v4847
        %v5117 = vadd.f32 %v4514, %v4851
        %v5118 = vadd.f32 %v4515, %v4853
        %v5119 = vadd.f32 %v4516, %v4855
        %v5120 = vadd.f32 %v4517, %v4854
        %v5121 = vadd.f32 %v4518, %v4858
        %v5122 = vadd.f32 %v4519, %v4860
        %v5123 = vadd.f32 %v4520, %v4862
        %v5124 = vadd.f32 %v4521, %v4861
        %v5125 = vadd.f32 %v4522, %v4865
        %v5126 = vadd.f32 %v4523, %v4867
        %v5127 = vadd.f32 %v4524, %v4869
        %v5128 = vadd.f32 %v4525, %v4868
        %v5129 = vadd.f32 %v4526, %v4872
        %v5130 = vadd.f32 %v4527, %v4874
        %v5131 = vadd.f32 %v4528, %v4876
        %v5132 = vadd.f32 %v4529, %v4875
        %v5133 = vadd.f32 %v4530, %v4879
        %v5134 = vadd.f32 %v4531, %v4881
        %v5135 = vadd.f32 %v4532, %v4883
        %v5136 = vadd.f32 %v4533, %v4882
        %v5137 = vadd.f32 %v4534, %v4886
        %v5138 = vadd.f32 %v4535, %v4888
        %v5139 = vadd.f32 %v4536, %v4890
        %v5140 = vadd.f32 %v4537, %v4889
        %v5141 = vadd.f32 %v4538, %v4893
        %v5142 = vadd.f32 %v4539, %v4895
        %v5143 = vadd.f32 %v4540, %v4897
        %v5144 = vadd.f32 %v4541, %v4896
        %v5145 = vadd.f32 %v4542, %v4900
        %v5146 = vadd.f32 %v4543, %v4902
        %v5147 = vadd.f32 %v4544, %v4904
        %v5148 = vadd.f32 %v4545, %v4903
        %v5149 = vadd.f32 %v4546, %v4907
        %v5150 = vadd.f32 %v4547, %v4909
        %v5151 = vadd.f32 %v4548, %v4911
        %v5152 = vadd.f32 %v4549, %v4910
        %v5153 = vadd.f32 %v4550, %v4914
        %v5154 = vadd.f32 %v4551, %v4916
        %v5155 = vadd.f32 %v4552, %v4918
        %v5156 = vadd.f32 %v4553, %v4917
        %v5157 = vadd.f32 %v4554, %v4921
        %v5158 = vadd.f32 %v4555, %v4923
        %v5159 = vadd.f32 %v4556, %v4925
        %v5160 = vadd.f32 %v4557, %v4924
        %v5161 = vadd.f32 %v4558, %v4928
        %v5162 = vadd.f32 %v4559, %v4930
        %v5163 = vadd.f32 %v4560, %v4932
        %v5164 = vadd.f32 %v4561, %v4931
        %v5165 = vadd.f32 %v4562, %v4935
        %v5166 = vadd.f32 %v4563, %v4937
        %v5167 = vadd.f32 %v4564, %v4939
        %v5168 = vadd.f32 %v4565, %v4938
        %v5169 = vadd.f32 %v4566, %v4942
        %v5170 = vadd.f32 %v4567, %v4944
        %v5171 = vadd.f32 %v4568, %v4946
        %v5172 = vadd.f32 %v4569, %v4945
        %v5173 = vadd.f32 %v4570, %v4949
        %v5174 = vadd.f32 %v4571, %v4951
        %v5175 = vadd.f32 %v4572, %v4953
        %v5176 = vadd.f32 %v4573, %v4952
        %v5177 = vadd.f32 %v4574, %v4956
        %v5178 = vadd.f32 %v4575, %v4958
        %v5179 = vadd.f32 %v4576, %v4960
        %v5180 = vadd.f32 %v4577, %v4959
        %v5181 = vadd.f32 %v4578, %v4963
        %v5182 = vadd.f32 %v4579, %v4965
        %v5183 = vadd.f32 %v4580, %v4967
        %v5184 = vadd.f32 %v4581, %v4966
        %v5185 = vadd.f32 %v4582, %v4970
        %v5186 = vadd.f32 %v4583, %v4972
        %v5187 = vadd.f32 %v4584, %v4974
        %v5188 = vadd.f32 %v4585, %v4973
        %v5189 = vadd.f32 %v4586, %v4977
        %v5190 = vadd.f32 %v4587, %v4979
        %v5191 = vadd.f32 %v4588, %v4981
        %v5192 = vadd.f32 %v4589, %v4980
        %v5193 = vadd.f32 %v4590, %v4984
        %v5194 = vadd.f32 %v4591, %v4986
        %v5195 = vadd.f32 %v4592, %v4988
        %v5196 = vadd.f32 %v4593, %v4987
        %v5197 = vld [vmem:[#allocation5] sm:$0x1]
        %v5199 = vlaneseq
        %v5200 = vshrl.u32 %v5199, 7
        %v5201 = vsub.s32 0, %v5200
        %v5202 = vrot.slane %v5197, %v5201
        %v5204 = vadd.f32 %v5093, %v5202
        %v5205 = vadd.f32 %v5094, %v5202
        %v5206 = vadd.f32 %v5095, %v5202
        %v5207 = vadd.f32 %v5096, %v5202
        %v5208 = vadd.f32 %v5097, %v5202
        %v5209 = vadd.f32 %v5098, %v5202
        %v5210 = vadd.f32 %v5099, %v5202
        %v5211 = vadd.f32 %v5100, %v5202
        %v5212 = vadd.f32 %v5101, %v5202
        %v5213 = vadd.f32 %v5102, %v5202
        %v5214 = vadd.f32 %v5103, %v5202
        %v5215 = vadd.f32 %v5104, %v5202
        %v5216 = vadd.f32 %v5105, %v5202
        %v5217 = vadd.f32 %v5106, %v5202
        %v5218 = vadd.f32 %v5107, %v5202
        %v5219 = vadd.f32 %v5108, %v5202
        %v5220 = vadd.f32 %v5109, %v5202
        %v5221 = vadd.f32 %v5110, %v5202
        %v5222 = vadd.f32 %v5111, %v5202
        %v5223 = vadd.f32 %v5112, %v5202
        %v5224 = vadd.f32 %v5113, %v5202
        %v5225 = vadd.f32 %v5114, %v5202
        %v5226 = vadd.f32 %v5115, %v5202
        %v5227 = vadd.f32 %v5116, %v5202
        %v5228 = vadd.f32 %v5117, %v5202
        %v5229 = vadd.f32 %v5118, %v5202
        %v5230 = vadd.f32 %v5119, %v5202
        %v5231 = vadd.f32 %v5120, %v5202
        %v5232 = vadd.f32 %v5121, %v5202
        %v5233 = vadd.f32 %v5122, %v5202
        %v5234 = vadd.f32 %v5123, %v5202
        %v5235 = vadd.f32 %v5124, %v5202
        %v5236 = vadd.f32 %v5125, %v5202
        %v5237 = vadd.f32 %v5126, %v5202
        %v5238 = vadd.f32 %v5127, %v5202
        %v5239 = vadd.f32 %v5128, %v5202
        %v5240 = vadd.f32 %v5129, %v5202
        %v5241 = vadd.f32 %v5130, %v5202
        %v5242 = vadd.f32 %v5131, %v5202
        %v5243 = vadd.f32 %v5132, %v5202
        %v5244 = vadd.f32 %v5133, %v5202
        %v5245 = vadd.f32 %v5134, %v5202
        %v5246 = vadd.f32 %v5135, %v5202
        %v5247 = vadd.f32 %v5136, %v5202
        %v5248 = vadd.f32 %v5137, %v5202
        %v5249 = vadd.f32 %v5138, %v5202
        %v5250 = vadd.f32 %v5139, %v5202
        %v5251 = vadd.f32 %v5140, %v5202
        %v5252 = vadd.f32 %v5141, %v5202
        %v5253 = vadd.f32 %v5142, %v5202
        %v5254 = vadd.f32 %v5143, %v5202
        %v5255 = vadd.f32 %v5144, %v5202
        %v5256 = vadd.f32 %v5145, %v5202
        %v5257 = vadd.f32 %v5146, %v5202
        %v5258 = vadd.f32 %v5147, %v5202
        %v5259 = vadd.f32 %v5148, %v5202
        %v5260 = vadd.f32 %v5149, %v5202
        %v5261 = vadd.f32 %v5150, %v5202
        %v5262 = vadd.f32 %v5151, %v5202
        %v5263 = vadd.f32 %v5152, %v5202
        %v5264 = vadd.f32 %v5153, %v5202
        %v5265 = vadd.f32 %v5154, %v5202
        %v5266 = vadd.f32 %v5155, %v5202
        %v5267 = vadd.f32 %v5156, %v5202
        %v5268 = vadd.f32 %v5157, %v5202
        %v5269 = vadd.f32 %v5158, %v5202
        %v5270 = vadd.f32 %v5159, %v5202
        %v5271 = vadd.f32 %v5160, %v5202
        %v5272 = vadd.f32 %v5161, %v5202
        %v5273 = vadd.f32 %v5162, %v5202
        %v5274 = vadd.f32 %v5163, %v5202
        %v5275 = vadd.f32 %v5164, %v5202
        %v5276 = vadd.f32 %v5165, %v5202
        %v5277 = vadd.f32 %v5166, %v5202
        %v5278 = vadd.f32 %v5167, %v5202
        %v5279 = vadd.f32 %v5168, %v5202
        %v5280 = vadd.f32 %v5169, %v5202
        %v5281 = vadd.f32 %v5170, %v5202
        %v5282 = vadd.f32 %v5171, %v5202
        %v5283 = vadd.f32 %v5172, %v5202
        %v5284 = vadd.f32 %v5173, %v5202
        %v5285 = vadd.f32 %v5174, %v5202
        %v5286 = vadd.f32 %v5175, %v5202
        %v5287 = vadd.f32 %v5176, %v5202
        %v5288 = vadd.f32 %v5177, %v5202
        %v5289 = vadd.f32 %v5178, %v5202
        %v5290 = vadd.f32 %v5179, %v5202
        %v5291 = vadd.f32 %v5180, %v5202
        %v5292 = vadd.f32 %v5181, %v5202
        %v5293 = vadd.f32 %v5182, %v5202
        %v5294 = vadd.f32 %v5183, %v5202
        %v5295 = vadd.f32 %v5184, %v5202
        %v5296 = vadd.f32 %v5185, %v5202
        %v5297 = vadd.f32 %v5186, %v5202
        %v5298 = vadd.f32 %v5187, %v5202
        %v5299 = vadd.f32 %v5188, %v5202
        %v5300 = vadd.f32 %v5189, %v5202
        %v5301 = vadd.f32 %v5190, %v5202
        %v5302 = vadd.f32 %v5191, %v5202
        %v5303 = vadd.f32 %v5192, %v5202
        %v5304 = vadd.f32 %v5193, %v5202
        %v5305 = vadd.f32 %v5194, %v5202
        %v5306 = vadd.f32 %v5195, %v5202
        %v5307 = vadd.f32 %v5196, %v5202
        %v5308 = vmax.f32 %v5204, 0.0
        %v5309 = vmax.f32 %v5205, 0.0
        %v5310 = vmax.f32 %v5206, 0.0
        %v5311 = vmax.f32 %v5207, 0.0
        %v5312 = vmax.f32 %v5208, 0.0
        %v5313 = vmax.f32 %v5209, 0.0
        %v5314 = vmax.f32 %v5210, 0.0
        %v5315 = vmax.f32 %v5211, 0.0
        %v5316 = vmax.f32 %v5212, 0.0
        %v5317 = vmax.f32 %v5213, 0.0
        %v5318 = vmax.f32 %v5214, 0.0
        %v5319 = vmax.f32 %v5215, 0.0
        %v5320 = vmax.f32 %v5216, 0.0
        %v5321 = vmax.f32 %v5217, 0.0
        %v5322 = vmax.f32 %v5218, 0.0
        %v5323 = vmax.f32 %v5219, 0.0
        %v5324 = vmax.f32 %v5220, 0.0
        %v5325 = vmax.f32 %v5221, 0.0
        %v5326 = vmax.f32 %v5222, 0.0
        %v5327 = vmax.f32 %v5223, 0.0
        %v5328 = vmax.f32 %v5224, 0.0
        %v5329 = vmax.f32 %v5225, 0.0
        %v5330 = vmax.f32 %v5226, 0.0
        %v5331 = vmax.f32 %v5227, 0.0
        %v5332 = vmax.f32 %v5228, 0.0
        %v5333 = vmax.f32 %v5229, 0.0
        %v5334 = vmax.f32 %v5230, 0.0
        %v5335 = vmax.f32 %v5231, 0.0
        %v5336 = vmax.f32 %v5232, 0.0
        %v5337 = vmax.f32 %v5233, 0.0
        %v5338 = vmax.f32 %v5234, 0.0
        %v5339 = vmax.f32 %v5235, 0.0
        %v5340 = vmax.f32 %v5236, 0.0
        %v5341 = vmax.f32 %v5237, 0.0
        %v5342 = vmax.f32 %v5238, 0.0
        %v5343 = vmax.f32 %v5239, 0.0
        %v5344 = vmax.f32 %v5240, 0.0
        %v5345 = vmax.f32 %v5241, 0.0
        %v5346 = vmax.f32 %v5242, 0.0
        %v5347 = vmax.f32 %v5243, 0.0
        %v5348 = vmax.f32 %v5244, 0.0
        %v5349 = vmax.f32 %v5245, 0.0
        %v5350 = vmax.f32 %v5246, 0.0
        %v5351 = vmax.f32 %v5247, 0.0
        %v5352 = vmax.f32 %v5248, 0.0
        %v5353 = vmax.f32 %v5249, 0.0
        %v5354 = vmax.f32 %v5250, 0.0
        %v5355 = vmax.f32 %v5251, 0.0
        %v5356 = vmax.f32 %v5252, 0.0
        %v5357 = vmax.f32 %v5253, 0.0
        %v5358 = vmax.f32 %v5254, 0.0
        %v5359 = vmax.f32 %v5255, 0.0
        %v5360 = vmax.f32 %v5256, 0.0
        %v5361 = vmax.f32 %v5257, 0.0
        %v5362 = vmax.f32 %v5258, 0.0
        %v5363 = vmax.f32 %v5259, 0.0
        %v5364 = vmax.f32 %v5260, 0.0
        %v5365 = vmax.f32 %v5261, 0.0
        %v5366 = vmax.f32 %v5262, 0.0
        %v5367 = vmax.f32 %v5263, 0.0
        %v5368 = vmax.f32 %v5264, 0.0
        %v5369 = vmax.f32 %v5265, 0.0
        %v5370 = vmax.f32 %v5266, 0.0
        %v5371 = vmax.f32 %v5267, 0.0
        %v5372 = vmax.f32 %v5268, 0.0
        %v5373 = vmax.f32 %v5269, 0.0
        %v5374 = vmax.f32 %v5270, 0.0
        %v5375 = vmax.f32 %v5271, 0.0
        %v5376 = vmax.f32 %v5272, 0.0
        %v5377 = vmax.f32 %v5273, 0.0
        %v5378 = vmax.f32 %v5274, 0.0
        %v5379 = vmax.f32 %v5275, 0.0
        %v5380 = vmax.f32 %v5276, 0.0
        %v5381 = vmax.f32 %v5277, 0.0
        %v5382 = vmax.f32 %v5278, 0.0
        %v5383 = vmax.f32 %v5279, 0.0
        %v5384 = vmax.f32 %v5280, 0.0
        %v5385 = vmax.f32 %v5281, 0.0
        %v5386 = vmax.f32 %v5282, 0.0
        %v5387 = vmax.f32 %v5283, 0.0
        %v5388 = vmax.f32 %v5284, 0.0
        %v5389 = vmax.f32 %v5285, 0.0
        %v5390 = vmax.f32 %v5286, 0.0
        %v5391 = vmax.f32 %v5287, 0.0
        %v5392 = vmax.f32 %v5288, 0.0
        %v5393 = vmax.f32 %v5289, 0.0
        %v5394 = vmax.f32 %v5290, 0.0
        %v5395 = vmax.f32 %v5291, 0.0
        %v5396 = vmax.f32 %v5292, 0.0
        %v5397 = vmax.f32 %v5293, 0.0
        %v5398 = vmax.f32 %v5294, 0.0
        %v5399 = vmax.f32 %v5295, 0.0
        %v5400 = vmax.f32 %v5296, 0.0
        %v5401 = vmax.f32 %v5297, 0.0
        %v5402 = vmax.f32 %v5298, 0.0
        %v5403 = vmax.f32 %v5299, 0.0
        %v5404 = vmax.f32 %v5300, 0.0
        %v5405 = vmax.f32 %v5301, 0.0
        %v5406 = vmax.f32 %v5302, 0.0
        %v5407 = vmax.f32 %v5303, 0.0
        %v5408 = vmax.f32 %v5304, 0.0
        %v5409 = vmax.f32 %v5305, 0.0
        %v5410 = vmax.f32 %v5306, 0.0
        %v5411 = vmax.f32 %v5307, 0.0
        %v5412 = vpack.c.bf16 %v5309, %v5308
        %v5413 = vpack.c.bf16 %v5311, %v5310
        %v5414 = vpack.c.bf16 %v5313, %v5312
        %v5415 = vpack.c.bf16 %v5315, %v5314
        %v5416 = vpack.c.bf16 %v5317, %v5316
        %v5417 = vpack.c.bf16 %v5319, %v5318
        %v5418 = vpack.c.bf16 %v5321, %v5320
        %v5419 = vpack.c.bf16 %v5323, %v5322
        %v5420 = vpack.c.bf16 %v5325, %v5324
        %v5421 = vpack.c.bf16 %v5327, %v5326
        %v5422 = vpack.c.bf16 %v5329, %v5328
        %v5423 = vpack.c.bf16 %v5331, %v5330
        %v5424 = vpack.c.bf16 %v5333, %v5332
        %v5425 = vpack.c.bf16 %v5335, %v5334
        %v5426 = vpack.c.bf16 %v5337, %v5336
        %v5427 = vpack.c.bf16 %v5339, %v5338
        %v5428 = vpack.c.bf16 %v5341, %v5340
        %v5429 = vpack.c.bf16 %v5343, %v5342
        %v5430 = vpack.c.bf16 %v5345, %v5344
        %v5431 = vpack.c.bf16 %v5347, %v5346
        %v5432 = vpack.c.bf16 %v5349, %v5348
        %v5433 = vpack.c.bf16 %v5351, %v5350
        %v5434 = vpack.c.bf16 %v5353, %v5352
        %v5435 = vpack.c.bf16 %v5355, %v5354
        %v5436 = vpack.c.bf16 %v5357, %v5356
        %v5437 = vpack.c.bf16 %v5359, %v5358
        %v5438 = vpack.c.bf16 %v5361, %v5360
        %v5439 = vpack.c.bf16 %v5363, %v5362
        %v5440 = vpack.c.bf16 %v5365, %v5364
        %v5441 = vpack.c.bf16 %v5367, %v5366
        %v5442 = vpack.c.bf16 %v5369, %v5368
        %v5443 = vpack.c.bf16 %v5371, %v5370
        %v5444 = vpack.c.bf16 %v5373, %v5372
        %v5445 = vpack.c.bf16 %v5375, %v5374
        %v5446 = vpack.c.bf16 %v5377, %v5376
        %v5447 = vpack.c.bf16 %v5379, %v5378
        %v5448 = vpack.c.bf16 %v5381, %v5380
        %v5449 = vpack.c.bf16 %v5383, %v5382
        %v5450 = vpack.c.bf16 %v5385, %v5384
        %v5451 = vpack.c.bf16 %v5387, %v5386
        %v5452 = vpack.c.bf16 %v5389, %v5388
        %v5453 = vpack.c.bf16 %v5391, %v5390
        %v5454 = vpack.c.bf16 %v5393, %v5392
        %v5455 = vpack.c.bf16 %v5395, %v5394
        %v5456 = vpack.c.bf16 %v5397, %v5396
        %v5457 = vpack.c.bf16 %v5399, %v5398
        %v5458 = vpack.c.bf16 %v5401, %v5400
        %v5459 = vpack.c.bf16 %v5403, %v5402
        %v5460 = vpack.c.bf16 %v5405, %v5404
        %v5461 = vpack.c.bf16 %v5407, %v5406
        %v5462 = vpack.c.bf16 %v5409, %v5408
        %v5463 = vpack.c.bf16 %v5411, %v5410
        %v5512 = vunpack.c.l.b16 %v5412
        %v5513 = vunpack.c.h.b16 %v5412
        %v5514 = vunpack.c.l.b16 %v5413
        %v5515 = vunpack.c.l.b16 %v5414
        %v5516 = vunpack.c.h.b16 %v5414
        %v5517 = vunpack.c.l.b16 %v5415
        %v5518 = vunpack.c.l.b16 %v5416
        %v5519 = vunpack.c.h.b16 %v5416
        %v5520 = vunpack.c.l.b16 %v5417
        %v5521 = vunpack.c.l.b16 %v5418
        %v5522 = vunpack.c.h.b16 %v5418
        %v5523 = vunpack.c.l.b16 %v5419
        %v5524 = vunpack.c.l.b16 %v5420
        %v5525 = vunpack.c.h.b16 %v5420
        %v5526 = vunpack.c.l.b16 %v5421
        %v5527 = vunpack.c.l.b16 %v5422
        %v5528 = vunpack.c.h.b16 %v5422
        %v5529 = vunpack.c.l.b16 %v5423
        %v5530 = vunpack.c.l.b16 %v5424
        %v5531 = vunpack.c.h.b16 %v5424
        %v5532 = vunpack.c.l.b16 %v5425
        %v5533 = vunpack.c.l.b16 %v5426
        %v5534 = vunpack.c.h.b16 %v5426
        %v5535 = vunpack.c.l.b16 %v5427
        %v5536 = vunpack.c.l.b16 %v5428
        %v5537 = vunpack.c.h.b16 %v5428
        %v5538 = vunpack.c.l.b16 %v5429
        %v5539 = vunpack.c.l.b16 %v5430
        %v5540 = vunpack.c.h.b16 %v5430
        %v5541 = vunpack.c.l.b16 %v5431
        %v5542 = vunpack.c.l.b16 %v5432
        %v5543 = vunpack.c.h.b16 %v5432
        %v5544 = vunpack.c.l.b16 %v5433
        %v5545 = vunpack.c.l.b16 %v5434
        %v5546 = vunpack.c.h.b16 %v5434
        %v5547 = vunpack.c.l.b16 %v5435
        %v5548 = vunpack.c.l.b16 %v5436
        %v5549 = vunpack.c.h.b16 %v5436
        %v5550 = vunpack.c.l.b16 %v5437
        %v5551 = vunpack.c.l.b16 %v5438
        %v5552 = vunpack.c.h.b16 %v5438
        %v5553 = vunpack.c.l.b16 %v5439
        %v5554 = vunpack.c.l.b16 %v5440
        %v5555 = vunpack.c.h.b16 %v5440
        %v5556 = vunpack.c.l.b16 %v5441
        %v5557 = vunpack.c.l.b16 %v5442
        %v5558 = vunpack.c.h.b16 %v5442
        %v5559 = vunpack.c.l.b16 %v5443
        %v5560 = vunpack.c.l.b16 %v5444
        %v5561 = vunpack.c.h.b16 %v5444
        %v5562 = vunpack.c.l.b16 %v5445
        %v5563 = vunpack.c.l.b16 %v5446
        %v5564 = vunpack.c.h.b16 %v5446
        %v5565 = vunpack.c.l.b16 %v5447
        %v5566 = vunpack.c.l.b16 %v5448
        %v5567 = vunpack.c.h.b16 %v5448
        %v5568 = vunpack.c.l.b16 %v5449
        %v5569 = vunpack.c.l.b16 %v5450
        %v5570 = vunpack.c.h.b16 %v5450
        %v5571 = vunpack.c.l.b16 %v5451
        %v5572 = vunpack.c.l.b16 %v5452
        %v5573 = vunpack.c.h.b16 %v5452
        %v5574 = vunpack.c.l.b16 %v5453
        %v5575 = vunpack.c.l.b16 %v5454
        %v5576 = vunpack.c.h.b16 %v5454
        %v5577 = vunpack.c.l.b16 %v5455
        %v5578 = vunpack.c.l.b16 %v5456
        %v5579 = vunpack.c.h.b16 %v5456
        %v5580 = vunpack.c.l.b16 %v5457
        %v5581 = vunpack.c.l.b16 %v5458
        %v5582 = vunpack.c.h.b16 %v5458
        %v5583 = vunpack.c.l.b16 %v5459
        %v5584 = vunpack.c.h.b16 %v5413
        %v5585 = vunpack.c.h.b16 %v5415
        %v5586 = vunpack.c.h.b16 %v5417
        %v5587 = vunpack.c.h.b16 %v5419
        %v5588 = vunpack.c.h.b16 %v5421
        %v5589 = vunpack.c.h.b16 %v5423
        %v5590 = vunpack.c.h.b16 %v5425
        %v5591 = vunpack.c.h.b16 %v5427
        %v5592 = vunpack.c.h.b16 %v5429
        %v5593 = vunpack.c.h.b16 %v5431
        %v5594 = vunpack.c.h.b16 %v5433
        %v5595 = vunpack.c.h.b16 %v5435
        %v5596 = vunpack.c.h.b16 %v5437
        %v5597 = vunpack.c.h.b16 %v5439
        %v5598 = vunpack.c.h.b16 %v5441
        %v5599 = vunpack.c.h.b16 %v5443
        %v5600 = vunpack.c.h.b16 %v5445
        %v5601 = vunpack.c.h.b16 %v5447
        %v5602 = vunpack.c.h.b16 %v5449
        %v5603 = vunpack.c.h.b16 %v5451
        %v5604 = vunpack.c.h.b16 %v5453
        %v5605 = vunpack.c.h.b16 %v5455
        %v5606 = vunpack.c.h.b16 %v5457
        %v5607 = vunpack.c.h.b16 %v5459
        %v5608 = vpack.c.b16 %v5512, %v5512
        %v5609 = vpack.c.b16 %v5513, %v5513
        %v5610 = vpack.c.b16 %v5514, %v5514
        %v5611 = vpack.c.b16 %v5584, %v5584
        %v5612 = vpack.c.b16 %v5515, %v5515
        %v5613 = vpack.c.b16 %v5516, %v5516
        %v5614 = vpack.c.b16 %v5517, %v5517
        %v5615 = vpack.c.b16 %v5585, %v5585
        %v5616 = vpack.c.b16 %v5518, %v5518
        %v5617 = vpack.c.b16 %v5519, %v5519
        %v5618 = vpack.c.b16 %v5520, %v5520
        %v5619 = vpack.c.b16 %v5586, %v5586
        %v5620 = vpack.c.b16 %v5521, %v5521
        %v5621 = vpack.c.b16 %v5522, %v5522
        %v5622 = vpack.c.b16 %v5523, %v5523
        %v5623 = vpack.c.b16 %v5587, %v5587
        %v5624 = vpack.c.b16 %v5524, %v5524
        %v5625 = vpack.c.b16 %v5525, %v5525
        %v5626 = vpack.c.b16 %v5526, %v5526
        %v5627 = vpack.c.b16 %v5588, %v5588
        %v5628 = vpack.c.b16 %v5527, %v5527
        %v5629 = vpack.c.b16 %v5528, %v5528
        %v5630 = vpack.c.b16 %v5529, %v5529
        %v5631 = vpack.c.b16 %v5589, %v5589
        %v5632 = vpack.c.b16 %v5530, %v5530
        %v5633 = vpack.c.b16 %v5531, %v5531
        %v5634 = vpack.c.b16 %v5532, %v5532
        %v5635 = vpack.c.b16 %v5590, %v5590
        %v5636 = vpack.c.b16 %v5533, %v5533
        %v5637 = vpack.c.b16 %v5534, %v5534
        %v5638 = vpack.c.b16 %v5535, %v5535
        %v5639 = vpack.c.b16 %v5591, %v5591
        %v5640 = vpack.c.b16 %v5536, %v5536
        %v5641 = vpack.c.b16 %v5537, %v5537
        %v5642 = vpack.c.b16 %v5538, %v5538
        %v5643 = vpack.c.b16 %v5592, %v5592
        %v5644 = vpack.c.b16 %v5539, %v5539
        %v5645 = vpack.c.b16 %v5540, %v5540
        %v5646 = vpack.c.b16 %v5541, %v5541
        %v5647 = vpack.c.b16 %v5593, %v5593
        %v5648 = vpack.c.b16 %v5542, %v5542
        %v5649 = vpack.c.b16 %v5543, %v5543
        %v5650 = vpack.c.b16 %v5544, %v5544
        %v5651 = vpack.c.b16 %v5594, %v5594
        %v5652 = vpack.c.b16 %v5545, %v5545
        %v5653 = vpack.c.b16 %v5546, %v5546
        %v5654 = vpack.c.b16 %v5547, %v5547
        %v5655 = vpack.c.b16 %v5595, %v5595
        %v5656 = vpack.c.b16 %v5548, %v5548
        %v5657 = vpack.c.b16 %v5549, %v5549
        %v5658 = vpack.c.b16 %v5550, %v5550
        %v5659 = vpack.c.b16 %v5596, %v5596
        %v5660 = vpack.c.b16 %v5551, %v5551
        %v5661 = vpack.c.b16 %v5552, %v5552
        %v5662 = vpack.c.b16 %v5553, %v5553
        %v5663 = vpack.c.b16 %v5597, %v5597
        %v5664 = vpack.c.b16 %v5554, %v5554
        %v5665 = vpack.c.b16 %v5555, %v5555
        %v5666 = vpack.c.b16 %v5556, %v5556
        %v5667 = vpack.c.b16 %v5598, %v5598
        %v5668 = vpack.c.b16 %v5557, %v5557
        %v5669 = vpack.c.b16 %v5558, %v5558
        %v5670 = vpack.c.b16 %v5559, %v5559
        %v5671 = vpack.c.b16 %v5599, %v5599
        %v5672 = vpack.c.b16 %v5560, %v5560
        %v5673 = vpack.c.b16 %v5561, %v5561
        %v5674 = vpack.c.b16 %v5562, %v5562
        %v5675 = vpack.c.b16 %v5600, %v5600
        %v5676 = vpack.c.b16 %v5563, %v5563
        %v5677 = vpack.c.b16 %v5564, %v5564
        %v5678 = vpack.c.b16 %v5565, %v5565
        %v5679 = vpack.c.b16 %v5601, %v5601
        %v5680 = vpack.c.b16 %v5566, %v5566
        %v5681 = vpack.c.b16 %v5567, %v5567
        %v5682 = vpack.c.b16 %v5568, %v5568
        %v5683 = vpack.c.b16 %v5602, %v5602
        %v5684 = vpack.c.b16 %v5569, %v5569
        %v5685 = vpack.c.b16 %v5570, %v5570
        %v5686 = vpack.c.b16 %v5571, %v5571
        %v5687 = vpack.c.b16 %v5603, %v5603
        %v5688 = vpack.c.b16 %v5572, %v5572
        %v5689 = vpack.c.b16 %v5573, %v5573
        %v5690 = vpack.c.b16 %v5574, %v5574
        %v5691 = vpack.c.b16 %v5604, %v5604
        %v5692 = vpack.c.b16 %v5575, %v5575
        %v5693 = vpack.c.b16 %v5576, %v5576
        %v5694 = vpack.c.b16 %v5577, %v5577
        %v5695 = vpack.c.b16 %v5605, %v5605
        %v5696 = vpack.c.b16 %v5578, %v5578
        %v5697 = vpack.c.b16 %v5579, %v5579
        %v5698 = vpack.c.b16 %v5580, %v5580
        %v5699 = vpack.c.b16 %v5606, %v5606
        %v5700 = vpack.c.b16 %v5581, %v5581
        %v5701 = vpack.c.b16 %v5582, %v5582
        %v5702 = vpack.c.b16 %v5583, %v5583
        %v5703 = vpack.c.b16 %v5607, %v5607
        %vm5704 = vsmask.f32 3328
        %vm5705 = vsmask.f32 7440
        %vm5706 = vmor %vm5704, %vm5705
        %v5708 = vshrl.u32 %v5608, 16
        %v5710 = vrot.slane %v5708, 4
        %v5711 = vshll.u32 %v5608, 16
        %v5713 = vrot.slane %v5711, 5
        %v5714 = vor.u32 %v5710, %v5713
        %v5715 = vrot.slane %v5714, 4
        %v5717 = vshll.u32 %v5609, 16
        %v5719 = vrot.slane %v5717, 5
        %v5720 = vsel %vm5706, %v5715, %v5719
        %v5721 = vshrl.u32 %v5609, 16
        %v5723 = vrot.slane %v5721, 4
        %v5724 = vor.u32 %v5723, %v5719
        %v5725 = vrot.slane %v5724, 4
        %v5727 = vshll.u32 %v5610, 16
        %v5729 = vrot.slane %v5727, 5
        %v5730 = vsel %vm5706, %v5725, %v5729
        %v5731 = vshrl.u32 %v5610, 16
        %v5733 = vrot.slane %v5731, 4
        %v5734 = vor.u32 %v5733, %v5729
        %v5735 = vrot.slane %v5734, 4
        %v5737 = vshll.u32 %v5611, 16
        %v5739 = vrot.slane %v5737, 5
        %v5740 = vsel %vm5706, %v5735, %v5739
        %v5742 = vshrl.u32 %v5612, 16
        %v5744 = vrot.slane %v5742, 4
        %v5745 = vshll.u32 %v5612, 16
        %v5747 = vrot.slane %v5745, 5
        %v5748 = vor.u32 %v5744, %v5747
        %v5749 = vrot.slane %v5748, 4
        %v5751 = vshll.u32 %v5613, 16
        %v5753 = vrot.slane %v5751, 5
        %v5754 = vsel %vm5706, %v5749, %v5753
        %v5755 = vshrl.u32 %v5613, 16
        %v5757 = vrot.slane %v5755, 4
        %v5758 = vor.u32 %v5757, %v5753
        %v5759 = vrot.slane %v5758, 4
        %v5761 = vshll.u32 %v5614, 16
        %v5763 = vrot.slane %v5761, 5
        %v5764 = vsel %vm5706, %v5759, %v5763
        %v5765 = vshrl.u32 %v5614, 16
        %v5767 = vrot.slane %v5765, 4
        %v5768 = vor.u32 %v5767, %v5763
        %v5769 = vrot.slane %v5768, 4
        %v5771 = vshll.u32 %v5615, 16
        %v5773 = vrot.slane %v5771, 5
        %v5774 = vsel %vm5706, %v5769, %v5773
        %v5776 = vshrl.u32 %v5616, 16
        %v5778 = vrot.slane %v5776, 4
        %v5779 = vshll.u32 %v5616, 16
        %v5781 = vrot.slane %v5779, 5
        %v5782 = vor.u32 %v5778, %v5781
        %v5783 = vrot.slane %v5782, 4
        %v5785 = vshll.u32 %v5617, 16
        %v5787 = vrot.slane %v5785, 5
        %v5788 = vsel %vm5706, %v5783, %v5787
        %v5789 = vshrl.u32 %v5617, 16
        %v5791 = vrot.slane %v5789, 4
        %v5792 = vor.u32 %v5791, %v5787
        %v5793 = vrot.slane %v5792, 4
        %v5795 = vshll.u32 %v5618, 16
        %v5797 = vrot.slane %v5795, 5
        %v5798 = vsel %vm5706, %v5793, %v5797
        %v5799 = vshrl.u32 %v5618, 16
        %v5801 = vrot.slane %v5799, 4
        %v5802 = vor.u32 %v5801, %v5797
        %v5803 = vrot.slane %v5802, 4
        %v5805 = vshll.u32 %v5619, 16
        %v5807 = vrot.slane %v5805, 5
        %v5808 = vsel %vm5706, %v5803, %v5807
        %v5810 = vshrl.u32 %v5620, 16
        %v5812 = vrot.slane %v5810, 4
        %v5813 = vshll.u32 %v5620, 16
        %v5815 = vrot.slane %v5813, 5
        %v5816 = vor.u32 %v5812, %v5815
        %v5817 = vrot.slane %v5816, 4
        %v5819 = vshll.u32 %v5621, 16
        %v5821 = vrot.slane %v5819, 5
        %v5822 = vsel %vm5706, %v5817, %v5821
        %v5823 = vshrl.u32 %v5621, 16
        %v5825 = vrot.slane %v5823, 4
        %v5826 = vor.u32 %v5825, %v5821
        %v5827 = vrot.slane %v5826, 4
        %v5829 = vshll.u32 %v5622, 16
        %v5831 = vrot.slane %v5829, 5
        %v5832 = vsel %vm5706, %v5827, %v5831
        %v5833 = vshrl.u32 %v5622, 16
        %v5835 = vrot.slane %v5833, 4
        %v5836 = vor.u32 %v5835, %v5831
        %v5837 = vrot.slane %v5836, 4
        %v5839 = vshll.u32 %v5623, 16
        %v5841 = vrot.slane %v5839, 5
        %v5842 = vsel %vm5706, %v5837, %v5841
        %v5844 = vshrl.u32 %v5624, 16
        %v5846 = vrot.slane %v5844, 4
        %v5847 = vshll.u32 %v5624, 16
        %v5849 = vrot.slane %v5847, 5
        %v5850 = vor.u32 %v5846, %v5849
        %v5851 = vrot.slane %v5850, 4
        %v5853 = vshll.u32 %v5625, 16
        %v5855 = vrot.slane %v5853, 5
        %v5856 = vsel %vm5706, %v5851, %v5855
        %v5857 = vshrl.u32 %v5625, 16
        %v5859 = vrot.slane %v5857, 4
        %v5860 = vor.u32 %v5859, %v5855
        %v5861 = vrot.slane %v5860, 4
        %v5863 = vshll.u32 %v5626, 16
        %v5865 = vrot.slane %v5863, 5
        %v5866 = vsel %vm5706, %v5861, %v5865
        %v5867 = vshrl.u32 %v5626, 16
        %v5869 = vrot.slane %v5867, 4
        %v5870 = vor.u32 %v5869, %v5865
        %v5871 = vrot.slane %v5870, 4
        %v5873 = vshll.u32 %v5627, 16
        %v5875 = vrot.slane %v5873, 5
        %v5876 = vsel %vm5706, %v5871, %v5875
        %v5878 = vshrl.u32 %v5628, 16
        %v5880 = vrot.slane %v5878, 4
        %v5881 = vshll.u32 %v5628, 16
        %v5883 = vrot.slane %v5881, 5
        %v5884 = vor.u32 %v5880, %v5883
        %v5885 = vrot.slane %v5884, 4
        %v5887 = vshll.u32 %v5629, 16
        %v5889 = vrot.slane %v5887, 5
        %v5890 = vsel %vm5706, %v5885, %v5889
        %v5891 = vshrl.u32 %v5629, 16
        %v5893 = vrot.slane %v5891, 4
        %v5894 = vor.u32 %v5893, %v5889
        %v5895 = vrot.slane %v5894, 4
        %v5897 = vshll.u32 %v5630, 16
        %v5899 = vrot.slane %v5897, 5
        %v5900 = vsel %vm5706, %v5895, %v5899
        %v5901 = vshrl.u32 %v5630, 16
        %v5903 = vrot.slane %v5901, 4
        %v5904 = vor.u32 %v5903, %v5899
        %v5905 = vrot.slane %v5904, 4
        %v5907 = vshll.u32 %v5631, 16
        %v5909 = vrot.slane %v5907, 5
        %v5910 = vsel %vm5706, %v5905, %v5909
        %v5912 = vshrl.u32 %v5632, 16
        %v5914 = vrot.slane %v5912, 4
        %v5915 = vshll.u32 %v5632, 16
        %v5917 = vrot.slane %v5915, 5
        %v5918 = vor.u32 %v5914, %v5917
        %v5919 = vrot.slane %v5918, 4
        %v5921 = vshll.u32 %v5633, 16
        %v5923 = vrot.slane %v5921, 5
        %v5924 = vsel %vm5706, %v5919, %v5923
        %v5925 = vshrl.u32 %v5633, 16
        %v5927 = vrot.slane %v5925, 4
        %v5928 = vor.u32 %v5927, %v5923
        %v5929 = vrot.slane %v5928, 4
        %v5931 = vshll.u32 %v5634, 16
        %v5933 = vrot.slane %v5931, 5
        %v5934 = vsel %vm5706, %v5929, %v5933
        %v5935 = vshrl.u32 %v5634, 16
        %v5937 = vrot.slane %v5935, 4
        %v5938 = vor.u32 %v5937, %v5933
        %v5939 = vrot.slane %v5938, 4
        %v5941 = vshll.u32 %v5635, 16
        %v5943 = vrot.slane %v5941, 5
        %v5944 = vsel %vm5706, %v5939, %v5943
        %v5946 = vshrl.u32 %v5636, 16
        %v5948 = vrot.slane %v5946, 4
        %v5949 = vshll.u32 %v5636, 16
        %v5951 = vrot.slane %v5949, 5
        %v5952 = vor.u32 %v5948, %v5951
        %v5953 = vrot.slane %v5952, 4
        %v5955 = vshll.u32 %v5637, 16
        %v5957 = vrot.slane %v5955, 5
        %v5958 = vsel %vm5706, %v5953, %v5957
        %v5959 = vshrl.u32 %v5637, 16
        %v5961 = vrot.slane %v5959, 4
        %v5962 = vor.u32 %v5961, %v5957
        %v5963 = vrot.slane %v5962, 4
        %v5965 = vshll.u32 %v5638, 16
        %v5967 = vrot.slane %v5965, 5
        %v5968 = vsel %vm5706, %v5963, %v5967
        %v5969 = vshrl.u32 %v5638, 16
        %v5971 = vrot.slane %v5969, 4
        %v5972 = vor.u32 %v5971, %v5967
        %v5973 = vrot.slane %v5972, 4
        %v5975 = vshll.u32 %v5639, 16
        %v5977 = vrot.slane %v5975, 5
        %v5978 = vsel %vm5706, %v5973, %v5977
        %v5980 = vshrl.u32 %v5640, 16
        %v5982 = vrot.slane %v5980, 4
        %v5983 = vshll.u32 %v5640, 16
        %v5985 = vrot.slane %v5983, 5
        %v5986 = vor.u32 %v5982, %v5985
        %v5987 = vrot.slane %v5986, 4
        %v5989 = vshll.u32 %v5641, 16
        %v5991 = vrot.slane %v5989, 5
        %v5992 = vsel %vm5706, %v5987, %v5991
        %v5993 = vshrl.u32 %v5641, 16
        %v5995 = vrot.slane %v5993, 4
        %v5996 = vor.u32 %v5995, %v5991
        %v5997 = vrot.slane %v5996, 4
        %v5999 = vshll.u32 %v5642, 16
        %v6001 = vrot.slane %v5999, 5
        %v6002 = vsel %vm5706, %v5997, %v6001
        %v6003 = vshrl.u32 %v5642, 16
        %v6005 = vrot.slane %v6003, 4
        %v6006 = vor.u32 %v6005, %v6001
        %v6007 = vrot.slane %v6006, 4
        %v6009 = vshll.u32 %v5643, 16
        %v6011 = vrot.slane %v6009, 5
        %v6012 = vsel %vm5706, %v6007, %v6011
        %v6014 = vshrl.u32 %v5644, 16
        %v6016 = vrot.slane %v6014, 4
        %v6017 = vshll.u32 %v5644, 16
        %v6019 = vrot.slane %v6017, 5
        %v6020 = vor.u32 %v6016, %v6019
        %v6021 = vrot.slane %v6020, 4
        %v6023 = vshll.u32 %v5645, 16
        %v6025 = vrot.slane %v6023, 5
        %v6026 = vsel %vm5706, %v6021, %v6025
        %v6027 = vshrl.u32 %v5645, 16
        %v6029 = vrot.slane %v6027, 4
        %v6030 = vor.u32 %v6029, %v6025
        %v6031 = vrot.slane %v6030, 4
        %v6033 = vshll.u32 %v5646, 16
        %v6035 = vrot.slane %v6033, 5
        %v6036 = vsel %vm5706, %v6031, %v6035
        %v6037 = vshrl.u32 %v5646, 16
        %v6039 = vrot.slane %v6037, 4
        %v6040 = vor.u32 %v6039, %v6035
        %v6041 = vrot.slane %v6040, 4
        %v6043 = vshll.u32 %v5647, 16
        %v6045 = vrot.slane %v6043, 5
        %v6046 = vsel %vm5706, %v6041, %v6045
        %v6048 = vshrl.u32 %v5648, 16
        %v6050 = vrot.slane %v6048, 4
        %v6051 = vshll.u32 %v5648, 16
        %v6053 = vrot.slane %v6051, 5
        %v6054 = vor.u32 %v6050, %v6053
        %v6055 = vrot.slane %v6054, 4
        %v6057 = vshll.u32 %v5649, 16
        %v6059 = vrot.slane %v6057, 5
        %v6060 = vsel %vm5706, %v6055, %v6059
        %v6061 = vshrl.u32 %v5649, 16
        %v6063 = vrot.slane %v6061, 4
        %v6064 = vor.u32 %v6063, %v6059
        %v6065 = vrot.slane %v6064, 4
        %v6067 = vshll.u32 %v5650, 16
        %v6069 = vrot.slane %v6067, 5
        %v6070 = vsel %vm5706, %v6065, %v6069
        %v6071 = vshrl.u32 %v5650, 16
        %v6073 = vrot.slane %v6071, 4
        %v6074 = vor.u32 %v6073, %v6069
        %v6075 = vrot.slane %v6074, 4
        %v6077 = vshll.u32 %v5651, 16
        %v6079 = vrot.slane %v6077, 5
        %v6080 = vsel %vm5706, %v6075, %v6079
        %v6082 = vshrl.u32 %v5652, 16
        %v6084 = vrot.slane %v6082, 4
        %v6085 = vshll.u32 %v5652, 16
        %v6087 = vrot.slane %v6085, 5
        %v6088 = vor.u32 %v6084, %v6087
        %v6089 = vrot.slane %v6088, 4
        %v6091 = vshll.u32 %v5653, 16
        %v6093 = vrot.slane %v6091, 5
        %v6094 = vsel %vm5706, %v6089, %v6093
        %v6095 = vshrl.u32 %v5653, 16
        %v6097 = vrot.slane %v6095, 4
        %v6098 = vor.u32 %v6097, %v6093
        %v6099 = vrot.slane %v6098, 4
        %v6101 = vshll.u32 %v5654, 16
        %v6103 = vrot.slane %v6101, 5
        %v6104 = vsel %vm5706, %v6099, %v6103
        %v6105 = vshrl.u32 %v5654, 16
        %v6107 = vrot.slane %v6105, 4
        %v6108 = vor.u32 %v6107, %v6103
        %v6109 = vrot.slane %v6108, 4
        %v6111 = vshll.u32 %v5655, 16
        %v6113 = vrot.slane %v6111, 5
        %v6114 = vsel %vm5706, %v6109, %v6113
        %v6116 = vshrl.u32 %v5656, 16
        %v6118 = vrot.slane %v6116, 4
        %v6119 = vshll.u32 %v5656, 16
        %v6121 = vrot.slane %v6119, 5
        %v6122 = vor.u32 %v6118, %v6121
        %v6123 = vrot.slane %v6122, 4
        %v6125 = vshll.u32 %v5657, 16
        %v6127 = vrot.slane %v6125, 5
        %v6128 = vsel %vm5706, %v6123, %v6127
        %v6129 = vshrl.u32 %v5657, 16
        %v6131 = vrot.slane %v6129, 4
        %v6132 = vor.u32 %v6131, %v6127
        %v6133 = vrot.slane %v6132, 4
        %v6135 = vshll.u32 %v5658, 16
        %v6137 = vrot.slane %v6135, 5
        %v6138 = vsel %vm5706, %v6133, %v6137
        %v6139 = vshrl.u32 %v5658, 16
        %v6141 = vrot.slane %v6139, 4
        %v6142 = vor.u32 %v6141, %v6137
        %v6143 = vrot.slane %v6142, 4
        %v6145 = vshll.u32 %v5659, 16
        %v6147 = vrot.slane %v6145, 5
        %v6148 = vsel %vm5706, %v6143, %v6147
        %v6150 = vshrl.u32 %v5660, 16
        %v6152 = vrot.slane %v6150, 4
        %v6153 = vshll.u32 %v5660, 16
        %v6155 = vrot.slane %v6153, 5
        %v6156 = vor.u32 %v6152, %v6155
        %v6157 = vrot.slane %v6156, 4
        %v6159 = vshll.u32 %v5661, 16
        %v6161 = vrot.slane %v6159, 5
        %v6162 = vsel %vm5706, %v6157, %v6161
        %v6163 = vshrl.u32 %v5661, 16
        %v6165 = vrot.slane %v6163, 4
        %v6166 = vor.u32 %v6165, %v6161
        %v6167 = vrot.slane %v6166, 4
        %v6169 = vshll.u32 %v5662, 16
        %v6171 = vrot.slane %v6169, 5
        %v6172 = vsel %vm5706, %v6167, %v6171
        %v6173 = vshrl.u32 %v5662, 16
        %v6175 = vrot.slane %v6173, 4
        %v6176 = vor.u32 %v6175, %v6171
        %v6177 = vrot.slane %v6176, 4
        %v6179 = vshll.u32 %v5663, 16
        %v6181 = vrot.slane %v6179, 5
        %v6182 = vsel %vm5706, %v6177, %v6181
        %v6184 = vshrl.u32 %v5664, 16
        %v6186 = vrot.slane %v6184, 4
        %v6187 = vshll.u32 %v5664, 16
        %v6189 = vrot.slane %v6187, 5
        %v6190 = vor.u32 %v6186, %v6189
        %v6191 = vrot.slane %v6190, 4
        %v6193 = vshll.u32 %v5665, 16
        %v6195 = vrot.slane %v6193, 5
        %v6196 = vsel %vm5706, %v6191, %v6195
        %v6197 = vshrl.u32 %v5665, 16
        %v6199 = vrot.slane %v6197, 4
        %v6200 = vor.u32 %v6199, %v6195
        %v6201 = vrot.slane %v6200, 4
        %v6203 = vshll.u32 %v5666, 16
        %v6205 = vrot.slane %v6203, 5
        %v6206 = vsel %vm5706, %v6201, %v6205
        %v6207 = vshrl.u32 %v5666, 16
        %v6209 = vrot.slane %v6207, 4
        %v6210 = vor.u32 %v6209, %v6205
        %v6211 = vrot.slane %v6210, 4
        %v6213 = vshll.u32 %v5667, 16
        %v6215 = vrot.slane %v6213, 5
        %v6216 = vsel %vm5706, %v6211, %v6215
        %v6218 = vshrl.u32 %v5668, 16
        %v6220 = vrot.slane %v6218, 4
        %v6221 = vshll.u32 %v5668, 16
        %v6223 = vrot.slane %v6221, 5
        %v6224 = vor.u32 %v6220, %v6223
        %v6225 = vrot.slane %v6224, 4
        %v6227 = vshll.u32 %v5669, 16
        %v6229 = vrot.slane %v6227, 5
        %v6230 = vsel %vm5706, %v6225, %v6229
        %v6231 = vshrl.u32 %v5669, 16
        %v6233 = vrot.slane %v6231, 4
        %v6234 = vor.u32 %v6233, %v6229
        %v6235 = vrot.slane %v6234, 4
        %v6237 = vshll.u32 %v5670, 16
        %v6239 = vrot.slane %v6237, 5
        %v6240 = vsel %vm5706, %v6235, %v6239
        %v6241 = vshrl.u32 %v5670, 16
        %v6243 = vrot.slane %v6241, 4
        %v6244 = vor.u32 %v6243, %v6239
        %v6245 = vrot.slane %v6244, 4
        %v6247 = vshll.u32 %v5671, 16
        %v6249 = vrot.slane %v6247, 5
        %v6250 = vsel %vm5706, %v6245, %v6249
        %v6252 = vshrl.u32 %v5672, 16
        %v6254 = vrot.slane %v6252, 4
        %v6255 = vshll.u32 %v5672, 16
        %v6257 = vrot.slane %v6255, 5
        %v6258 = vor.u32 %v6254, %v6257
        %v6259 = vrot.slane %v6258, 4
        %v6261 = vshll.u32 %v5673, 16
        %v6263 = vrot.slane %v6261, 5
        %v6264 = vsel %vm5706, %v6259, %v6263
        %v6265 = vshrl.u32 %v5673, 16
        %v6267 = vrot.slane %v6265, 4
        %v6268 = vor.u32 %v6267, %v6263
        %v6269 = vrot.slane %v6268, 4
        %v6271 = vshll.u32 %v5674, 16
        %v6273 = vrot.slane %v6271, 5
        %v6274 = vsel %vm5706, %v6269, %v6273
        %v6275 = vshrl.u32 %v5674, 16
        %v6277 = vrot.slane %v6275, 4
        %v6278 = vor.u32 %v6277, %v6273
        %v6279 = vrot.slane %v6278, 4
        %v6281 = vshll.u32 %v5675, 16
        %v6283 = vrot.slane %v6281, 5
        %v6284 = vsel %vm5706, %v6279, %v6283
        %v6286 = vshrl.u32 %v5676, 16
        %v6288 = vrot.slane %v6286, 4
        %v6289 = vshll.u32 %v5676, 16
        %v6291 = vrot.slane %v6289, 5
        %v6292 = vor.u32 %v6288, %v6291
        %v6293 = vrot.slane %v6292, 4
        %v6295 = vshll.u32 %v5677, 16
        %v6297 = vrot.slane %v6295, 5
        %v6298 = vsel %vm5706, %v6293, %v6297
        %v6299 = vshrl.u32 %v5677, 16
        %v6301 = vrot.slane %v6299, 4
        %v6302 = vor.u32 %v6301, %v6297
        %v6303 = vrot.slane %v6302, 4
        %v6305 = vshll.u32 %v5678, 16
        %v6307 = vrot.slane %v6305, 5
        %v6308 = vsel %vm5706, %v6303, %v6307
        %v6309 = vshrl.u32 %v5678, 16
        %v6311 = vrot.slane %v6309, 4
        %v6312 = vor.u32 %v6311, %v6307
        %v6313 = vrot.slane %v6312, 4
        %v6315 = vshll.u32 %v5679, 16
        %v6317 = vrot.slane %v6315, 5
        %v6318 = vsel %vm5706, %v6313, %v6317
        %v6320 = vshrl.u32 %v5680, 16
        %v6322 = vrot.slane %v6320, 4
        %v6323 = vshll.u32 %v5680, 16
        %v6325 = vrot.slane %v6323, 5
        %v6326 = vor.u32 %v6322, %v6325
        %v6327 = vrot.slane %v6326, 4
        %v6329 = vshll.u32 %v5681, 16
        %v6331 = vrot.slane %v6329, 5
        %v6332 = vsel %vm5706, %v6327, %v6331
        %v6333 = vshrl.u32 %v5681, 16
        %v6335 = vrot.slane %v6333, 4
        %v6336 = vor.u32 %v6335, %v6331
        %v6337 = vrot.slane %v6336, 4
        %v6339 = vshll.u32 %v5682, 16
        %v6341 = vrot.slane %v6339, 5
        %v6342 = vsel %vm5706, %v6337, %v6341
        %v6343 = vshrl.u32 %v5682, 16
        %v6345 = vrot.slane %v6343, 4
        %v6346 = vor.u32 %v6345, %v6341
        %v6347 = vrot.slane %v6346, 4
        %v6349 = vshll.u32 %v5683, 16
        %v6351 = vrot.slane %v6349, 5
        %v6352 = vsel %vm5706, %v6347, %v6351
        %v6354 = vshrl.u32 %v5684, 16
        %v6356 = vrot.slane %v6354, 4
        %v6357 = vshll.u32 %v5684, 16
        %v6359 = vrot.slane %v6357, 5
        %v6360 = vor.u32 %v6356, %v6359
        %v6361 = vrot.slane %v6360, 4
        %v6363 = vshll.u32 %v5685, 16
        %v6365 = vrot.slane %v6363, 5
        %v6366 = vsel %vm5706, %v6361, %v6365
        %v6367 = vshrl.u32 %v5685, 16
        %v6369 = vrot.slane %v6367, 4
        %v6370 = vor.u32 %v6369, %v6365
        %v6371 = vrot.slane %v6370, 4
        %v6373 = vshll.u32 %v5686, 16
        %v6375 = vrot.slane %v6373, 5
        %v6376 = vsel %vm5706, %v6371, %v6375
        %v6377 = vshrl.u32 %v5686, 16
        %v6379 = vrot.slane %v6377, 4
        %v6380 = vor.u32 %v6379, %v6375
        %v6381 = vrot.slane %v6380, 4
        %v6383 = vshll.u32 %v5687, 16
        %v6385 = vrot.slane %v6383, 5
        %v6386 = vsel %vm5706, %v6381, %v6385
        %v6388 = vshrl.u32 %v5688, 16
        %v6390 = vrot.slane %v6388, 4
        %v6391 = vshll.u32 %v5688, 16
        %v6393 = vrot.slane %v6391, 5
        %v6394 = vor.u32 %v6390, %v6393
        %v6395 = vrot.slane %v6394, 4
        %v6397 = vshll.u32 %v5689, 16
        %v6399 = vrot.slane %v6397, 5
        %v6400 = vsel %vm5706, %v6395, %v6399
        %v6401 = vshrl.u32 %v5689, 16
        %v6403 = vrot.slane %v6401, 4
        %v6404 = vor.u32 %v6403, %v6399
        %v6405 = vrot.slane %v6404, 4
        %v6407 = vshll.u32 %v5690, 16
        %v6409 = vrot.slane %v6407, 5
        %v6410 = vsel %vm5706, %v6405, %v6409
        %v6411 = vshrl.u32 %v5690, 16
        %v6413 = vrot.slane %v6411, 4
        %v6414 = vor.u32 %v6413, %v6409
        %v6415 = vrot.slane %v6414, 4
        %v6417 = vshll.u32 %v5691, 16
        %v6419 = vrot.slane %v6417, 5
        %v6420 = vsel %vm5706, %v6415, %v6419
        %v6422 = vshrl.u32 %v5692, 16
        %v6424 = vrot.slane %v6422, 4
        %v6425 = vshll.u32 %v5692, 16
        %v6427 = vrot.slane %v6425, 5
        %v6428 = vor.u32 %v6424, %v6427
        %v6429 = vrot.slane %v6428, 4
        %v6431 = vshll.u32 %v5693, 16
        %v6433 = vrot.slane %v6431, 5
        %v6434 = vsel %vm5706, %v6429, %v6433
        %v6435 = vshrl.u32 %v5693, 16
        %v6437 = vrot.slane %v6435, 4
        %v6438 = vor.u32 %v6437, %v6433
        %v6439 = vrot.slane %v6438, 4
        %v6441 = vshll.u32 %v5694, 16
        %v6443 = vrot.slane %v6441, 5
        %v6444 = vsel %vm5706, %v6439, %v6443
        %v6445 = vshrl.u32 %v5694, 16
        %v6447 = vrot.slane %v6445, 4
        %v6448 = vor.u32 %v6447, %v6443
        %v6449 = vrot.slane %v6448, 4
        %v6451 = vshll.u32 %v5695, 16
        %v6453 = vrot.slane %v6451, 5
        %v6454 = vsel %vm5706, %v6449, %v6453
        %v6456 = vshrl.u32 %v5696, 16
        %v6458 = vrot.slane %v6456, 4
        %v6459 = vshll.u32 %v5696, 16
        %v6461 = vrot.slane %v6459, 5
        %v6462 = vor.u32 %v6458, %v6461
        %v6463 = vrot.slane %v6462, 4
        %v6465 = vshll.u32 %v5697, 16
        %v6467 = vrot.slane %v6465, 5
        %v6468 = vsel %vm5706, %v6463, %v6467
        %v6469 = vshrl.u32 %v5697, 16
        %v6471 = vrot.slane %v6469, 4
        %v6472 = vor.u32 %v6471, %v6467
        %v6473 = vrot.slane %v6472, 4
        %v6475 = vshll.u32 %v5698, 16
        %v6477 = vrot.slane %v6475, 5
        %v6478 = vsel %vm5706, %v6473, %v6477
        %v6479 = vshrl.u32 %v5698, 16
        %v6481 = vrot.slane %v6479, 4
        %v6482 = vor.u32 %v6481, %v6477
        %v6483 = vrot.slane %v6482, 4
        %v6485 = vshll.u32 %v5699, 16
        %v6487 = vrot.slane %v6485, 5
        %v6488 = vsel %vm5706, %v6483, %v6487
        %v6490 = vshrl.u32 %v5700, 16
        %v6492 = vrot.slane %v6490, 4
        %v6493 = vshll.u32 %v5700, 16
        %v6495 = vrot.slane %v6493, 5
        %v6496 = vor.u32 %v6492, %v6495
        %v6497 = vrot.slane %v6496, 4
        %v6499 = vshll.u32 %v5701, 16
        %v6501 = vrot.slane %v6499, 5
        %v6502 = vsel %vm5706, %v6497, %v6501
        %v6503 = vshrl.u32 %v5701, 16
        %v6505 = vrot.slane %v6503, 4
        %v6506 = vor.u32 %v6505, %v6501
        %v6507 = vrot.slane %v6506, 4
        %v6509 = vshll.u32 %v5702, 16
        %v6511 = vrot.slane %v6509, 5
        %v6512 = vsel %vm5706, %v6507, %v6511
        %v6513 = vshrl.u32 %v5702, 16
        %v6515 = vrot.slane %v6513, 4
        %v6516 = vor.u32 %v6515, %v6511
        %v6517 = vrot.slane %v6516, 4
        %v6519 = vshll.u32 %v5703, 16
        %v6521 = vrot.slane %v6519, 5
        %v6522 = vsel %vm5706, %v6517, %v6521
        %vm6523 = vcmask 1042432
        %vm6524 = vcmask 1046532
        %vm6525 = vmor %vm6523, %vm6524
        %v6526 = vrot.slane %v5608, 5
        %v6527 = vrot.slane %v6526, 4
        %v6528 = vrot.slane %v5609, 5
        %v6529 = vsel %vm6525, %v6527, %v6528
        %v6530 = vrot.slane %v6528, 4
        %v6531 = vrot.slane %v5610, 5
        %v6532 = vsel %vm6525, %v6530, %v6531
        %v6533 = vrot.slane %v6531, 4
        %v6534 = vrot.slane %v5611, 5
        %v6535 = vsel %vm6525, %v6533, %v6534
        %v6536 = vrot.slane %v5612, 5
        %v6537 = vrot.slane %v6536, 4
        %v6538 = vrot.slane %v5613, 5
        %v6539 = vsel %vm6525, %v6537, %v6538
        %v6540 = vrot.slane %v6538, 4
        %v6541 = vrot.slane %v5614, 5
        %v6542 = vsel %vm6525, %v6540, %v6541
        %v6543 = vrot.slane %v6541, 4
        %v6544 = vrot.slane %v5615, 5
        %v6545 = vsel %vm6525, %v6543, %v6544
        %v6546 = vrot.slane %v5616, 5
        %v6547 = vrot.slane %v6546, 4
        %v6548 = vrot.slane %v5617, 5
        %v6549 = vsel %vm6525, %v6547, %v6548
        %v6550 = vrot.slane %v6548, 4
        %v6551 = vrot.slane %v5618, 5
        %v6552 = vsel %vm6525, %v6550, %v6551
        %v6553 = vrot.slane %v6551, 4
        %v6554 = vrot.slane %v5619, 5
        %v6555 = vsel %vm6525, %v6553, %v6554
        %v6556 = vrot.slane %v5620, 5
        %v6557 = vrot.slane %v6556, 4
        %v6558 = vrot.slane %v5621, 5
        %v6559 = vsel %vm6525, %v6557, %v6558
        %v6560 = vrot.slane %v6558, 4
        %v6561 = vrot.slane %v5622, 5
        %v6562 = vsel %vm6525, %v6560, %v6561
        %v6563 = vrot.slane %v6561, 4
        %v6564 = vrot.slane %v5623, 5
        %v6565 = vsel %vm6525, %v6563, %v6564
        %v6566 = vrot.slane %v5624, 5
        %v6567 = vrot.slane %v6566, 4
        %v6568 = vrot.slane %v5625, 5
        %v6569 = vsel %vm6525, %v6567, %v6568
        %v6570 = vrot.slane %v6568, 4
        %v6571 = vrot.slane %v5626, 5
        %v6572 = vsel %vm6525, %v6570, %v6571
        %v6573 = vrot.slane %v6571, 4
        %v6574 = vrot.slane %v5627, 5
        %v6575 = vsel %vm6525, %v6573, %v6574
        %v6576 = vrot.slane %v5628, 5
        %v6577 = vrot.slane %v6576, 4
        %v6578 = vrot.slane %v5629, 5
        %v6579 = vsel %vm6525, %v6577, %v6578
        %v6580 = vrot.slane %v6578, 4
        %v6581 = vrot.slane %v5630, 5
        %v6582 = vsel %vm6525, %v6580, %v6581
        %v6583 = vrot.slane %v6581, 4
        %v6584 = vrot.slane %v5631, 5
        %v6585 = vsel %vm6525, %v6583, %v6584
        %v6586 = vrot.slane %v5632, 5
        %v6587 = vrot.slane %v6586, 4
        %v6588 = vrot.slane %v5633, 5
        %v6589 = vsel %vm6525, %v6587, %v6588
        %v6590 = vrot.slane %v6588, 4
        %v6591 = vrot.slane %v5634, 5
        %v6592 = vsel %vm6525, %v6590, %v6591
        %v6593 = vrot.slane %v6591, 4
        %v6594 = vrot.slane %v5635, 5
        %v6595 = vsel %vm6525, %v6593, %v6594
        %v6596 = vrot.slane %v5636, 5
        %v6597 = vrot.slane %v6596, 4
        %v6598 = vrot.slane %v5637, 5
        %v6599 = vsel %vm6525, %v6597, %v6598
        %v6600 = vrot.slane %v6598, 4
        %v6601 = vrot.slane %v5638, 5
        %v6602 = vsel %vm6525, %v6600, %v6601
        %v6603 = vrot.slane %v6601, 4
        %v6604 = vrot.slane %v5639, 5
        %v6605 = vsel %vm6525, %v6603, %v6604
        %v6606 = vrot.slane %v5640, 5
        %v6607 = vrot.slane %v6606, 4
        %v6608 = vrot.slane %v5641, 5
        %v6609 = vsel %vm6525, %v6607, %v6608
        %v6610 = vrot.slane %v6608, 4
        %v6611 = vrot.slane %v5642, 5
        %v6612 = vsel %vm6525, %v6610, %v6611
        %v6613 = vrot.slane %v6611, 4
        %v6614 = vrot.slane %v5643, 5
        %v6615 = vsel %vm6525, %v6613, %v6614
        %v6616 = vrot.slane %v5644, 5
        %v6617 = vrot.slane %v6616, 4
        %v6618 = vrot.slane %v5645, 5
        %v6619 = vsel %vm6525, %v6617, %v6618
        %v6620 = vrot.slane %v6618, 4
        %v6621 = vrot.slane %v5646, 5
        %v6622 = vsel %vm6525, %v6620, %v6621
        %v6623 = vrot.slane %v6621, 4
        %v6624 = vrot.slane %v5647, 5
        %v6625 = vsel %vm6525, %v6623, %v6624
        %v6626 = vrot.slane %v5648, 5
        %v6627 = vrot.slane %v6626, 4
        %v6628 = vrot.slane %v5649, 5
        %v6629 = vsel %vm6525, %v6627, %v6628
        %v6630 = vrot.slane %v6628, 4
        %v6631 = vrot.slane %v5650, 5
        %v6632 = vsel %vm6525, %v6630, %v6631
        %v6633 = vrot.slane %v6631, 4
        %v6634 = vrot.slane %v5651, 5
        %v6635 = vsel %vm6525, %v6633, %v6634
        %v6636 = vrot.slane %v5652, 5
        %v6637 = vrot.slane %v6636, 4
        %v6638 = vrot.slane %v5653, 5
        %v6639 = vsel %vm6525, %v6637, %v6638
        %v6640 = vrot.slane %v6638, 4
        %v6641 = vrot.slane %v5654, 5
        %v6642 = vsel %vm6525, %v6640, %v6641
        %v6643 = vrot.slane %v6641, 4
        %v6644 = vrot.slane %v5655, 5
        %v6645 = vsel %vm6525, %v6643, %v6644
        %v6646 = vrot.slane %v5656, 5
        %v6647 = vrot.slane %v6646, 4
        %v6648 = vrot.slane %v5657, 5
        %v6649 = vsel %vm6525, %v6647, %v6648
        %v6650 = vrot.slane %v6648, 4
        %v6651 = vrot.slane %v5658, 5
        %v6652 = vsel %vm6525, %v6650, %v6651
        %v6653 = vrot.slane %v6651, 4
        %v6654 = vrot.slane %v5659, 5
        %v6655 = vsel %vm6525, %v6653, %v6654
        %v6656 = vrot.slane %v5660, 5
        %v6657 = vrot.slane %v6656, 4
        %v6658 = vrot.slane %v5661, 5
        %v6659 = vsel %vm6525, %v6657, %v6658
        %v6660 = vrot.slane %v6658, 4
        %v6661 = vrot.slane %v5662, 5
        %v6662 = vsel %vm6525, %v6660, %v6661
        %v6663 = vrot.slane %v6661, 4
        %v6664 = vrot.slane %v5663, 5
        %v6665 = vsel %vm6525, %v6663, %v6664
        %v6666 = vrot.slane %v5664, 5
        %v6667 = vrot.slane %v6666, 4
        %v6668 = vrot.slane %v5665, 5
        %v6669 = vsel %vm6525, %v6667, %v6668
        %v6670 = vrot.slane %v6668, 4
        %v6671 = vrot.slane %v5666, 5
        %v6672 = vsel %vm6525, %v6670, %v6671
        %v6673 = vrot.slane %v6671, 4
        %v6674 = vrot.slane %v5667, 5
        %v6675 = vsel %vm6525, %v6673, %v6674
        %v6676 = vrot.slane %v5668, 5
        %v6677 = vrot.slane %v6676, 4
        %v6678 = vrot.slane %v5669, 5
        %v6679 = vsel %vm6525, %v6677, %v6678
        %v6680 = vrot.slane %v6678, 4
        %v6681 = vrot.slane %v5670, 5
        %v6682 = vsel %vm6525, %v6680, %v6681
        %v6683 = vrot.slane %v6681, 4
        %v6684 = vrot.slane %v5671, 5
        %v6685 = vsel %vm6525, %v6683, %v6684
        %v6686 = vrot.slane %v5672, 5
        %v6687 = vrot.slane %v6686, 4
        %v6688 = vrot.slane %v5673, 5
        %v6689 = vsel %vm6525, %v6687, %v6688
        %v6690 = vrot.slane %v6688, 4
        %v6691 = vrot.slane %v5674, 5
        %v6692 = vsel %vm6525, %v6690, %v6691
        %v6693 = vrot.slane %v6691, 4
        %v6694 = vrot.slane %v5675, 5
        %v6695 = vsel %vm6525, %v6693, %v6694
        %v6696 = vrot.slane %v5676, 5
        %v6697 = vrot.slane %v6696, 4
        %v6698 = vrot.slane %v5677, 5
        %v6699 = vsel %vm6525, %v6697, %v6698
        %v6700 = vrot.slane %v6698, 4
        %v6701 = vrot.slane %v5678, 5
        %v6702 = vsel %vm6525, %v6700, %v6701
        %v6703 = vrot.slane %v6701, 4
        %v6704 = vrot.slane %v5679, 5
        %v6705 = vsel %vm6525, %v6703, %v6704
        %v6706 = vrot.slane %v5680, 5
        %v6707 = vrot.slane %v6706, 4
        %v6708 = vrot.slane %v5681, 5
        %v6709 = vsel %vm6525, %v6707, %v6708
        %v6710 = vrot.slane %v6708, 4
        %v6711 = vrot.slane %v5682, 5
        %v6712 = vsel %vm6525, %v6710, %v6711
        %v6713 = vrot.slane %v6711, 4
        %v6714 = vrot.slane %v5683, 5
        %v6715 = vsel %vm6525, %v6713, %v6714
        %v6716 = vrot.slane %v5684, 5
        %v6717 = vrot.slane %v6716, 4
        %v6718 = vrot.slane %v5685, 5
        %v6719 = vsel %vm6525, %v6717, %v6718
        %v6720 = vrot.slane %v6718, 4
        %v6721 = vrot.slane %v5686, 5
        %v6722 = vsel %vm6525, %v6720, %v6721
        %v6723 = vrot.slane %v6721, 4
        %v6724 = vrot.slane %v5687, 5
        %v6725 = vsel %vm6525, %v6723, %v6724
        %v6726 = vrot.slane %v5688, 5
        %v6727 = vrot.slane %v6726, 4
        %v6728 = vrot.slane %v5689, 5
        %v6729 = vsel %vm6525, %v6727, %v6728
        %v6730 = vrot.slane %v6728, 4
        %v6731 = vrot.slane %v5690, 5
        %v6732 = vsel %vm6525, %v6730, %v6731
        %v6733 = vrot.slane %v6731, 4
        %v6734 = vrot.slane %v5691, 5
        %v6735 = vsel %vm6525, %v6733, %v6734
        %v6736 = vrot.slane %v5692, 5
        %v6737 = vrot.slane %v6736, 4
        %v6738 = vrot.slane %v5693, 5
        %v6739 = vsel %vm6525, %v6737, %v6738
        %v6740 = vrot.slane %v6738, 4
        %v6741 = vrot.slane %v5694, 5
        %v6742 = vsel %vm6525, %v6740, %v6741
        %v6743 = vrot.slane %v6741, 4
        %v6744 = vrot.slane %v5695, 5
        %v6745 = vsel %vm6525, %v6743, %v6744
        %v6746 = vrot.slane %v5696, 5
        %v6747 = vrot.slane %v6746, 4
        %v6748 = vrot.slane %v5697, 5
        %v6749 = vsel %vm6525, %v6747, %v6748
        %v6750 = vrot.slane %v6748, 4
        %v6751 = vrot.slane %v5698, 5
        %v6752 = vsel %vm6525, %v6750, %v6751
        %v6753 = vrot.slane %v6751, 4
        %v6754 = vrot.slane %v5699, 5
        %v6755 = vsel %vm6525, %v6753, %v6754
        %v6756 = vrot.slane %v5700, 5
        %v6757 = vrot.slane %v6756, 4
        %v6758 = vrot.slane %v5701, 5
        %v6759 = vsel %vm6525, %v6757, %v6758
        %v6760 = vrot.slane %v6758, 4
        %v6761 = vrot.slane %v5702, 5
        %v6762 = vsel %vm6525, %v6760, %v6761
        %v6763 = vrot.slane %v6761, 4
        %v6764 = vrot.slane %v5703, 5
        %v6765 = vsel %vm6525, %v6763, %v6764
        %v6768 = vunpack.c.l.b16 %v5460
        %v6769 = vunpack.c.h.b16 %v5460
        %v6770 = vunpack.c.l.b16 %v5461
        %v6771 = vunpack.c.h.b16 %v5461
        %v6772 = vpack.c.b16 %v6768, %v6768
        %v6773 = vpack.c.b16 %v6769, %v6769
        %v6774 = vpack.c.b16 %v6770, %v6770
        %v6775 = vpack.c.b16 %v6771, %v6771
        %v6777 = vshrl.u32 %v6772, 16
        %v6779 = vrot.slane %v6777, 4
        %v6780 = vshll.u32 %v6772, 16
        %v6782 = vrot.slane %v6780, 5
        %v6783 = vor.u32 %v6779, %v6782
        %v6784 = vrot.slane %v6783, 4
        %v6786 = vshll.u32 %v6773, 16
        %v6788 = vrot.slane %v6786, 5
        %v6789 = vsel %vm5706, %v6784, %v6788
        %v6790 = vshrl.u32 %v6773, 16
        %v6792 = vrot.slane %v6790, 4
        %v6793 = vor.u32 %v6792, %v6788
        %v6794 = vrot.slane %v6793, 4
        %v6796 = vshll.u32 %v6774, 16
        %v6798 = vrot.slane %v6796, 5
        %v6799 = vsel %vm5706, %v6794, %v6798
        %v6800 = vshrl.u32 %v6774, 16
        %v6802 = vrot.slane %v6800, 4
        %v6803 = vor.u32 %v6802, %v6798
        %v6804 = vrot.slane %v6803, 4
        %v6806 = vshll.u32 %v6775, 16
        %v6808 = vrot.slane %v6806, 5
        %v6809 = vsel %vm5706, %v6804, %v6808
        %v6810 = vrot.slane %v6772, 5
        %v6811 = vrot.slane %v6810, 4
        %v6812 = vrot.slane %v6773, 5
        %v6813 = vsel %vm6525, %v6811, %v6812
        %v6814 = vrot.slane %v6812, 4
        %v6815 = vrot.slane %v6774, 5
        %v6816 = vsel %vm6525, %v6814, %v6815
        %v6817 = vrot.slane %v6815, 4
        %v6818 = vrot.slane %v6775, 5
        %v6819 = vsel %vm6525, %v6817, %v6818
        %v6822 = vunpack.c.l.b16 %v5462
        %v6823 = vunpack.c.h.b16 %v5462
        %v6824 = vunpack.c.l.b16 %v5463
        %v6825 = vunpack.c.h.b16 %v5463
        %v6826 = vpack.c.b16 %v6822, %v6822
        %v6827 = vpack.c.b16 %v6823, %v6823
        %v6828 = vpack.c.b16 %v6824, %v6824
        %v6829 = vpack.c.b16 %v6825, %v6825
        %v6831 = vshrl.u32 %v6826, 16
        %v6833 = vrot.slane %v6831, 4
        %v6834 = vshll.u32 %v6826, 16
        %v6836 = vrot.slane %v6834, 5
        %v6837 = vor.u32 %v6833, %v6836
        %v6838 = vrot.slane %v6837, 4
        %v6840 = vshll.u32 %v6827, 16
        %v6842 = vrot.slane %v6840, 5
        %v6843 = vsel %vm5706, %v6838, %v6842
        %v6844 = vshrl.u32 %v6827, 16
        %v6846 = vrot.slane %v6844, 4
        %v6847 = vor.u32 %v6846, %v6842
        %v6848 = vrot.slane %v6847, 4
        %v6850 = vshll.u32 %v6828, 16
        %v6852 = vrot.slane %v6850, 5
        %v6853 = vsel %vm5706, %v6848, %v6852
        %v6854 = vshrl.u32 %v6828, 16
        %v6856 = vrot.slane %v6854, 4
        %v6857 = vor.u32 %v6856, %v6852
        %v6858 = vrot.slane %v6857, 4
        %v6860 = vshll.u32 %v6829, 16
        %v6862 = vrot.slane %v6860, 5
        %v6863 = vsel %vm5706, %v6858, %v6862
        %v6864 = vrot.slane %v6826, 5
        %v6865 = vrot.slane %v6864, 4
        %v6866 = vrot.slane %v6827, 5
        %v6867 = vsel %vm6525, %v6865, %v6866
        %v6868 = vrot.slane %v6866, 4
        %v6869 = vrot.slane %v6828, 5
        %v6870 = vsel %vm6525, %v6868, %v6869
        %v6871 = vrot.slane %v6869, 4
        %v6872 = vrot.slane %v6829, 5
        %v6873 = vsel %vm6525, %v6871, %v6872
        %v6874 = vpack.c.b16 %v5513, %v5512
        %v6875 = vpack.c.b16 %v5515, %v5514
        %v6876 = vpack.c.b16 %v5517, %v5516
        %v6877 = vpack.c.b16 %v5519, %v5518
        %v6878 = vpack.c.b16 %v5521, %v5520
        %v6879 = vpack.c.b16 %v5523, %v5522
        %v6880 = vpack.c.b16 %v5525, %v5524
        %v6881 = vpack.c.b16 %v5527, %v5526
        %v6882 = vpack.c.b16 %v5529, %v5528
        %v6883 = vpack.c.b16 %v5531, %v5530
        %v6884 = vpack.c.b16 %v5533, %v5532
        %v6885 = vpack.c.b16 %v5535, %v5534
        %v6886 = vpack.c.b16 %v5537, %v5536
        %v6887 = vpack.c.b16 %v5539, %v5538
        %v6888 = vpack.c.b16 %v5541, %v5540
        %v6889 = vpack.c.b16 %v5543, %v5542
        %v6890 = vpack.c.b16 %v5545, %v5544
        %v6891 = vpack.c.b16 %v5547, %v5546
        %v6892 = vpack.c.b16 %v5549, %v5548
        %v6893 = vpack.c.b16 %v5551, %v5550
        %v6894 = vpack.c.b16 %v5553, %v5552
        %v6895 = vpack.c.b16 %v5555, %v5554
        %v6896 = vpack.c.b16 %v5557, %v5556
        %v6897 = vpack.c.b16 %v5559, %v5558
        %v6898 = vpack.c.b16 %v5561, %v5560
        %v6899 = vpack.c.b16 %v5563, %v5562
        %v6900 = vpack.c.b16 %v5565, %v5564
        %v6901 = vpack.c.b16 %v5567, %v5566
        %v6902 = vpack.c.b16 %v5569, %v5568
        %v6903 = vpack.c.b16 %v5571, %v5570
        %v6904 = vpack.c.b16 %v5573, %v5572
        %v6905 = vpack.c.b16 %v5575, %v5574
        %v6906 = vpack.c.b16 %v5577, %v5576
        %v6907 = vpack.c.b16 %v5579, %v5578
        %v6908 = vpack.c.b16 %v5581, %v5580
        %v6909 = vpack.c.b16 %v5583, %v5582
        %v6910 = vunpack.c.l.b16 %v5720
        %v6911 = vunpack.c.l.b16 %v5730
        %v6912 = vunpack.c.l.b16 %v5740
        %v6913 = vunpack.c.l.b16 %v5754
        %v6914 = vunpack.c.l.b16 %v5764
        %v6915 = vunpack.c.l.b16 %v5774
        %v6916 = vunpack.c.l.b16 %v5788
        %v6917 = vunpack.c.l.b16 %v5798
        %v6918 = vunpack.c.l.b16 %v5808
        %v6919 = vunpack.c.l.b16 %v5822
        %v6920 = vunpack.c.l.b16 %v5832
        %v6921 = vunpack.c.l.b16 %v5842
        %v6922 = vunpack.c.l.b16 %v5856
        %v6923 = vunpack.c.l.b16 %v5866
        %v6924 = vunpack.c.l.b16 %v5876
        %v6925 = vunpack.c.l.b16 %v5890
        %v6926 = vunpack.c.l.b16 %v5900
        %v6927 = vunpack.c.l.b16 %v5910
        %v6928 = vunpack.c.l.b16 %v5924
        %v6929 = vunpack.c.l.b16 %v5934
        %v6930 = vunpack.c.l.b16 %v5944
        %v6931 = vunpack.c.l.b16 %v5958
        %v6932 = vunpack.c.l.b16 %v5968
        %v6933 = vunpack.c.l.b16 %v5978
        %v6934 = vunpack.c.l.b16 %v5992
        %v6935 = vunpack.c.l.b16 %v6002
        %v6936 = vunpack.c.l.b16 %v6012
        %v6937 = vunpack.c.l.b16 %v6026
        %v6938 = vunpack.c.l.b16 %v6036
        %v6939 = vunpack.c.l.b16 %v6046
        %v6940 = vunpack.c.l.b16 %v6060
        %v6941 = vunpack.c.l.b16 %v6070
        %v6942 = vunpack.c.l.b16 %v6080
        %v6943 = vunpack.c.l.b16 %v6094
        %v6944 = vunpack.c.l.b16 %v6104
        %v6945 = vunpack.c.l.b16 %v6114
        %v6946 = vunpack.c.l.b16 %v6128
        %v6947 = vunpack.c.l.b16 %v6138
        %v6948 = vunpack.c.l.b16 %v6148
        %v6949 = vunpack.c.l.b16 %v6162
        %v6950 = vunpack.c.l.b16 %v6172
        %v6951 = vunpack.c.l.b16 %v6182
        %v6952 = vunpack.c.l.b16 %v6196
        %v6953 = vunpack.c.l.b16 %v6206
        %v6954 = vunpack.c.l.b16 %v6216
        %v6955 = vunpack.c.l.b16 %v6230
        %v6956 = vunpack.c.l.b16 %v6240
        %v6957 = vunpack.c.l.b16 %v6250
        %v6958 = vunpack.c.l.b16 %v6264
        %v6959 = vunpack.c.l.b16 %v6274
        %v6960 = vunpack.c.l.b16 %v6284
        %v6961 = vunpack.c.l.b16 %v6298
        %v6962 = vunpack.c.l.b16 %v6308
        %v6963 = vunpack.c.l.b16 %v6318
        %v6964 = vunpack.c.l.b16 %v6332
        %v6965 = vunpack.c.l.b16 %v6342
        %v6966 = vunpack.c.l.b16 %v6352
        %v6967 = vunpack.c.l.b16 %v6366
        %v6968 = vunpack.c.l.b16 %v6376
        %v6969 = vunpack.c.l.b16 %v6386
        %v6970 = vunpack.c.l.b16 %v6400
        %v6971 = vunpack.c.l.b16 %v6410
        %v6972 = vunpack.c.l.b16 %v6420
        %v6973 = vunpack.c.l.b16 %v6434
        %v6974 = vunpack.c.l.b16 %v6444
        %v6975 = vunpack.c.l.b16 %v6454
        %v6976 = vunpack.c.l.b16 %v6468
        %v6977 = vunpack.c.l.b16 %v6478
        %v6978 = vunpack.c.l.b16 %v6488
        %v6979 = vunpack.c.l.b16 %v6502
        %v6980 = vunpack.c.l.b16 %v6512
        %v6981 = vunpack.c.l.b16 %v6522
        %v6982 = vpack.c.b16 %v6911, %v6910
        %v6983 = vpack.c.b16 %v6913, %v6912
        %v6984 = vpack.c.b16 %v6915, %v6914
        %v6985 = vpack.c.b16 %v6917, %v6916
        %v6986 = vpack.c.b16 %v6919, %v6918
        %v6987 = vpack.c.b16 %v6921, %v6920
        %v6988 = vpack.c.b16 %v6923, %v6922
        %v6989 = vpack.c.b16 %v6925, %v6924
        %v6990 = vpack.c.b16 %v6927, %v6926
        %v6991 = vpack.c.b16 %v6929, %v6928
        %v6992 = vpack.c.b16 %v6931, %v6930
        %v6993 = vpack.c.b16 %v6933, %v6932
        %v6994 = vpack.c.b16 %v6935, %v6934
        %v6995 = vpack.c.b16 %v6937, %v6936
        %v6996 = vpack.c.b16 %v6939, %v6938
        %v6997 = vpack.c.b16 %v6941, %v6940
        %v6998 = vpack.c.b16 %v6943, %v6942
        %v6999 = vpack.c.b16 %v6945, %v6944
        %v7000 = vpack.c.b16 %v6947, %v6946
        %v7001 = vpack.c.b16 %v6949, %v6948
        %v7002 = vpack.c.b16 %v6951, %v6950
        %v7003 = vpack.c.b16 %v6953, %v6952
        %v7004 = vpack.c.b16 %v6955, %v6954
        %v7005 = vpack.c.b16 %v6957, %v6956
        %v7006 = vpack.c.b16 %v6959, %v6958
        %v7007 = vpack.c.b16 %v6961, %v6960
        %v7008 = vpack.c.b16 %v6963, %v6962
        %v7009 = vpack.c.b16 %v6965, %v6964
        %v7010 = vpack.c.b16 %v6967, %v6966
        %v7011 = vpack.c.b16 %v6969, %v6968
        %v7012 = vpack.c.b16 %v6971, %v6970
        %v7013 = vpack.c.b16 %v6973, %v6972
        %v7014 = vpack.c.b16 %v6975, %v6974
        %v7015 = vpack.c.b16 %v6977, %v6976
        %v7016 = vpack.c.b16 %v6979, %v6978
        %v7017 = vpack.c.b16 %v6981, %v6980
        %7018 = vrot.lane.b32.xlu0 %v6982, 32
        %v7019 = vpop.permute.xlu0 %7018
        %7020 = vrot.lane.b32.xlu0 %v6983, 32
        %v7021 = vpop.permute.xlu0 %7020
        %7022 = vrot.lane.b32.xlu0 %v6984, 32
        %v7023 = vpop.permute.xlu0 %7022
        %7024 = vrot.lane.b32.xlu0 %v6985, 32
        %v7025 = vpop.permute.xlu0 %7024
        %7026 = vrot.lane.b32.xlu0 %v6986, 32
        %v7027 = vpop.permute.xlu0 %7026
        %7028 = vrot.lane.b32.xlu0 %v6987, 32
        %v7029 = vpop.permute.xlu0 %7028
        %7030 = vrot.lane.b32.xlu0 %v6988, 32
        %v7031 = vpop.permute.xlu0 %7030
        %7032 = vrot.lane.b32.xlu0 %v6989, 32
        %v7033 = vpop.permute.xlu0 %7032
        %7034 = vrot.lane.b32.xlu0 %v6990, 32
        %v7035 = vpop.permute.xlu0 %7034
        %7036 = vrot.lane.b32.xlu0 %v6991, 32
        %v7037 = vpop.permute.xlu0 %7036
        %7038 = vrot.lane.b32.xlu0 %v6992, 32
        %v7039 = vpop.permute.xlu0 %7038
        %7040 = vrot.lane.b32.xlu0 %v6993, 32
        %v7041 = vpop.permute.xlu0 %7040
        %7042 = vrot.lane.b32.xlu0 %v6994, 32
        %v7043 = vpop.permute.xlu0 %7042
        %7044 = vrot.lane.b32.xlu0 %v6995, 32
        %v7045 = vpop.permute.xlu0 %7044
        %7046 = vrot.lane.b32.xlu0 %v6996, 32
        %v7047 = vpop.permute.xlu0 %7046
        %7048 = vrot.lane.b32.xlu0 %v6997, 32
        %v7049 = vpop.permute.xlu0 %7048
        %7050 = vrot.lane.b32.xlu0 %v6998, 32
        %v7051 = vpop.permute.xlu0 %7050
        %7052 = vrot.lane.b32.xlu0 %v6999, 32
        %v7053 = vpop.permute.xlu0 %7052
        %7054 = vrot.lane.b32.xlu0 %v7000, 32
        %v7055 = vpop.permute.xlu0 %7054
        %7056 = vrot.lane.b32.xlu0 %v7001, 32
        %v7057 = vpop.permute.xlu0 %7056
        %7058 = vrot.lane.b32.xlu0 %v7002, 32
        %v7059 = vpop.permute.xlu0 %7058
        %7060 = vrot.lane.b32.xlu0 %v7003, 32
        %v7061 = vpop.permute.xlu0 %7060
        %7062 = vrot.lane.b32.xlu0 %v7004, 32
        %v7063 = vpop.permute.xlu0 %7062
        %7064 = vrot.lane.b32.xlu0 %v7005, 32
        %v7065 = vpop.permute.xlu0 %7064
        %7066 = vrot.lane.b32.xlu0 %v7006, 32
        %v7067 = vpop.permute.xlu0 %7066
        %7068 = vrot.lane.b32.xlu0 %v7007, 32
        %v7069 = vpop.permute.xlu0 %7068
        %7070 = vrot.lane.b32.xlu0 %v7008, 32
        %v7071 = vpop.permute.xlu0 %7070
        %7072 = vrot.lane.b32.xlu0 %v7009, 32
        %v7073 = vpop.permute.xlu0 %7072
        %7074 = vrot.lane.b32.xlu0 %v7010, 32
        %v7075 = vpop.permute.xlu0 %7074
        %7076 = vrot.lane.b32.xlu0 %v7011, 32
        %v7077 = vpop.permute.xlu0 %7076
        %7078 = vrot.lane.b32.xlu0 %v7012, 32
        %v7079 = vpop.permute.xlu0 %7078
        %7080 = vrot.lane.b32.xlu0 %v7013, 32
        %v7081 = vpop.permute.xlu0 %7080
        %7082 = vrot.lane.b32.xlu0 %v7014, 32
        %v7083 = vpop.permute.xlu0 %7082
        %7084 = vrot.lane.b32.xlu0 %v7015, 32
        %v7085 = vpop.permute.xlu0 %7084
        %7086 = vrot.lane.b32.xlu0 %v7016, 32
        %v7087 = vpop.permute.xlu0 %7086
        %7088 = vrot.lane.b32.xlu0 %v7017, 32
        %v7089 = vpop.permute.xlu0 %7088
        %v7090 = vunpack.c.l.b16 %v6529
        %v7091 = vunpack.c.l.b16 %v6532
        %v7092 = vunpack.c.l.b16 %v6535
        %v7093 = vunpack.c.l.b16 %v6539
        %v7094 = vunpack.c.l.b16 %v6542
        %v7095 = vunpack.c.l.b16 %v6545
        %v7096 = vunpack.c.l.b16 %v6549
        %v7097 = vunpack.c.l.b16 %v6552
        %v7098 = vunpack.c.l.b16 %v6555
        %v7099 = vunpack.c.l.b16 %v6559
        %v7100 = vunpack.c.l.b16 %v6562
        %v7101 = vunpack.c.l.b16 %v6565
        %v7102 = vunpack.c.l.b16 %v6569
        %v7103 = vunpack.c.l.b16 %v6572
        %v7104 = vunpack.c.l.b16 %v6575
        %v7105 = vunpack.c.l.b16 %v6579
        %v7106 = vunpack.c.l.b16 %v6582
        %v7107 = vunpack.c.l.b16 %v6585
        %v7108 = vunpack.c.l.b16 %v6589
        %v7109 = vunpack.c.l.b16 %v6592
        %v7110 = vunpack.c.l.b16 %v6595
        %v7111 = vunpack.c.l.b16 %v6599
        %v7112 = vunpack.c.l.b16 %v6602
        %v7113 = vunpack.c.l.b16 %v6605
        %v7114 = vunpack.c.l.b16 %v6609
        %v7115 = vunpack.c.l.b16 %v6612
        %v7116 = vunpack.c.l.b16 %v6615
        %v7117 = vunpack.c.l.b16 %v6619
        %v7118 = vunpack.c.l.b16 %v6622
        %v7119 = vunpack.c.l.b16 %v6625
        %v7120 = vunpack.c.l.b16 %v6629
        %v7121 = vunpack.c.l.b16 %v6632
        %v7122 = vunpack.c.l.b16 %v6635
        %v7123 = vunpack.c.l.b16 %v6639
        %v7124 = vunpack.c.l.b16 %v6642
        %v7125 = vunpack.c.l.b16 %v6645
        %v7126 = vunpack.c.l.b16 %v6649
        %v7127 = vunpack.c.l.b16 %v6652
        %v7128 = vunpack.c.l.b16 %v6655
        %v7129 = vunpack.c.l.b16 %v6659
        %v7130 = vunpack.c.l.b16 %v6662
        %v7131 = vunpack.c.l.b16 %v6665
        %v7132 = vunpack.c.l.b16 %v6669
        %v7133 = vunpack.c.l.b16 %v6672
        %v7134 = vunpack.c.l.b16 %v6675
        %v7135 = vunpack.c.l.b16 %v6679
        %v7136 = vunpack.c.l.b16 %v6682
        %v7137 = vunpack.c.l.b16 %v6685
        %v7138 = vunpack.c.l.b16 %v6689
        %v7139 = vunpack.c.l.b16 %v6692
        %v7140 = vunpack.c.l.b16 %v6695
        %v7141 = vunpack.c.l.b16 %v6699
        %v7142 = vunpack.c.l.b16 %v6702
        %v7143 = vunpack.c.l.b16 %v6705
        %v7144 = vunpack.c.l.b16 %v6709
        %v7145 = vunpack.c.l.b16 %v6712
        %v7146 = vunpack.c.l.b16 %v6715
        %v7147 = vunpack.c.l.b16 %v6719
        %v7148 = vunpack.c.l.b16 %v6722
        %v7149 = vunpack.c.l.b16 %v6725
        %v7150 = vunpack.c.l.b16 %v6729
        %v7151 = vunpack.c.l.b16 %v6732
        %v7152 = vunpack.c.l.b16 %v6735
        %v7153 = vunpack.c.l.b16 %v6739
        %v7154 = vunpack.c.l.b16 %v6742
        %v7155 = vunpack.c.l.b16 %v6745
        %v7156 = vunpack.c.l.b16 %v6749
        %v7157 = vunpack.c.l.b16 %v6752
        %v7158 = vunpack.c.l.b16 %v6755
        %v7159 = vunpack.c.l.b16 %v6759
        %v7160 = vunpack.c.l.b16 %v6762
        %v7161 = vunpack.c.l.b16 %v6765
        %v7162 = vpack.c.b16 %v7091, %v7090
        %v7163 = vpack.c.b16 %v7093, %v7092
        %v7164 = vpack.c.b16 %v7095, %v7094
        %v7165 = vpack.c.b16 %v7097, %v7096
        %v7166 = vpack.c.b16 %v7099, %v7098
        %v7167 = vpack.c.b16 %v7101, %v7100
        %v7168 = vpack.c.b16 %v7103, %v7102
        %v7169 = vpack.c.b16 %v7105, %v7104
        %v7170 = vpack.c.b16 %v7107, %v7106
        %v7171 = vpack.c.b16 %v7109, %v7108
        %v7172 = vpack.c.b16 %v7111, %v7110
        %v7173 = vpack.c.b16 %v7113, %v7112
        %v7174 = vpack.c.b16 %v7115, %v7114
        %v7175 = vpack.c.b16 %v7117, %v7116
        %v7176 = vpack.c.b16 %v7119, %v7118
        %v7177 = vpack.c.b16 %v7121, %v7120
        %v7178 = vpack.c.b16 %v7123, %v7122
        %v7179 = vpack.c.b16 %v7125, %v7124
        %v7180 = vpack.c.b16 %v7127, %v7126
        %v7181 = vpack.c.b16 %v7129, %v7128
        %v7182 = vpack.c.b16 %v7131, %v7130
        %v7183 = vpack.c.b16 %v7133, %v7132
        %v7184 = vpack.c.b16 %v7135, %v7134
        %v7185 = vpack.c.b16 %v7137, %v7136
        %v7186 = vpack.c.b16 %v7139, %v7138
        %v7187 = vpack.c.b16 %v7141, %v7140
        %v7188 = vpack.c.b16 %v7143, %v7142
        %v7189 = vpack.c.b16 %v7145, %v7144
        %v7190 = vpack.c.b16 %v7147, %v7146
        %v7191 = vpack.c.b16 %v7149, %v7148
        %v7192 = vpack.c.b16 %v7151, %v7150
        %v7193 = vpack.c.b16 %v7153, %v7152
        %v7194 = vpack.c.b16 %v7155, %v7154
        %v7195 = vpack.c.b16 %v7157, %v7156
        %v7196 = vpack.c.b16 %v7159, %v7158
        %v7197 = vpack.c.b16 %v7161, %v7160
        %7198 = vrot.lane.b32.xlu0 %v7162, 64
        %v7199 = vpop.permute.xlu0 %7198
        %7200 = vrot.lane.b32.xlu0 %v7163, 64
        %v7201 = vpop.permute.xlu0 %7200
        %7202 = vrot.lane.b32.xlu0 %v7164, 64
        %v7203 = vpop.permute.xlu0 %7202
        %7204 = vrot.lane.b32.xlu0 %v7165, 64
        %v7205 = vpop.permute.xlu0 %7204
        %7206 = vrot.lane.b32.xlu0 %v7166, 64
        %v7207 = vpop.permute.xlu0 %7206
        %7208 = vrot.lane.b32.xlu0 %v7167, 64
        %v7209 = vpop.permute.xlu0 %7208
        %7210 = vrot.lane.b32.xlu0 %v7168, 64
        %v7211 = vpop.permute.xlu0 %7210
        %7212 = vrot.lane.b32.xlu0 %v7169, 64
        %v7213 = vpop.permute.xlu0 %7212
        %7214 = vrot.lane.b32.xlu0 %v7170, 64
        %v7215 = vpop.permute.xlu0 %7214
        %7216 = vrot.lane.b32.xlu0 %v7171, 64
        %v7217 = vpop.permute.xlu0 %7216
        %7218 = vrot.lane.b32.xlu0 %v7172, 64
        %v7219 = vpop.permute.xlu0 %7218
        %7220 = vrot.lane.b32.xlu0 %v7173, 64
        %v7221 = vpop.permute.xlu0 %7220
        %7222 = vrot.lane.b32.xlu0 %v7174, 64
        %v7223 = vpop.permute.xlu0 %7222
        %7224 = vrot.lane.b32.xlu0 %v7175, 64
        %v7225 = vpop.permute.xlu0 %7224
        %7226 = vrot.lane.b32.xlu0 %v7176, 64
        %v7227 = vpop.permute.xlu0 %7226
        %7228 = vrot.lane.b32.xlu0 %v7177, 64
        %v7229 = vpop.permute.xlu0 %7228
        %7230 = vrot.lane.b32.xlu0 %v7178, 64
        %v7231 = vpop.permute.xlu0 %7230
        %7232 = vrot.lane.b32.xlu0 %v7179, 64
        %v7233 = vpop.permute.xlu0 %7232
        %7234 = vrot.lane.b32.xlu0 %v7180, 64
        %v7235 = vpop.permute.xlu0 %7234
        %7236 = vrot.lane.b32.xlu0 %v7181, 64
        %v7237 = vpop.permute.xlu0 %7236
        %7238 = vrot.lane.b32.xlu0 %v7182, 64
        %v7239 = vpop.permute.xlu0 %7238
        %7240 = vrot.lane.b32.xlu0 %v7183, 64
        %v7241 = vpop.permute.xlu0 %7240
        %7242 = vrot.lane.b32.xlu0 %v7184, 64
        %v7243 = vpop.permute.xlu0 %7242
        %7244 = vrot.lane.b32.xlu0 %v7185, 64
        %v7245 = vpop.permute.xlu0 %7244
        %7246 = vrot.lane.b32.xlu0 %v7186, 64
        %v7247 = vpop.permute.xlu0 %7246
        %7248 = vrot.lane.b32.xlu0 %v7187, 64
        %v7249 = vpop.permute.xlu0 %7248
        %7250 = vrot.lane.b32.xlu0 %v7188, 64
        %v7251 = vpop.permute.xlu0 %7250
        %7252 = vrot.lane.b32.xlu0 %v7189, 64
        %v7253 = vpop.permute.xlu0 %7252
        %7254 = vrot.lane.b32.xlu0 %v7190, 64
        %v7255 = vpop.permute.xlu0 %7254
        %7256 = vrot.lane.b32.xlu0 %v7191, 64
        %v7257 = vpop.permute.xlu0 %7256
        %7258 = vrot.lane.b32.xlu0 %v7192, 64
        %v7259 = vpop.permute.xlu0 %7258
        %7260 = vrot.lane.b32.xlu0 %v7193, 64
        %v7261 = vpop.permute.xlu0 %7260
        %7262 = vrot.lane.b32.xlu0 %v7194, 64
        %v7263 = vpop.permute.xlu0 %7262
        %7264 = vrot.lane.b32.xlu0 %v7195, 64
        %v7265 = vpop.permute.xlu0 %7264
        %7266 = vrot.lane.b32.xlu0 %v7196, 64
        %v7267 = vpop.permute.xlu0 %7266
        %7268 = vrot.lane.b32.xlu0 %v7197, 64
        %v7269 = vpop.permute.xlu0 %7268
        %v7270 = vpack.c.b16 %v5516, %v5515
        %v7271 = vpack.c.b16 %v5518, %v5517
        %v7272 = vpack.c.b16 %v5520, %v5519
        %v7273 = vpack.c.b16 %v5522, %v5521
        %v7274 = vpack.c.b16 %v5524, %v5523
        %v7275 = vpack.c.b16 %v5526, %v5525
        %v7276 = vpack.c.b16 %v5528, %v5527
        %v7277 = vpack.c.b16 %v5530, %v5529
        %v7278 = vpack.c.b16 %v5532, %v5531
        %v7279 = vpack.c.b16 %v5534, %v5533
        %v7280 = vpack.c.b16 %v5536, %v5535
        %v7281 = vpack.c.b16 %v5538, %v5537
        %v7282 = vpack.c.b16 %v5540, %v5539
        %v7283 = vpack.c.b16 %v5542, %v5541
        %v7284 = vpack.c.b16 %v5544, %v5543
        %v7285 = vpack.c.b16 %v5546, %v5545
        %v7286 = vpack.c.b16 %v5548, %v5547
        %v7287 = vpack.c.b16 %v5550, %v5549
        %v7288 = vpack.c.b16 %v5552, %v5551
        %v7289 = vpack.c.b16 %v5554, %v5553
        %v7290 = vpack.c.b16 %v5556, %v5555
        %v7291 = vpack.c.b16 %v5558, %v5557
        %v7292 = vpack.c.b16 %v5560, %v5559
        %v7293 = vpack.c.b16 %v5562, %v5561
        %v7294 = vpack.c.b16 %v5564, %v5563
        %v7295 = vpack.c.b16 %v5566, %v5565
        %v7296 = vpack.c.b16 %v5568, %v5567
        %v7297 = vpack.c.b16 %v5570, %v5569
        %v7298 = vpack.c.b16 %v5572, %v5571
        %v7299 = vpack.c.b16 %v5574, %v5573
        %v7300 = vpack.c.b16 %v5576, %v5575
        %v7301 = vpack.c.b16 %v5578, %v5577
        %v7302 = vpack.c.b16 %v5580, %v5579
        %v7303 = vpack.c.b16 %v5582, %v5581
        %v7304 = vpack.c.b16 %v6768, %v5583
        %v7305 = vpack.c.b16 %v6770, %v6769
        %7306 = vrot.lane.b32.xlu0 %v7270, 96
        %v7307 = vpop.permute.xlu0 %7306
        %7308 = vrot.lane.b32.xlu0 %v7271, 96
        %v7309 = vpop.permute.xlu0 %7308
        %7310 = vrot.lane.b32.xlu0 %v7272, 96
        %v7311 = vpop.permute.xlu0 %7310
        %7312 = vrot.lane.b32.xlu0 %v7273, 96
        %v7313 = vpop.permute.xlu0 %7312
        %7314 = vrot.lane.b32.xlu0 %v7274, 96
        %v7315 = vpop.permute.xlu0 %7314
        %7316 = vrot.lane.b32.xlu0 %v7275, 96
        %v7317 = vpop.permute.xlu0 %7316
        %7318 = vrot.lane.b32.xlu0 %v7276, 96
        %v7319 = vpop.permute.xlu0 %7318
        %7320 = vrot.lane.b32.xlu0 %v7277, 96
        %v7321 = vpop.permute.xlu0 %7320
        %7322 = vrot.lane.b32.xlu0 %v7278, 96
        %v7323 = vpop.permute.xlu0 %7322
        %7324 = vrot.lane.b32.xlu0 %v7279, 96
        %v7325 = vpop.permute.xlu0 %7324
        %7326 = vrot.lane.b32.xlu0 %v7280, 96
        %v7327 = vpop.permute.xlu0 %7326
        %7328 = vrot.lane.b32.xlu0 %v7281, 96
        %v7329 = vpop.permute.xlu0 %7328
        %7330 = vrot.lane.b32.xlu0 %v7282, 96
        %v7331 = vpop.permute.xlu0 %7330
        %7332 = vrot.lane.b32.xlu0 %v7283, 96
        %v7333 = vpop.permute.xlu0 %7332
        %7334 = vrot.lane.b32.xlu0 %v7284, 96
        %v7335 = vpop.permute.xlu0 %7334
        %7336 = vrot.lane.b32.xlu0 %v7285, 96
        %v7337 = vpop.permute.xlu0 %7336
        %7338 = vrot.lane.b32.xlu0 %v7286, 96
        %v7339 = vpop.permute.xlu0 %7338
        %7340 = vrot.lane.b32.xlu0 %v7287, 96
        %v7341 = vpop.permute.xlu0 %7340
        %7342 = vrot.lane.b32.xlu0 %v7288, 96
        %v7343 = vpop.permute.xlu0 %7342
        %7344 = vrot.lane.b32.xlu0 %v7289, 96
        %v7345 = vpop.permute.xlu0 %7344
        %7346 = vrot.lane.b32.xlu0 %v7290, 96
        %v7347 = vpop.permute.xlu0 %7346
        %7348 = vrot.lane.b32.xlu0 %v7291, 96
        %v7349 = vpop.permute.xlu0 %7348
        %7350 = vrot.lane.b32.xlu0 %v7292, 96
        %v7351 = vpop.permute.xlu0 %7350
        %7352 = vrot.lane.b32.xlu0 %v7293, 96
        %v7353 = vpop.permute.xlu0 %7352
        %7354 = vrot.lane.b32.xlu0 %v7294, 96
        %v7355 = vpop.permute.xlu0 %7354
        %7356 = vrot.lane.b32.xlu0 %v7295, 96
        %v7357 = vpop.permute.xlu0 %7356
        %7358 = vrot.lane.b32.xlu0 %v7296, 96
        %v7359 = vpop.permute.xlu0 %7358
        %7360 = vrot.lane.b32.xlu0 %v7297, 96
        %v7361 = vpop.permute.xlu0 %7360
        %7362 = vrot.lane.b32.xlu0 %v7298, 96
        %v7363 = vpop.permute.xlu0 %7362
        %7364 = vrot.lane.b32.xlu0 %v7299, 96
        %v7365 = vpop.permute.xlu0 %7364
        %7366 = vrot.lane.b32.xlu0 %v7300, 96
        %v7367 = vpop.permute.xlu0 %7366
        %7368 = vrot.lane.b32.xlu0 %v7301, 96
        %v7369 = vpop.permute.xlu0 %7368
        %7370 = vrot.lane.b32.xlu0 %v7302, 96
        %v7371 = vpop.permute.xlu0 %7370
        %7372 = vrot.lane.b32.xlu0 %v7303, 96
        %v7373 = vpop.permute.xlu0 %7372
        %7374 = vrot.lane.b32.xlu0 %v7304, 96
        %v7375 = vpop.permute.xlu0 %7374
        %7376 = vrot.lane.b32.xlu0 %v7305, 96
        %v7377 = vpop.permute.xlu0 %7376
        %v7378 = vunpack.c.l.b16 %v6789
        %v7379 = vunpack.c.l.b16 %v6799
        %v7380 = vunpack.c.l.b16 %v6809
        %v7381 = vpack.c.b16 %v6914, %v6913
        %v7382 = vpack.c.b16 %v6916, %v6915
        %v7383 = vpack.c.b16 %v6918, %v6917
        %v7384 = vpack.c.b16 %v6920, %v6919
        %v7385 = vpack.c.b16 %v6922, %v6921
        %v7386 = vpack.c.b16 %v6924, %v6923
        %v7387 = vpack.c.b16 %v6926, %v6925
        %v7388 = vpack.c.b16 %v6928, %v6927
        %v7389 = vpack.c.b16 %v6930, %v6929
        %v7390 = vpack.c.b16 %v6932, %v6931
        %v7391 = vpack.c.b16 %v6934, %v6933
        %v7392 = vpack.c.b16 %v6936, %v6935
        %v7393 = vpack.c.b16 %v6938, %v6937
        %v7394 = vpack.c.b16 %v6940, %v6939
        %v7395 = vpack.c.b16 %v6942, %v6941
        %v7396 = vpack.c.b16 %v6944, %v6943
        %v7397 = vpack.c.b16 %v6946, %v6945
        %v7398 = vpack.c.b16 %v6948, %v6947
        %v7399 = vpack.c.b16 %v6950, %v6949
        %v7400 = vpack.c.b16 %v6952, %v6951
        %v7401 = vpack.c.b16 %v6954, %v6953
        %v7402 = vpack.c.b16 %v6956, %v6955
        %v7403 = vpack.c.b16 %v6958, %v6957
        %v7404 = vpack.c.b16 %v6960, %v6959
        %v7405 = vpack.c.b16 %v6962, %v6961
        %v7406 = vpack.c.b16 %v6964, %v6963
        %v7407 = vpack.c.b16 %v6966, %v6965
        %v7408 = vpack.c.b16 %v6968, %v6967
        %v7409 = vpack.c.b16 %v6970, %v6969
        %v7410 = vpack.c.b16 %v6972, %v6971
        %v7411 = vpack.c.b16 %v6974, %v6973
        %v7412 = vpack.c.b16 %v6976, %v6975
        %v7413 = vpack.c.b16 %v6978, %v6977
        %v7414 = vpack.c.b16 %v6980, %v6979
        %v7415 = vpack.c.b16 %v7378, %v6981
        %v7416 = vpack.c.b16 %v7380, %v7379
        %v7417 = vunpack.c.l.b16 %v6813
        %v7418 = vunpack.c.l.b16 %v6816
        %v7419 = vunpack.c.l.b16 %v6819
        %v7420 = vpack.c.b16 %v7094, %v7093
        %v7421 = vpack.c.b16 %v7096, %v7095
        %v7422 = vpack.c.b16 %v7098, %v7097
        %v7423 = vpack.c.b16 %v7100, %v7099
        %v7424 = vpack.c.b16 %v7102, %v7101
        %v7425 = vpack.c.b16 %v7104, %v7103
        %v7426 = vpack.c.b16 %v7106, %v7105
        %v7427 = vpack.c.b16 %v7108, %v7107
        %v7428 = vpack.c.b16 %v7110, %v7109
        %v7429 = vpack.c.b16 %v7112, %v7111
        %v7430 = vpack.c.b16 %v7114, %v7113
        %v7431 = vpack.c.b16 %v7116, %v7115
        %v7432 = vpack.c.b16 %v7118, %v7117
        %v7433 = vpack.c.b16 %v7120, %v7119
        %v7434 = vpack.c.b16 %v7122, %v7121
        %v7435 = vpack.c.b16 %v7124, %v7123
        %v7436 = vpack.c.b16 %v7126, %v7125
        %v7437 = vpack.c.b16 %v7128, %v7127
        %v7438 = vpack.c.b16 %v7130, %v7129
        %v7439 = vpack.c.b16 %v7132, %v7131
        %v7440 = vpack.c.b16 %v7134, %v7133
        %v7441 = vpack.c.b16 %v7136, %v7135
        %v7442 = vpack.c.b16 %v7138, %v7137
        %v7443 = vpack.c.b16 %v7140, %v7139
        %v7444 = vpack.c.b16 %v7142, %v7141
        %v7445 = vpack.c.b16 %v7144, %v7143
        %v7446 = vpack.c.b16 %v7146, %v7145
        %v7447 = vpack.c.b16 %v7148, %v7147
        %v7448 = vpack.c.b16 %v7150, %v7149
        %v7449 = vpack.c.b16 %v7152, %v7151
        %v7450 = vpack.c.b16 %v7154, %v7153
        %v7451 = vpack.c.b16 %v7156, %v7155
        %v7452 = vpack.c.b16 %v7158, %v7157
        %v7453 = vpack.c.b16 %v7160, %v7159
        %v7454 = vpack.c.b16 %v7417, %v7161
        %v7455 = vpack.c.b16 %v7419, %v7418
        %7456 = vrot.lane.b32.xlu0 %v7420, 32
        %v7457 = vpop.permute.xlu0 %7456
        %7458 = vrot.lane.b32.xlu0 %v7421, 32
        %v7459 = vpop.permute.xlu0 %7458
        %7460 = vrot.lane.b32.xlu0 %v7422, 32
        %v7461 = vpop.permute.xlu0 %7460
        %7462 = vrot.lane.b32.xlu0 %v7423, 32
        %v7463 = vpop.permute.xlu0 %7462
        %7464 = vrot.lane.b32.xlu0 %v7424, 32
        %v7465 = vpop.permute.xlu0 %7464
        %7466 = vrot.lane.b32.xlu0 %v7425, 32
        %v7467 = vpop.permute.xlu0 %7466
        %7468 = vrot.lane.b32.xlu0 %v7426, 32
        %v7469 = vpop.permute.xlu0 %7468
        %7470 = vrot.lane.b32.xlu0 %v7427, 32
        %v7471 = vpop.permute.xlu0 %7470
        %7472 = vrot.lane.b32.xlu0 %v7428, 32
        %v7473 = vpop.permute.xlu0 %7472
        %7474 = vrot.lane.b32.xlu0 %v7429, 32
        %v7475 = vpop.permute.xlu0 %7474
        %7476 = vrot.lane.b32.xlu0 %v7430, 32
        %v7477 = vpop.permute.xlu0 %7476
        %7478 = vrot.lane.b32.xlu0 %v7431, 32
        %v7479 = vpop.permute.xlu0 %7478
        %7480 = vrot.lane.b32.xlu0 %v7432, 32
        %v7481 = vpop.permute.xlu0 %7480
        %7482 = vrot.lane.b32.xlu0 %v7433, 32
        %v7483 = vpop.permute.xlu0 %7482
        %7484 = vrot.lane.b32.xlu0 %v7434, 32
        %v7485 = vpop.permute.xlu0 %7484
        %7486 = vrot.lane.b32.xlu0 %v7435, 32
        %v7487 = vpop.permute.xlu0 %7486
        %7488 = vrot.lane.b32.xlu0 %v7436, 32
        %v7489 = vpop.permute.xlu0 %7488
        %7490 = vrot.lane.b32.xlu0 %v7437, 32
        %v7491 = vpop.permute.xlu0 %7490
        %7492 = vrot.lane.b32.xlu0 %v7438, 32
        %v7493 = vpop.permute.xlu0 %7492
        %7494 = vrot.lane.b32.xlu0 %v7439, 32
        %v7495 = vpop.permute.xlu0 %7494
        %7496 = vrot.lane.b32.xlu0 %v7440, 32
        %v7497 = vpop.permute.xlu0 %7496
        %7498 = vrot.lane.b32.xlu0 %v7441, 32
        %v7499 = vpop.permute.xlu0 %7498
        %7500 = vrot.lane.b32.xlu0 %v7442, 32
        %v7501 = vpop.permute.xlu0 %7500
        %7502 = vrot.lane.b32.xlu0 %v7443, 32
        %v7503 = vpop.permute.xlu0 %7502
        %7504 = vrot.lane.b32.xlu0 %v7444, 32
        %v7505 = vpop.permute.xlu0 %7504
        %7506 = vrot.lane.b32.xlu0 %v7445, 32
        %v7507 = vpop.permute.xlu0 %7506
        %7508 = vrot.lane.b32.xlu0 %v7446, 32
        %v7509 = vpop.permute.xlu0 %7508
        %7510 = vrot.lane.b32.xlu0 %v7447, 32
        %v7511 = vpop.permute.xlu0 %7510
        %7512 = vrot.lane.b32.xlu0 %v7448, 32
        %v7513 = vpop.permute.xlu0 %7512
        %7514 = vrot.lane.b32.xlu0 %v7449, 32
        %v7515 = vpop.permute.xlu0 %7514
        %7516 = vrot.lane.b32.xlu0 %v7450, 32
        %v7517 = vpop.permute.xlu0 %7516
        %7518 = vrot.lane.b32.xlu0 %v7451, 32
        %v7519 = vpop.permute.xlu0 %7518
        %7520 = vrot.lane.b32.xlu0 %v7452, 32
        %v7521 = vpop.permute.xlu0 %7520
        %7522 = vrot.lane.b32.xlu0 %v7453, 32
        %v7523 = vpop.permute.xlu0 %7522
        %7524 = vrot.lane.b32.xlu0 %v7454, 32
        %v7525 = vpop.permute.xlu0 %7524
        %7526 = vrot.lane.b32.xlu0 %v7455, 32
        %v7527 = vpop.permute.xlu0 %7526
        %v7528 = vpack.c.b16 %v6769, %v6768
        %v7529 = vpack.c.b16 %v6822, %v6770
        %v7530 = vpack.c.b16 %v6824, %v6823
        %7531 = vrot.lane.b32.xlu0 %v6877, 64
        %v7532 = vpop.permute.xlu0 %7531
        %7533 = vrot.lane.b32.xlu0 %v6878, 64
        %v7534 = vpop.permute.xlu0 %7533
        %7535 = vrot.lane.b32.xlu0 %v6879, 64
        %v7536 = vpop.permute.xlu0 %7535
        %7537 = vrot.lane.b32.xlu0 %v6880, 64
        %v7538 = vpop.permute.xlu0 %7537
        %7539 = vrot.lane.b32.xlu0 %v6881, 64
        %v7540 = vpop.permute.xlu0 %7539
        %7541 = vrot.lane.b32.xlu0 %v6882, 64
        %v7542 = vpop.permute.xlu0 %7541
        %7543 = vrot.lane.b32.xlu0 %v6883, 64
        %v7544 = vpop.permute.xlu0 %7543
        %7545 = vrot.lane.b32.xlu0 %v6884, 64
        %v7546 = vpop.permute.xlu0 %7545
        %7547 = vrot.lane.b32.xlu0 %v6885, 64
        %v7548 = vpop.permute.xlu0 %7547
        %7549 = vrot.lane.b32.xlu0 %v6886, 64
        %v7550 = vpop.permute.xlu0 %7549
        %7551 = vrot.lane.b32.xlu0 %v6887, 64
        %v7552 = vpop.permute.xlu0 %7551
        %7553 = vrot.lane.b32.xlu0 %v6888, 64
        %v7554 = vpop.permute.xlu0 %7553
        %7555 = vrot.lane.b32.xlu0 %v6889, 64
        %v7556 = vpop.permute.xlu0 %7555
        %7557 = vrot.lane.b32.xlu0 %v6890, 64
        %v7558 = vpop.permute.xlu0 %7557
        %7559 = vrot.lane.b32.xlu0 %v6891, 64
        %v7560 = vpop.permute.xlu0 %7559
        %7561 = vrot.lane.b32.xlu0 %v6892, 64
        %v7562 = vpop.permute.xlu0 %7561
        %7563 = vrot.lane.b32.xlu0 %v6893, 64
        %v7564 = vpop.permute.xlu0 %7563
        %7565 = vrot.lane.b32.xlu0 %v6894, 64
        %v7566 = vpop.permute.xlu0 %7565
        %7567 = vrot.lane.b32.xlu0 %v6895, 64
        %v7568 = vpop.permute.xlu0 %7567
        %7569 = vrot.lane.b32.xlu0 %v6896, 64
        %v7570 = vpop.permute.xlu0 %7569
        %7571 = vrot.lane.b32.xlu0 %v6897, 64
        %v7572 = vpop.permute.xlu0 %7571
        %7573 = vrot.lane.b32.xlu0 %v6898, 64
        %v7574 = vpop.permute.xlu0 %7573
        %7575 = vrot.lane.b32.xlu0 %v6899, 64
        %v7576 = vpop.permute.xlu0 %7575
        %7577 = vrot.lane.b32.xlu0 %v6900, 64
        %v7578 = vpop.permute.xlu0 %7577
        %7579 = vrot.lane.b32.xlu0 %v6901, 64
        %v7580 = vpop.permute.xlu0 %7579
        %7581 = vrot.lane.b32.xlu0 %v6902, 64
        %v7582 = vpop.permute.xlu0 %7581
        %7583 = vrot.lane.b32.xlu0 %v6903, 64
        %v7584 = vpop.permute.xlu0 %7583
        %7585 = vrot.lane.b32.xlu0 %v6904, 64
        %v7586 = vpop.permute.xlu0 %7585
        %7587 = vrot.lane.b32.xlu0 %v6905, 64
        %v7588 = vpop.permute.xlu0 %7587
        %7589 = vrot.lane.b32.xlu0 %v6906, 64
        %v7590 = vpop.permute.xlu0 %7589
        %7591 = vrot.lane.b32.xlu0 %v6907, 64
        %v7592 = vpop.permute.xlu0 %7591
        %7593 = vrot.lane.b32.xlu0 %v6908, 64
        %v7594 = vpop.permute.xlu0 %7593
        %7595 = vrot.lane.b32.xlu0 %v6909, 64
        %v7596 = vpop.permute.xlu0 %7595
        %7597 = vrot.lane.b32.xlu0 %v7528, 64
        %v7598 = vpop.permute.xlu0 %7597
        %7599 = vrot.lane.b32.xlu0 %v7529, 64
        %v7600 = vpop.permute.xlu0 %7599
        %7601 = vrot.lane.b32.xlu0 %v7530, 64
        %v7602 = vpop.permute.xlu0 %7601
        %v7603 = vunpack.c.l.b16 %v6843
        %v7604 = vunpack.c.l.b16 %v6853
        %v7605 = vunpack.c.l.b16 %v6863
        %v7606 = vpack.c.b16 %v7379, %v7378
        %v7607 = vpack.c.b16 %v7603, %v7380
        %v7608 = vpack.c.b16 %v7605, %v7604
        %7609 = vrot.lane.b32.xlu0 %v6985, 96
        %v7610 = vpop.permute.xlu0 %7609
        %7611 = vrot.lane.b32.xlu0 %v6986, 96
        %v7612 = vpop.permute.xlu0 %7611
        %7613 = vrot.lane.b32.xlu0 %v6987, 96
        %v7614 = vpop.permute.xlu0 %7613
        %7615 = vrot.lane.b32.xlu0 %v6988, 96
        %v7616 = vpop.permute.xlu0 %7615
        %7617 = vrot.lane.b32.xlu0 %v6989, 96
        %v7618 = vpop.permute.xlu0 %7617
        %7619 = vrot.lane.b32.xlu0 %v6990, 96
        %v7620 = vpop.permute.xlu0 %7619
        %7621 = vrot.lane.b32.xlu0 %v6991, 96
        %v7622 = vpop.permute.xlu0 %7621
        %7623 = vrot.lane.b32.xlu0 %v6992, 96
        %v7624 = vpop.permute.xlu0 %7623
        %7625 = vrot.lane.b32.xlu0 %v6993, 96
        %v7626 = vpop.permute.xlu0 %7625
        %7627 = vrot.lane.b32.xlu0 %v6994, 96
        %v7628 = vpop.permute.xlu0 %7627
        %7629 = vrot.lane.b32.xlu0 %v6995, 96
        %v7630 = vpop.permute.xlu0 %7629
        %7631 = vrot.lane.b32.xlu0 %v6996, 96
        %v7632 = vpop.permute.xlu0 %7631
        %7633 = vrot.lane.b32.xlu0 %v6997, 96
        %v7634 = vpop.permute.xlu0 %7633
        %7635 = vrot.lane.b32.xlu0 %v6998, 96
        %v7636 = vpop.permute.xlu0 %7635
        %7637 = vrot.lane.b32.xlu0 %v6999, 96
        %v7638 = vpop.permute.xlu0 %7637
        %7639 = vrot.lane.b32.xlu0 %v7000, 96
        %v7640 = vpop.permute.xlu0 %7639
        %7641 = vrot.lane.b32.xlu0 %v7001, 96
        %v7642 = vpop.permute.xlu0 %7641
        %7643 = vrot.lane.b32.xlu0 %v7002, 96
        %v7644 = vpop.permute.xlu0 %7643
        %7645 = vrot.lane.b32.xlu0 %v7003, 96
        %v7646 = vpop.permute.xlu0 %7645
        %7647 = vrot.lane.b32.xlu0 %v7004, 96
        %v7648 = vpop.permute.xlu0 %7647
        %7649 = vrot.lane.b32.xlu0 %v7005, 96
        %v7650 = vpop.permute.xlu0 %7649
        %7651 = vrot.lane.b32.xlu0 %v7006, 96
        %v7652 = vpop.permute.xlu0 %7651
        %7653 = vrot.lane.b32.xlu0 %v7007, 96
        %v7654 = vpop.permute.xlu0 %7653
        %7655 = vrot.lane.b32.xlu0 %v7008, 96
        %v7656 = vpop.permute.xlu0 %7655
        %7657 = vrot.lane.b32.xlu0 %v7009, 96
        %v7658 = vpop.permute.xlu0 %7657
        %7659 = vrot.lane.b32.xlu0 %v7010, 96
        %v7660 = vpop.permute.xlu0 %7659
        %7661 = vrot.lane.b32.xlu0 %v7011, 96
        %v7662 = vpop.permute.xlu0 %7661
        %7663 = vrot.lane.b32.xlu0 %v7012, 96
        %v7664 = vpop.permute.xlu0 %7663
        %7665 = vrot.lane.b32.xlu0 %v7013, 96
        %v7666 = vpop.permute.xlu0 %7665
        %7667 = vrot.lane.b32.xlu0 %v7014, 96
        %v7668 = vpop.permute.xlu0 %7667
        %7669 = vrot.lane.b32.xlu0 %v7015, 96
        %v7670 = vpop.permute.xlu0 %7669
        %7671 = vrot.lane.b32.xlu0 %v7016, 96
        %v7672 = vpop.permute.xlu0 %7671
        %7673 = vrot.lane.b32.xlu0 %v7017, 96
        %v7674 = vpop.permute.xlu0 %7673
        %7675 = vrot.lane.b32.xlu0 %v7606, 96
        %v7676 = vpop.permute.xlu0 %7675
        %7677 = vrot.lane.b32.xlu0 %v7607, 96
        %v7678 = vpop.permute.xlu0 %7677
        %7679 = vrot.lane.b32.xlu0 %v7608, 96
        %v7680 = vpop.permute.xlu0 %7679
        %v7681 = vunpack.c.l.b16 %v6867
        %v7682 = vunpack.c.l.b16 %v6870
        %v7683 = vunpack.c.l.b16 %v6873
        %v7684 = vpack.c.b16 %v7418, %v7417
        %v7685 = vpack.c.b16 %v7681, %v7419
        %v7686 = vpack.c.b16 %v7683, %v7682
        %vm7687 = vcmask 261120
        %v7690 = vsel %vm7687, %v6874, %v7019
        %v7693 = vsel %vm7687, %v6875, %v7021
        %v7696 = vsel %vm7687, %v6876, %v7023
        %v7699 = vsel %vm7687, %v6877, %v7025
        %v7702 = vsel %vm7687, %v6878, %v7027
        %v7705 = vsel %vm7687, %v6879, %v7029
        %v7708 = vsel %vm7687, %v6880, %v7031
        %v7711 = vsel %vm7687, %v6881, %v7033
        %v7714 = vsel %vm7687, %v6882, %v7035
        %v7717 = vsel %vm7687, %v6883, %v7037
        %v7720 = vsel %vm7687, %v6884, %v7039
        %v7723 = vsel %vm7687, %v6885, %v7041
        %v7726 = vsel %vm7687, %v6886, %v7043
        %v7729 = vsel %vm7687, %v6887, %v7045
        %v7732 = vsel %vm7687, %v6888, %v7047
        %v7735 = vsel %vm7687, %v6889, %v7049
        %v7738 = vsel %vm7687, %v6890, %v7051
        %v7741 = vsel %vm7687, %v6891, %v7053
        %v7744 = vsel %vm7687, %v6892, %v7055
        %v7747 = vsel %vm7687, %v6893, %v7057
        %v7750 = vsel %vm7687, %v6894, %v7059
        %v7753 = vsel %vm7687, %v6895, %v7061
        %v7756 = vsel %vm7687, %v6896, %v7063
        %v7759 = vsel %vm7687, %v6897, %v7065
        %v7762 = vsel %vm7687, %v6898, %v7067
        %v7765 = vsel %vm7687, %v6899, %v7069
        %v7768 = vsel %vm7687, %v6900, %v7071
        %v7771 = vsel %vm7687, %v6901, %v7073
        %v7774 = vsel %vm7687, %v6902, %v7075
        %v7777 = vsel %vm7687, %v6903, %v7077
        %v7780 = vsel %vm7687, %v6904, %v7079
        %v7783 = vsel %vm7687, %v6905, %v7081
        %v7786 = vsel %vm7687, %v6906, %v7083
        %v7789 = vsel %vm7687, %v6907, %v7085
        %v7792 = vsel %vm7687, %v6908, %v7087
        %v7795 = vsel %vm7687, %v6909, %v7089
        %vm7796 = vcmask 523264
        %v7798 = vsel %vm7796, %v7690, %v7199
        %v7800 = vsel %vm7796, %v7693, %v7201
        %v7802 = vsel %vm7796, %v7696, %v7203
        %v7804 = vsel %vm7796, %v7699, %v7205
        %v7806 = vsel %vm7796, %v7702, %v7207
        %v7808 = vsel %vm7796, %v7705, %v7209
        %v7810 = vsel %vm7796, %v7708, %v7211
        %v7812 = vsel %vm7796, %v7711, %v7213
        %v7814 = vsel %vm7796, %v7714, %v7215
        %v7816 = vsel %vm7796, %v7717, %v7217
        %v7818 = vsel %vm7796, %v7720, %v7219
        %v7820 = vsel %vm7796, %v7723, %v7221
        %v7822 = vsel %vm7796, %v7726, %v7223
        %v7824 = vsel %vm7796, %v7729, %v7225
        %v7826 = vsel %vm7796, %v7732, %v7227
        %v7828 = vsel %vm7796, %v7735, %v7229
        %v7830 = vsel %vm7796, %v7738, %v7231
        %v7832 = vsel %vm7796, %v7741, %v7233
        %v7834 = vsel %vm7796, %v7744, %v7235
        %v7836 = vsel %vm7796, %v7747, %v7237
        %v7838 = vsel %vm7796, %v7750, %v7239
        %v7840 = vsel %vm7796, %v7753, %v7241
        %v7842 = vsel %vm7796, %v7756, %v7243
        %v7844 = vsel %vm7796, %v7759, %v7245
        %v7846 = vsel %vm7796, %v7762, %v7247
        %v7848 = vsel %vm7796, %v7765, %v7249
        %v7850 = vsel %vm7796, %v7768, %v7251
        %v7852 = vsel %vm7796, %v7771, %v7253
        %v7854 = vsel %vm7796, %v7774, %v7255
        %v7856 = vsel %vm7796, %v7777, %v7257
        %v7858 = vsel %vm7796, %v7780, %v7259
        %v7860 = vsel %vm7796, %v7783, %v7261
        %v7862 = vsel %vm7796, %v7786, %v7263
        %v7864 = vsel %vm7796, %v7789, %v7265
        %v7866 = vsel %vm7796, %v7792, %v7267
        %v7868 = vsel %vm7796, %v7795, %v7269
        %vm7869 = vcmask 785408
        %v7871 = vsel %vm7869, %v7798, %v7307
        %v7874 = vsel %vm7869, %v7800, %v7309
        %v7877 = vsel %vm7869, %v7802, %v7311
        %v7880 = vsel %vm7869, %v7804, %v7313
        %v7883 = vsel %vm7869, %v7806, %v7315
        %v7886 = vsel %vm7869, %v7808, %v7317
        %v7889 = vsel %vm7869, %v7810, %v7319
        %v7892 = vsel %vm7869, %v7812, %v7321
        %v7895 = vsel %vm7869, %v7814, %v7323
        %v7898 = vsel %vm7869, %v7816, %v7325
        %v7901 = vsel %vm7869, %v7818, %v7327
        %v7904 = vsel %vm7869, %v7820, %v7329
        %v7907 = vsel %vm7869, %v7822, %v7331
        %v7910 = vsel %vm7869, %v7824, %v7333
        %v7913 = vsel %vm7869, %v7826, %v7335
        %v7916 = vsel %vm7869, %v7828, %v7337
        %v7919 = vsel %vm7869, %v7830, %v7339
        %v7922 = vsel %vm7869, %v7832, %v7341
        %v7925 = vsel %vm7869, %v7834, %v7343
        %v7928 = vsel %vm7869, %v7836, %v7345
        %v7931 = vsel %vm7869, %v7838, %v7347
        %v7934 = vsel %vm7869, %v7840, %v7349
        %v7937 = vsel %vm7869, %v7842, %v7351
        %v7940 = vsel %vm7869, %v7844, %v7353
        %v7943 = vsel %vm7869, %v7846, %v7355
        %v7946 = vsel %vm7869, %v7848, %v7357
        %v7949 = vsel %vm7869, %v7850, %v7359
        %v7952 = vsel %vm7869, %v7852, %v7361
        %v7955 = vsel %vm7869, %v7854, %v7363
        %v7958 = vsel %vm7869, %v7856, %v7365
        %v7961 = vsel %vm7869, %v7858, %v7367
        %v7964 = vsel %vm7869, %v7860, %v7369
        %v7967 = vsel %vm7869, %v7862, %v7371
        %v7970 = vsel %vm7869, %v7864, %v7373
        %v7973 = vsel %vm7869, %v7866, %v7375
        %v7976 = vsel %vm7869, %v7868, %v7377
        %v7980 = vsel %vm7687, %v7381, %v7457
        %v7983 = vsel %vm7687, %v7382, %v7459
        %v7986 = vsel %vm7687, %v7383, %v7461
        %v7989 = vsel %vm7687, %v7384, %v7463
        %v7992 = vsel %vm7687, %v7385, %v7465
        %v7995 = vsel %vm7687, %v7386, %v7467
        %v7998 = vsel %vm7687, %v7387, %v7469
        %v8001 = vsel %vm7687, %v7388, %v7471
        %v8004 = vsel %vm7687, %v7389, %v7473
        %v8007 = vsel %vm7687, %v7390, %v7475
        %v8010 = vsel %vm7687, %v7391, %v7477
        %v8013 = vsel %vm7687, %v7392, %v7479
        %v8016 = vsel %vm7687, %v7393, %v7481
        %v8019 = vsel %vm7687, %v7394, %v7483
        %v8022 = vsel %vm7687, %v7395, %v7485
        %v8025 = vsel %vm7687, %v7396, %v7487
        %v8028 = vsel %vm7687, %v7397, %v7489
        %v8031 = vsel %vm7687, %v7398, %v7491
        %v8034 = vsel %vm7687, %v7399, %v7493
        %v8037 = vsel %vm7687, %v7400, %v7495
        %v8040 = vsel %vm7687, %v7401, %v7497
        %v8043 = vsel %vm7687, %v7402, %v7499
        %v8046 = vsel %vm7687, %v7403, %v7501
        %v8049 = vsel %vm7687, %v7404, %v7503
        %v8052 = vsel %vm7687, %v7405, %v7505
        %v8055 = vsel %vm7687, %v7406, %v7507
        %v8058 = vsel %vm7687, %v7407, %v7509
        %v8061 = vsel %vm7687, %v7408, %v7511
        %v8064 = vsel %vm7687, %v7409, %v7513
        %v8067 = vsel %vm7687, %v7410, %v7515
        %v8070 = vsel %vm7687, %v7411, %v7517
        %v8073 = vsel %vm7687, %v7412, %v7519
        %v8076 = vsel %vm7687, %v7413, %v7521
        %v8079 = vsel %vm7687, %v7414, %v7523
        %v8082 = vsel %vm7687, %v7415, %v7525
        %v8085 = vsel %vm7687, %v7416, %v7527
        %v8087 = vsel %vm7796, %v7980, %v7532
        %v8089 = vsel %vm7796, %v7983, %v7534
        %v8091 = vsel %vm7796, %v7986, %v7536
        %v8093 = vsel %vm7796, %v7989, %v7538
        %v8095 = vsel %vm7796, %v7992, %v7540
        %v8097 = vsel %vm7796, %v7995, %v7542
        %v8099 = vsel %vm7796, %v7998, %v7544
        %v8101 = vsel %vm7796, %v8001, %v7546
        %v8103 = vsel %vm7796, %v8004, %v7548
        %v8105 = vsel %vm7796, %v8007, %v7550
        %v8107 = vsel %vm7796, %v8010, %v7552
        %v8109 = vsel %vm7796, %v8013, %v7554
        %v8111 = vsel %vm7796, %v8016, %v7556
        %v8113 = vsel %vm7796, %v8019, %v7558
        %v8115 = vsel %vm7796, %v8022, %v7560
        %v8117 = vsel %vm7796, %v8025, %v7562
        %v8119 = vsel %vm7796, %v8028, %v7564
        %v8121 = vsel %vm7796, %v8031, %v7566
        %v8123 = vsel %vm7796, %v8034, %v7568
        %v8125 = vsel %vm7796, %v8037, %v7570
        %v8127 = vsel %vm7796, %v8040, %v7572
        %v8129 = vsel %vm7796, %v8043, %v7574
        %v8131 = vsel %vm7796, %v8046, %v7576
        %v8133 = vsel %vm7796, %v8049, %v7578
        %v8135 = vsel %vm7796, %v8052, %v7580
        %v8137 = vsel %vm7796, %v8055, %v7582
        %v8139 = vsel %vm7796, %v8058, %v7584
        %v8141 = vsel %vm7796, %v8061, %v7586
        %v8143 = vsel %vm7796, %v8064, %v7588
        %v8145 = vsel %vm7796, %v8067, %v7590
        %v8147 = vsel %vm7796, %v8070, %v7592
        %v8149 = vsel %vm7796, %v8073, %v7594
        %v8151 = vsel %vm7796, %v8076, %v7596
        %v8153 = vsel %vm7796, %v8079, %v7598
        %v8155 = vsel %vm7796, %v8082, %v7600
        %v8157 = vsel %vm7796, %v8085, %v7602
        %v8159 = vsel %vm7869, %v8087, %v7610
        %v8162 = vsel %vm7869, %v8089, %v7612
        %v8165 = vsel %vm7869, %v8091, %v7614
        %v8168 = vsel %vm7869, %v8093, %v7616
        %v8171 = vsel %vm7869, %v8095, %v7618
        %v8174 = vsel %vm7869, %v8097, %v7620
        %v8177 = vsel %vm7869, %v8099, %v7622
        %v8180 = vsel %vm7869, %v8101, %v7624
        %v8183 = vsel %vm7869, %v8103, %v7626
        %v8186 = vsel %vm7869, %v8105, %v7628
        %v8189 = vsel %vm7869, %v8107, %v7630
        %v8192 = vsel %vm7869, %v8109, %v7632
        %v8195 = vsel %vm7869, %v8111, %v7634
        %v8198 = vsel %vm7869, %v8113, %v7636
        %v8201 = vsel %vm7869, %v8115, %v7638
        %v8204 = vsel %vm7869, %v8117, %v7640
        %v8207 = vsel %vm7869, %v8119, %v7642
        %v8210 = vsel %vm7869, %v8121, %v7644
        %v8213 = vsel %vm7869, %v8123, %v7646
        %v8216 = vsel %vm7869, %v8125, %v7648
        %v8219 = vsel %vm7869, %v8127, %v7650
        %v8222 = vsel %vm7869, %v8129, %v7652
        %v8225 = vsel %vm7869, %v8131, %v7654
        %v8228 = vsel %vm7869, %v8133, %v7656
        %v8231 = vsel %vm7869, %v8135, %v7658
        %v8234 = vsel %vm7869, %v8137, %v7660
        %v8237 = vsel %vm7869, %v8139, %v7662
        %v8240 = vsel %vm7869, %v8141, %v7664
        %v8243 = vsel %vm7869, %v8143, %v7666
        %v8246 = vsel %vm7869, %v8145, %v7668
        %v8249 = vsel %vm7869, %v8147, %v7670
        %v8252 = vsel %vm7869, %v8149, %v7672
        %v8255 = vsel %vm7869, %v8151, %v7674
        %v8258 = vsel %vm7869, %v8153, %v7676
        %v8261 = vsel %vm7869, %v8155, %v7678
        %v8264 = vsel %vm7869, %v8157, %v7680
        %v8266 = vld [vmem:[%s3] sm:$0xf]
        %v8267 = vld [vmem:[%s3 + $0x4] sm:$0xf]
        %v8268 = vld [vmem:[%s3 + $0x8] sm:$0xf]
        %v8269 = vld [vmem:[%s3 + $0xc] sm:$0xf]
        %v8270 = vld [vmem:[%s3 + $0x10] sm:$0xf]
        %v8271 = vld [vmem:[%s3 + $0x14] sm:$0xf]
        %v8272 = vld [vmem:[%s3 + $0x18] sm:$0xf]
        %v8273 = vld [vmem:[%s3 + $0x1c] sm:$0xf]
        %v8274 = vld [vmem:[%s3 + $0x20] sm:$0xf]
        %v8275 = vld [vmem:[%s3 + $0x24] sm:$0xf]
        %v8276 = vld [vmem:[%s3 + $0x28] sm:$0xf]
        %v8277 = vld [vmem:[%s3 + $0x2c] sm:$0xf]
        %v8278 = vld [vmem:[%s3 + $0x30] sm:$0xf]
        %v8279 = vld [vmem:[%s3 + $0x34] sm:$0xf]
        %v8280 = vld [vmem:[%s3 + $0x38] sm:$0xf]
        %v8281 = vld [vmem:[%s3 + $0x3c] sm:$0xf]
        %v8282 = vld [vmem:[%s3 + $0x40] sm:$0xf]
        %v8283 = vld [vmem:[%s3 + $0x44] sm:$0xf]
        %v8284 = vld [vmem:[%s3 + $0x48] sm:$0xf]
        %v8285 = vld [vmem:[%s3 + $0x4c] sm:$0xf]
        %v8286 = vld [vmem:[%s3 + $0x50] sm:$0xf]
        %v8287 = vld [vmem:[%s3 + $0x54] sm:$0xf]
        %v8288 = vld [vmem:[%s3 + $0x58] sm:$0xf]
        %v8289 = vld [vmem:[%s3 + $0x5c] sm:$0xf]
        %v8290 = vld [vmem:[%s3 + $0x60] sm:$0xf]
        %v8291 = vld [vmem:[%s3 + $0x64] sm:$0xf]
        %v8292 = vld [vmem:[%s3 + $0x68] sm:$0xf]
        %v8293 = vld [vmem:[%s3 + $0x6c] sm:$0xf]
        %v8294 = vld [vmem:[%s3 + $0x70] sm:$0xf]
        %v8295 = vld [vmem:[%s3 + $0x74] sm:$0xf]
        %v8296 = vld [vmem:[%s3 + $0x78] sm:$0xf]
        %v8297 = vld [vmem:[%s3 + $0x7c] sm:$0xf]
        %v8298 = vld [vmem:[%s3 + $0x80] sm:$0xf]
        %v8299 = vld [vmem:[%s3 + $0x84] sm:$0xf]
        %v8300 = vld [vmem:[%s3 + $0x88] sm:$0xf]
        %v8301 = vld [vmem:[%s3 + $0x8c] sm:$0xf]
        %v8302 = vld [vmem:[#allocation7] sm:$0x1]
        %v8304 = vlaneseq
        %v8305 = vshrl.u32 %v8304, 7
        %v8306 = vsub.s32 0, %v8305
        %v8307 = vrot.slane %v8302, %v8306
        %v8345 = vunpack.c.l.b16 %v8266
        %v8346 = vunpack.c.l.b16 %v8267
        %v8347 = vunpack.c.l.b16 %v8268
        %v8348 = vunpack.c.l.b16 %v8269
        %v8349 = vunpack.c.l.b16 %v8270
        %v8350 = vunpack.c.l.b16 %v8271
        %v8351 = vunpack.c.l.b16 %v8272
        %v8352 = vunpack.c.l.b16 %v8273
        %v8353 = vunpack.c.l.b16 %v8274
        %v8354 = vunpack.c.l.b16 %v8275
        %v8355 = vunpack.c.l.b16 %v8276
        %v8356 = vunpack.c.l.b16 %v8277
        %v8357 = vunpack.c.l.b16 %v8278
        %v8358 = vunpack.c.l.b16 %v8279
        %v8359 = vunpack.c.l.b16 %v8280
        %v8360 = vunpack.c.l.b16 %v8281
        %v8361 = vunpack.c.l.b16 %v8282
        %v8362 = vunpack.c.l.b16 %v8283
        %v8363 = vunpack.c.l.b16 %v8284
        %v8364 = vunpack.c.l.b16 %v8285
        %v8365 = vunpack.c.l.b16 %v8286
        %v8366 = vunpack.c.l.b16 %v8287
        %v8367 = vunpack.c.l.b16 %v8288
        %v8368 = vunpack.c.l.b16 %v8289
        %v8369 = vunpack.c.l.b16 %v8290
        %v8370 = vunpack.c.l.b16 %v8291
        %v8371 = vunpack.c.l.b16 %v8292
        %v8372 = vunpack.c.l.b16 %v8293
        %v8373 = vunpack.c.l.b16 %v8294
        %v8374 = vunpack.c.l.b16 %v8295
        %v8375 = vunpack.c.l.b16 %v8296
        %v8376 = vunpack.c.l.b16 %v8297
        %v8377 = vunpack.c.l.b16 %v8298
        %v8378 = vunpack.c.l.b16 %v8299
        %v8379 = vunpack.c.l.b16 %v8300
        %v8380 = vunpack.c.l.b16 %v8301
        %v8381 = vpack.c.b16 %v8346, %v8345
        %v8382 = vpack.c.b16 %v8348, %v8347
        %v8383 = vpack.c.b16 %v8350, %v8349
        %v8384 = vpack.c.b16 %v8352, %v8351
        %v8385 = vpack.c.b16 %v8354, %v8353
        %v8386 = vpack.c.b16 %v8356, %v8355
        %v8387 = vpack.c.b16 %v8358, %v8357
        %v8388 = vpack.c.b16 %v8360, %v8359
        %v8389 = vpack.c.b16 %v8362, %v8361
        %v8390 = vpack.c.b16 %v8364, %v8363
        %v8391 = vpack.c.b16 %v8366, %v8365
        %v8392 = vpack.c.b16 %v8368, %v8367
        %v8393 = vpack.c.b16 %v8370, %v8369
        %v8394 = vpack.c.b16 %v8372, %v8371
        %v8395 = vpack.c.b16 %v8374, %v8373
        %v8396 = vpack.c.b16 %v8376, %v8375
        %v8397 = vpack.c.b16 %v8378, %v8377
        %v8398 = vpack.c.b16 %v8380, %v8379
        %v8418 = vsel %vm7687, %v7165, 0
        %v8421 = vsel %vm7687, %v7166, 0
        %v8424 = vsel %vm7687, %v7167, 0
        %v8427 = vsel %vm7687, %v7168, 0
        %v8430 = vsel %vm7687, %v7169, 0
        %v8433 = vsel %vm7687, %v7170, 0
        %v8436 = vsel %vm7687, %v7171, 0
        %v8439 = vsel %vm7687, %v7172, 0
        %v8442 = vsel %vm7687, %v7173, 0
        %v8445 = vsel %vm7687, %v7174, 0
        %v8448 = vsel %vm7687, %v7175, 0
        %v8451 = vsel %vm7687, %v7176, 0
        %v8454 = vsel %vm7687, %v7177, 0
        %v8457 = vsel %vm7687, %v7178, 0
        %v8460 = vsel %vm7687, %v7179, 0
        %v8463 = vsel %vm7687, %v7180, 0
        %v8466 = vsel %vm7687, %v7181, 0
        %v8469 = vsel %vm7687, %v7182, 0
        %v8472 = vsel %vm7687, %v7183, 0
        %v8475 = vsel %vm7687, %v7184, 0
        %v8478 = vsel %vm7687, %v7185, 0
        %v8481 = vsel %vm7687, %v7186, 0
        %v8484 = vsel %vm7687, %v7187, 0
        %v8487 = vsel %vm7687, %v7188, 0
        %v8490 = vsel %vm7687, %v7189, 0
        %v8493 = vsel %vm7687, %v7190, 0
        %v8496 = vsel %vm7687, %v7191, 0
        %v8499 = vsel %vm7687, %v7192, 0
        %v8502 = vsel %vm7687, %v7193, 0
        %v8505 = vsel %vm7687, %v7194, 0
        %v8508 = vsel %vm7687, %v7195, 0
        %v8511 = vsel %vm7687, %v7196, 0
        %v8514 = vsel %vm7687, %v7197, 0
        %v8517 = vsel %vm7687, %v7684, 0
        %v8520 = vsel %vm7687, %v7685, 0
        %v8523 = vsel %vm7687, %v7686, 0
        %8525 = vmatprep.subr.bf16.mxu0 0
        %8526 = vmatpush1.bf16.msra.mxu0 %v8388
        %8527 = vmatprep.subr.bf16.mxu0 0
        %8528 = vmatpush1.bf16.msra.mxu0 %v8387
        %8529 = vmatprep.subr.bf16.mxu0 0
        %8530 = vmatpush1.bf16.msra.mxu0 %v8386
        %8531 = vmatprep.subr.bf16.mxu0 0
        %8532 = vmatpush1.bf16.msra.mxu0 %v8385
        %8533 = vmatprep.subr.bf16.mxu0 0
        %8534 = vmatpush1.bf16.msra.mxu0 %v8384
        %8535 = vmatprep.subr.bf16.mxu0 0
        %8536 = vmatpush1.bf16.msra.mxu0 %v8383
        %8537 = vmatprep.subr.bf16.mxu0 0
        %8538 = vmatpush1.bf16.msra.mxu0 %v8382
        %8539 = vmatprep.subr.bf16.mxu0 0
        %8540 = vmatpush1.bf16.msra.mxu0 %v8381
        %8541 = vmatprep.subr.bf16.mxu0 0
        %8542 = vmatpush2.bf16.msra.mxu0 %v8396
        %8543 = vmatprep.subr.bf16.mxu0 0
        %8544 = vmatpush2.bf16.msra.mxu0 %v8395
        %8545 = vmatprep.subr.bf16.mxu0 0
        %8546 = vmatpush2.bf16.msra.mxu0 %v8394
        %8547 = vmatprep.subr.bf16.mxu0 0
        %8548 = vmatpush2.bf16.msra.mxu0 %v8393
        %8549 = vmatprep.subr.bf16.mxu0 0
        %8550 = vmatpush2.bf16.msra.mxu0 %v8392
        %8551 = vmatprep.subr.bf16.mxu0 0
        %8552 = vmatpush2.bf16.msra.mxu0 %v8391
        %8553 = vmatprep.subr.bf16.mxu0 0
        %8554 = vmatpush2.bf16.msra.mxu0 %v8390
        %8555 = vmatprep.subr.bf16.mxu0 0
        %8556 = vmatpush2.bf16.msra.mxu0 %v8389
        %8557 = vmatprep.mubr.bf16.mxu0 %v8159
        %8558 = vmatmul.mubr.bf16.gmra.mxu0 %v7871
        %v8559 = vpop.f32.mrf.mxu0
        %v8560 = vadd.f32 %v8307, %v8559
        %v8561 = vpop.f32.mrf.mxu0
        %v8562 = vpop.f32.mrf.mxu0
        %v8563 = vadd.f32 %v8307, %v8562
        %v8564 = vpop.f32.mrf.mxu0
        %8565 = vmatprep.mubr.bf16.mxu0 %v8162
        %8566 = vmatmul.mubr.bf16.gmra.mxu0 %v7874
        %v8567 = vpop.f32.mrf.mxu0
        %v8568 = vadd.f32 %v8307, %v8567
        %v8569 = vpop.f32.mrf.mxu0
        %v8570 = vpop.f32.mrf.mxu0
        %v8571 = vadd.f32 %v8307, %v8570
        %v8572 = vpop.f32.mrf.mxu0
        %8573 = vmatprep.mubr.bf16.mxu0 %v8165
        %8574 = vmatmul.mubr.bf16.gmra.mxu0 %v7877
        %v8575 = vpop.f32.mrf.mxu0
        %v8576 = vadd.f32 %v8307, %v8575
        %v8577 = vpop.f32.mrf.mxu0
        %v8578 = vpop.f32.mrf.mxu0
        %v8579 = vadd.f32 %v8307, %v8578
        %v8580 = vpop.f32.mrf.mxu0
        %8581 = vmatprep.mubr.bf16.mxu0 %v8168
        %8582 = vmatmul.mubr.bf16.gmra.mxu0 %v7880
        %v8583 = vpop.f32.mrf.mxu0
        %v8584 = vadd.f32 %v8307, %v8583
        %v8585 = vpop.f32.mrf.mxu0
        %v8586 = vpop.f32.mrf.mxu0
        %v8587 = vadd.f32 %v8307, %v8586
        %v8588 = vpop.f32.mrf.mxu0
        %8589 = vmatprep.mubr.bf16.mxu0 %v8171
        %8590 = vmatmul.mubr.bf16.gmra.mxu0 %v7883
        %v8591 = vpop.f32.mrf.mxu0
        %v8592 = vadd.f32 %v8307, %v8591
        %v8593 = vpop.f32.mrf.mxu0
        %v8594 = vpop.f32.mrf.mxu0
        %v8595 = vadd.f32 %v8307, %v8594
        %v8596 = vpop.f32.mrf.mxu0
        %8597 = vmatprep.mubr.bf16.mxu0 %v8174
        %8598 = vmatmul.mubr.bf16.gmra.mxu0 %v7886
        %v8599 = vpop.f32.mrf.mxu0
        %v8600 = vadd.f32 %v8307, %v8599
        %v8601 = vpop.f32.mrf.mxu0
        %v8602 = vpop.f32.mrf.mxu0
        %v8603 = vadd.f32 %v8307, %v8602
        %v8604 = vpop.f32.mrf.mxu0
        %8605 = vmatprep.mubr.bf16.mxu0 %v8177
        %8606 = vmatmul.mubr.bf16.gmra.mxu0 %v7889
        %v8607 = vpop.f32.mrf.mxu0
        %v8608 = vadd.f32 %v8307, %v8607
        %v8609 = vpop.f32.mrf.mxu0
        %v8610 = vpop.f32.mrf.mxu0
        %v8611 = vadd.f32 %v8307, %v8610
        %v8612 = vpop.f32.mrf.mxu0
        %8613 = vmatprep.mubr.bf16.mxu0 %v8180
        %8614 = vmatmul.mubr.bf16.gmra.mxu0 %v7892
        %v8615 = vpop.f32.mrf.mxu0
        %v8616 = vadd.f32 %v8307, %v8615
        %v8617 = vpop.f32.mrf.mxu0
        %v8618 = vpop.f32.mrf.mxu0
        %v8619 = vadd.f32 %v8307, %v8618
        %v8620 = vpop.f32.mrf.mxu0
        %8621 = vmatprep.mubr.bf16.mxu0 %v8183
        %8622 = vmatmul.mubr.bf16.gmra.mxu0 %v7895
        %v8623 = vpop.f32.mrf.mxu0
        %v8624 = vadd.f32 %v8307, %v8623
        %v8625 = vpop.f32.mrf.mxu0
        %v8626 = vpop.f32.mrf.mxu0
        %v8627 = vadd.f32 %v8307, %v8626
        %v8628 = vpop.f32.mrf.mxu0
        %8629 = vmatprep.mubr.bf16.mxu0 %v8186
        %8630 = vmatmul.mubr.bf16.gmra.mxu0 %v7898
        %v8631 = vpop.f32.mrf.mxu0
        %v8632 = vadd.f32 %v8307, %v8631
        %v8633 = vpop.f32.mrf.mxu0
        %v8634 = vpop.f32.mrf.mxu0
        %v8635 = vadd.f32 %v8307, %v8634
        %v8636 = vpop.f32.mrf.mxu0
        %8637 = vmatprep.mubr.bf16.mxu0 %v8189
        %8638 = vmatmul.mubr.bf16.gmra.mxu0 %v7901
        %v8639 = vpop.f32.mrf.mxu0
        %v8640 = vadd.f32 %v8307, %v8639
        %v8641 = vpop.f32.mrf.mxu0
        %v8642 = vpop.f32.mrf.mxu0
        %v8643 = vadd.f32 %v8307, %v8642
        %v8644 = vpop.f32.mrf.mxu0
        %8645 = vmatprep.mubr.bf16.mxu0 %v8192
        %8646 = vmatmul.mubr.bf16.gmra.mxu0 %v7904
        %v8647 = vpop.f32.mrf.mxu0
        %v8648 = vadd.f32 %v8307, %v8647
        %v8649 = vpop.f32.mrf.mxu0
        %v8650 = vpop.f32.mrf.mxu0
        %v8651 = vadd.f32 %v8307, %v8650
        %v8652 = vpop.f32.mrf.mxu0
        %8653 = vmatprep.mubr.bf16.mxu0 %v8195
        %8654 = vmatmul.mubr.bf16.gmra.mxu0 %v7907
        %v8655 = vpop.f32.mrf.mxu0
        %v8656 = vadd.f32 %v8307, %v8655
        %v8657 = vpop.f32.mrf.mxu0
        %v8658 = vpop.f32.mrf.mxu0
        %v8659 = vadd.f32 %v8307, %v8658
        %v8660 = vpop.f32.mrf.mxu0
        %8661 = vmatprep.mubr.bf16.mxu0 %v8198
        %8662 = vmatmul.mubr.bf16.gmra.mxu0 %v7910
        %v8663 = vpop.f32.mrf.mxu0
        %v8664 = vadd.f32 %v8307, %v8663
        %v8665 = vpop.f32.mrf.mxu0
        %v8666 = vpop.f32.mrf.mxu0
        %v8667 = vadd.f32 %v8307, %v8666
        %v8668 = vpop.f32.mrf.mxu0
        %8669 = vmatprep.mubr.bf16.mxu0 %v8201
        %8670 = vmatmul.mubr.bf16.gmra.mxu0 %v7913
        %v8671 = vpop.f32.mrf.mxu0
        %v8672 = vadd.f32 %v8307, %v8671
        %v8673 = vpop.f32.mrf.mxu0
        %v8674 = vpop.f32.mrf.mxu0
        %v8675 = vadd.f32 %v8307, %v8674
        %v8676 = vpop.f32.mrf.mxu0
        %8677 = vmatprep.mubr.bf16.mxu0 %v8204
        %8678 = vmatmul.mubr.bf16.gmra.mxu0 %v7916
        %v8679 = vpop.f32.mrf.mxu0
        %v8680 = vadd.f32 %v8307, %v8679
        %v8681 = vpop.f32.mrf.mxu0
        %v8682 = vpop.f32.mrf.mxu0
        %v8683 = vadd.f32 %v8307, %v8682
        %v8684 = vpop.f32.mrf.mxu0
        %8685 = vmatprep.mubr.bf16.mxu0 %v8207
        %8686 = vmatmul.mubr.bf16.gmra.mxu0 %v7919
        %v8687 = vpop.f32.mrf.mxu0
        %v8688 = vadd.f32 %v8307, %v8687
        %v8689 = vpop.f32.mrf.mxu0
        %v8690 = vpop.f32.mrf.mxu0
        %v8691 = vadd.f32 %v8307, %v8690
        %v8692 = vpop.f32.mrf.mxu0
        %8693 = vmatprep.mubr.bf16.mxu0 %v8210
        %8694 = vmatmul.mubr.bf16.gmra.mxu0 %v7922
        %v8695 = vpop.f32.mrf.mxu0
        %v8696 = vadd.f32 %v8307, %v8695
        %v8697 = vpop.f32.mrf.mxu0
        %v8698 = vpop.f32.mrf.mxu0
        %v8699 = vadd.f32 %v8307, %v8698
        %v8700 = vpop.f32.mrf.mxu0
        %8701 = vmatprep.mubr.bf16.mxu0 %v8213
        %8702 = vmatmul.mubr.bf16.gmra.mxu0 %v7925
        %v8703 = vpop.f32.mrf.mxu0
        %v8704 = vadd.f32 %v8307, %v8703
        %v8705 = vpop.f32.mrf.mxu0
        %v8706 = vpop.f32.mrf.mxu0
        %v8707 = vadd.f32 %v8307, %v8706
        %v8708 = vpop.f32.mrf.mxu0
        %8709 = vmatprep.mubr.bf16.mxu0 %v8216
        %8710 = vmatmul.mubr.bf16.gmra.mxu0 %v7928
        %v8711 = vpop.f32.mrf.mxu0
        %v8712 = vadd.f32 %v8307, %v8711
        %v8713 = vpop.f32.mrf.mxu0
        %v8714 = vpop.f32.mrf.mxu0
        %v8715 = vadd.f32 %v8307, %v8714
        %v8716 = vpop.f32.mrf.mxu0
        %8717 = vmatprep.mubr.bf16.mxu0 %v8219
        %8718 = vmatmul.mubr.bf16.gmra.mxu0 %v7931
        %v8719 = vpop.f32.mrf.mxu0
        %v8720 = vadd.f32 %v8307, %v8719
        %v8721 = vpop.f32.mrf.mxu0
        %v8722 = vpop.f32.mrf.mxu0
        %v8723 = vadd.f32 %v8307, %v8722
        %v8724 = vpop.f32.mrf.mxu0
        %8725 = vmatprep.mubr.bf16.mxu0 %v8222
        %8726 = vmatmul.mubr.bf16.gmra.mxu0 %v7934
        %v8727 = vpop.f32.mrf.mxu0
        %v8728 = vadd.f32 %v8307, %v8727
        %v8729 = vpop.f32.mrf.mxu0
        %v8730 = vpop.f32.mrf.mxu0
        %v8731 = vadd.f32 %v8307, %v8730
        %v8732 = vpop.f32.mrf.mxu0
        %8733 = vmatprep.mubr.bf16.mxu0 %v8225
        %8734 = vmatmul.mubr.bf16.gmra.mxu0 %v7937
        %v8735 = vpop.f32.mrf.mxu0
        %v8736 = vadd.f32 %v8307, %v8735
        %v8737 = vpop.f32.mrf.mxu0
        %v8738 = vpop.f32.mrf.mxu0
        %v8739 = vadd.f32 %v8307, %v8738
        %v8740 = vpop.f32.mrf.mxu0
        %8741 = vmatprep.mubr.bf16.mxu0 %v8228
        %8742 = vmatmul.mubr.bf16.gmra.mxu0 %v7940
        %v8743 = vpop.f32.mrf.mxu0
        %v8744 = vadd.f32 %v8307, %v8743
        %v8745 = vpop.f32.mrf.mxu0
        %v8746 = vpop.f32.mrf.mxu0
        %v8747 = vadd.f32 %v8307, %v8746
        %v8748 = vpop.f32.mrf.mxu0
        %8749 = vmatprep.mubr.bf16.mxu0 %v8231
        %8750 = vmatmul.mubr.bf16.gmra.mxu0 %v7943
        %v8751 = vpop.f32.mrf.mxu0
        %v8752 = vadd.f32 %v8307, %v8751
        %v8753 = vpop.f32.mrf.mxu0
        %v8754 = vpop.f32.mrf.mxu0
        %v8755 = vadd.f32 %v8307, %v8754
        %v8756 = vpop.f32.mrf.mxu0
        %8757 = vmatprep.mubr.bf16.mxu0 %v8234
        %8758 = vmatmul.mubr.bf16.gmra.mxu0 %v7946
        %v8759 = vpop.f32.mrf.mxu0
        %v8760 = vadd.f32 %v8307, %v8759
        %v8761 = vpop.f32.mrf.mxu0
        %v8762 = vpop.f32.mrf.mxu0
        %v8763 = vadd.f32 %v8307, %v8762
        %v8764 = vpop.f32.mrf.mxu0
        %8765 = vmatprep.mubr.bf16.mxu0 %v8237
        %8766 = vmatmul.mubr.bf16.gmra.mxu0 %v7949
        %v8767 = vpop.f32.mrf.mxu0
        %v8768 = vadd.f32 %v8307, %v8767
        %v8769 = vpop.f32.mrf.mxu0
        %v8770 = vpop.f32.mrf.mxu0
        %v8771 = vadd.f32 %v8307, %v8770
        %v8772 = vpop.f32.mrf.mxu0
        %8773 = vmatprep.mubr.bf16.mxu0 %v8240
        %8774 = vmatmul.mubr.bf16.gmra.mxu0 %v7952
        %v8775 = vpop.f32.mrf.mxu0
        %v8776 = vadd.f32 %v8307, %v8775
        %v8777 = vpop.f32.mrf.mxu0
        %v8778 = vpop.f32.mrf.mxu0
        %v8779 = vadd.f32 %v8307, %v8778
        %v8780 = vpop.f32.mrf.mxu0
        %8781 = vmatprep.mubr.bf16.mxu0 %v8243
        %8782 = vmatmul.mubr.bf16.gmra.mxu0 %v7955
        %v8783 = vpop.f32.mrf.mxu0
        %v8784 = vadd.f32 %v8307, %v8783
        %v8785 = vpop.f32.mrf.mxu0
        %v8786 = vpop.f32.mrf.mxu0
        %v8787 = vadd.f32 %v8307, %v8786
        %v8788 = vpop.f32.mrf.mxu0
        %8789 = vmatprep.mubr.bf16.mxu0 %v8246
        %8790 = vmatmul.mubr.bf16.gmra.mxu0 %v7958
        %v8791 = vpop.f32.mrf.mxu0
        %v8792 = vadd.f32 %v8307, %v8791
        %v8793 = vpop.f32.mrf.mxu0
        %v8794 = vpop.f32.mrf.mxu0
        %v8795 = vadd.f32 %v8307, %v8794
        %v8796 = vpop.f32.mrf.mxu0
        %8797 = vmatprep.mubr.bf16.mxu0 %v8249
        %8798 = vmatmul.mubr.bf16.gmra.mxu0 %v7961
        %v8799 = vpop.f32.mrf.mxu0
        %v8800 = vadd.f32 %v8307, %v8799
        %v8801 = vpop.f32.mrf.mxu0
        %v8802 = vpop.f32.mrf.mxu0
        %v8803 = vadd.f32 %v8307, %v8802
        %v8804 = vpop.f32.mrf.mxu0
        %8805 = vmatprep.mubr.bf16.mxu0 %v8252
        %8806 = vmatmul.mubr.bf16.gmra.mxu0 %v7964
        %v8807 = vpop.f32.mrf.mxu0
        %v8808 = vadd.f32 %v8307, %v8807
        %v8809 = vpop.f32.mrf.mxu0
        %v8810 = vpop.f32.mrf.mxu0
        %v8811 = vadd.f32 %v8307, %v8810
        %v8812 = vpop.f32.mrf.mxu0
        %8813 = vmatprep.mubr.bf16.mxu0 %v8255
        %8814 = vmatmul.mubr.bf16.gmra.mxu0 %v7967
        %v8815 = vpop.f32.mrf.mxu0
        %v8816 = vadd.f32 %v8307, %v8815
        %v8817 = vpop.f32.mrf.mxu0
        %v8818 = vpop.f32.mrf.mxu0
        %v8819 = vadd.f32 %v8307, %v8818
        %v8820 = vpop.f32.mrf.mxu0
        %8821 = vmatprep.mubr.bf16.mxu0 %v8258
        %8822 = vmatmul.mubr.bf16.gmra.mxu0 %v7970
        %v8823 = vpop.f32.mrf.mxu0
        %v8824 = vadd.f32 %v8307, %v8823
        %v8825 = vpop.f32.mrf.mxu0
        %v8826 = vpop.f32.mrf.mxu0
        %v8827 = vadd.f32 %v8307, %v8826
        %v8828 = vpop.f32.mrf.mxu0
        %8829 = vmatprep.mubr.bf16.mxu0 %v8261
        %8830 = vmatmul.mubr.bf16.gmra.mxu0 %v7973
        %v8831 = vpop.f32.mrf.mxu0
        %v8832 = vadd.f32 %v8307, %v8831
        %v8833 = vpop.f32.mrf.mxu0
        %v8834 = vpop.f32.mrf.mxu0
        %v8835 = vadd.f32 %v8307, %v8834
        %v8836 = vpop.f32.mrf.mxu0
        %8837 = vmatprep.mubr.bf16.mxu0 %v8264
        %8838 = vmatmul.mubr.bf16.gmra.mxu0 %v7976
        %v8839 = vpop.f32.mrf.mxu0
        %v8840 = vadd.f32 %v8307, %v8839
        %v8841 = vpop.f32.mrf.mxu0
        %v8842 = vpop.f32.mrf.mxu0
        %v8843 = vadd.f32 %v8307, %v8842
        %v8844 = vpop.f32.mrf.mxu0
        %8845 = vdwg.mxu0
        %8846 = vmatprep.subr.bf16.mxu0 0
        %8847 = vmatpush1.bf16.msra.mxu0 0
        %8848 = vmatprep.subr.bf16.mxu0 0
        %8849 = vmatpush1.bf16.msra.mxu0 0
        %8850 = vmatprep.subr.bf16.mxu0 0
        %8851 = vmatpush1.bf16.msra.mxu0 0
        %8852 = vmatprep.subr.bf16.mxu0 0
        %8853 = vmatpush1.bf16.msra.mxu0 0
        %8854 = vmatprep.subr.bf16.mxu0 0
        %8855 = vmatpush1.bf16.msra.mxu0 0
        %8856 = vmatprep.subr.bf16.mxu0 0
        %8857 = vmatpush1.bf16.msra.mxu0 0
        %8858 = vmatprep.subr.bf16.mxu0 0
        %8859 = vmatpush1.bf16.msra.mxu0 %v8398
        %8860 = vmatprep.subr.bf16.mxu0 0
        %8861 = vmatpush1.bf16.msra.mxu0 %v8397
        %8862 = vmatprep.subr.bf16.mxu0 0
        %8863 = vmatpush2.bf16.msra.mxu0 0
        %8864 = vmatprep.subr.bf16.mxu0 0
        %8865 = vmatpush2.bf16.msra.mxu0 0
        %8866 = vmatprep.subr.bf16.mxu0 0
        %8867 = vmatpush2.bf16.msra.mxu0 0
        %8868 = vmatprep.subr.bf16.mxu0 0
        %8869 = vmatpush2.bf16.msra.mxu0 0
        %8870 = vmatprep.subr.bf16.mxu0 0
        %8871 = vmatpush2.bf16.msra.mxu0 0
        %8872 = vmatprep.subr.bf16.mxu0 0
        %8873 = vmatpush2.bf16.msra.mxu0 0
        %8874 = vmatprep.subr.bf16.mxu0 0
        %8875 = vmatpush2.bf16.msra.mxu0 0
        %8876 = vmatprep.subr.bf16.mxu0 0
        %8877 = vmatpush2.bf16.msra.mxu0 0
        %8878 = vmatprep.mubr.bf16.mxu0 0
        %8879 = vmatmul.mubr.bf16.gmra.mxu0 %v8418
        %v8880 = vpop.f32.mrf.mxu0
        %v8881 = vadd.f32 %v8560, %v8880
        %v8882 = vpop.f32.mrf.mxu0
        %v8883 = vpop.f32.mrf.mxu0
        %v8884 = vadd.f32 %v8563, %v8883
        %v8885 = vpop.f32.mrf.mxu0
        %8886 = vmatprep.mubr.bf16.mxu0 0
        %8887 = vmatmul.mubr.bf16.gmra.mxu0 %v8421
        %v8888 = vpop.f32.mrf.mxu0
        %v8889 = vadd.f32 %v8568, %v8888
        %v8890 = vpop.f32.mrf.mxu0
        %v8891 = vpop.f32.mrf.mxu0
        %v8892 = vadd.f32 %v8571, %v8891
        %v8893 = vpop.f32.mrf.mxu0
        %8894 = vmatprep.mubr.bf16.mxu0 0
        %8895 = vmatmul.mubr.bf16.gmra.mxu0 %v8424
        %v8896 = vpop.f32.mrf.mxu0
        %v8897 = vadd.f32 %v8576, %v8896
        %v8898 = vpop.f32.mrf.mxu0
        %v8899 = vpop.f32.mrf.mxu0
        %v8900 = vadd.f32 %v8579, %v8899
        %v8901 = vpop.f32.mrf.mxu0
        %8902 = vmatprep.mubr.bf16.mxu0 0
        %8903 = vmatmul.mubr.bf16.gmra.mxu0 %v8427
        %v8904 = vpop.f32.mrf.mxu0
        %v8905 = vadd.f32 %v8584, %v8904
        %v8906 = vpop.f32.mrf.mxu0
        %v8907 = vpop.f32.mrf.mxu0
        %v8908 = vadd.f32 %v8587, %v8907
        %v8909 = vpop.f32.mrf.mxu0
        %8910 = vmatprep.mubr.bf16.mxu0 0
        %8911 = vmatmul.mubr.bf16.gmra.mxu0 %v8430
        %v8912 = vpop.f32.mrf.mxu0
        %v8913 = vadd.f32 %v8592, %v8912
        %v8914 = vpop.f32.mrf.mxu0
        %v8915 = vpop.f32.mrf.mxu0
        %v8916 = vadd.f32 %v8595, %v8915
        %v8917 = vpop.f32.mrf.mxu0
        %8918 = vmatprep.mubr.bf16.mxu0 0
        %8919 = vmatmul.mubr.bf16.gmra.mxu0 %v8433
        %v8920 = vpop.f32.mrf.mxu0
        %v8921 = vadd.f32 %v8600, %v8920
        %v8922 = vpop.f32.mrf.mxu0
        %v8923 = vpop.f32.mrf.mxu0
        %v8924 = vadd.f32 %v8603, %v8923
        %v8925 = vpop.f32.mrf.mxu0
        %8926 = vmatprep.mubr.bf16.mxu0 0
        %8927 = vmatmul.mubr.bf16.gmra.mxu0 %v8436
        %v8928 = vpop.f32.mrf.mxu0
        %v8929 = vadd.f32 %v8608, %v8928
        %v8930 = vpop.f32.mrf.mxu0
        %v8931 = vpop.f32.mrf.mxu0
        %v8932 = vadd.f32 %v8611, %v8931
        %v8933 = vpop.f32.mrf.mxu0
        %8934 = vmatprep.mubr.bf16.mxu0 0
        %8935 = vmatmul.mubr.bf16.gmra.mxu0 %v8439
        %v8936 = vpop.f32.mrf.mxu0
        %v8937 = vadd.f32 %v8616, %v8936
        %v8938 = vpop.f32.mrf.mxu0
        %v8939 = vpop.f32.mrf.mxu0
        %v8940 = vadd.f32 %v8619, %v8939
        %v8941 = vpop.f32.mrf.mxu0
        %8942 = vmatprep.mubr.bf16.mxu0 0
        %8943 = vmatmul.mubr.bf16.gmra.mxu0 %v8442
        %v8944 = vpop.f32.mrf.mxu0
        %v8945 = vadd.f32 %v8624, %v8944
        %v8946 = vpop.f32.mrf.mxu0
        %v8947 = vpop.f32.mrf.mxu0
        %v8948 = vadd.f32 %v8627, %v8947
        %v8949 = vpop.f32.mrf.mxu0
        %8950 = vmatprep.mubr.bf16.mxu0 0
        %8951 = vmatmul.mubr.bf16.gmra.mxu0 %v8445
        %v8952 = vpop.f32.mrf.mxu0
        %v8953 = vadd.f32 %v8632, %v8952
        %v8954 = vpop.f32.mrf.mxu0
        %v8955 = vpop.f32.mrf.mxu0
        %v8956 = vadd.f32 %v8635, %v8955
        %v8957 = vpop.f32.mrf.mxu0
        %8958 = vmatprep.mubr.bf16.mxu0 0
        %8959 = vmatmul.mubr.bf16.gmra.mxu0 %v8448
        %v8960 = vpop.f32.mrf.mxu0
        %v8961 = vadd.f32 %v8640, %v8960
        %v8962 = vpop.f32.mrf.mxu0
        %v8963 = vpop.f32.mrf.mxu0
        %v8964 = vadd.f32 %v8643, %v8963
        %v8965 = vpop.f32.mrf.mxu0
        %8966 = vmatprep.mubr.bf16.mxu0 0
        %8967 = vmatmul.mubr.bf16.gmra.mxu0 %v8451
        %v8968 = vpop.f32.mrf.mxu0
        %v8969 = vadd.f32 %v8648, %v8968
        %v8970 = vpop.f32.mrf.mxu0
        %v8971 = vpop.f32.mrf.mxu0
        %v8972 = vadd.f32 %v8651, %v8971
        %v8973 = vpop.f32.mrf.mxu0
        %8974 = vmatprep.mubr.bf16.mxu0 0
        %8975 = vmatmul.mubr.bf16.gmra.mxu0 %v8454
        %v8976 = vpop.f32.mrf.mxu0
        %v8977 = vadd.f32 %v8656, %v8976
        %v8978 = vpop.f32.mrf.mxu0
        %v8979 = vpop.f32.mrf.mxu0
        %v8980 = vadd.f32 %v8659, %v8979
        %v8981 = vpop.f32.mrf.mxu0
        %8982 = vmatprep.mubr.bf16.mxu0 0
        %8983 = vmatmul.mubr.bf16.gmra.mxu0 %v8457
        %v8984 = vpop.f32.mrf.mxu0
        %v8985 = vadd.f32 %v8664, %v8984
        %v8986 = vpop.f32.mrf.mxu0
        %v8987 = vpop.f32.mrf.mxu0
        %v8988 = vadd.f32 %v8667, %v8987
        %v8989 = vpop.f32.mrf.mxu0
        %8990 = vmatprep.mubr.bf16.mxu0 0
        %8991 = vmatmul.mubr.bf16.gmra.mxu0 %v8460
        %v8992 = vpop.f32.mrf.mxu0
        %v8993 = vadd.f32 %v8672, %v8992
        %v8994 = vpop.f32.mrf.mxu0
        %v8995 = vpop.f32.mrf.mxu0
        %v8996 = vadd.f32 %v8675, %v8995
        %v8997 = vpop.f32.mrf.mxu0
        %8998 = vmatprep.mubr.bf16.mxu0 0
        %8999 = vmatmul.mubr.bf16.gmra.mxu0 %v8463
        %v9000 = vpop.f32.mrf.mxu0
        %v9001 = vadd.f32 %v8680, %v9000
        %v9002 = vpop.f32.mrf.mxu0
        %v9003 = vpop.f32.mrf.mxu0
        %v9004 = vadd.f32 %v8683, %v9003
        %v9005 = vpop.f32.mrf.mxu0
        %9006 = vmatprep.mubr.bf16.mxu0 0
        %9007 = vmatmul.mubr.bf16.gmra.mxu0 %v8466
        %v9008 = vpop.f32.mrf.mxu0
        %v9009 = vadd.f32 %v8688, %v9008
        %v9010 = vpop.f32.mrf.mxu0
        %v9011 = vpop.f32.mrf.mxu0
        %v9012 = vadd.f32 %v8691, %v9011
        %v9013 = vpop.f32.mrf.mxu0
        %9014 = vmatprep.mubr.bf16.mxu0 0
        %9015 = vmatmul.mubr.bf16.gmra.mxu0 %v8469
        %v9016 = vpop.f32.mrf.mxu0
        %v9017 = vadd.f32 %v8696, %v9016
        %v9018 = vpop.f32.mrf.mxu0
        %v9019 = vpop.f32.mrf.mxu0
        %v9020 = vadd.f32 %v8699, %v9019
        %v9021 = vpop.f32.mrf.mxu0
        %9022 = vmatprep.mubr.bf16.mxu0 0
        %9023 = vmatmul.mubr.bf16.gmra.mxu0 %v8472
        %v9024 = vpop.f32.mrf.mxu0
        %v9025 = vadd.f32 %v8704, %v9024
        %v9026 = vpop.f32.mrf.mxu0
        %v9027 = vpop.f32.mrf.mxu0
        %v9028 = vadd.f32 %v8707, %v9027
        %v9029 = vpop.f32.mrf.mxu0
        %9030 = vmatprep.mubr.bf16.mxu0 0
        %9031 = vmatmul.mubr.bf16.gmra.mxu0 %v8475
        %v9032 = vpop.f32.mrf.mxu0
        %v9033 = vadd.f32 %v8712, %v9032
        %v9034 = vpop.f32.mrf.mxu0
        %v9035 = vpop.f32.mrf.mxu0
        %v9036 = vadd.f32 %v8715, %v9035
        %v9037 = vpop.f32.mrf.mxu0
        %9038 = vmatprep.mubr.bf16.mxu0 0
        %9039 = vmatmul.mubr.bf16.gmra.mxu0 %v8478
        %v9040 = vpop.f32.mrf.mxu0
        %v9041 = vadd.f32 %v8720, %v9040
        %v9042 = vpop.f32.mrf.mxu0
        %v9043 = vpop.f32.mrf.mxu0
        %v9044 = vadd.f32 %v8723, %v9043
        %v9045 = vpop.f32.mrf.mxu0
        %9046 = vmatprep.mubr.bf16.mxu0 0
        %9047 = vmatmul.mubr.bf16.gmra.mxu0 %v8481
        %v9048 = vpop.f32.mrf.mxu0
        %v9049 = vadd.f32 %v8728, %v9048
        %v9050 = vpop.f32.mrf.mxu0
        %v9051 = vpop.f32.mrf.mxu0
        %v9052 = vadd.f32 %v8731, %v9051
        %v9053 = vpop.f32.mrf.mxu0
        %9054 = vmatprep.mubr.bf16.mxu0 0
        %9055 = vmatmul.mubr.bf16.gmra.mxu0 %v8484
        %v9056 = vpop.f32.mrf.mxu0
        %v9057 = vadd.f32 %v8736, %v9056
        %v9058 = vpop.f32.mrf.mxu0
        %v9059 = vpop.f32.mrf.mxu0
        %v9060 = vadd.f32 %v8739, %v9059
        %v9061 = vpop.f32.mrf.mxu0
        %9062 = vmatprep.mubr.bf16.mxu0 0
        %9063 = vmatmul.mubr.bf16.gmra.mxu0 %v8487
        %v9064 = vpop.f32.mrf.mxu0
        %v9065 = vadd.f32 %v8744, %v9064
        %v9066 = vpop.f32.mrf.mxu0
        %v9067 = vpop.f32.mrf.mxu0
        %v9068 = vadd.f32 %v8747, %v9067
        %v9069 = vpop.f32.mrf.mxu0
        %9070 = vmatprep.mubr.bf16.mxu0 0
        %9071 = vmatmul.mubr.bf16.gmra.mxu0 %v8490
        %v9072 = vpop.f32.mrf.mxu0
        %v9073 = vadd.f32 %v8752, %v9072
        %v9074 = vpop.f32.mrf.mxu0
        %v9075 = vpop.f32.mrf.mxu0
        %v9076 = vadd.f32 %v8755, %v9075
        %v9077 = vpop.f32.mrf.mxu0
        %9078 = vmatprep.mubr.bf16.mxu0 0
        %9079 = vmatmul.mubr.bf16.gmra.mxu0 %v8493
        %v9080 = vpop.f32.mrf.mxu0
        %v9081 = vadd.f32 %v8760, %v9080
        %v9082 = vpop.f32.mrf.mxu0
        %v9083 = vpop.f32.mrf.mxu0
        %v9084 = vadd.f32 %v8763, %v9083
        %v9085 = vpop.f32.mrf.mxu0
        %9086 = vmatprep.mubr.bf16.mxu0 0
        %9087 = vmatmul.mubr.bf16.gmra.mxu0 %v8496
        %v9088 = vpop.f32.mrf.mxu0
        %v9089 = vadd.f32 %v8768, %v9088
        %v9090 = vpop.f32.mrf.mxu0
        %v9091 = vpop.f32.mrf.mxu0
        %v9092 = vadd.f32 %v8771, %v9091
        %v9093 = vpop.f32.mrf.mxu0
        %9094 = vmatprep.mubr.bf16.mxu0 0
        %9095 = vmatmul.mubr.bf16.gmra.mxu0 %v8499
        %v9096 = vpop.f32.mrf.mxu0
        %v9097 = vadd.f32 %v8776, %v9096
        %v9098 = vpop.f32.mrf.mxu0
        %v9099 = vpop.f32.mrf.mxu0
        %v9100 = vadd.f32 %v8779, %v9099
        %v9101 = vpop.f32.mrf.mxu0
        %9102 = vmatprep.mubr.bf16.mxu0 0
        %9103 = vmatmul.mubr.bf16.gmra.mxu0 %v8502
        %v9104 = vpop.f32.mrf.mxu0
        %v9105 = vadd.f32 %v8784, %v9104
        %v9106 = vpop.f32.mrf.mxu0
        %v9107 = vpop.f32.mrf.mxu0
        %v9108 = vadd.f32 %v8787, %v9107
        %v9109 = vpop.f32.mrf.mxu0
        %9110 = vmatprep.mubr.bf16.mxu0 0
        %9111 = vmatmul.mubr.bf16.gmra.mxu0 %v8505
        %v9112 = vpop.f32.mrf.mxu0
        %v9113 = vadd.f32 %v8792, %v9112
        %v9114 = vpop.f32.mrf.mxu0
        %v9115 = vpop.f32.mrf.mxu0
        %v9116 = vadd.f32 %v8795, %v9115
        %v9117 = vpop.f32.mrf.mxu0
        %9118 = vmatprep.mubr.bf16.mxu0 0
        %9119 = vmatmul.mubr.bf16.gmra.mxu0 %v8508
        %v9120 = vpop.f32.mrf.mxu0
        %v9121 = vadd.f32 %v8800, %v9120
        %v9122 = vpop.f32.mrf.mxu0
        %v9123 = vpop.f32.mrf.mxu0
        %v9124 = vadd.f32 %v8803, %v9123
        %v9125 = vpop.f32.mrf.mxu0
        %9126 = vmatprep.mubr.bf16.mxu0 0
        %9127 = vmatmul.mubr.bf16.gmra.mxu0 %v8511
        %v9128 = vpop.f32.mrf.mxu0
        %v9129 = vadd.f32 %v8808, %v9128
        %v9130 = vpop.f32.mrf.mxu0
        %v9131 = vpop.f32.mrf.mxu0
        %v9132 = vadd.f32 %v8811, %v9131
        %v9133 = vpop.f32.mrf.mxu0
        %9134 = vmatprep.mubr.bf16.mxu0 0
        %9135 = vmatmul.mubr.bf16.gmra.mxu0 %v8514
        %v9136 = vpop.f32.mrf.mxu0
        %v9137 = vadd.f32 %v8816, %v9136
        %v9138 = vpop.f32.mrf.mxu0
        %v9139 = vpop.f32.mrf.mxu0
        %v9140 = vadd.f32 %v8819, %v9139
        %v9141 = vpop.f32.mrf.mxu0
        %9142 = vmatprep.mubr.bf16.mxu0 0
        %9143 = vmatmul.mubr.bf16.gmra.mxu0 %v8517
        %v9144 = vpop.f32.mrf.mxu0
        %v9145 = vadd.f32 %v8824, %v9144
        %v9146 = vpop.f32.mrf.mxu0
        %v9147 = vpop.f32.mrf.mxu0
        %v9148 = vadd.f32 %v8827, %v9147
        %v9149 = vpop.f32.mrf.mxu0
        %9150 = vmatprep.mubr.bf16.mxu0 0
        %9151 = vmatmul.mubr.bf16.gmra.mxu0 %v8520
        %v9152 = vpop.f32.mrf.mxu0
        %v9153 = vadd.f32 %v8832, %v9152
        %v9154 = vpop.f32.mrf.mxu0
        %v9155 = vpop.f32.mrf.mxu0
        %v9156 = vadd.f32 %v8835, %v9155
        %v9157 = vpop.f32.mrf.mxu0
        %9158 = vmatprep.mubr.bf16.mxu0 0
        %9159 = vmatmul.mubr.bf16.gmra.mxu0 %v8523
        %v9160 = vpop.f32.mrf.mxu0
        %v9161 = vadd.f32 %v8840, %v9160
        %v9162 = vpop.f32.mrf.mxu0
        %v9163 = vpop.f32.mrf.mxu0
        %v9164 = vadd.f32 %v8843, %v9163
        %v9165 = vpop.f32.mrf.mxu0
        %9166 = vdwg.mxu0
        %v9167 = vmax.f32 %v8881, 0.0
        %v9168 = vmax.f32 %v8884, 0.0
        %v9169 = vmax.f32 %v8889, 0.0
        %v9170 = vmax.f32 %v8892, 0.0
        %v9171 = vmax.f32 %v8897, 0.0
        %v9172 = vmax.f32 %v8900, 0.0
        %v9173 = vmax.f32 %v8905, 0.0
        %v9174 = vmax.f32 %v8908, 0.0
        %v9175 = vmax.f32 %v8913, 0.0
        %v9176 = vmax.f32 %v8916, 0.0
        %v9177 = vmax.f32 %v8921, 0.0
        %v9178 = vmax.f32 %v8924, 0.0
        %v9179 = vmax.f32 %v8929, 0.0
        %v9180 = vmax.f32 %v8932, 0.0
        %v9181 = vmax.f32 %v8937, 0.0
        %v9182 = vmax.f32 %v8940, 0.0
        %v9183 = vmax.f32 %v8945, 0.0
        %v9184 = vmax.f32 %v8948, 0.0
        %v9185 = vmax.f32 %v8953, 0.0
        %v9186 = vmax.f32 %v8956, 0.0
        %v9187 = vmax.f32 %v8961, 0.0
        %v9188 = vmax.f32 %v8964, 0.0
        %v9189 = vmax.f32 %v8969, 0.0
        %v9190 = vmax.f32 %v8972, 0.0
        %v9191 = vmax.f32 %v8977, 0.0
        %v9192 = vmax.f32 %v8980, 0.0
        %v9193 = vmax.f32 %v8985, 0.0
        %v9194 = vmax.f32 %v8988, 0.0
        %v9195 = vmax.f32 %v8993, 0.0
        %v9196 = vmax.f32 %v8996, 0.0
        %v9197 = vmax.f32 %v9001, 0.0
        %v9198 = vmax.f32 %v9004, 0.0
        %v9199 = vmax.f32 %v9009, 0.0
        %v9200 = vmax.f32 %v9012, 0.0
        %v9201 = vmax.f32 %v9017, 0.0
        %v9202 = vmax.f32 %v9020, 0.0
        %v9203 = vmax.f32 %v9025, 0.0
        %v9204 = vmax.f32 %v9028, 0.0
        %v9205 = vmax.f32 %v9033, 0.0
        %v9206 = vmax.f32 %v9036, 0.0
        %v9207 = vmax.f32 %v9041, 0.0
        %v9208 = vmax.f32 %v9044, 0.0
        %v9209 = vmax.f32 %v9049, 0.0
        %v9210 = vmax.f32 %v9052, 0.0
        %v9211 = vmax.f32 %v9057, 0.0
        %v9212 = vmax.f32 %v9060, 0.0
        %v9213 = vmax.f32 %v9065, 0.0
        %v9214 = vmax.f32 %v9068, 0.0
        %v9215 = vmax.f32 %v9073, 0.0
        %v9216 = vmax.f32 %v9076, 0.0
        %v9217 = vmax.f32 %v9081, 0.0
        %v9218 = vmax.f32 %v9084, 0.0
        %v9219 = vmax.f32 %v9089, 0.0
        %v9220 = vmax.f32 %v9092, 0.0
        %v9221 = vmax.f32 %v9097, 0.0
        %v9222 = vmax.f32 %v9100, 0.0
        %v9223 = vmax.f32 %v9105, 0.0
        %v9224 = vmax.f32 %v9108, 0.0
        %v9225 = vmax.f32 %v9113, 0.0
        %v9226 = vmax.f32 %v9116, 0.0
        %v9227 = vmax.f32 %v9121, 0.0
        %v9228 = vmax.f32 %v9124, 0.0
        %v9229 = vmax.f32 %v9129, 0.0
        %v9230 = vmax.f32 %v9132, 0.0
        %v9231 = vmax.f32 %v9137, 0.0
        %v9232 = vmax.f32 %v9140, 0.0
        %v9233 = vmax.f32 %v9145, 0.0
        %v9234 = vmax.f32 %v9148, 0.0
        %v9235 = vmax.f32 %v9153, 0.0
        %v9236 = vmax.f32 %v9156, 0.0
        %v9237 = vmax.f32 %v9161, 0.0
        %v9238 = vmax.f32 %v9164, 0.0
        %v9239 = vsel %vm7796, %v9167, -inf
        %v9240 = vsel %vm7796, %v9170, -inf
        %v9241 = vmax.f32 %v9239, %v9240
        %v9242 = vsel %vm7796, %v9168, -inf
        %v9243 = vsel %vm7796, %v9171, -inf
        %v9244 = vmax.f32 %v9242, %v9243
        %v9245 = vsel %vm7796, %v9169, -inf
        %v9246 = vsel %vm7796, %v9172, -inf
        %v9247 = vmax.f32 %v9245, %v9246
        %v9248 = vsel %vm7796, %v9173, -inf
        %v9249 = vsel %vm7796, %v9176, -inf
        %v9250 = vmax.f32 %v9248, %v9249
        %v9251 = vsel %vm7796, %v9174, -inf
        %v9252 = vsel %vm7796, %v9177, -inf
        %v9253 = vmax.f32 %v9251, %v9252
        %v9254 = vsel %vm7796, %v9175, -inf
        %v9255 = vsel %vm7796, %v9178, -inf
        %v9256 = vmax.f32 %v9254, %v9255
        %v9257 = vsel %vm7796, %v9179, -inf
        %v9258 = vsel %vm7796, %v9182, -inf
        %v9259 = vmax.f32 %v9257, %v9258
        %v9260 = vsel %vm7796, %v9180, -inf
        %v9261 = vsel %vm7796, %v9183, -inf
        %v9262 = vmax.f32 %v9260, %v9261
        %v9263 = vsel %vm7796, %v9181, -inf
        %v9264 = vsel %vm7796, %v9184, -inf
        %v9265 = vmax.f32 %v9263, %v9264
        %v9266 = vsel %vm7796, %v9185, -inf
        %v9267 = vsel %vm7796, %v9188, -inf
        %v9268 = vmax.f32 %v9266, %v9267
        %v9269 = vsel %vm7796, %v9186, -inf
        %v9270 = vsel %vm7796, %v9189, -inf
        %v9271 = vmax.f32 %v9269, %v9270
        %v9272 = vsel %vm7796, %v9187, -inf
        %v9273 = vsel %vm7796, %v9190, -inf
        %v9274 = vmax.f32 %v9272, %v9273
        %v9275 = vsel %vm7796, %v9191, -inf
        %v9276 = vsel %vm7796, %v9194, -inf
        %v9277 = vmax.f32 %v9275, %v9276
        %v9278 = vsel %vm7796, %v9192, -inf
        %v9279 = vsel %vm7796, %v9195, -inf
        %v9280 = vmax.f32 %v9278, %v9279
        %v9281 = vsel %vm7796, %v9193, -inf
        %v9282 = vsel %vm7796, %v9196, -inf
        %v9283 = vmax.f32 %v9281, %v9282
        %v9284 = vsel %vm7796, %v9197, -inf
        %v9285 = vsel %vm7796, %v9200, -inf
        %v9286 = vmax.f32 %v9284, %v9285
        %v9287 = vsel %vm7796, %v9198, -inf
        %v9288 = vsel %vm7796, %v9201, -inf
        %v9289 = vmax.f32 %v9287, %v9288
        %v9290 = vsel %vm7796, %v9199, -inf
        %v9291 = vsel %vm7796, %v9202, -inf
        %v9292 = vmax.f32 %v9290, %v9291
        %v9293 = vsel %vm7796, %v9203, -inf
        %v9294 = vsel %vm7796, %v9206, -inf
        %v9295 = vmax.f32 %v9293, %v9294
        %v9296 = vsel %vm7796, %v9204, -inf
        %v9297 = vsel %vm7796, %v9207, -inf
        %v9298 = vmax.f32 %v9296, %v9297
        %v9299 = vsel %vm7796, %v9205, -inf
        %v9300 = vsel %vm7796, %v9208, -inf
        %v9301 = vmax.f32 %v9299, %v9300
        %v9302 = vsel %vm7796, %v9209, -inf
        %v9303 = vsel %vm7796, %v9212, -inf
        %v9304 = vmax.f32 %v9302, %v9303
        %v9305 = vsel %vm7796, %v9210, -inf
        %v9306 = vsel %vm7796, %v9213, -inf
        %v9307 = vmax.f32 %v9305, %v9306
        %v9308 = vsel %vm7796, %v9211, -inf
        %v9309 = vsel %vm7796, %v9214, -inf
        %v9310 = vmax.f32 %v9308, %v9309
        %v9311 = vsel %vm7796, %v9215, -inf
        %v9312 = vsel %vm7796, %v9218, -inf
        %v9313 = vmax.f32 %v9311, %v9312
        %v9314 = vsel %vm7796, %v9216, -inf
        %v9315 = vsel %vm7796, %v9219, -inf
        %v9316 = vmax.f32 %v9314, %v9315
        %v9317 = vsel %vm7796, %v9217, -inf
        %v9318 = vsel %vm7796, %v9220, -inf
        %v9319 = vmax.f32 %v9317, %v9318
        %v9320 = vsel %vm7796, %v9221, -inf
        %v9321 = vsel %vm7796, %v9224, -inf
        %v9322 = vmax.f32 %v9320, %v9321
        %v9323 = vsel %vm7796, %v9222, -inf
        %v9324 = vsel %vm7796, %v9225, -inf
        %v9325 = vmax.f32 %v9323, %v9324
        %v9326 = vsel %vm7796, %v9223, -inf
        %v9327 = vsel %vm7796, %v9226, -inf
        %v9328 = vmax.f32 %v9326, %v9327
        %v9329 = vsel %vm7796, %v9227, -inf
        %v9330 = vsel %vm7796, %v9230, -inf
        %v9331 = vmax.f32 %v9329, %v9330
        %v9332 = vsel %vm7796, %v9228, -inf
        %v9333 = vsel %vm7796, %v9231, -inf
        %v9334 = vmax.f32 %v9332, %v9333
        %v9335 = vsel %vm7796, %v9229, -inf
        %v9336 = vsel %vm7796, %v9232, -inf
        %v9337 = vmax.f32 %v9335, %v9336
        %v9338 = vsel %vm7796, %v9233, -inf
        %v9339 = vsel %vm7796, %v9236, -inf
        %v9340 = vmax.f32 %v9338, %v9339
        %v9341 = vsel %vm7796, %v9234, -inf
        %v9342 = vsel %vm7796, %v9237, -inf
        %v9343 = vmax.f32 %v9341, %v9342
        %v9344 = vsel %vm7796, %v9235, -inf
        %v9345 = vsel %vm7796, %v9238, -inf
        %v9346 = vmax.f32 %v9344, %v9345
        %9347 = vst.msk [vmem:[#allocation2] sm:$0xff] %vm7796, %v9241
        %9348 = vst.msk [vmem:[#allocation2 + $0x8] sm:$0xff] %vm7796, %v9244
        %9349 = vst.msk [vmem:[#allocation2 + $0x10] sm:$0xff] %vm7796, %v9247
        %9350 = vst.msk [vmem:[#allocation2 + $0x18] sm:$0xff] %vm7796, %v9250
        %9351 = vst.msk [vmem:[#allocation2 + $0x20] sm:$0xff] %vm7796, %v9253
        %9352 = vst.msk [vmem:[#allocation2 + $0x28] sm:$0xff] %vm7796, %v9256
        %9353 = vst.msk [vmem:[#allocation2 + $0x30] sm:$0xff] %vm7796, %v9259
        %9354 = vst.msk [vmem:[#allocation2 + $0x38] sm:$0xff] %vm7796, %v9262
        %9355 = vst.msk [vmem:[#allocation2 + $0x40] sm:$0xff] %vm7796, %v9265
        %9356 = vst.msk [vmem:[#allocation2 + $0x48] sm:$0xff] %vm7796, %v9268
        %9357 = vst.msk [vmem:[#allocation2 + $0x50] sm:$0xff] %vm7796, %v9271
        %9358 = vst.msk [vmem:[#allocation2 + $0x58] sm:$0xff] %vm7796, %v9274
        %9359 = vst.msk [vmem:[#allocation2 + $0x60] sm:$0xff] %vm7796, %v9277
        %9360 = vst.msk [vmem:[#allocation2 + $0x68] sm:$0xff] %vm7796, %v9280
        %9361 = vst.msk [vmem:[#allocation2 + $0x70] sm:$0xff] %vm7796, %v9283
        %9362 = vst.msk [vmem:[#allocation2 + $0x78] sm:$0xff] %vm7796, %v9286
        %9363 = vst.msk [vmem:[#allocation2 + $0x80] sm:$0xff] %vm7796, %v9289
        %9364 = vst.msk [vmem:[#allocation2 + $0x88] sm:$0xff] %vm7796, %v9292
        %9365 = vst.msk [vmem:[#allocation2 + $0x90] sm:$0xff] %vm7796, %v9295
        %9366 = vst.msk [vmem:[#allocation2 + $0x98] sm:$0xff] %vm7796, %v9298
        %9367 = vst.msk [vmem:[#allocation2 + $0xa0] sm:$0xff] %vm7796, %v9301
        %9368 = vst.msk [vmem:[#allocation2 + $0xa8] sm:$0xff] %vm7796, %v9304
        %9369 = vst.msk [vmem:[#allocation2 + $0xb0] sm:$0xff] %vm7796, %v9307
        %9370 = vst.msk [vmem:[#allocation2 + $0xb8] sm:$0xff] %vm7796, %v9310
        %9371 = vst.msk [vmem:[#allocation2 + $0xc0] sm:$0xff] %vm7796, %v9313
        %9372 = vst.msk [vmem:[#allocation2 + $0xc8] sm:$0xff] %vm7796, %v9316
        %9373 = vst.msk [vmem:[#allocation2 + $0xd0] sm:$0xff] %vm7796, %v9319
        %9374 = vst.msk [vmem:[#allocation2 + $0xd8] sm:$0xff] %vm7796, %v9322
        %9375 = vst.msk [vmem:[#allocation2 + $0xe0] sm:$0xff] %vm7796, %v9325
        %9376 = vst.msk [vmem:[#allocation2 + $0xe8] sm:$0xff] %vm7796, %v9328
        %9377 = vst.msk [vmem:[#allocation2 + $0xf0] sm:$0xff] %vm7796, %v9331
        %9378 = vst.msk [vmem:[#allocation2 + $0xf8] sm:$0xff] %vm7796, %v9334
        %9379 = vst.msk [vmem:[#allocation2 + $0x100] sm:$0xff] %vm7796, %v9337
        %9380 = vst.msk [vmem:[#allocation2 + $0x108] sm:$0xff] %vm7796, %v9340
        %9381 = vst.msk [vmem:[#allocation2 + $0x110] sm:$0xff] %vm7796, %v9343
        %9382 = vst.msk [vmem:[#allocation2 + $0x118] sm:$0xff] %vm7796, %v9346
        %v9383 = vld [vmem:[#allocation2] ss:$4 sm:$0x3f]
        %s9384 = scalar_lea.vmem [#allocation2], 24
        %v9385 = vld [vmem:[%s9384] ss:$4 sm:$0x3f]
        %s9386 = scalar_lea.vmem [#allocation2], 48
        %v9387 = vld [vmem:[%s9386] ss:$4 sm:$0x3f]
        %s9388 = scalar_lea.vmem [#allocation2], 72
        %v9389 = vld [vmem:[%s9388] ss:$4 sm:$0x3f]
        %s9390 = scalar_lea.vmem [#allocation2], 96
        %v9391 = vld [vmem:[%s9390] ss:$4 sm:$0x3f]
        %s9392 = scalar_lea.vmem [#allocation2], 120
        %v9393 = vld [vmem:[%s9392] ss:$4 sm:$0x3f]
        %s9394 = scalar_lea.vmem [#allocation2], 144
        %v9395 = vld [vmem:[%s9394] ss:$4 sm:$0x3f]
        %s9396 = scalar_lea.vmem [#allocation2], 168
        %v9397 = vld [vmem:[%s9396] ss:$4 sm:$0x3f]
        %s9398 = scalar_lea.vmem [#allocation2], 192
        %v9399 = vld [vmem:[%s9398] ss:$4 sm:$0x3f]
        %s9400 = scalar_lea.vmem [#allocation2], 216
        %v9401 = vld [vmem:[%s9400] ss:$4 sm:$0x3f]
        %s9402 = scalar_lea.vmem [#allocation2], 240
        %v9403 = vld [vmem:[%s9402] ss:$4 sm:$0x3f]
        %s9404 = scalar_lea.vmem [#allocation2], 264
        %v9405 = vld [vmem:[%s9404] ss:$4 sm:$0x3f]
        %s9406 = scalar_lea.vmem [#allocation2], 1
        %v9407 = vld [vmem:[%s9406] ss:$4 sm:$0x3f]
        %s9408 = scalar_lea.vmem [#allocation2], 25
        %v9409 = vld [vmem:[%s9408] ss:$4 sm:$0x3f]
        %s9410 = scalar_lea.vmem [#allocation2], 49
        %v9411 = vld [vmem:[%s9410] ss:$4 sm:$0x3f]
        %s9412 = scalar_lea.vmem [#allocation2], 73
        %v9413 = vld [vmem:[%s9412] ss:$4 sm:$0x3f]
        %s9414 = scalar_lea.vmem [#allocation2], 97
        %v9415 = vld [vmem:[%s9414] ss:$4 sm:$0x3f]
        %s9416 = scalar_lea.vmem [#allocation2], 121
        %v9417 = vld [vmem:[%s9416] ss:$4 sm:$0x3f]
        %s9418 = scalar_lea.vmem [#allocation2], 145
        %v9419 = vld [vmem:[%s9418] ss:$4 sm:$0x3f]
        %s9420 = scalar_lea.vmem [#allocation2], 169
        %v9421 = vld [vmem:[%s9420] ss:$4 sm:$0x3f]
        %s9422 = scalar_lea.vmem [#allocation2], 193
        %v9423 = vld [vmem:[%s9422] ss:$4 sm:$0x3f]
        %s9424 = scalar_lea.vmem [#allocation2], 217
        %v9425 = vld [vmem:[%s9424] ss:$4 sm:$0x3f]
        %s9426 = scalar_lea.vmem [#allocation2], 241
        %v9427 = vld [vmem:[%s9426] ss:$4 sm:$0x3f]
        %s9428 = scalar_lea.vmem [#allocation2], 265
        %v9429 = vld [vmem:[%s9428] ss:$4 sm:$0x3f]
        %s9430 = scalar_lea.vmem [#allocation2], 2
        %v9431 = vld [vmem:[%s9430] ss:$4 sm:$0x3f]
        %s9432 = scalar_lea.vmem [#allocation2], 26
        %v9433 = vld [vmem:[%s9432] ss:$4 sm:$0x3f]
        %s9434 = scalar_lea.vmem [#allocation2], 50
        %v9435 = vld [vmem:[%s9434] ss:$4 sm:$0x3f]
        %s9436 = scalar_lea.vmem [#allocation2], 74
        %v9437 = vld [vmem:[%s9436] ss:$4 sm:$0x3f]
        %s9438 = scalar_lea.vmem [#allocation2], 98
        %v9439 = vld [vmem:[%s9438] ss:$4 sm:$0x3f]
        %s9440 = scalar_lea.vmem [#allocation2], 122
        %v9441 = vld [vmem:[%s9440] ss:$4 sm:$0x3f]
        %s9442 = scalar_lea.vmem [#allocation2], 146
        %v9443 = vld [vmem:[%s9442] ss:$4 sm:$0x3f]
        %s9444 = scalar_lea.vmem [#allocation2], 170
        %v9445 = vld [vmem:[%s9444] ss:$4 sm:$0x3f]
        %s9446 = scalar_lea.vmem [#allocation2], 194
        %v9447 = vld [vmem:[%s9446] ss:$4 sm:$0x3f]
        %s9448 = scalar_lea.vmem [#allocation2], 218
        %v9449 = vld [vmem:[%s9448] ss:$4 sm:$0x3f]
        %s9450 = scalar_lea.vmem [#allocation2], 242
        %v9451 = vld [vmem:[%s9450] ss:$4 sm:$0x3f]
        %s9452 = scalar_lea.vmem [#allocation2], 266
        %v9453 = vld [vmem:[%s9452] ss:$4 sm:$0x3f]
        %s9454 = scalar_lea.vmem [#allocation2], 3
        %v9455 = vld [vmem:[%s9454] ss:$4 sm:$0x3f]
        %s9456 = scalar_lea.vmem [#allocation2], 27
        %v9457 = vld [vmem:[%s9456] ss:$4 sm:$0x3f]
        %s9458 = scalar_lea.vmem [#allocation2], 51
        %v9459 = vld [vmem:[%s9458] ss:$4 sm:$0x3f]
        %s9460 = scalar_lea.vmem [#allocation2], 75
        %v9461 = vld [vmem:[%s9460] ss:$4 sm:$0x3f]
        %s9462 = scalar_lea.vmem [#allocation2], 99
        %v9463 = vld [vmem:[%s9462] ss:$4 sm:$0x3f]
        %s9464 = scalar_lea.vmem [#allocation2], 123
        %v9465 = vld [vmem:[%s9464] ss:$4 sm:$0x3f]
        %s9466 = scalar_lea.vmem [#allocation2], 147
        %v9467 = vld [vmem:[%s9466] ss:$4 sm:$0x3f]
        %s9468 = scalar_lea.vmem [#allocation2], 171
        %v9469 = vld [vmem:[%s9468] ss:$4 sm:$0x3f]
        %s9470 = scalar_lea.vmem [#allocation2], 195
        %v9471 = vld [vmem:[%s9470] ss:$4 sm:$0x3f]
        %s9472 = scalar_lea.vmem [#allocation2], 219
        %v9473 = vld [vmem:[%s9472] ss:$4 sm:$0x3f]
        %s9474 = scalar_lea.vmem [#allocation2], 243
        %v9475 = vld [vmem:[%s9474] ss:$4 sm:$0x3f]
        %s9476 = scalar_lea.vmem [#allocation2], 267
        %v9477 = vld [vmem:[%s9476] ss:$4 sm:$0x3f]
        %v9478 = vmax.f32 %v9383, %v9407
        %v9479 = vmax.f32 %v9385, %v9409
        %v9480 = vmax.f32 %v9387, %v9411
        %v9481 = vmax.f32 %v9389, %v9413
        %v9482 = vmax.f32 %v9391, %v9415
        %v9483 = vmax.f32 %v9393, %v9417
        %v9484 = vmax.f32 %v9395, %v9419
        %v9485 = vmax.f32 %v9397, %v9421
        %v9486 = vmax.f32 %v9399, %v9423
        %v9487 = vmax.f32 %v9401, %v9425
        %v9488 = vmax.f32 %v9403, %v9427
        %v9489 = vmax.f32 %v9405, %v9429
        %v9490 = vmax.f32 %v9431, %v9455
        %v9491 = vmax.f32 %v9433, %v9457
        %v9492 = vmax.f32 %v9435, %v9459
        %v9493 = vmax.f32 %v9437, %v9461
        %v9494 = vmax.f32 %v9439, %v9463
        %v9495 = vmax.f32 %v9441, %v9465
        %v9496 = vmax.f32 %v9443, %v9467
        %v9497 = vmax.f32 %v9445, %v9469
        %v9498 = vmax.f32 %v9447, %v9471
        %v9499 = vmax.f32 %v9449, %v9473
        %v9500 = vmax.f32 %v9451, %v9475
        %v9501 = vmax.f32 %v9453, %v9477
        %9514 = vrot.lane.b32.xlu0 %v9490, 64
        %v9515 = vpop.permute.xlu0 %9514
        %9516 = vrot.lane.b32.xlu0 %v9491, 64
        %v9517 = vpop.permute.xlu0 %9516
        %9518 = vrot.lane.b32.xlu0 %v9492, 64
        %v9519 = vpop.permute.xlu0 %9518
        %9520 = vrot.lane.b32.xlu0 %v9493, 64
        %v9521 = vpop.permute.xlu0 %9520
        %9522 = vrot.lane.b32.xlu0 %v9494, 64
        %v9523 = vpop.permute.xlu0 %9522
        %9524 = vrot.lane.b32.xlu0 %v9495, 64
        %v9525 = vpop.permute.xlu0 %9524
        %9526 = vrot.lane.b32.xlu0 %v9496, 64
        %v9527 = vpop.permute.xlu0 %9526
        %9528 = vrot.lane.b32.xlu0 %v9497, 64
        %v9529 = vpop.permute.xlu0 %9528
        %9530 = vrot.lane.b32.xlu0 %v9498, 64
        %v9531 = vpop.permute.xlu0 %9530
        %9532 = vrot.lane.b32.xlu0 %v9499, 64
        %v9533 = vpop.permute.xlu0 %9532
        %9534 = vrot.lane.b32.xlu0 %v9500, 64
        %v9535 = vpop.permute.xlu0 %9534
        %9536 = vrot.lane.b32.xlu0 %v9501, 64
        %v9537 = vpop.permute.xlu0 %9536
        %v9550 = vsel %vm7796, %v9478, %v9515
        %v9551 = vsel %vm7796, %v9479, %v9517
        %v9552 = vsel %vm7796, %v9480, %v9519
        %v9553 = vsel %vm7796, %v9481, %v9521
        %v9554 = vsel %vm7796, %v9482, %v9523
        %v9555 = vsel %vm7796, %v9483, %v9525
        %v9556 = vsel %vm7796, %v9484, %v9527
        %v9557 = vsel %vm7796, %v9485, %v9529
        %v9558 = vsel %vm7796, %v9486, %v9531
        %v9559 = vsel %vm7796, %v9487, %v9533
        %v9560 = vsel %vm7796, %v9488, %v9535
        %v9561 = vsel %vm7796, %v9489, %v9537
        %9562 = vst [vmem:[%s264] sm:$0x3f] %v9550
        %9563 = vst [vmem:[%s264 + $0x8] sm:$0x3f] %v9551
        %9564 = vst [vmem:[%s264 + $0x10] sm:$0x3f] %v9552
        %9565 = vst [vmem:[%s264 + $0x18] sm:$0x3f] %v9553
        %9566 = vst [vmem:[%s264 + $0x20] sm:$0x3f] %v9554
        %9567 = vst [vmem:[%s264 + $0x28] sm:$0x3f] %v9555
        %9568 = vst [vmem:[%s264 + $0x30] sm:$0x3f] %v9556
        %9569 = vst [vmem:[%s264 + $0x38] sm:$0x3f] %v9557
        %9570 = vst [vmem:[%s264 + $0x40] sm:$0x3f] %v9558
        %9571 = vst [vmem:[%s264 + $0x48] sm:$0x3f] %v9559
        %9572 = vst [vmem:[%s264 + $0x50] sm:$0x3f] %v9560
        %9573 = vst [vmem:[%s264 + $0x58] sm:$0x3f] %v9561
        %p9574 = scmp.lt.s32.totalorder %s18, 1
        %s9575 = scalar_select %p9574, %s18, 1
        %s9576 = smul.addr %s9575, 12
        %s9577 = smul.addr %s9576, 8
        %s9578 = scalar_lea.vmem %s5, %s9577
        // Predicated region
        $region53: #{mnist_forward.2} parent=39 // pred_check
          %p9579 = pneg %p146
        $region54: #{mnist_forward.2} parent=39 // pred_check_branch
          %9581 = sbr.rel (%p9579) target = $region56
        $region55: #{mnist_forward.2} parent=39 // pred_region
          _
        $region56: #{mnist_forward.2} parent=39 // pred_fallthru
          _
      $region40: #{mnist_forward.2} parent=5 // pred_fallthru
        _
      %p9582 = scmp.le.s32.totalorder 2, %s13
      // Predicated region
      $region57: #{mnist_forward.2} parent=5 // pred_check
        %p9583 = pneg %p9582
      $region58: #{mnist_forward.2} parent=5 // pred_check_branch
        %9585 = sbr.rel (%p9583) target = $region60
      $region59: #{mnist_forward.2} parent=5 // pred_region
        %s9586 = ssub.s32 %s13, 2
        // Predicated region
        $region61: #{mnist_forward.2} parent=59 // pred_check
          %p9587 = pneg %p152
        $region62: #{mnist_forward.2} parent=59 // pred_check_branch
          %9589 = sbr.rel (%p9587) target = $region64
        $region63: #{mnist_forward.2} parent=59 // pred_region
          %p9590 = scmp.lt.s32.totalorder %s19, 1
          %s9591 = scalar_select %p9590, %s19, 1
          %s9592 = smul.addr %s9591, 12
          %s9593 = smul.addr %s9592, 8
          %s9594 = scalar_lea.vmem %s5, %s9593
        $region64: #{mnist_forward.2} parent=59 // pred_fallthru
          _
      $region60: #{mnist_forward.2} parent=5 // pred_fallthru
        _
    $region6: #{mnist_forward.2} parent=1 // loop_footer
      %s17 = sadd.s32 1, %s13
    $region7: #{mnist_forward.2} parent=1 // loop_footer_branch
      %12 = sbr.rel target = $region3
    $region8: #{mnist_forward.2} parent=1 // loop_exit
      _
    %9595 = vsyncpa [#allocation4], 1
    %s9596 = scalar_lea.sflag [#allocation4], 1
    %9597 = vsyncpa %s9596, 1
    %9598 = vsyncpa [#allocation6], 1

</llo_original>
